<compile_context>
chip_gen: v6e
topology: v6e:2x2x1
jax: 0.10.0
libtpu: 0.0.40
codegen_flags: <defaults>
</compile_context>

<pallas_src>
import functools

import numpy as np
import jax
import jax.numpy as jnp
from jax.experimental import pallas as pl
from jax.experimental.pallas import tpu as pltpu


# ----------------------------------------------------------------------------
# Fused kernel: 5x GATv2Conv+Tanh -> GlobalAttention pool -> fc1/fc2/fc3.
# One grid step == one independent graph-batch instance.
# ----------------------------------------------------------------------------
def critic_kernel(x_ref, adj_ref, edge_ref, b_ref, bt_ref,
                  wlr_ref, we_all_ref, gsmall_ref, headw_ref, headb_ref,
                  out_ref, *, hdim, num_layers, msg_dtype):
  dot = lambda a, b: jnp.dot(a, b, preferred_element_type=jnp.float32)
  n = adj_ref.shape[1]
  neg = jnp.float32(-1e30)

  adj = adj_ref[0]                                     # [N, N]  adj[t, s]
  B = b_ref[0]                                         # [G, N]
  Bt = bt_ref[0]                                       # [N, G]
  h = x_ref[0]                                         # [N, H]  (layer-1 input zero-padded)

  # Loop-invariant edge projection hoisted out of the layer loop:
  # one [N*N, E] @ [E, 5H] matmul instead of five K=E passes on the h-dependent chain.
  ep_all = dot(edge_ref[0], we_all_ref[...])           # [N*N, 5H]

  # ---- 5x GATv2Conv + Tanh (static unroll, stacked weights) ----
  for l in range(num_layers):
    gs = gsmall_ref[l]                                 # [1, 4H] = [bl|br | att | bias]
    xlr = dot(h, wlr_ref[l]) + gs[:, :2 * hdim]        # [N, 2H]  (lin_l | lin_r fused)
    xl = xlr[:, :hdim]                                 # lin_l(x_s) -> messages
    xr = xlr[:, hdim:]                                 # lin_r(x_t)
    att = gs[:, 2 * hdim:3 * hdim]                     # [1, H]
    bias = gs[:, 3 * hdim:]                            # [1, H]

    ep = ep_all[:, l * hdim:(l + 1) * hdim].reshape(n, n, hdim)
    m = (ep.astype(msg_dtype)
         + xl.astype(msg_dtype)[None, :, :]
         + xr.astype(msg_dtype)[:, None, :])           # [T, S, H]   (bf16 on v6e/v7x)
    m = jnp.where(m > 0, m, 0.2 * m)                   # LeakyReLU(0.2)
    logits = jnp.sum(m * att.astype(msg_dtype)[None, :, :], axis=-1)
    logits = logits.astype(jnp.float32)                # [N, N]  softmax stays f32
    logits = jnp.where(adj > 0.0, logits, neg)
    lmax = jnp.max(logits, axis=-1, keepdims=True)     # rows never empty (self loops)
    p = jnp.exp(logits - lmax)                         # masked entries underflow to exactly 0
    alpha = p * pl.reciprocal(jnp.sum(p, axis=-1, keepdims=True), approx=True)
    h = jnp.tanh(dot(alpha, xl) + bias)                # aggregate + conv bias + Tanh

  # ---- GlobalAttention pooling (gate_nn / nn, first layers fused) ----
  hw = headw_ref[...]                                  # [7, H, 2H] (column-padded slab)
  hb = headb_ref[...]                                  # [7, 1, 2H]
  g1n1 = jnp.tanh(dot(h, hw[0]) + hb[0])               # [N, 2H] gate-l1 | nn-l1
  g = g1n1[:, :hdim]
  hh = g1n1[:, hdim:]
  g = jnp.tanh(dot(g, hw[1][:, :hdim]) + hb[1][:, :hdim])
  gate = dot(g, hw[2][:, :1]) + hb[2][:, :1]           # [N, 1]
  hh = jnp.tanh(dot(hh, hw[3][:, :hdim]) + hb[3][:, :hdim])   # [N, H]

  # Per-graph max shift: exact (constant shift within a graph) and NaN-safe (denominator >= 1).
  masked = jnp.where(Bt > 0.0, gate, neg)              # [N, G]
  gmax = jnp.max(masked, axis=0, keepdims=True)        # [1, G]  per-graph max
  shift = jnp.max(jnp.where(Bt > 0.0, gmax, neg), axis=1, keepdims=True)   # [N, 1]
  e = jnp.exp(gate - shift)                            # [N, 1]
  num_den = dot(B, jnp.concatenate([e * hh, e], axis=1))      # [G, H+1]  num | den fused
  pooled = num_den[:, :hdim] * pl.reciprocal(num_den[:, hdim:], approx=True)   # [G, H]

  # ---- critic head ----
  y = jnp.tanh(dot(pooled, hw[4][:, :hdim]) + hb[4][:, :hdim])
  y = jnp.tanh(dot(y, hw[5][:, :hdim]) + hb[5][:, :hdim])
  y = jnp.tanh(dot(y, hw[6][:, :1]) + hb[6][:, :1])    # [G, 1]
  out_ref[0] = y


def _batched_spec(shape):
  nd = len(shape)
  return pl.BlockSpec((1,) + tuple(shape[1:]), lambda b: (b,) + (0,) * (nd - 1))


def _const_spec(shape):
  nd = len(shape)
  return pl.BlockSpec(tuple(shape), lambda b: (0,) * nd)


@functools.partial(jax.jit, static_argnames=("use_bf16_msgs",))
def critic_forward(packed, x_pad, adj, edge_flat, B, Bt, use_bf16_msgs=False):
  nb, _, hdim = x_pad.shape
  g = B.shape[1]
  num_layers = packed["wlr"].shape[0]
  kernel = functools.partial(
      critic_kernel, hdim=hdim, num_layers=num_layers,
      msg_dtype=jnp.bfloat16 if use_bf16_msgs else jnp.float32)

  graph_inputs = (x_pad, adj, edge_flat, B, Bt)
  weight_inputs = (packed["wlr"], packed["we_all"], packed["gat_small"],
                   packed["head_w"], packed["head_b"])
  in_specs = ([_batched_spec(a.shape) for a in graph_inputs]
              + [_const_spec(a.shape) for a in weight_inputs])

  return pl.pallas_call(
      kernel,
      out_shape=jax.ShapeDtypeStruct((nb, g, 1), jnp.float32),
      grid=(nb,),
      in_specs=in_specs,
      out_specs=pl.BlockSpec((1, g, 1), lambda b: (b, 0, 0)),
      compiler_params=pltpu.CompilerParams(dimension_semantics=("parallel",)),
  )(*graph_inputs, *weight_inputs)


# ----------------------------------------------------------------------------
# Parameter init (deterministic, synthetic) + packing for the fused kernel
# ----------------------------------------------------------------------------
def _init_linear(key, din, dout):
  kw, kb = jax.random.split(key)
  lim = 1.0 / np.sqrt(din)
  w = jax.random.uniform(kw, (din, dout), jnp.float32, -lim, lim)
  b = jax.random.uniform(kb, (1, dout), jnp.float32, -lim, lim)
  return w, b


def _init_gat(key, cin, h, edim):
  ks = jax.random.split(key, 4)
  wl, bl = _init_linear(ks[0], cin, h)     # lin_l (with bias)
  wr, br = _init_linear(ks[1], cin, h)     # lin_r (with bias)
  we, _ = _init_linear(ks[2], edim, h)     # lin_edge (no bias)
  att = jax.random.normal(ks[3], (1, h), jnp.float32) / np.sqrt(h)
  bias = jnp.zeros((1, h), jnp.float32)    # final conv bias
  return dict(wl=wl, bl=bl, wr=wr, br=br, we=we, att=att, bias=bias)


def init_params(key, cin, h, edim):
  ks = jax.random.split(key, 13)
  gat, din = [], cin
  for l in range(5):
    gat.append(_init_gat(ks[l], din, h, edim))
    din = h
  wg1, bg1 = _init_linear(ks[5], h, h)
  wg2, bg2 = _init_linear(ks[6], h, h)
  wg3, bg3 = _init_linear(ks[7], h, 1)
  wn1, bn1 = _init_linear(ks[8], h, h)
  wn2, bn2 = _init_linear(ks[9], h, h)
  w1, b1 = _init_linear(ks[10], h, h)
  w2, b2 = _init_linear(ks[11], h, h)
  w3, b3 = _init_linear(ks[12], h, 1)
  return dict(gat=gat, wg1=wg1, bg1=bg1, wg2=wg2, bg2=bg2, wg3=wg3, bg3=bg3,
              wn1=wn1, bn1=bn1, wn2=wn2, bn2=bn2,
              w1=w1, b1=b1, w2=w2, b2=b2, w3=w3, b3=b3)


def pack_params(params, h):
  """Pack all weights into 5 VMEM slabs (fewer, larger prologue DMAs)."""
  wlr_l, we_l, small_l = [], [], []
  for p in params["gat"]:
    wl, wr = p["wl"], p["wr"]
    if wl.shape[0] < h:                                   # pad Cin -> H with zero rows (exact)
      pad = h - wl.shape[0]
      wl = jnp.pad(wl, ((0, pad), (0, 0)))
      wr = jnp.pad(wr, ((0, pad), (0, 0)))
    wlr_l.append(jnp.concatenate([wl, wr], axis=1))       # [H, 2H]
    we_l.append(p["we"])                                  # [E, H]
    small_l.append(jnp.concatenate(
        [p["bl"], p["br"], p["att"], p["bias"]], axis=1))  # [1, 4H]

  def pad_cols(w, cols):
    return jnp.pad(w, ((0, 0), (0, cols - w.shape[1])))

  head_w = jnp.stack([
      jnp.concatenate([params["wg1"], params["wn1"]], axis=1),   # gate-l1 | nn-l1 fused
      pad_cols(params["wg2"], 2 * h),
      pad_cols(params["wg3"], 2 * h),
      pad_cols(params["wn2"], 2 * h),
      pad_cols(params["w1"], 2 * h),
      pad_cols(params["w2"], 2 * h),
      pad_cols(params["w3"], 2 * h),
  ])                                                             # [7, H, 2H]
  head_b = jnp.stack([
      jnp.concatenate([params["bg1"], params["bn1"]], axis=1),
      pad_cols(params["bg2"], 2 * h),
      pad_cols(params["bg3"], 2 * h),
      pad_cols(params["bn2"], 2 * h),
      pad_cols(params["b1"], 2 * h),
      pad_cols(params["b2"], 2 * h),
      pad_cols(params["b3"], 2 * h),
  ])                                                             # [7, 1, 2H]
  return dict(
      wlr=jnp.stack(wlr_l),                                      # [5, H, 2H]
      we_all=jnp.concatenate(we_l, axis=1),                      # [E, 5H] (hoisted edge matmul)
      gat_small=jnp.stack(small_l),                              # [5, 1, 4H]
      head_w=head_w, head_b=head_b)


# ----------------------------------------------------------------------------
# Graph densification (wrapper glue; matches PyG add_self_loops fill_value='mean')
# ----------------------------------------------------------------------------
def build_dense_graph(num_nodes, edge_index, edge_attr):
  n = num_nodes
  d = edge_attr.shape[1]
  adj = np.zeros((n, n), np.float32)
  dense = np.zeros((n, n, d), np.float32)
  deg = np.zeros((n,), np.float32)
  acc = np.zeros((n, d), np.float32)
  src = np.asarray(edge_index[0]); tgt = np.asarray(edge_index[1])
  ea = np.asarray(edge_attr)
  for k in range(src.shape[0]):
    s, t = int(src[k]), int(tgt[k])
    adj[t, s] = 1.0
    dense[t, s] = ea[k]
    deg[t] += 1.0
    acc[t] += ea[k]
  for i in range(n):
    adj[i, i] = 1.0
    dense[i, i] = acc[i] / max(deg[i], 1.0)   # self-loop edge attr = mean of incoming attrs
  return jnp.asarray(adj), jnp.asarray(dense.reshape(n * n, d))


# ----------------------------------------------------------------------------
# Pure-JAX reference (same densified math) for a correctness check (per instance)
# ----------------------------------------------------------------------------
def critic_reference(params, x, adj, edge_flat, B, Bt):
  prec = jax.lax.Precision.HIGHEST
  dot = lambda a, b: jnp.dot(a, b, precision=prec)
  n = x.shape[0]
  h = x
  for p in params["gat"]:
    hdim = p["wl"].shape[1]
    xl = dot(h, p["wl"]) + p["bl"]
    xr = dot(h, p["wr"]) + p["br"]
    ep = dot(edge_flat, p["we"]).reshape(n, n, hdim)
    m = ep + xl[None, :, :] + xr[:, None, :]
    m = jnp.where(m > 0.0, m, 0.2 * m)
    logits = jnp.sum(m * p["att"][0][None, None, :], axis=-1)
    logits = jnp.where(adj > 0.0, logits, -1e30)
    pm = jnp.exp(logits - jnp.max(logits, axis=-1, keepdims=True)) * adj
    alpha = pm / jnp.sum(pm, axis=-1, keepdims=True)
    h = jnp.tanh(dot(alpha, xl) + p["bias"])
  g = jnp.tanh(dot(h, params["wg1"]) + params["bg1"])
  g = jnp.tanh(dot(g, params["wg2"]) + params["bg2"])
  gate = dot(g, params["wg3"]) + params["bg3"]
  hh = jnp.tanh(dot(h, params["wn1"]) + params["bn1"])
  hh = jnp.tanh(dot(hh, params["wn2"]) + params["bn2"])
  e = jnp.exp(gate - jnp.max(gate))
  s = dot(B, e); d = dot(Bt, s); w = e / d
  pooled = dot(B, w * hh)
  y = jnp.tanh(dot(pooled, params["w1"]) + params["b1"])
  y = jnp.tanh(dot(y, params["w2"]) + params["b2"])
  y = jnp.tanh(dot(y, params["w3"]) + params["b3"])
  return y


if __name__ == "__main__":
  # 2 independent graph-batch instances (grid axis), each with 2 graphs x 8 nodes.
  # c_in_critic=8, hidden_width=32, edge_dim_critic=4.
  NB = 2
  N_PER_GRAPH, G = 8, 2
  N = N_PER_GRAPH * G
  CIN, HIDDEN, EDIM = 8, 32, 4

  key = jax.random.PRNGKey(0)
  k_p, k_data = jax.random.split(key)
  params = init_params(k_p, CIN, HIDDEN, EDIM)
  packed = pack_params(params, HIDDEN)

  # bidirectional ring edges inside each graph (same topology per instance)
  edges = []
  for gi in range(G):
    base = gi * N_PER_GRAPH
    for j in range(N_PER_GRAPH):
      a, b = base + j, base + (j + 1) % N_PER_GRAPH
      edges.append((a, b))
      edges.append((b, a))
  edge_index = np.array(edges, dtype=np.int32).T               # [2, 32]

  batch_ids = np.repeat(np.arange(G), N_PER_GRAPH)
  B_np = (batch_ids[None, :] == np.arange(G)[:, None]).astype(np.float32)   # [G, N]

  xs, adjs, efs = [], [], []
  data_keys = jax.random.split(k_data, NB)
  for i in range(NB):
    kx, ke = jax.random.split(data_keys[i])
    x = jax.random.normal(kx, (N, CIN), jnp.float32)
    edge_attr = jax.random.normal(ke, (edge_index.shape[1], EDIM), jnp.float32)
    adj_i, ef_i = build_dense_graph(N, edge_index, edge_attr)
    xs.append(x); adjs.append(adj_i); efs.append(ef_i)

  x_all = jnp.stack(xs)                                         # [NB, N, CIN]
  x_pad = jnp.pad(x_all, ((0, 0), (0, 0), (0, HIDDEN - CIN)))   # zero-pad Cin -> H (exact)
  adj_all = jnp.stack(adjs)                                     # [NB, N, N]
  ef_all = jnp.stack(efs)                                       # [NB, N*N, E]
  B_all = jnp.asarray(np.stack([B_np] * NB))                    # [NB, G, N]
  Bt_all = jnp.asarray(np.stack([B_np.T] * NB))                 # [NB, N, G]

  # f32 path (all generations), strict check against the pure-JAX reference
  out = critic_forward(packed, x_pad, adj_all, ef_all, B_all, Bt_all, use_bf16_msgs=False)
  out = jax.block_until_ready(out)
  assert out.shape == (NB, G, 1), out.shape
  assert bool(jnp.all(jnp.isfinite(out)))
  for i in range(NB):
    ref = critic_reference(params, xs[i], adjs[i], efs[i],
                           jnp.asarray(B_np), jnp.asarray(B_np.T))
    np.testing.assert_allclose(np.asarray(out[i]), np.asarray(ref), rtol=3e-3, atol=3e-3)

  # Reduced-precision message-tensor path (feedback: bf16 on v6e/v7x only; skip on v5e).
  kind = jax.devices()[0].device_kind.lower()
  if ("v6" in kind) or ("v7" in kind):
    out_bf16 = jax.block_until_ready(
        critic_forward(packed, x_pad, adj_all, ef_all, B_all, Bt_all, use_bf16_msgs=True))
    assert bool(jnp.all(jnp.isfinite(out_bf16)))
    # loose sanity bound for the bf16 message path (catches structural bugs, not rounding)
    np.testing.assert_allclose(np.asarray(out_bf16), np.asarray(out), atol=1e-1)

  print("KERNEL_OK")
</pallas_src>

<mosaic_0001>
module attributes {stable_mosaic.version = 11 : i64} {
  func.func @critic_kernel(%arg0: i32, %arg1: memref<1x16x32xf32, #tpu.memory_space<vmem>>, %arg2: memref<1x16x16xf32, #tpu.memory_space<vmem>>, %arg3: memref<1x256x4xf32, #tpu.memory_space<vmem>>, %arg4: memref<1x2x16xf32, #tpu.memory_space<vmem>>, %arg5: memref<1x16x2xf32, #tpu.memory_space<vmem>>, %arg6: memref<5x32x64xf32, #tpu.memory_space<vmem>>, %arg7: memref<4x160xf32, #tpu.memory_space<vmem>>, %arg8: memref<5x1x128xf32, #tpu.memory_space<vmem>>, %arg9: memref<7x32x64xf32, #tpu.memory_space<vmem>>, %arg10: memref<7x1x64xf32, #tpu.memory_space<vmem>>, %arg11: memref<1x2x1xf32, #tpu.memory_space<vmem>>) attributes {dimension_semantics = [#tpu.dimension_semantics<parallel>], iteration_bounds = array<i64: 2>, scalar_prefetch = 0 : i64, scratch_operands = 0 : i64, tpu.core_type = #tpu.core_type<tc>, window_params = [{transform_indices = @transform_0, window_bounds = array<i64: 1, 16, 32>}, {transform_indices = @transform_1, window_bounds = array<i64: 1, 16, 16>}, {transform_indices = @transform_2, window_bounds = array<i64: 1, 256, 4>}, {transform_indices = @transform_3, window_bounds = array<i64: 1, 2, 16>}, {transform_indices = @transform_4, window_bounds = array<i64: 1, 16, 2>}, {pipeline_mode = #tpu.pipeline_mode<synchronous>, transform_indices = @transform_5, window_bounds = array<i64: 5, 32, 64>}, {pipeline_mode = #tpu.pipeline_mode<synchronous>, transform_indices = @transform_6, window_bounds = array<i64: 4, 160>}, {pipeline_mode = #tpu.pipeline_mode<synchronous>, transform_indices = @transform_7, window_bounds = array<i64: 5, 1, 128>}, {pipeline_mode = #tpu.pipeline_mode<synchronous>, transform_indices = @transform_8, window_bounds = array<i64: 7, 32, 64>}, {pipeline_mode = #tpu.pipeline_mode<synchronous>, transform_indices = @transform_9, window_bounds = array<i64: 7, 1, 64>}, {transform_indices = @transform_10, window_bounds = array<i64: 1, 2, 1>}]} {
    %c0 = arith.constant 0 : index
    %c0_0 = arith.constant 0 : index
    %c0_1 = arith.constant 0 : index
    %0 = vector.load %arg2[%c0, %c0_0, %c0_1] : memref<1x16x16xf32, #tpu.memory_space<vmem>>, vector<1x16x16xf32>
    %1 = vector.shape_cast %0 : vector<1x16x16xf32> to vector<16x16xf32>
    %c0_2 = arith.constant 0 : index
    %c0_3 = arith.constant 0 : index
    %c0_4 = arith.constant 0 : index
    %2 = vector.load %arg4[%c0_2, %c0_3, %c0_4] : memref<1x2x16xf32, #tpu.memory_space<vmem>>, vector<1x2x16xf32>
    %3 = vector.shape_cast %2 : vector<1x2x16xf32> to vector<2x16xf32>
    %c0_5 = arith.constant 0 : index
    %c0_6 = arith.constant 0 : index
    %c0_7 = arith.constant 0 : index
    %4 = vector.load %arg5[%c0_5, %c0_6, %c0_7] : memref<1x16x2xf32, #tpu.memory_space<vmem>>, vector<1x16x2xf32>
    %5 = vector.shape_cast %4 : vector<1x16x2xf32> to vector<16x2xf32>
    %c0_8 = arith.constant 0 : index
    %c0_9 = arith.constant 0 : index
    %c0_10 = arith.constant 0 : index
    %6 = vector.load %arg1[%c0_8, %c0_9, %c0_10] : memref<1x16x32xf32, #tpu.memory_space<vmem>>, vector<1x16x32xf32>
    %7 = vector.shape_cast %6 : vector<1x16x32xf32> to vector<16x32xf32>
    %c0_11 = arith.constant 0 : index
    %c0_12 = arith.constant 0 : index
    %c0_13 = arith.constant 0 : index
    %8 = vector.load %arg3[%c0_11, %c0_12, %c0_13] : memref<1x256x4xf32, #tpu.memory_space<vmem>>, vector<1x256x4xf32>
    %9 = vector.shape_cast %8 : vector<1x256x4xf32> to vector<256x4xf32>
    %c0_14 = arith.constant 0 : index
    %c0_15 = arith.constant 0 : index
    %10 = vector.load %arg7[%c0_14, %c0_15] : memref<4x160xf32, #tpu.memory_space<vmem>>, vector<4x160xf32>
    %cst = arith.constant dense<0.000000e+00> : vector<256x160xf32>
    %11 = tpu.matmul %9, %10, %cst {dimension_numbers = #tpu.dot_dimension_numbers<[1], [0], [0], [1], [0, 0, 1, 1], [], []>} : vector<256x4xf32>, vector<4x160xf32>, vector<256x160xf32> -> vector<256x160xf32>
    %c0_16 = arith.constant 0 : index
    %c0_17 = arith.constant 0 : index
    %c0_18 = arith.constant 0 : index
    %12 = vector.load %arg8[%c0_16, %c0_17, %c0_18] : memref<5x1x128xf32, #tpu.memory_space<vmem>>, vector<1x1x128xf32>
    %13 = vector.shape_cast %12 : vector<1x1x128xf32> to vector<1x128xf32>
    %c0_19 = arith.constant 0 : index
    %c0_20 = arith.constant 0 : index
    %c0_21 = arith.constant 0 : index
    %14 = vector.load %arg6[%c0_19, %c0_20, %c0_21] : memref<5x32x64xf32, #tpu.memory_space<vmem>>, vector<1x32x64xf32>
    %15 = vector.shape_cast %14 : vector<1x32x64xf32> to vector<32x64xf32>
    %cst_22 = arith.constant dense<0.000000e+00> : vector<16x64xf32>
    %16 = tpu.matmul %7, %15, %cst_22 {dimension_numbers = #tpu.dot_dimension_numbers<[1], [0], [0], [1], [0, 0, 1, 1], [], []>} : vector<16x32xf32>, vector<32x64xf32>, vector<16x64xf32> -> vector<16x64xf32>
    %17 = vector.extract_strided_slice %13 {offsets = [0, 0], sizes = [1, 64], strides = [1, 1]} : vector<1x128xf32> to vector<1x64xf32>
    %18 = vector.broadcast %17 : vector<1x64xf32> to vector<16x64xf32>
    %19 = arith.addf %16, %18 : vector<16x64xf32>
    %20 = vector.extract_strided_slice %19 {offsets = [0, 0], sizes = [16, 32], strides = [1, 1]} : vector<16x64xf32> to vector<16x32xf32>
    %21 = vector.extract_strided_slice %19 {offsets = [0, 32], sizes = [16, 32], strides = [1, 1]} : vector<16x64xf32> to vector<16x32xf32>
    %22 = vector.extract_strided_slice %13 {offsets = [0, 64], sizes = [1, 32], strides = [1, 1]} : vector<1x128xf32> to vector<1x32xf32>
    %23 = vector.extract_strided_slice %13 {offsets = [0, 96], sizes = [1, 32], strides = [1, 1]} : vector<1x128xf32> to vector<1x32xf32>
    %24 = vector.extract_strided_slice %11 {offsets = [0, 0], sizes = [256, 32], strides = [1, 1]} : vector<256x160xf32> to vector<256x32xf32>
    %25 = vector.shape_cast %24 : vector<256x32xf32> to vector<16x16x32xf32>
    %26 = vector.shape_cast %20 : vector<16x32xf32> to vector<1x16x32xf32>
    %27 = vector.broadcast %26 : vector<1x16x32xf32> to vector<16x16x32xf32>
    %28 = arith.addf %25, %27 : vector<16x16x32xf32>
    %29 = vector.shape_cast %21 : vector<16x32xf32> to vector<16x1x32xf32>
    %30 = vector.broadcast %29 : vector<16x1x32xf32> to vector<16x16x32xf32>
    %31 = arith.addf %28, %30 : vector<16x16x32xf32>
    %cst_23 = arith.constant 0.000000e+00 : f32
    %32 = vector.broadcast %cst_23 : f32 to vector<16x16x32xf32>
    %33 = arith.cmpf ogt, %31, %32 : vector<16x16x32xf32>
    %cst_24 = arith.constant 2.000000e-01 : f32
    %34 = vector.broadcast %cst_24 : f32 to vector<16x16x32xf32>
    %35 = arith.mulf %34, %31 : vector<16x16x32xf32>
    %36 = arith.select %33, %31, %35 : vector<16x16x32xi1>, vector<16x16x32xf32>
    %37 = vector.shape_cast %22 : vector<1x32xf32> to vector<1x1x32xf32>
    %38 = vector.broadcast %37 : vector<1x1x32xf32> to vector<16x16x32xf32>
    %39 = arith.mulf %36, %38 : vector<16x16x32xf32>
    %cst_25 = arith.constant dense<0.000000e+00> : vector<16x16xf32>
    %40 = vector.multi_reduction <add>, %39, %cst_25 [2] : vector<16x16x32xf32> to vector<16x16xf32>
    %cst_26 = arith.constant 0.000000e+00 : f32
    %41 = vector.broadcast %cst_26 : f32 to vector<16x16xf32>
    %42 = arith.cmpf ogt, %1, %41 : vector<16x16xf32>
    %cst_27 = arith.constant -1.000000e+30 : f32
    %43 = vector.broadcast %cst_27 : f32 to vector<16x16xf32>
    %44 = arith.select %42, %40, %43 : vector<16x16xi1>, vector<16x16xf32>
    %cst_28 = arith.constant dense<0xFF800000> : vector<16xf32>
    %45 = vector.multi_reduction <maximumf>, %44, %cst_28 [1] : vector<16x16xf32> to vector<16xf32>
    %46 = vector.shape_cast %45 : vector<16xf32> to vector<16x1xf32>
    %47 = vector.broadcast %46 : vector<16x1xf32> to vector<16x16xf32>
    %48 = arith.subf %44, %47 : vector<16x16xf32>
    %49 = math.exp %48 : vector<16x16xf32>
    %cst_29 = arith.constant dense<0.000000e+00> : vector<16xf32>
    %50 = vector.multi_reduction <add>, %49, %cst_29 [1] : vector<16x16xf32> to vector<16xf32>
    %51 = vector.shape_cast %50 : vector<16xf32> to vector<16x1xf32>
    %52 = tpu.reciprocal %51 {approx = true} : vector<16x1xf32> -> vector<16x1xf32>
    %53 = vector.broadcast %52 : vector<16x1xf32> to vector<16x16xf32>
    %54 = arith.mulf %49, %53 : vector<16x16xf32>
    %cst_30 = arith.constant dense<0.000000e+00> : vector<16x32xf32>
    %55 = tpu.matmul %54, %20, %cst_30 {dimension_numbers = #tpu.dot_dimension_numbers<[1], [0], [0], [1], [0, 0, 1, 1], [], []>} : vector<16x16xf32>, vector<16x32xf32>, vector<16x32xf32> -> vector<16x32xf32>
    %56 = vector.broadcast %23 : vector<1x32xf32> to vector<16x32xf32>
    %57 = arith.addf %55, %56 : vector<16x32xf32>
    %58 = math.tanh %57 : vector<16x32xf32>
    %c1 = arith.constant 1 : index
    %c0_31 = arith.constant 0 : index
    %c0_32 = arith.constant 0 : index
    %59 = vector.load %arg8[%c1, %c0_31, %c0_32] : memref<5x1x128xf32, #tpu.memory_space<vmem>>, vector<1x1x128xf32>
    %60 = vector.shape_cast %59 : vector<1x1x128xf32> to vector<1x128xf32>
    %c1_33 = arith.constant 1 : index
    %c0_34 = arith.constant 0 : index
    %c0_35 = arith.constant 0 : index
    %61 = vector.load %arg6[%c1_33, %c0_34, %c0_35] : memref<5x32x64xf32, #tpu.memory_space<vmem>>, vector<1x32x64xf32>
    %62 = vector.shape_cast %61 : vector<1x32x64xf32> to vector<32x64xf32>
    %cst_36 = arith.constant dense<0.000000e+00> : vector<16x64xf32>
    %63 = tpu.matmul %58, %62, %cst_36 {dimension_numbers = #tpu.dot_dimension_numbers<[1], [0], [0], [1], [0, 0, 1, 1], [], []>} : vector<16x32xf32>, vector<32x64xf32>, vector<16x64xf32> -> vector<16x64xf32>
    %64 = vector.extract_strided_slice %60 {offsets = [0, 0], sizes = [1, 64], strides = [1, 1]} : vector<1x128xf32> to vector<1x64xf32>
    %65 = vector.broadcast %64 : vector<1x64xf32> to vector<16x64xf32>
    %66 = arith.addf %63, %65 : vector<16x64xf32>
    %67 = vector.extract_strided_slice %66 {offsets = [0, 0], sizes = [16, 32], strides = [1, 1]} : vector<16x64xf32> to vector<16x32xf32>
    %68 = vector.extract_strided_slice %66 {offsets = [0, 32], sizes = [16, 32], strides = [1, 1]} : vector<16x64xf32> to vector<16x32xf32>
    %69 = vector.extract_strided_slice %60 {offsets = [0, 64], sizes = [1, 32], strides = [1, 1]} : vector<1x128xf32> to vector<1x32xf32>
    %70 = vector.extract_strided_slice %60 {offsets = [0, 96], sizes = [1, 32], strides = [1, 1]} : vector<1x128xf32> to vector<1x32xf32>
    %71 = vector.extract_strided_slice %11 {offsets = [0, 32], sizes = [256, 32], strides = [1, 1]} : vector<256x160xf32> to vector<256x32xf32>
    %72 = vector.shape_cast %71 : vector<256x32xf32> to vector<16x16x32xf32>
    %73 = vector.shape_cast %67 : vector<16x32xf32> to vector<1x16x32xf32>
    %74 = vector.broadcast %73 : vector<1x16x32xf32> to vector<16x16x32xf32>
    %75 = arith.addf %72, %74 : vector<16x16x32xf32>
    %76 = vector.shape_cast %68 : vector<16x32xf32> to vector<16x1x32xf32>
    %77 = vector.broadcast %76 : vector<16x1x32xf32> to vector<16x16x32xf32>
    %78 = arith.addf %75, %77 : vector<16x16x32xf32>
    %cst_37 = arith.constant 0.000000e+00 : f32
    %79 = vector.broadcast %cst_37 : f32 to vector<16x16x32xf32>
    %80 = arith.cmpf ogt, %78, %79 : vector<16x16x32xf32>
    %cst_38 = arith.constant 2.000000e-01 : f32
    %81 = vector.broadcast %cst_38 : f32 to vector<16x16x32xf32>
    %82 = arith.mulf %81, %78 : vector<16x16x32xf32>
    %83 = arith.select %80, %78, %82 : vector<16x16x32xi1>, vector<16x16x32xf32>
    %84 = vector.shape_cast %69 : vector<1x32xf32> to vector<1x1x32xf32>
    %85 = vector.broadcast %84 : vector<1x1x32xf32> to vector<16x16x32xf32>
    %86 = arith.mulf %83, %85 : vector<16x16x32xf32>
    %cst_39 = arith.constant dense<0.000000e+00> : vector<16x16xf32>
    %87 = vector.multi_reduction <add>, %86, %cst_39 [2] : vector<16x16x32xf32> to vector<16x16xf32>
    %cst_40 = arith.constant 0.000000e+00 : f32
    %88 = vector.broadcast %cst_40 : f32 to vector<16x16xf32>
    %89 = arith.cmpf ogt, %1, %88 : vector<16x16xf32>
    %cst_41 = arith.constant -1.000000e+30 : f32
    %90 = vector.broadcast %cst_41 : f32 to vector<16x16xf32>
    %91 = arith.select %89, %87, %90 : vector<16x16xi1>, vector<16x16xf32>
    %cst_42 = arith.constant dense<0xFF800000> : vector<16xf32>
    %92 = vector.multi_reduction <maximumf>, %91, %cst_42 [1] : vector<16x16xf32> to vector<16xf32>
    %93 = vector.shape_cast %92 : vector<16xf32> to vector<16x1xf32>
    %94 = vector.broadcast %93 : vector<16x1xf32> to vector<16x16xf32>
    %95 = arith.subf %91, %94 : vector<16x16xf32>
    %96 = math.exp %95 : vector<16x16xf32>
    %cst_43 = arith.constant dense<0.000000e+00> : vector<16xf32>
    %97 = vector.multi_reduction <add>, %96, %cst_43 [1] : vector<16x16xf32> to vector<16xf32>
    %98 = vector.shape_cast %97 : vector<16xf32> to vector<16x1xf32>
    %99 = tpu.reciprocal %98 {approx = true} : vector<16x1xf32> -> vector<16x1xf32>
    %100 = vector.broadcast %99 : vector<16x1xf32> to vector<16x16xf32>
    %101 = arith.mulf %96, %100 : vector<16x16xf32>
    %cst_44 = arith.constant dense<0.000000e+00> : vector<16x32xf32>
    %102 = tpu.matmul %101, %67, %cst_44 {dimension_numbers = #tpu.dot_dimension_numbers<[1], [0], [0], [1], [0, 0, 1, 1], [], []>} : vector<16x16xf32>, vector<16x32xf32>, vector<16x32xf32> -> vector<16x32xf32>
    %103 = vector.broadcast %70 : vector<1x32xf32> to vector<16x32xf32>
    %104 = arith.addf %102, %103 : vector<16x32xf32>
    %105 = math.tanh %104 : vector<16x32xf32>
    %c2 = arith.constant 2 : index
    %c0_45 = arith.constant 0 : index
    %c0_46 = arith.constant 0 : index
    %106 = vector.load %arg8[%c2, %c0_45, %c0_46] : memref<5x1x128xf32, #tpu.memory_space<vmem>>, vector<1x1x128xf32>
    %107 = vector.shape_cast %106 : vector<1x1x128xf32> to vector<1x128xf32>
    %c2_47 = arith.constant 2 : index
    %c0_48 = arith.constant 0 : index
    %c0_49 = arith.constant 0 : index
    %108 = vector.load %arg6[%c2_47, %c0_48, %c0_49] : memref<5x32x64xf32, #tpu.memory_space<vmem>>, vector<1x32x64xf32>
    %109 = vector.shape_cast %108 : vector<1x32x64xf32> to vector<32x64xf32>
    %cst_50 = arith.constant dense<0.000000e+00> : vector<16x64xf32>
    %110 = tpu.matmul %105, %109, %cst_50 {dimension_numbers = #tpu.dot_dimension_numbers<[1], [0], [0], [1], [0, 0, 1, 1], [], []>} : vector<16x32xf32>, vector<32x64xf32>, vector<16x64xf32> -> vector<16x64xf32>
    %111 = vector.extract_strided_slice %107 {offsets = [0, 0], sizes = [1, 64], strides = [1, 1]} : vector<1x128xf32> to vector<1x64xf32>
    %112 = vector.broadcast %111 : vector<1x64xf32> to vector<16x64xf32>
    %113 = arith.addf %110, %112 : vector<16x64xf32>
    %114 = vector.extract_strided_slice %113 {offsets = [0, 0], sizes = [16, 32], strides = [1, 1]} : vector<16x64xf32> to vector<16x32xf32>
    %115 = vector.extract_strided_slice %113 {offsets = [0, 32], sizes = [16, 32], strides = [1, 1]} : vector<16x64xf32> to vector<16x32xf32>
    %116 = vector.extract_strided_slice %107 {offsets = [0, 64], sizes = [1, 32], strides = [1, 1]} : vector<1x128xf32> to vector<1x32xf32>
    %117 = vector.extract_strided_slice %107 {offsets = [0, 96], sizes = [1, 32], strides = [1, 1]} : vector<1x128xf32> to vector<1x32xf32>
    %118 = vector.extract_strided_slice %11 {offsets = [0, 64], sizes = [256, 32], strides = [1, 1]} : vector<256x160xf32> to vector<256x32xf32>
    %119 = vector.shape_cast %118 : vector<256x32xf32> to vector<16x16x32xf32>
    %120 = vector.shape_cast %114 : vector<16x32xf32> to vector<1x16x32xf32>
    %121 = vector.broadcast %120 : vector<1x16x32xf32> to vector<16x16x32xf32>
    %122 = arith.addf %119, %121 : vector<16x16x32xf32>
    %123 = vector.shape_cast %115 : vector<16x32xf32> to vector<16x1x32xf32>
    %124 = vector.broadcast %123 : vector<16x1x32xf32> to vector<16x16x32xf32>
    %125 = arith.addf %122, %124 : vector<16x16x32xf32>
    %cst_51 = arith.constant 0.000000e+00 : f32
    %126 = vector.broadcast %cst_51 : f32 to vector<16x16x32xf32>
    %127 = arith.cmpf ogt, %125, %126 : vector<16x16x32xf32>
    %cst_52 = arith.constant 2.000000e-01 : f32
    %128 = vector.broadcast %cst_52 : f32 to vector<16x16x32xf32>
    %129 = arith.mulf %128, %125 : vector<16x16x32xf32>
    %130 = arith.select %127, %125, %129 : vector<16x16x32xi1>, vector<16x16x32xf32>
    %131 = vector.shape_cast %116 : vector<1x32xf32> to vector<1x1x32xf32>
    %132 = vector.broadcast %131 : vector<1x1x32xf32> to vector<16x16x32xf32>
    %133 = arith.mulf %130, %132 : vector<16x16x32xf32>
    %cst_53 = arith.constant dense<0.000000e+00> : vector<16x16xf32>
    %134 = vector.multi_reduction <add>, %133, %cst_53 [2] : vector<16x16x32xf32> to vector<16x16xf32>
    %cst_54 = arith.constant 0.000000e+00 : f32
    %135 = vector.broadcast %cst_54 : f32 to vector<16x16xf32>
    %136 = arith.cmpf ogt, %1, %135 : vector<16x16xf32>
    %cst_55 = arith.constant -1.000000e+30 : f32
    %137 = vector.broadcast %cst_55 : f32 to vector<16x16xf32>
    %138 = arith.select %136, %134, %137 : vector<16x16xi1>, vector<16x16xf32>
    %cst_56 = arith.constant dense<0xFF800000> : vector<16xf32>
    %139 = vector.multi_reduction <maximumf>, %138, %cst_56 [1] : vector<16x16xf32> to vector<16xf32>
    %140 = vector.shape_cast %139 : vector<16xf32> to vector<16x1xf32>
    %141 = vector.broadcast %140 : vector<16x1xf32> to vector<16x16xf32>
    %142 = arith.subf %138, %141 : vector<16x16xf32>
    %143 = math.exp %142 : vector<16x16xf32>
    %cst_57 = arith.constant dense<0.000000e+00> : vector<16xf32>
    %144 = vector.multi_reduction <add>, %143, %cst_57 [1] : vector<16x16xf32> to vector<16xf32>
    %145 = vector.shape_cast %144 : vector<16xf32> to vector<16x1xf32>
    %146 = tpu.reciprocal %145 {approx = true} : vector<16x1xf32> -> vector<16x1xf32>
    %147 = vector.broadcast %146 : vector<16x1xf32> to vector<16x16xf32>
    %148 = arith.mulf %143, %147 : vector<16x16xf32>
    %cst_58 = arith.constant dense<0.000000e+00> : vector<16x32xf32>
    %149 = tpu.matmul %148, %114, %cst_58 {dimension_numbers = #tpu.dot_dimension_numbers<[1], [0], [0], [1], [0, 0, 1, 1], [], []>} : vector<16x16xf32>, vector<16x32xf32>, vector<16x32xf32> -> vector<16x32xf32>
    %150 = vector.broadcast %117 : vector<1x32xf32> to vector<16x32xf32>
    %151 = arith.addf %149, %150 : vector<16x32xf32>
    %152 = math.tanh %151 : vector<16x32xf32>
    %c3 = arith.constant 3 : index
    %c0_59 = arith.constant 0 : index
    %c0_60 = arith.constant 0 : index
    %153 = vector.load %arg8[%c3, %c0_59, %c0_60] : memref<5x1x128xf32, #tpu.memory_space<vmem>>, vector<1x1x128xf32>
    %154 = vector.shape_cast %153 : vector<1x1x128xf32> to vector<1x128xf32>
    %c3_61 = arith.constant 3 : index
    %c0_62 = arith.constant 0 : index
    %c0_63 = arith.constant 0 : index
    %155 = vector.load %arg6[%c3_61, %c0_62, %c0_63] : memref<5x32x64xf32, #tpu.memory_space<vmem>>, vector<1x32x64xf32>
    %156 = vector.shape_cast %155 : vector<1x32x64xf32> to vector<32x64xf32>
    %cst_64 = arith.constant dense<0.000000e+00> : vector<16x64xf32>
    %157 = tpu.matmul %152, %156, %cst_64 {dimension_numbers = #tpu.dot_dimension_numbers<[1], [0], [0], [1], [0, 0, 1, 1], [], []>} : vector<16x32xf32>, vector<32x64xf32>, vector<16x64xf32> -> vector<16x64xf32>
    %158 = vector.extract_strided_slice %154 {offsets = [0, 0], sizes = [1, 64], strides = [1, 1]} : vector<1x128xf32> to vector<1x64xf32>
    %159 = vector.broadcast %158 : vector<1x64xf32> to vector<16x64xf32>
    %160 = arith.addf %157, %159 : vector<16x64xf32>
    %161 = vector.extract_strided_slice %160 {offsets = [0, 0], sizes = [16, 32], strides = [1, 1]} : vector<16x64xf32> to vector<16x32xf32>
    %162 = vector.extract_strided_slice %160 {offsets = [0, 32], sizes = [16, 32], strides = [1, 1]} : vector<16x64xf32> to vector<16x32xf32>
    %163 = vector.extract_strided_slice %154 {offsets = [0, 64], sizes = [1, 32], strides = [1, 1]} : vector<1x128xf32> to vector<1x32xf32>
    %164 = vector.extract_strided_slice %154 {offsets = [0, 96], sizes = [1, 32], strides = [1, 1]} : vector<1x128xf32> to vector<1x32xf32>
    %165 = vector.extract_strided_slice %11 {offsets = [0, 96], sizes = [256, 32], strides = [1, 1]} : vector<256x160xf32> to vector<256x32xf32>
    %166 = vector.shape_cast %165 : vector<256x32xf32> to vector<16x16x32xf32>
    %167 = vector.shape_cast %161 : vector<16x32xf32> to vector<1x16x32xf32>
    %168 = vector.broadcast %167 : vector<1x16x32xf32> to vector<16x16x32xf32>
    %169 = arith.addf %166, %168 : vector<16x16x32xf32>
    %170 = vector.shape_cast %162 : vector<16x32xf32> to vector<16x1x32xf32>
    %171 = vector.broadcast %170 : vector<16x1x32xf32> to vector<16x16x32xf32>
    %172 = arith.addf %169, %171 : vector<16x16x32xf32>
    %cst_65 = arith.constant 0.000000e+00 : f32
    %173 = vector.broadcast %cst_65 : f32 to vector<16x16x32xf32>
    %174 = arith.cmpf ogt, %172, %173 : vector<16x16x32xf32>
    %cst_66 = arith.constant 2.000000e-01 : f32
    %175 = vector.broadcast %cst_66 : f32 to vector<16x16x32xf32>
    %176 = arith.mulf %175, %172 : vector<16x16x32xf32>
    %177 = arith.select %174, %172, %176 : vector<16x16x32xi1>, vector<16x16x32xf32>
    %178 = vector.shape_cast %163 : vector<1x32xf32> to vector<1x1x32xf32>
    %179 = vector.broadcast %178 : vector<1x1x32xf32> to vector<16x16x32xf32>
    %180 = arith.mulf %177, %179 : vector<16x16x32xf32>
    %cst_67 = arith.constant dense<0.000000e+00> : vector<16x16xf32>
    %181 = vector.multi_reduction <add>, %180, %cst_67 [2] : vector<16x16x32xf32> to vector<16x16xf32>
    %cst_68 = arith.constant 0.000000e+00 : f32
    %182 = vector.broadcast %cst_68 : f32 to vector<16x16xf32>
    %183 = arith.cmpf ogt, %1, %182 : vector<16x16xf32>
    %cst_69 = arith.constant -1.000000e+30 : f32
    %184 = vector.broadcast %cst_69 : f32 to vector<16x16xf32>
    %185 = arith.select %183, %181, %184 : vector<16x16xi1>, vector<16x16xf32>
    %cst_70 = arith.constant dense<0xFF800000> : vector<16xf32>
    %186 = vector.multi_reduction <maximumf>, %185, %cst_70 [1] : vector<16x16xf32> to vector<16xf32>
    %187 = vector.shape_cast %186 : vector<16xf32> to vector<16x1xf32>
    %188 = vector.broadcast %187 : vector<16x1xf32> to vector<16x16xf32>
    %189 = arith.subf %185, %188 : vector<16x16xf32>
    %190 = math.exp %189 : vector<16x16xf32>
    %cst_71 = arith.constant dense<0.000000e+00> : vector<16xf32>
    %191 = vector.multi_reduction <add>, %190, %cst_71 [1] : vector<16x16xf32> to vector<16xf32>
    %192 = vector.shape_cast %191 : vector<16xf32> to vector<16x1xf32>
    %193 = tpu.reciprocal %192 {approx = true} : vector<16x1xf32> -> vector<16x1xf32>
    %194 = vector.broadcast %193 : vector<16x1xf32> to vector<16x16xf32>
    %195 = arith.mulf %190, %194 : vector<16x16xf32>
    %cst_72 = arith.constant dense<0.000000e+00> : vector<16x32xf32>
    %196 = tpu.matmul %195, %161, %cst_72 {dimension_numbers = #tpu.dot_dimension_numbers<[1], [0], [0], [1], [0, 0, 1, 1], [], []>} : vector<16x16xf32>, vector<16x32xf32>, vector<16x32xf32> -> vector<16x32xf32>
    %197 = vector.broadcast %164 : vector<1x32xf32> to vector<16x32xf32>
    %198 = arith.addf %196, %197 : vector<16x32xf32>
    %199 = math.tanh %198 : vector<16x32xf32>
    %c4 = arith.constant 4 : index
    %c0_73 = arith.constant 0 : index
    %c0_74 = arith.constant 0 : index
    %200 = vector.load %arg8[%c4, %c0_73, %c0_74] : memref<5x1x128xf32, #tpu.memory_space<vmem>>, vector<1x1x128xf32>
    %201 = vector.shape_cast %200 : vector<1x1x128xf32> to vector<1x128xf32>
    %c4_75 = arith.constant 4 : index
    %c0_76 = arith.constant 0 : index
    %c0_77 = arith.constant 0 : index
    %202 = vector.load %arg6[%c4_75, %c0_76, %c0_77] : memref<5x32x64xf32, #tpu.memory_space<vmem>>, vector<1x32x64xf32>
    %203 = vector.shape_cast %202 : vector<1x32x64xf32> to vector<32x64xf32>
    %cst_78 = arith.constant dense<0.000000e+00> : vector<16x64xf32>
    %204 = tpu.matmul %199, %203, %cst_78 {dimension_numbers = #tpu.dot_dimension_numbers<[1], [0], [0], [1], [0, 0, 1, 1], [], []>} : vector<16x32xf32>, vector<32x64xf32>, vector<16x64xf32> -> vector<16x64xf32>
    %205 = vector.extract_strided_slice %201 {offsets = [0, 0], sizes = [1, 64], strides = [1, 1]} : vector<1x128xf32> to vector<1x64xf32>
    %206 = vector.broadcast %205 : vector<1x64xf32> to vector<16x64xf32>
    %207 = arith.addf %204, %206 : vector<16x64xf32>
    %208 = vector.extract_strided_slice %207 {offsets = [0, 0], sizes = [16, 32], strides = [1, 1]} : vector<16x64xf32> to vector<16x32xf32>
    %209 = vector.extract_strided_slice %207 {offsets = [0, 32], sizes = [16, 32], strides = [1, 1]} : vector<16x64xf32> to vector<16x32xf32>
    %210 = vector.extract_strided_slice %201 {offsets = [0, 64], sizes = [1, 32], strides = [1, 1]} : vector<1x128xf32> to vector<1x32xf32>
    %211 = vector.extract_strided_slice %201 {offsets = [0, 96], sizes = [1, 32], strides = [1, 1]} : vector<1x128xf32> to vector<1x32xf32>
    %212 = vector.extract_strided_slice %11 {offsets = [0, 128], sizes = [256, 32], strides = [1, 1]} : vector<256x160xf32> to vector<256x32xf32>
    %213 = vector.shape_cast %212 : vector<256x32xf32> to vector<16x16x32xf32>
    %214 = vector.shape_cast %208 : vector<16x32xf32> to vector<1x16x32xf32>
    %215 = vector.broadcast %214 : vector<1x16x32xf32> to vector<16x16x32xf32>
    %216 = arith.addf %213, %215 : vector<16x16x32xf32>
    %217 = vector.shape_cast %209 : vector<16x32xf32> to vector<16x1x32xf32>
    %218 = vector.broadcast %217 : vector<16x1x32xf32> to vector<16x16x32xf32>
    %219 = arith.addf %216, %218 : vector<16x16x32xf32>
    %cst_79 = arith.constant 0.000000e+00 : f32
    %220 = vector.broadcast %cst_79 : f32 to vector<16x16x32xf32>
    %221 = arith.cmpf ogt, %219, %220 : vector<16x16x32xf32>
    %cst_80 = arith.constant 2.000000e-01 : f32
    %222 = vector.broadcast %cst_80 : f32 to vector<16x16x32xf32>
    %223 = arith.mulf %222, %219 : vector<16x16x32xf32>
    %224 = arith.select %221, %219, %223 : vector<16x16x32xi1>, vector<16x16x32xf32>
    %225 = vector.shape_cast %210 : vector<1x32xf32> to vector<1x1x32xf32>
    %226 = vector.broadcast %225 : vector<1x1x32xf32> to vector<16x16x32xf32>
    %227 = arith.mulf %224, %226 : vector<16x16x32xf32>
    %cst_81 = arith.constant dense<0.000000e+00> : vector<16x16xf32>
    %228 = vector.multi_reduction <add>, %227, %cst_81 [2] : vector<16x16x32xf32> to vector<16x16xf32>
    %cst_82 = arith.constant 0.000000e+00 : f32
    %229 = vector.broadcast %cst_82 : f32 to vector<16x16xf32>
    %230 = arith.cmpf ogt, %1, %229 : vector<16x16xf32>
    %cst_83 = arith.constant -1.000000e+30 : f32
    %231 = vector.broadcast %cst_83 : f32 to vector<16x16xf32>
    %232 = arith.select %230, %228, %231 : vector<16x16xi1>, vector<16x16xf32>
    %cst_84 = arith.constant dense<0xFF800000> : vector<16xf32>
    %233 = vector.multi_reduction <maximumf>, %232, %cst_84 [1] : vector<16x16xf32> to vector<16xf32>
    %234 = vector.shape_cast %233 : vector<16xf32> to vector<16x1xf32>
    %235 = vector.broadcast %234 : vector<16x1xf32> to vector<16x16xf32>
    %236 = arith.subf %232, %235 : vector<16x16xf32>
    %237 = math.exp %236 : vector<16x16xf32>
    %cst_85 = arith.constant dense<0.000000e+00> : vector<16xf32>
    %238 = vector.multi_reduction <add>, %237, %cst_85 [1] : vector<16x16xf32> to vector<16xf32>
    %239 = vector.shape_cast %238 : vector<16xf32> to vector<16x1xf32>
    %240 = tpu.reciprocal %239 {approx = true} : vector<16x1xf32> -> vector<16x1xf32>
    %241 = vector.broadcast %240 : vector<16x1xf32> to vector<16x16xf32>
    %242 = arith.mulf %237, %241 : vector<16x16xf32>
    %cst_86 = arith.constant dense<0.000000e+00> : vector<16x32xf32>
    %243 = tpu.matmul %242, %208, %cst_86 {dimension_numbers = #tpu.dot_dimension_numbers<[1], [0], [0], [1], [0, 0, 1, 1], [], []>} : vector<16x16xf32>, vector<16x32xf32>, vector<16x32xf32> -> vector<16x32xf32>
    %244 = vector.broadcast %211 : vector<1x32xf32> to vector<16x32xf32>
    %245 = arith.addf %243, %244 : vector<16x32xf32>
    %246 = math.tanh %245 : vector<16x32xf32>
    %c0_87 = arith.constant 0 : index
    %c0_88 = arith.constant 0 : index
    %c0_89 = arith.constant 0 : index
    %247 = vector.load %arg9[%c0_87, %c0_88, %c0_89] : memref<7x32x64xf32, #tpu.memory_space<vmem>>, vector<7x32x64xf32>
    %c0_90 = arith.constant 0 : index
    %c0_91 = arith.constant 0 : index
    %c0_92 = arith.constant 0 : index
    %248 = vector.load %arg10[%c0_90, %c0_91, %c0_92] : memref<7x1x64xf32, #tpu.memory_space<vmem>>, vector<7x1x64xf32>
    %249 = vector.extract_strided_slice %247 {offsets = [0, 0, 0], sizes = [1, 32, 64], strides = [1, 1, 1]} : vector<7x32x64xf32> to vector<1x32x64xf32>
    %250 = vector.shape_cast %249 : vector<1x32x64xf32> to vector<32x64xf32>
    %cst_93 = arith.constant dense<0.000000e+00> : vector<16x64xf32>
    %251 = tpu.matmul %246, %250, %cst_93 {dimension_numbers = #tpu.dot_dimension_numbers<[1], [0], [0], [1], [0, 0, 1, 1], [], []>} : vector<16x32xf32>, vector<32x64xf32>, vector<16x64xf32> -> vector<16x64xf32>
    %252 = vector.extract_strided_slice %248 {offsets = [0, 0, 0], sizes = [1, 1, 64], strides = [1, 1, 1]} : vector<7x1x64xf32> to vector<1x1x64xf32>
    %253 = vector.shape_cast %252 : vector<1x1x64xf32> to vector<1x64xf32>
    %254 = vector.broadcast %253 : vector<1x64xf32> to vector<16x64xf32>
    %255 = arith.addf %251, %254 : vector<16x64xf32>
    %256 = math.tanh %255 : vector<16x64xf32>
    %257 = vector.extract_strided_slice %256 {offsets = [0, 0], sizes = [16, 32], strides = [1, 1]} : vector<16x64xf32> to vector<16x32xf32>
    %258 = vector.extract_strided_slice %256 {offsets = [0, 32], sizes = [16, 32], strides = [1, 1]} : vector<16x64xf32> to vector<16x32xf32>
    %259 = vector.extract_strided_slice %247 {offsets = [1, 0, 0], sizes = [1, 32, 64], strides = [1, 1, 1]} : vector<7x32x64xf32> to vector<1x32x64xf32>
    %260 = vector.shape_cast %259 : vector<1x32x64xf32> to vector<32x64xf32>
    %261 = vector.extract_strided_slice %260 {offsets = [0, 0], sizes = [32, 32], strides = [1, 1]} : vector<32x64xf32> to vector<32x32xf32>
    %cst_94 = arith.constant dense<0.000000e+00> : vector<16x32xf32>
    %262 = tpu.matmul %257, %261, %cst_94 {dimension_numbers = #tpu.dot_dimension_numbers<[1], [0], [0], [1], [0, 0, 1, 1], [], []>} : vector<16x32xf32>, vector<32x32xf32>, vector<16x32xf32> -> vector<16x32xf32>
    %263 = vector.extract_strided_slice %248 {offsets = [1, 0, 0], sizes = [1, 1, 64], strides = [1, 1, 1]} : vector<7x1x64xf32> to vector<1x1x64xf32>
    %264 = vector.shape_cast %263 : vector<1x1x64xf32> to vector<1x64xf32>
    %265 = vector.extract_strided_slice %264 {offsets = [0, 0], sizes = [1, 32], strides = [1, 1]} : vector<1x64xf32> to vector<1x32xf32>
    %266 = vector.broadcast %265 : vector<1x32xf32> to vector<16x32xf32>
    %267 = arith.addf %262, %266 : vector<16x32xf32>
    %268 = math.tanh %267 : vector<16x32xf32>
    %269 = vector.extract_strided_slice %247 {offsets = [2, 0, 0], sizes = [1, 32, 64], strides = [1, 1, 1]} : vector<7x32x64xf32> to vector<1x32x64xf32>
    %270 = vector.shape_cast %269 : vector<1x32x64xf32> to vector<32x64xf32>
    %271 = vector.extract_strided_slice %270 {offsets = [0, 0], sizes = [32, 1], strides = [1, 1]} : vector<32x64xf32> to vector<32x1xf32>
    %cst_95 = arith.constant dense<0.000000e+00> : vector<16x1xf32>
    %272 = tpu.matmul %268, %271, %cst_95 {dimension_numbers = #tpu.dot_dimension_numbers<[1], [0], [0], [1], [0, 0, 1, 1], [], []>} : vector<16x32xf32>, vector<32x1xf32>, vector<16x1xf32> -> vector<16x1xf32>
    %273 = vector.extract_strided_slice %248 {offsets = [2, 0, 0], sizes = [1, 1, 64], strides = [1, 1, 1]} : vector<7x1x64xf32> to vector<1x1x64xf32>
    %274 = vector.shape_cast %273 : vector<1x1x64xf32> to vector<1x64xf32>
    %275 = vector.extract_strided_slice %274 {offsets = [0, 0], sizes = [1, 1], strides = [1, 1]} : vector<1x64xf32> to vector<1x1xf32>
    %276 = vector.broadcast %275 : vector<1x1xf32> to vector<16x1xf32>
    %277 = arith.addf %272, %276 : vector<16x1xf32>
    %278 = vector.extract_strided_slice %247 {offsets = [3, 0, 0], sizes = [1, 32, 64], strides = [1, 1, 1]} : vector<7x32x64xf32> to vector<1x32x64xf32>
    %279 = vector.shape_cast %278 : vector<1x32x64xf32> to vector<32x64xf32>
    %280 = vector.extract_strided_slice %279 {offsets = [0, 0], sizes = [32, 32], strides = [1, 1]} : vector<32x64xf32> to vector<32x32xf32>
    %cst_96 = arith.constant dense<0.000000e+00> : vector<16x32xf32>
    %281 = tpu.matmul %258, %280, %cst_96 {dimension_numbers = #tpu.dot_dimension_numbers<[1], [0], [0], [1], [0, 0, 1, 1], [], []>} : vector<16x32xf32>, vector<32x32xf32>, vector<16x32xf32> -> vector<16x32xf32>
    %282 = vector.extract_strided_slice %248 {offsets = [3, 0, 0], sizes = [1, 1, 64], strides = [1, 1, 1]} : vector<7x1x64xf32> to vector<1x1x64xf32>
    %283 = vector.shape_cast %282 : vector<1x1x64xf32> to vector<1x64xf32>
    %284 = vector.extract_strided_slice %283 {offsets = [0, 0], sizes = [1, 32], strides = [1, 1]} : vector<1x64xf32> to vector<1x32xf32>
    %285 = vector.broadcast %284 : vector<1x32xf32> to vector<16x32xf32>
    %286 = arith.addf %281, %285 : vector<16x32xf32>
    %287 = math.tanh %286 : vector<16x32xf32>
    %cst_97 = arith.constant 0.000000e+00 : f32
    %288 = vector.broadcast %cst_97 : f32 to vector<16x2xf32>
    %289 = arith.cmpf ogt, %5, %288 : vector<16x2xf32>
    %cst_98 = arith.constant -1.000000e+30 : f32
    %290 = vector.shape_cast %277 : vector<16x1xf32> to vector<16x1xf32>
    %291 = vector.broadcast %290 : vector<16x1xf32> to vector<16x2xf32>
    %292 = vector.broadcast %cst_98 : f32 to vector<16x2xf32>
    %293 = arith.select %289, %291, %292 : vector<16x2xi1>, vector<16x2xf32>
    %cst_99 = arith.constant dense<0xFF800000> : vector<2xf32>
    %294 = vector.multi_reduction <maximumf>, %293, %cst_99 [0] : vector<16x2xf32> to vector<2xf32>
    %295 = vector.shape_cast %294 : vector<2xf32> to vector<1x2xf32>
    %cst_100 = arith.constant 0.000000e+00 : f32
    %296 = vector.broadcast %cst_100 : f32 to vector<16x2xf32>
    %297 = arith.cmpf ogt, %5, %296 : vector<16x2xf32>
    %cst_101 = arith.constant -1.000000e+30 : f32
    %298 = vector.shape_cast %295 : vector<1x2xf32> to vector<1x2xf32>
    %299 = vector.broadcast %298 : vector<1x2xf32> to vector<16x2xf32>
    %300 = vector.broadcast %cst_101 : f32 to vector<16x2xf32>
    %301 = arith.select %297, %299, %300 : vector<16x2xi1>, vector<16x2xf32>
    %cst_102 = arith.constant dense<0xFF800000> : vector<16xf32>
    %302 = vector.multi_reduction <maximumf>, %301, %cst_102 [1] : vector<16x2xf32> to vector<16xf32>
    %303 = vector.shape_cast %302 : vector<16xf32> to vector<16x1xf32>
    %304 = arith.subf %277, %303 : vector<16x1xf32>
    %305 = math.exp %304 : vector<16x1xf32>
    %306 = vector.broadcast %305 : vector<16x1xf32> to vector<16x32xf32>
    %307 = arith.mulf %306, %287 : vector<16x32xf32>
    %308 = tpu.concatenate %307, %305 in 1 : vector<16x32xf32>, vector<16x1xf32> -> vector<16x33xf32>
    %cst_103 = arith.constant dense<0.000000e+00> : vector<2x33xf32>
    %309 = tpu.matmul %3, %308, %cst_103 {dimension_numbers = #tpu.dot_dimension_numbers<[1], [0], [0], [1], [0, 0, 1, 1], [], []>} : vector<2x16xf32>, vector<16x33xf32>, vector<2x33xf32> -> vector<2x33xf32>
    %310 = vector.extract_strided_slice %309 {offsets = [0, 0], sizes = [2, 32], strides = [1, 1]} : vector<2x33xf32> to vector<2x32xf32>
    %311 = vector.extract_strided_slice %309 {offsets = [0, 32], sizes = [2, 1], strides = [1, 1]} : vector<2x33xf32> to vector<2x1xf32>
    %312 = tpu.reciprocal %311 {approx = true} : vector<2x1xf32> -> vector<2x1xf32>
    %313 = vector.broadcast %312 : vector<2x1xf32> to vector<2x32xf32>
    %314 = arith.mulf %310, %313 : vector<2x32xf32>
    %315 = vector.extract_strided_slice %247 {offsets = [4, 0, 0], sizes = [1, 32, 64], strides = [1, 1, 1]} : vector<7x32x64xf32> to vector<1x32x64xf32>
    %316 = vector.shape_cast %315 : vector<1x32x64xf32> to vector<32x64xf32>
    %317 = vector.extract_strided_slice %316 {offsets = [0, 0], sizes = [32, 32], strides = [1, 1]} : vector<32x64xf32> to vector<32x32xf32>
    %cst_104 = arith.constant dense<0.000000e+00> : vector<2x32xf32>
    %318 = tpu.matmul %314, %317, %cst_104 {dimension_numbers = #tpu.dot_dimension_numbers<[1], [0], [0], [1], [0, 0, 1, 1], [], []>} : vector<2x32xf32>, vector<32x32xf32>, vector<2x32xf32> -> vector<2x32xf32>
    %319 = vector.extract_strided_slice %248 {offsets = [4, 0, 0], sizes = [1, 1, 64], strides = [1, 1, 1]} : vector<7x1x64xf32> to vector<1x1x64xf32>
    %320 = vector.shape_cast %319 : vector<1x1x64xf32> to vector<1x64xf32>
    %321 = vector.extract_strided_slice %320 {offsets = [0, 0], sizes = [1, 32], strides = [1, 1]} : vector<1x64xf32> to vector<1x32xf32>
    %322 = vector.broadcast %321 : vector<1x32xf32> to vector<2x32xf32>
    %323 = arith.addf %318, %322 : vector<2x32xf32>
    %324 = math.tanh %323 : vector<2x32xf32>
    %325 = vector.extract_strided_slice %247 {offsets = [5, 0, 0], sizes = [1, 32, 64], strides = [1, 1, 1]} : vector<7x32x64xf32> to vector<1x32x64xf32>
    %326 = vector.shape_cast %325 : vector<1x32x64xf32> to vector<32x64xf32>
    %327 = vector.extract_strided_slice %326 {offsets = [0, 0], sizes = [32, 32], strides = [1, 1]} : vector<32x64xf32> to vector<32x32xf32>
    %cst_105 = arith.constant dense<0.000000e+00> : vector<2x32xf32>
    %328 = tpu.matmul %324, %327, %cst_105 {dimension_numbers = #tpu.dot_dimension_numbers<[1], [0], [0], [1], [0, 0, 1, 1], [], []>} : vector<2x32xf32>, vector<32x32xf32>, vector<2x32xf32> -> vector<2x32xf32>
    %329 = vector.extract_strided_slice %248 {offsets = [5, 0, 0], sizes = [1, 1, 64], strides = [1, 1, 1]} : vector<7x1x64xf32> to vector<1x1x64xf32>
    %330 = vector.shape_cast %329 : vector<1x1x64xf32> to vector<1x64xf32>
    %331 = vector.extract_strided_slice %330 {offsets = [0, 0], sizes = [1, 32], strides = [1, 1]} : vector<1x64xf32> to vector<1x32xf32>
    %332 = vector.broadcast %331 : vector<1x32xf32> to vector<2x32xf32>
    %333 = arith.addf %328, %332 : vector<2x32xf32>
    %334 = math.tanh %333 : vector<2x32xf32>
    %335 = vector.extract_strided_slice %247 {offsets = [6, 0, 0], sizes = [1, 32, 64], strides = [1, 1, 1]} : vector<7x32x64xf32> to vector<1x32x64xf32>
    %336 = vector.shape_cast %335 : vector<1x32x64xf32> to vector<32x64xf32>
    %337 = vector.extract_strided_slice %336 {offsets = [0, 0], sizes = [32, 1], strides = [1, 1]} : vector<32x64xf32> to vector<32x1xf32>
    %cst_106 = arith.constant dense<0.000000e+00> : vector<2x1xf32>
    %338 = tpu.matmul %334, %337, %cst_106 {dimension_numbers = #tpu.dot_dimension_numbers<[1], [0], [0], [1], [0, 0, 1, 1], [], []>} : vector<2x32xf32>, vector<32x1xf32>, vector<2x1xf32> -> vector<2x1xf32>
    %339 = vector.extract_strided_slice %248 {offsets = [6, 0, 0], sizes = [1, 1, 64], strides = [1, 1, 1]} : vector<7x1x64xf32> to vector<1x1x64xf32>
    %340 = vector.shape_cast %339 : vector<1x1x64xf32> to vector<1x64xf32>
    %341 = vector.extract_strided_slice %340 {offsets = [0, 0], sizes = [1, 1], strides = [1, 1]} : vector<1x64xf32> to vector<1x1xf32>
    %342 = vector.broadcast %341 : vector<1x1xf32> to vector<2x1xf32>
    %343 = arith.addf %338, %342 : vector<2x1xf32>
    %344 = math.tanh %343 : vector<2x1xf32>
    %c0_107 = arith.constant 0 : index
    %c0_108 = arith.constant 0 : index
    %c0_109 = arith.constant 0 : index
    %345 = vector.load %arg11[%c0_107, %c0_108, %c0_109] : memref<1x2x1xf32, #tpu.memory_space<vmem>>, vector<1x2x1xf32>
    %346 = vector.shape_cast %345 : vector<1x2x1xf32> to vector<2x1xf32>
    %347 = vector.shape_cast %344 : vector<2x1xf32> to vector<1x2x1xf32>
    tpu.vector_store %arg11[%c0_107, %c0_108, %c0_109], %347 {strides = array<i32>} : memref<1x2x1xf32, #tpu.memory_space<vmem>>, vector<1x2x1xf32>,
    return
  }
  func.func @transform_0(%arg0: i32) -> (i32, i32, i32) {
    %c0_i32 = arith.constant 0 : i32
    %c0_i32_0 = arith.constant 0 : i32
    %c0_i32_1 = arith.constant 0 : i32
    return %arg0, %c0_i32, %c0_i32_0 : i32, i32, i32
  }
  func.func @transform_1(%arg0: i32) -> (i32, i32, i32) {
    %c0_i32 = arith.constant 0 : i32
    %c0_i32_0 = arith.constant 0 : i32
    %c0_i32_1 = arith.constant 0 : i32
    return %arg0, %c0_i32, %c0_i32_0 : i32, i32, i32
  }
  func.func @transform_2(%arg0: i32) -> (i32, i32, i32) {
    %c0_i32 = arith.constant 0 : i32
    %c0_i32_0 = arith.constant 0 : i32
    %c0_i32_1 = arith.constant 0 : i32
    return %arg0, %c0_i32, %c0_i32_0 : i32, i32, i32
  }
  func.func @transform_3(%arg0: i32) -> (i32, i32, i32) {
    %c0_i32 = arith.constant 0 : i32
    %c0_i32_0 = arith.constant 0 : i32
    %c0_i32_1 = arith.constant 0 : i32
    return %arg0, %c0_i32, %c0_i32_0 : i32, i32, i32
  }
  func.func @transform_4(%arg0: i32) -> (i32, i32, i32) {
    %c0_i32 = arith.constant 0 : i32
    %c0_i32_0 = arith.constant 0 : i32
    %c0_i32_1 = arith.constant 0 : i32
    return %arg0, %c0_i32, %c0_i32_0 : i32, i32, i32
  }
  func.func @transform_5(%arg0: i32) -> (i32, i32, i32) {
    %c0_i32 = arith.constant 0 : i32
    %c0_i32_0 = arith.constant 0 : i32
    %c0_i32_1 = arith.constant 0 : i32
    %c0_i32_2 = arith.constant 0 : i32
    return %c0_i32, %c0_i32_0, %c0_i32_1 : i32, i32, i32
  }
  func.func @transform_6(%arg0: i32) -> (i32, i32) {
    %c0_i32 = arith.constant 0 : i32
    %c0_i32_0 = arith.constant 0 : i32
    %c0_i32_1 = arith.constant 0 : i32
    return %c0_i32, %c0_i32_0 : i32, i32
  }
  func.func @transform_7(%arg0: i32) -> (i32, i32, i32) {
    %c0_i32 = arith.constant 0 : i32
    %c0_i32_0 = arith.constant 0 : i32
    %c0_i32_1 = arith.constant 0 : i32
    %c0_i32_2 = arith.constant 0 : i32
    return %c0_i32, %c0_i32_0, %c0_i32_1 : i32, i32, i32
  }
  func.func @transform_8(%arg0: i32) -> (i32, i32, i32) {
    %c0_i32 = arith.constant 0 : i32
    %c0_i32_0 = arith.constant 0 : i32
    %c0_i32_1 = arith.constant 0 : i32
    %c0_i32_2 = arith.constant 0 : i32
    return %c0_i32, %c0_i32_0, %c0_i32_1 : i32, i32, i32
  }
  func.func @transform_9(%arg0: i32) -> (i32, i32, i32) {
    %c0_i32 = arith.constant 0 : i32
    %c0_i32_0 = arith.constant 0 : i32
    %c0_i32_1 = arith.constant 0 : i32
    %c0_i32_2 = arith.constant 0 : i32
    return %c0_i32, %c0_i32_0, %c0_i32_1 : i32, i32, i32
  }
  func.func @transform_10(%arg0: i32) -> (i32, i32, i32) {
    %c0_i32 = arith.constant 0 : i32
    %c0_i32_0 = arith.constant 0 : i32
    %c0_i32_1 = arith.constant 0 : i32
    return %arg0, %c0_i32, %c0_i32_0 : i32, i32, i32
  }
}

</mosaic_0001>

<llo_original>
// kernel: critic_forward.1
$region0: #{critic_forward.1}
  #allocation0 [shape = 'u32[]', space=smem, size = 0x4, offset = 0x4, fixed_abs, tag = 'smem constant byte address 0x4 - core index']
  #allocation1 [shape = 'u32[144,128]{1,0:T(1,128)}', space=vmem, size = 0x12000, scoped, tag = 'internal scratch']
  %s0 = inlined_call_operand.vmem [shape: f32[2,16,32], index: 0, kind: input, shape index: {}]
  %s1 = inlined_call_operand.vmem [shape: f32[2,16,16], index: 1, kind: input, shape index: {}]
  %s2 = inlined_call_operand.vmem [shape: f32[2,256,4], index: 2, kind: input, shape index: {}]
  %s3 = inlined_call_operand.vmem [shape: f32[2,2,16], index: 3, kind: input, shape index: {}]
  %s4 = inlined_call_operand.vmem [shape: f32[2,16,2], index: 4, kind: input, shape index: {}]
  %s5 = inlined_call_operand.vmem [shape: f32[5,32,64], index: 5, kind: input, shape index: {}]
  %s6 = inlined_call_operand.vmem [shape: f32[4,160], index: 6, kind: input, shape index: {}]
  %s7 = inlined_call_operand.vmem [shape: f32[5,1,128], index: 7, kind: input, shape index: {}]
  %s8 = inlined_call_operand.vmem [shape: f32[7,32,64], index: 8, kind: input, shape index: {}]
  %s9 = inlined_call_operand.vmem [shape: f32[7,1,64], index: 9, kind: input, shape index: {}]
  %s10 = inlined_call_operand.vmem [shape: f32[2,2,1], index: 10, kind: output, shape index: {}]
  %s11 = sld [smem:[#allocation0]]
  $region73: #{critic_forward.1} parent=0
    _
  %s13 = ssub.s32 1, %s11
  %s14 = scalar_select 0, %s13, %s11
  loop: start=0, step=1, limit=4
  $region2: #{critic_forward.1} parent=0 // loop_pre_header
    _
  $region3: #{critic_forward.1} parent=0 // loop_header
    %s16 = sphi 0, %s20
    %p17 = scmp.ge.s32.totalorder %s16, 4
    %s26 = sphi 0, %s28
    %s29 = sphi 0, %s26
    %s30 = sphi 0, %s29
    %s46 = sphi 0, %s30
    %s52 = sphi 0, %s54
    %s55 = sphi 0, %s52
    %s56 = sphi 0, %s55
    %s72 = sphi 0, %s56
    %s78 = sphi 0, %s80
    %s81 = sphi 0, %s78
    %s82 = sphi 0, %s81
    %s98 = sphi 0, %s82
    %s104 = sphi 0, %s106
    %s107 = sphi 0, %s104
    %s108 = sphi 0, %s107
    %s124 = sphi 0, %s108
    %s130 = sphi 0, %s132
    %s133 = sphi 0, %s130
    %s134 = sphi 0, %s133
    %s150 = sphi 0, %s134
    %s154 = sphi 0, %s154
    %s156 = sphi 0, %s154
    %s157 = sphi 0, %s156
    %s171 = sphi 0, %s157
    %s175 = sphi 0, %s175
    %s177 = sphi 0, %s175
    %s178 = sphi 0, %s177
    %s192 = sphi 0, %s178
    %s196 = sphi 0, %s196
    %s198 = sphi 0, %s196
    %s199 = sphi 0, %s198
    %s213 = sphi 0, %s199
    %s217 = sphi 0, %s217
    %s219 = sphi 0, %s217
    %s220 = sphi 0, %s219
    %s234 = sphi 0, %s220
    %s238 = sphi 0, %s238
    %s240 = sphi 0, %s238
    %s241 = sphi 0, %s240
    %s255 = sphi 0, %s241
    %s261 = sphi 0, %s263
    %s264 = sphi 0, %s261
    %s265 = sphi 0, %s264
    %s281 = sphi 0, %s265
  $region4: #{critic_forward.1} parent=0 // loop_header_branch
    %19 = sbr.rel (%p17) target = $region8
  $region5: #{critic_forward.1} parent=0 // loop_body
    %s21 = ssub.s32 %s16, 1
    %s22 = ssub.s32 %s16, 2
    %s23 = sadd.s32 %s16, 1
    %s24 = ssub.s32 %s16, %s23
    %p25 = scmp.eq.s32.totalorder %s24, 0
    %s27 = sadd.s32 %s26, 1
    %s28 = scalar_select %p25, %s26, %s27
    %p31 = pneg %p25
    %p32 = scmp.eq.s32.totalorder %s16, 1
    %p33 = por %p31, %p32
    %p34 = scmp.ne.s32.totalorder %s26, %s29
    %p35 = scmp.eq.s32.totalorder %s16, 0
    %p36 = por %p34, %p35
    %p37 = scmp.ne.s32.totalorder %s26, %s29
    %p38 = scmp.eq.s32.totalorder %s21, 1
    %p39 = por %p37, %p38
    %p40 = scmp.ne.s32.totalorder %s29, %s30
    %p41 = scmp.eq.s32.totalorder %s21, 0
    %p42 = por %p40, %p41
    %p43 = scmp.ne.s32.totalorder %s29, %s30
    %p44 = scmp.eq.s32.totalorder %s22, 1
    %p45 = por %p43, %p44
    %p47 = scmp.ne.s32.totalorder %s30, %s46
    %p48 = scmp.eq.s32.totalorder %s22, 0
    %p49 = por %p47, %p48
    %s50 = ssub.s32 %s16, %s23
    %p51 = scmp.eq.s32.totalorder %s50, 0
    %s53 = sadd.s32 %s52, 1
    %s54 = scalar_select %p51, %s52, %s53
    %p57 = pneg %p51
    %p58 = scmp.eq.s32.totalorder %s16, 1
    %p59 = por %p57, %p58
    %p60 = scmp.ne.s32.totalorder %s52, %s55
    %p61 = scmp.eq.s32.totalorder %s16, 0
    %p62 = por %p60, %p61
    %p63 = scmp.ne.s32.totalorder %s52, %s55
    %p64 = scmp.eq.s32.totalorder %s21, 1
    %p65 = por %p63, %p64
    %p66 = scmp.ne.s32.totalorder %s55, %s56
    %p67 = scmp.eq.s32.totalorder %s21, 0
    %p68 = por %p66, %p67
    %p69 = scmp.ne.s32.totalorder %s55, %s56
    %p70 = scmp.eq.s32.totalorder %s22, 1
    %p71 = por %p69, %p70
    %p73 = scmp.ne.s32.totalorder %s56, %s72
    %p74 = scmp.eq.s32.totalorder %s22, 0
    %p75 = por %p73, %p74
    %s76 = ssub.s32 %s16, %s23
    %p77 = scmp.eq.s32.totalorder %s76, 0
    %s79 = sadd.s32 %s78, 1
    %s80 = scalar_select %p77, %s78, %s79
    %p83 = pneg %p77
    %p84 = scmp.eq.s32.totalorder %s16, 1
    %p85 = por %p83, %p84
    %p86 = scmp.ne.s32.totalorder %s78, %s81
    %p87 = scmp.eq.s32.totalorder %s16, 0
    %p88 = por %p86, %p87
    %p89 = scmp.ne.s32.totalorder %s78, %s81
    %p90 = scmp.eq.s32.totalorder %s21, 1
    %p91 = por %p89, %p90
    %p92 = scmp.ne.s32.totalorder %s81, %s82
    %p93 = scmp.eq.s32.totalorder %s21, 0
    %p94 = por %p92, %p93
    %p95 = scmp.ne.s32.totalorder %s81, %s82
    %p96 = scmp.eq.s32.totalorder %s22, 1
    %p97 = por %p95, %p96
    %p99 = scmp.ne.s32.totalorder %s82, %s98
    %p100 = scmp.eq.s32.totalorder %s22, 0
    %p101 = por %p99, %p100
    %s102 = ssub.s32 %s16, %s23
    %p103 = scmp.eq.s32.totalorder %s102, 0
    %s105 = sadd.s32 %s104, 1
    %s106 = scalar_select %p103, %s104, %s105
    %p109 = pneg %p103
    %p110 = scmp.eq.s32.totalorder %s16, 1
    %p111 = por %p109, %p110
    %p112 = scmp.ne.s32.totalorder %s104, %s107
    %p113 = scmp.eq.s32.totalorder %s16, 0
    %p114 = por %p112, %p113
    %p115 = scmp.ne.s32.totalorder %s104, %s107
    %p116 = scmp.eq.s32.totalorder %s21, 1
    %p117 = por %p115, %p116
    %p118 = scmp.ne.s32.totalorder %s107, %s108
    %p119 = scmp.eq.s32.totalorder %s21, 0
    %p120 = por %p118, %p119
    %p121 = scmp.ne.s32.totalorder %s107, %s108
    %p122 = scmp.eq.s32.totalorder %s22, 1
    %p123 = por %p121, %p122
    %p125 = scmp.ne.s32.totalorder %s108, %s124
    %p126 = scmp.eq.s32.totalorder %s22, 0
    %p127 = por %p125, %p126
    %s128 = ssub.s32 %s16, %s23
    %p129 = scmp.eq.s32.totalorder %s128, 0
    %s131 = sadd.s32 %s130, 1
    %s132 = scalar_select %p129, %s130, %s131
    %p135 = pneg %p129
    %p136 = scmp.eq.s32.totalorder %s16, 1
    %p137 = por %p135, %p136
    %p138 = scmp.ne.s32.totalorder %s130, %s133
    %p139 = scmp.eq.s32.totalorder %s16, 0
    %p140 = por %p138, %p139
    %p141 = scmp.ne.s32.totalorder %s130, %s133
    %p142 = scmp.eq.s32.totalorder %s21, 1
    %p143 = por %p141, %p142
    %p144 = scmp.ne.s32.totalorder %s133, %s134
    %p145 = scmp.eq.s32.totalorder %s21, 0
    %p146 = por %p144, %p145
    %p147 = scmp.ne.s32.totalorder %s133, %s134
    %p148 = scmp.eq.s32.totalorder %s22, 1
    %p149 = por %p147, %p148
    %p151 = scmp.ne.s32.totalorder %s134, %s150
    %p152 = scmp.eq.s32.totalorder %s22, 0
    %p153 = por %p151, %p152
    %s155 = sadd.s32 %s154, 1
    %p158 = scmp.eq.s32.totalorder %s16, 1
    %p159 = scmp.ne.s32.totalorder %s154, %s156
    %p160 = scmp.eq.s32.totalorder %s16, 0
    %p161 = por %p159, %p160
    %p162 = scmp.ne.s32.totalorder %s154, %s156
    %p163 = scmp.eq.s32.totalorder %s21, 1
    %p164 = por %p162, %p163
    %p165 = scmp.ne.s32.totalorder %s156, %s157
    %p166 = scmp.eq.s32.totalorder %s21, 0
    %p167 = por %p165, %p166
    %p168 = scmp.ne.s32.totalorder %s156, %s157
    %p169 = scmp.eq.s32.totalorder %s22, 1
    %p170 = por %p168, %p169
    %p172 = scmp.ne.s32.totalorder %s157, %s171
    %p173 = scmp.eq.s32.totalorder %s22, 0
    %p174 = por %p172, %p173
    %s176 = sadd.s32 %s175, 1
    %p179 = scmp.eq.s32.totalorder %s16, 1
    %p180 = scmp.ne.s32.totalorder %s175, %s177
    %p181 = scmp.eq.s32.totalorder %s16, 0
    %p182 = por %p180, %p181
    %p183 = scmp.ne.s32.totalorder %s175, %s177
    %p184 = scmp.eq.s32.totalorder %s21, 1
    %p185 = por %p183, %p184
    %p186 = scmp.ne.s32.totalorder %s177, %s178
    %p187 = scmp.eq.s32.totalorder %s21, 0
    %p188 = por %p186, %p187
    %p189 = scmp.ne.s32.totalorder %s177, %s178
    %p190 = scmp.eq.s32.totalorder %s22, 1
    %p191 = por %p189, %p190
    %p193 = scmp.ne.s32.totalorder %s178, %s192
    %p194 = scmp.eq.s32.totalorder %s22, 0
    %p195 = por %p193, %p194
    %s197 = sadd.s32 %s196, 1
    %p200 = scmp.eq.s32.totalorder %s16, 1
    %p201 = scmp.ne.s32.totalorder %s196, %s198
    %p202 = scmp.eq.s32.totalorder %s16, 0
    %p203 = por %p201, %p202
    %p204 = scmp.ne.s32.totalorder %s196, %s198
    %p205 = scmp.eq.s32.totalorder %s21, 1
    %p206 = por %p204, %p205
    %p207 = scmp.ne.s32.totalorder %s198, %s199
    %p208 = scmp.eq.s32.totalorder %s21, 0
    %p209 = por %p207, %p208
    %p210 = scmp.ne.s32.totalorder %s198, %s199
    %p211 = scmp.eq.s32.totalorder %s22, 1
    %p212 = por %p210, %p211
    %p214 = scmp.ne.s32.totalorder %s199, %s213
    %p215 = scmp.eq.s32.totalorder %s22, 0
    %p216 = por %p214, %p215
    %s218 = sadd.s32 %s217, 1
    %p221 = scmp.eq.s32.totalorder %s16, 1
    %p222 = scmp.ne.s32.totalorder %s217, %s219
    %p223 = scmp.eq.s32.totalorder %s16, 0
    %p224 = por %p222, %p223
    %p225 = scmp.ne.s32.totalorder %s217, %s219
    %p226 = scmp.eq.s32.totalorder %s21, 1
    %p227 = por %p225, %p226
    %p228 = scmp.ne.s32.totalorder %s219, %s220
    %p229 = scmp.eq.s32.totalorder %s21, 0
    %p230 = por %p228, %p229
    %p231 = scmp.ne.s32.totalorder %s219, %s220
    %p232 = scmp.eq.s32.totalorder %s22, 1
    %p233 = por %p231, %p232
    %p235 = scmp.ne.s32.totalorder %s220, %s234
    %p236 = scmp.eq.s32.totalorder %s22, 0
    %p237 = por %p235, %p236
    %s239 = sadd.s32 %s238, 1
    %p242 = scmp.eq.s32.totalorder %s16, 1
    %p243 = scmp.ne.s32.totalorder %s238, %s240
    %p244 = scmp.eq.s32.totalorder %s16, 0
    %p245 = por %p243, %p244
    %p246 = scmp.ne.s32.totalorder %s238, %s240
    %p247 = scmp.eq.s32.totalorder %s21, 1
    %p248 = por %p246, %p247
    %p249 = scmp.ne.s32.totalorder %s240, %s241
    %p250 = scmp.eq.s32.totalorder %s21, 0
    %p251 = por %p249, %p250
    %p252 = scmp.ne.s32.totalorder %s240, %s241
    %p253 = scmp.eq.s32.totalorder %s22, 1
    %p254 = por %p252, %p253
    %p256 = scmp.ne.s32.totalorder %s241, %s255
    %p257 = scmp.eq.s32.totalorder %s22, 0
    %p258 = por %p256, %p257
    %s259 = ssub.s32 %s16, %s23
    %p260 = scmp.eq.s32.totalorder %s259, 0
    %s262 = sadd.s32 %s261, 1
    %s263 = scalar_select %p260, %s261, %s262
    %p266 = pneg %p260
    %p267 = scmp.eq.s32.totalorder %s16, 1
    %p268 = por %p266, %p267
    %p269 = scmp.ne.s32.totalorder %s261, %s264
    %p270 = scmp.eq.s32.totalorder %s16, 0
    %p271 = por %p269, %p270
    %p272 = scmp.ne.s32.totalorder %s261, %s264
    %p273 = scmp.eq.s32.totalorder %s21, 1
    %p274 = por %p272, %p273
    %p275 = scmp.ne.s32.totalorder %s264, %s265
    %p276 = scmp.eq.s32.totalorder %s21, 0
    %p277 = por %p275, %p276
    %p278 = scmp.ne.s32.totalorder %s264, %s265
    %p279 = scmp.eq.s32.totalorder %s22, 1
    %p280 = por %p278, %p279
    %p282 = scmp.ne.s32.totalorder %s265, %s281
    %p283 = scmp.eq.s32.totalorder %s22, 0
    %p284 = por %p282, %p283
    %p285 = scmp.le.s32.totalorder 1, %s16
    %p286 = scmp.lt.s32.totalorder %s16, 3
    %p287 = pnand %p285, %p286
    %p288 = pneg %p287
    // Predicated region
    $region9: #{critic_forward.1} parent=5 // pred_check
      _
    $region10: #{critic_forward.1} parent=5 // pred_check_branch
      %290 = sbr.rel (%p287) target = $region12
    $region11: #{critic_forward.1} parent=5 // pred_region
      %s291 = ssub.s32 %s16, 1
      // Predicated region
      $region13: #{critic_forward.1} parent=11 // pred_check
        %p292 = pneg %p167
      $region14: #{critic_forward.1} parent=11 // pred_check_branch
        %294 = sbr.rel (%p292) target = $region16
      $region15: #{critic_forward.1} parent=11 // pred_region
        _
      $region16: #{critic_forward.1} parent=11 // pred_fallthru
        _
      // Predicated region
      $region17: #{critic_forward.1} parent=11 // pred_check
        %p295 = pneg %p188
      $region18: #{critic_forward.1} parent=11 // pred_check_branch
        %297 = sbr.rel (%p295) target = $region20
      $region19: #{critic_forward.1} parent=11 // pred_region
        _
      $region20: #{critic_forward.1} parent=11 // pred_fallthru
        _
      // Predicated region
      $region21: #{critic_forward.1} parent=11 // pred_check
        %p298 = pneg %p209
      $region22: #{critic_forward.1} parent=11 // pred_check_branch
        %300 = sbr.rel (%p298) target = $region24
      $region23: #{critic_forward.1} parent=11 // pred_region
        _
      $region24: #{critic_forward.1} parent=11 // pred_fallthru
        _
      // Predicated region
      $region25: #{critic_forward.1} parent=11 // pred_check
        %p301 = pneg %p230
      $region26: #{critic_forward.1} parent=11 // pred_check_branch
        %303 = sbr.rel (%p301) target = $region28
      $region27: #{critic_forward.1} parent=11 // pred_region
        _
      $region28: #{critic_forward.1} parent=11 // pred_fallthru
        _
      // Predicated region
      $region29: #{critic_forward.1} parent=11 // pred_check
        %p304 = pneg %p251
      $region30: #{critic_forward.1} parent=11 // pred_check_branch
        %306 = sbr.rel (%p304) target = $region32
      $region31: #{critic_forward.1} parent=11 // pred_region
        _
      $region32: #{critic_forward.1} parent=11 // pred_fallthru
        _
    $region12: #{critic_forward.1} parent=5 // pred_fallthru
      _
    %p307 = scmp.lt.s32.totalorder %s16, 2
    // Predicated region
    $region33: #{critic_forward.1} parent=5 // pred_check
      %p308 = pneg %p307
    $region34: #{critic_forward.1} parent=5 // pred_check_branch
      %310 = sbr.rel (%p308) target = $region36
    $region35: #{critic_forward.1} parent=5 // pred_region
      // Predicated region
      $region37: #{critic_forward.1} parent=35 // pred_check
        %p311 = pneg %p36
      $region38: #{critic_forward.1} parent=35 // pred_check_branch
        %313 = sbr.rel (%p311) target = $region40
      $region39: #{critic_forward.1} parent=35 // pred_region
        %p314 = scmp.lt.s32.totalorder %s16, 1
        %s315 = scalar_select %p314, %s16, 1
        %s316 = smul.addr %s315, 2
        %s317 = smul.addr %s316, 8
        %s318 = scalar_lea.vmem %s0, %s317
      $region40: #{critic_forward.1} parent=35 // pred_fallthru
        _
      // Predicated region
      $region41: #{critic_forward.1} parent=35 // pred_check
        %p319 = pneg %p62
      $region42: #{critic_forward.1} parent=35 // pred_check_branch
        %321 = sbr.rel (%p319) target = $region44
      $region43: #{critic_forward.1} parent=35 // pred_region
        %p322 = scmp.lt.s32.totalorder %s16, 1
        %s323 = scalar_select %p322, %s16, 1
        %s324 = smul.addr %s323, 2
        %s325 = smul.addr %s324, 8
        %s326 = scalar_lea.vmem %s1, %s325
      $region44: #{critic_forward.1} parent=35 // pred_fallthru
        _
      // Predicated region
      $region45: #{critic_forward.1} parent=35 // pred_check
        %p327 = pneg %p88
      $region46: #{critic_forward.1} parent=35 // pred_check_branch
        %329 = sbr.rel (%p327) target = $region48
      $region47: #{critic_forward.1} parent=35 // pred_region
        %p330 = scmp.lt.s32.totalorder %s16, 1
        %s331 = scalar_select %p330, %s16, 1
        %s332 = smul.addr %s331, 32
        %s333 = smul.addr %s332, 8
        %s334 = scalar_lea.vmem %s2, %s333
      $region48: #{critic_forward.1} parent=35 // pred_fallthru
        _
      // Predicated region
      $region49: #{critic_forward.1} parent=35 // pred_check
        %p335 = pneg %p114
      $region50: #{critic_forward.1} parent=35 // pred_check_branch
        %337 = sbr.rel (%p335) target = $region52
      $region51: #{critic_forward.1} parent=35 // pred_region
        %p338 = scmp.lt.s32.totalorder %s16, 1
        %s339 = scalar_select %p338, %s16, 1
        %s340 = smul.addr %s339, 2
        %s341 = scalar_lea.vmem %s3, %s340
      $region52: #{critic_forward.1} parent=35 // pred_fallthru
        _
      // Predicated region
      $region53: #{critic_forward.1} parent=35 // pred_check
        %p342 = pneg %p140
      $region54: #{critic_forward.1} parent=35 // pred_check_branch
        %344 = sbr.rel (%p342) target = $region56
      $region55: #{critic_forward.1} parent=35 // pred_region
        %p345 = scmp.lt.s32.totalorder %s16, 1
        %s346 = scalar_select %p345, %s16, 1
        %s347 = smul.addr %s346, 2
        %s348 = smul.addr %s347, 8
        %s349 = scalar_lea.vmem %s4, %s348
      $region56: #{critic_forward.1} parent=35 // pred_fallthru
        _
    $region36: #{critic_forward.1} parent=5 // pred_fallthru
      _
    %p350 = scmp.le.s32.totalorder 1, %s16
    %p351 = scmp.lt.s32.totalorder %s16, 3
    %p352 = pnand %p350, %p351
    %p353 = pneg %p352
    // Predicated region
    $region57: #{critic_forward.1} parent=5 // pred_check
      _
    $region58: #{critic_forward.1} parent=5 // pred_check_branch
      %355 = sbr.rel (%p352) target = $region60
    $region59: #{critic_forward.1} parent=5 // pred_region
      %s356 = ssub.s32 %s16, 1
      %p357 = scmp.lt.s32.totalorder %s21, 1
      %s358 = scalar_select %p357, %s21, 1
      %s359 = smul.addr %s358, 2
      %s360 = smul.addr %s359, 8
      %s361 = scalar_lea.vmem %s0, %s360
      %p362 = pneg %p42
      %p363 = pneg %p39
      %p364 = scmp.lt.s32.totalorder %s21, 1
      %s365 = scalar_select %p364, %s21, 1
      %s366 = smul.addr %s365, 2
      %s367 = smul.addr %s366, 8
      %s368 = scalar_lea.vmem %s1, %s367
      %p369 = pneg %p68
      %p370 = pneg %p65
      %p371 = scmp.lt.s32.totalorder %s21, 1
      %s372 = scalar_select %p371, %s21, 1
      %s373 = smul.addr %s372, 32
      %s374 = smul.addr %s373, 8
      %s375 = scalar_lea.vmem %s2, %s374
      %p376 = pneg %p94
      %p377 = pneg %p91
      %p378 = scmp.lt.s32.totalorder %s21, 1
      %s379 = scalar_select %p378, %s21, 1
      %s380 = smul.addr %s379, 2
      %s381 = scalar_lea.vmem %s3, %s380
      %p382 = pneg %p120
      %p383 = pneg %p117
      %p384 = scmp.lt.s32.totalorder %s21, 1
      %s385 = scalar_select %p384, %s21, 1
      %s386 = smul.addr %s385, 2
      %s387 = smul.addr %s386, 8
      %s388 = scalar_lea.vmem %s4, %s387
      %p389 = pneg %p146
      %p390 = pneg %p143
      %p391 = pneg %p167
      %p392 = pneg %p164
      %p393 = pneg %p188
      %p394 = pneg %p185
      %p395 = pneg %p209
      %p396 = pneg %p206
      %p397 = pneg %p230
      %p398 = pneg %p227
      %p399 = pneg %p251
      %p400 = pneg %p248
      %p401 = pneg %p277
      %p402 = pneg %p274
      %p403 = scmp.lt.s32.totalorder %s21, 1
      %s404 = scalar_select %p403, %s21, 1
      %s405 = smul.addr %s404, 2
      %s406 = scalar_lea.vmem %s10, %s405
      %p407 = scmp.lt.s32.totalorder %s21, 1
      %s408 = scalar_select %p407, %s21, 1
      %s409 = smul.addr %s408, 2
      %s410 = smul.addr %s409, 8
      %s411 = scalar_lea.vmem %s0, %s410
      %p412 = scmp.lt.s32.totalorder %s21, 1
      %s413 = scalar_select %p412, %s21, 1
      %s414 = smul.addr %s413, 2
      %s415 = smul.addr %s414, 8
      %s416 = scalar_lea.vmem %s1, %s415
      %p417 = scmp.lt.s32.totalorder %s21, 1
      %s418 = scalar_select %p417, %s21, 1
      %s419 = smul.addr %s418, 32
      %s420 = smul.addr %s419, 8
      %s421 = scalar_lea.vmem %s2, %s420
      %p422 = scmp.lt.s32.totalorder %s21, 1
      %s423 = scalar_select %p422, %s21, 1
      %s424 = smul.addr %s423, 2
      %s425 = scalar_lea.vmem %s3, %s424
      %p426 = scmp.lt.s32.totalorder %s21, 1
      %s427 = scalar_select %p426, %s21, 1
      %s428 = smul.addr %s427, 2
      %s429 = smul.addr %s428, 8
      %s430 = scalar_lea.vmem %s4, %s429
      %p431 = scmp.lt.s32.totalorder %s21, 1
      %s432 = scalar_select %p431, %s21, 1
      %s433 = smul.addr %s432, 2
      %s434 = scalar_lea.vmem %s10, %s433
      %v435 = vld [vmem:[%s416] sm:$0xff]
      %v436 = vld [vmem:[%s416 + $0x8] sm:$0xff]
      %v437 = vld [vmem:[%s425] sm:$0x3]
      %v438 = vld [vmem:[%s430] sm:$0xff]
      %v439 = vld [vmem:[%s430 + $0x8] sm:$0xff]
      %v440 = vld [vmem:[%s411] sm:$0xff]
      %v441 = vld [vmem:[%s411 + $0x8] sm:$0xff]
      %v442 = vld [vmem:[%s421] sm:$0xff]
      %v443 = vld [vmem:[%s421 + $0x8] sm:$0xff]
      %v444 = vld [vmem:[%s421 + $0x10] sm:$0xff]
      %v445 = vld [vmem:[%s421 + $0x18] sm:$0xff]
      %v446 = vld [vmem:[%s421 + $0x20] sm:$0xff]
      %v447 = vld [vmem:[%s421 + $0x28] sm:$0xff]
      %v448 = vld [vmem:[%s421 + $0x30] sm:$0xff]
      %v449 = vld [vmem:[%s421 + $0x38] sm:$0xff]
      %v450 = vld [vmem:[%s421 + $0x40] sm:$0xff]
      %v451 = vld [vmem:[%s421 + $0x48] sm:$0xff]
      %v452 = vld [vmem:[%s421 + $0x50] sm:$0xff]
      %v453 = vld [vmem:[%s421 + $0x58] sm:$0xff]
      %v454 = vld [vmem:[%s421 + $0x60] sm:$0xff]
      %v455 = vld [vmem:[%s421 + $0x68] sm:$0xff]
      %v456 = vld [vmem:[%s421 + $0x70] sm:$0xff]
      %v457 = vld [vmem:[%s421 + $0x78] sm:$0xff]
      %v458 = vld [vmem:[%s421 + $0x80] sm:$0xff]
      %v459 = vld [vmem:[%s421 + $0x88] sm:$0xff]
      %v460 = vld [vmem:[%s421 + $0x90] sm:$0xff]
      %v461 = vld [vmem:[%s421 + $0x98] sm:$0xff]
      %v462 = vld [vmem:[%s421 + $0xa0] sm:$0xff]
      %v463 = vld [vmem:[%s421 + $0xa8] sm:$0xff]
      %v464 = vld [vmem:[%s421 + $0xb0] sm:$0xff]
      %v465 = vld [vmem:[%s421 + $0xb8] sm:$0xff]
      %v466 = vld [vmem:[%s421 + $0xc0] sm:$0xff]
      %v467 = vld [vmem:[%s421 + $0xc8] sm:$0xff]
      %v468 = vld [vmem:[%s421 + $0xd0] sm:$0xff]
      %v469 = vld [vmem:[%s421 + $0xd8] sm:$0xff]
      %v470 = vld [vmem:[%s421 + $0xe0] sm:$0xff]
      %v471 = vld [vmem:[%s421 + $0xe8] sm:$0xff]
      %v472 = vld [vmem:[%s421 + $0xf0] sm:$0xff]
      %v473 = vld [vmem:[%s421 + $0xf8] sm:$0xff]
      %v474 = vld [vmem:[%s6] sm:$0xff]
      %v476 = vcombine.high %v474, %v474
      %vm477 = vcmask 31744
      %v479 = vsel %vm477, %v442, 0
      %v482 = vsel %vm477, %v443, 0
      %v485 = vsel %vm477, %v444, 0
      %v488 = vsel %vm477, %v445, 0
      %v491 = vsel %vm477, %v446, 0
      %v494 = vsel %vm477, %v447, 0
      %v497 = vsel %vm477, %v448, 0
      %v500 = vsel %vm477, %v449, 0
      %v503 = vsel %vm477, %v450, 0
      %v506 = vsel %vm477, %v451, 0
      %v509 = vsel %vm477, %v452, 0
      %v512 = vsel %vm477, %v453, 0
      %v515 = vsel %vm477, %v454, 0
      %v518 = vsel %vm477, %v455, 0
      %v521 = vsel %vm477, %v456, 0
      %v524 = vsel %vm477, %v457, 0
      %v527 = vsel %vm477, %v458, 0
      %v530 = vsel %vm477, %v459, 0
      %v533 = vsel %vm477, %v460, 0
      %v536 = vsel %vm477, %v461, 0
      %v539 = vsel %vm477, %v462, 0
      %v542 = vsel %vm477, %v463, 0
      %v545 = vsel %vm477, %v464, 0
      %v548 = vsel %vm477, %v465, 0
      %v551 = vsel %vm477, %v466, 0
      %v554 = vsel %vm477, %v467, 0
      %v557 = vsel %vm477, %v468, 0
      %v560 = vsel %vm477, %v469, 0
      %v563 = vsel %vm477, %v470, 0
      %v566 = vsel %vm477, %v471, 0
      %v569 = vsel %vm477, %v472, 0
      %v572 = vsel %vm477, %v473, 0
      %vm574 = vcmask 1043456
      %v575 = vsel %vm574, %v474, 0
      %v577 = vsel %vm574, %v476, 0
      %579 = vmatprep.subr.mxu0 0.0
      %580 = vmatpush1.msra.mxu0 0.0
      %581 = vmatprep.subr.mxu0 0.0
      %582 = vmatpush1.msra.mxu0 0.0
      %583 = vmatprep.subr.mxu0 0.0
      %584 = vmatpush1.msra.mxu0 0.0
      %585 = vmatprep.subr.mxu0 0.0
      %586 = vmatpush1.msra.mxu0 0.0
      %587 = vmatprep.subr.mxu0 0.0
      %588 = vmatpush1.msra.mxu0 0.0
      %589 = vmatprep.subr.mxu0 0.0
      %590 = vmatpush1.msra.mxu0 0.0
      %591 = vmatprep.subr.mxu0 0.0
      %592 = vmatpush1.msra.mxu0 0.0
      %593 = vmatprep.subr.mxu0 0.0
      %594 = vmatpush1.msra.mxu0 0.0
      %595 = vmatprep.subr.mxu0 0.0
      %596 = vmatpush1.msra.mxu0 0.0
      %597 = vmatprep.subr.mxu0 0.0
      %598 = vmatpush1.msra.mxu0 0.0
      %599 = vmatprep.subr.mxu0 0.0
      %600 = vmatpush1.msra.mxu0 0.0
      %601 = vmatprep.subr.mxu0 0.0
      %602 = vmatpush1.msra.mxu0 0.0
      %603 = vmatprep.subr.mxu0 0.0
      %604 = vmatpush1.msra.mxu0 0.0
      %605 = vmatprep.subr.mxu0 0.0
      %606 = vmatpush1.msra.mxu0 0.0
      %607 = vmatprep.subr.mxu0 0.0
      %608 = vmatpush1.msra.mxu0 0.0
      %609 = vmatprep.subr.mxu0 %v577
      %610 = vmatpush1.msra.mxu0 %v575
      %611 = vmatprep.subr.mxu0 0.0
      %612 = vmatpush2.msra.mxu0 0.0
      %613 = vmatprep.subr.mxu0 0.0
      %614 = vmatpush2.msra.mxu0 0.0
      %615 = vmatprep.subr.mxu0 0.0
      %616 = vmatpush2.msra.mxu0 0.0
      %617 = vmatprep.subr.mxu0 0.0
      %618 = vmatpush2.msra.mxu0 0.0
      %619 = vmatprep.subr.mxu0 0.0
      %620 = vmatpush2.msra.mxu0 0.0
      %621 = vmatprep.subr.mxu0 0.0
      %622 = vmatpush2.msra.mxu0 0.0
      %623 = vmatprep.subr.mxu0 0.0
      %624 = vmatpush2.msra.mxu0 0.0
      %625 = vmatprep.subr.mxu0 0.0
      %626 = vmatpush2.msra.mxu0 0.0
      %627 = vmatprep.subr.mxu0 0.0
      %628 = vmatpush2.msra.mxu0 0.0
      %629 = vmatprep.subr.mxu0 0.0
      %630 = vmatpush2.msra.mxu0 0.0
      %631 = vmatprep.subr.mxu0 0.0
      %632 = vmatpush2.msra.mxu0 0.0
      %633 = vmatprep.subr.mxu0 0.0
      %634 = vmatpush2.msra.mxu0 0.0
      %635 = vmatprep.subr.mxu0 0.0
      %636 = vmatpush2.msra.mxu0 0.0
      %637 = vmatprep.subr.mxu0 0.0
      %638 = vmatpush2.msra.mxu0 0.0
      %639 = vmatprep.subr.mxu0 0.0
      %640 = vmatpush2.msra.mxu0 0.0
      %641 = vmatprep.subr.mxu0 0.0
      %642 = vmatpush2.msra.mxu0 0.0
      %643 = vmatprep.mubr.f32.mxu0 0.0
      %644 = vmatmul.mubr.f32.gmra.mxu0 %v479
      %v645 = vpop.f32.mrf.mxu0
      %v646 = vadd.f32 0.0, %v645
      %v647 = vpop.f32.mrf.mxu0
      %v648 = vadd.f32 0.0, %v647
      %649 = vmatprep.mubr.f32.mxu0 0.0
      %650 = vmatmul.mubr.f32.gmra.mxu0 %v482
      %v651 = vpop.f32.mrf.mxu0
      %v652 = vadd.f32 0.0, %v651
      %v653 = vpop.f32.mrf.mxu0
      %v654 = vadd.f32 0.0, %v653
      %655 = vmatprep.mubr.f32.mxu0 0.0
      %656 = vmatmul.mubr.f32.gmra.mxu0 %v485
      %v657 = vpop.f32.mrf.mxu0
      %v658 = vadd.f32 0.0, %v657
      %v659 = vpop.f32.mrf.mxu0
      %v660 = vadd.f32 0.0, %v659
      %661 = vmatprep.mubr.f32.mxu0 0.0
      %662 = vmatmul.mubr.f32.gmra.mxu0 %v488
      %v663 = vpop.f32.mrf.mxu0
      %v664 = vadd.f32 0.0, %v663
      %v665 = vpop.f32.mrf.mxu0
      %v666 = vadd.f32 0.0, %v665
      %667 = vmatprep.mubr.f32.mxu0 0.0
      %668 = vmatmul.mubr.f32.gmra.mxu0 %v491
      %v669 = vpop.f32.mrf.mxu0
      %v670 = vadd.f32 0.0, %v669
      %v671 = vpop.f32.mrf.mxu0
      %v672 = vadd.f32 0.0, %v671
      %673 = vmatprep.mubr.f32.mxu0 0.0
      %674 = vmatmul.mubr.f32.gmra.mxu0 %v494
      %v675 = vpop.f32.mrf.mxu0
      %v676 = vadd.f32 0.0, %v675
      %v677 = vpop.f32.mrf.mxu0
      %v678 = vadd.f32 0.0, %v677
      %679 = vmatprep.mubr.f32.mxu0 0.0
      %680 = vmatmul.mubr.f32.gmra.mxu0 %v497
      %v681 = vpop.f32.mrf.mxu0
      %v682 = vadd.f32 0.0, %v681
      %v683 = vpop.f32.mrf.mxu0
      %v684 = vadd.f32 0.0, %v683
      %685 = vmatprep.mubr.f32.mxu0 0.0
      %686 = vmatmul.mubr.f32.gmra.mxu0 %v500
      %v687 = vpop.f32.mrf.mxu0
      %v688 = vadd.f32 0.0, %v687
      %v689 = vpop.f32.mrf.mxu0
      %v690 = vadd.f32 0.0, %v689
      %691 = vmatprep.mubr.f32.mxu0 0.0
      %692 = vmatmul.mubr.f32.gmra.mxu0 %v503
      %v693 = vpop.f32.mrf.mxu0
      %v694 = vadd.f32 0.0, %v693
      %v695 = vpop.f32.mrf.mxu0
      %v696 = vadd.f32 0.0, %v695
      %697 = vmatprep.mubr.f32.mxu0 0.0
      %698 = vmatmul.mubr.f32.gmra.mxu0 %v506
      %v699 = vpop.f32.mrf.mxu0
      %v700 = vadd.f32 0.0, %v699
      %v701 = vpop.f32.mrf.mxu0
      %v702 = vadd.f32 0.0, %v701
      %703 = vmatprep.mubr.f32.mxu0 0.0
      %704 = vmatmul.mubr.f32.gmra.mxu0 %v509
      %v705 = vpop.f32.mrf.mxu0
      %v706 = vadd.f32 0.0, %v705
      %v707 = vpop.f32.mrf.mxu0
      %v708 = vadd.f32 0.0, %v707
      %709 = vmatprep.mubr.f32.mxu0 0.0
      %710 = vmatmul.mubr.f32.gmra.mxu0 %v512
      %v711 = vpop.f32.mrf.mxu0
      %v712 = vadd.f32 0.0, %v711
      %v713 = vpop.f32.mrf.mxu0
      %v714 = vadd.f32 0.0, %v713
      %715 = vmatprep.mubr.f32.mxu0 0.0
      %716 = vmatmul.mubr.f32.gmra.mxu0 %v515
      %v717 = vpop.f32.mrf.mxu0
      %v718 = vadd.f32 0.0, %v717
      %v719 = vpop.f32.mrf.mxu0
      %v720 = vadd.f32 0.0, %v719
      %721 = vmatprep.mubr.f32.mxu0 0.0
      %722 = vmatmul.mubr.f32.gmra.mxu0 %v518
      %v723 = vpop.f32.mrf.mxu0
      %v724 = vadd.f32 0.0, %v723
      %v725 = vpop.f32.mrf.mxu0
      %v726 = vadd.f32 0.0, %v725
      %727 = vmatprep.mubr.f32.mxu0 0.0
      %728 = vmatmul.mubr.f32.gmra.mxu0 %v521
      %v729 = vpop.f32.mrf.mxu0
      %v730 = vadd.f32 0.0, %v729
      %v731 = vpop.f32.mrf.mxu0
      %v732 = vadd.f32 0.0, %v731
      %733 = vmatprep.mubr.f32.mxu0 0.0
      %734 = vmatmul.mubr.f32.gmra.mxu0 %v524
      %v735 = vpop.f32.mrf.mxu0
      %v736 = vadd.f32 0.0, %v735
      %v737 = vpop.f32.mrf.mxu0
      %v738 = vadd.f32 0.0, %v737
      %739 = vmatprep.mubr.f32.mxu0 0.0
      %740 = vmatmul.mubr.f32.gmra.mxu0 %v527
      %v741 = vpop.f32.mrf.mxu0
      %v742 = vadd.f32 0.0, %v741
      %v743 = vpop.f32.mrf.mxu0
      %v744 = vadd.f32 0.0, %v743
      %745 = vmatprep.mubr.f32.mxu0 0.0
      %746 = vmatmul.mubr.f32.gmra.mxu0 %v530
      %v747 = vpop.f32.mrf.mxu0
      %v748 = vadd.f32 0.0, %v747
      %v749 = vpop.f32.mrf.mxu0
      %v750 = vadd.f32 0.0, %v749
      %751 = vmatprep.mubr.f32.mxu0 0.0
      %752 = vmatmul.mubr.f32.gmra.mxu0 %v533
      %v753 = vpop.f32.mrf.mxu0
      %v754 = vadd.f32 0.0, %v753
      %v755 = vpop.f32.mrf.mxu0
      %v756 = vadd.f32 0.0, %v755
      %757 = vmatprep.mubr.f32.mxu0 0.0
      %758 = vmatmul.mubr.f32.gmra.mxu0 %v536
      %v759 = vpop.f32.mrf.mxu0
      %v760 = vadd.f32 0.0, %v759
      %v761 = vpop.f32.mrf.mxu0
      %v762 = vadd.f32 0.0, %v761
      %763 = vmatprep.mubr.f32.mxu0 0.0
      %764 = vmatmul.mubr.f32.gmra.mxu0 %v539
      %v765 = vpop.f32.mrf.mxu0
      %v766 = vadd.f32 0.0, %v765
      %v767 = vpop.f32.mrf.mxu0
      %v768 = vadd.f32 0.0, %v767
      %769 = vmatprep.mubr.f32.mxu0 0.0
      %770 = vmatmul.mubr.f32.gmra.mxu0 %v542
      %v771 = vpop.f32.mrf.mxu0
      %v772 = vadd.f32 0.0, %v771
      %v773 = vpop.f32.mrf.mxu0
      %v774 = vadd.f32 0.0, %v773
      %775 = vmatprep.mubr.f32.mxu0 0.0
      %776 = vmatmul.mubr.f32.gmra.mxu0 %v545
      %v777 = vpop.f32.mrf.mxu0
      %v778 = vadd.f32 0.0, %v777
      %v779 = vpop.f32.mrf.mxu0
      %v780 = vadd.f32 0.0, %v779
      %781 = vmatprep.mubr.f32.mxu0 0.0
      %782 = vmatmul.mubr.f32.gmra.mxu0 %v548
      %v783 = vpop.f32.mrf.mxu0
      %v784 = vadd.f32 0.0, %v783
      %v785 = vpop.f32.mrf.mxu0
      %v786 = vadd.f32 0.0, %v785
      %787 = vmatprep.mubr.f32.mxu0 0.0
      %788 = vmatmul.mubr.f32.gmra.mxu0 %v551
      %v789 = vpop.f32.mrf.mxu0
      %v790 = vadd.f32 0.0, %v789
      %v791 = vpop.f32.mrf.mxu0
      %v792 = vadd.f32 0.0, %v791
      %793 = vmatprep.mubr.f32.mxu0 0.0
      %794 = vmatmul.mubr.f32.gmra.mxu0 %v554
      %v795 = vpop.f32.mrf.mxu0
      %v796 = vadd.f32 0.0, %v795
      %v797 = vpop.f32.mrf.mxu0
      %v798 = vadd.f32 0.0, %v797
      %799 = vmatprep.mubr.f32.mxu0 0.0
      %800 = vmatmul.mubr.f32.gmra.mxu0 %v557
      %v801 = vpop.f32.mrf.mxu0
      %v802 = vadd.f32 0.0, %v801
      %v803 = vpop.f32.mrf.mxu0
      %v804 = vadd.f32 0.0, %v803
      %805 = vmatprep.mubr.f32.mxu0 0.0
      %806 = vmatmul.mubr.f32.gmra.mxu0 %v560
      %v807 = vpop.f32.mrf.mxu0
      %v808 = vadd.f32 0.0, %v807
      %v809 = vpop.f32.mrf.mxu0
      %v810 = vadd.f32 0.0, %v809
      %811 = vmatprep.mubr.f32.mxu0 0.0
      %812 = vmatmul.mubr.f32.gmra.mxu0 %v563
      %v813 = vpop.f32.mrf.mxu0
      %v814 = vadd.f32 0.0, %v813
      %v815 = vpop.f32.mrf.mxu0
      %v816 = vadd.f32 0.0, %v815
      %817 = vmatprep.mubr.f32.mxu0 0.0
      %818 = vmatmul.mubr.f32.gmra.mxu0 %v566
      %v819 = vpop.f32.mrf.mxu0
      %v820 = vadd.f32 0.0, %v819
      %v821 = vpop.f32.mrf.mxu0
      %v822 = vadd.f32 0.0, %v821
      %823 = vmatprep.mubr.f32.mxu0 0.0
      %824 = vmatmul.mubr.f32.gmra.mxu0 %v569
      %v825 = vpop.f32.mrf.mxu0
      %v826 = vadd.f32 0.0, %v825
      %v827 = vpop.f32.mrf.mxu0
      %v828 = vadd.f32 0.0, %v827
      %829 = vmatprep.mubr.f32.mxu0 0.0
      %830 = vmatmul.mubr.f32.gmra.mxu0 %v572
      %v831 = vpop.f32.mrf.mxu0
      %v832 = vadd.f32 0.0, %v831
      %v833 = vpop.f32.mrf.mxu0
      %v834 = vadd.f32 0.0, %v833
      %835 = vdwg.mxu0
      %v836 = vld [vmem:[%s7] sm:$0x1]
      %v837 = vld [vmem:[%s5] sm:$0xff]
      %v838 = vld [vmem:[%s5 + $0x8] sm:$0xff]
      %v839 = vld [vmem:[%s5 + $0x10] sm:$0xff]
      %v840 = vld [vmem:[%s5 + $0x18] sm:$0xff]
      %v842 = vlaneseq
      %v843 = vshrl.u32 %v842, 7
      %v844 = vsub.s32 0, %v843
      %v845 = vrot.slane %v836, %v844
      %vm847 = vcmask 261120
      %v849 = vsel %vm847, %v440, 0
      %v852 = vsel %vm847, %v441, 0
      %854 = vmatprep.subr.mxu0 0.0
      %855 = vmatpush1.msra.mxu0 0.0
      %856 = vmatprep.subr.mxu0 0.0
      %857 = vmatpush1.msra.mxu0 0.0
      %858 = vmatprep.subr.mxu0 0.0
      %859 = vmatpush1.msra.mxu0 0.0
      %860 = vmatprep.subr.mxu0 0.0
      %861 = vmatpush1.msra.mxu0 0.0
      %862 = vmatprep.subr.mxu0 0.0
      %863 = vmatpush1.msra.mxu0 0.0
      %864 = vmatprep.subr.mxu0 0.0
      %865 = vmatpush1.msra.mxu0 0.0
      %866 = vmatprep.subr.mxu0 0.0
      %867 = vmatpush1.msra.mxu0 0.0
      %868 = vmatprep.subr.mxu0 0.0
      %869 = vmatpush1.msra.mxu0 0.0
      %870 = vmatprep.subr.mxu0 0.0
      %871 = vmatpush1.msra.mxu0 0.0
      %872 = vmatprep.subr.mxu0 0.0
      %873 = vmatpush1.msra.mxu0 0.0
      %874 = vmatprep.subr.mxu0 0.0
      %875 = vmatpush1.msra.mxu0 0.0
      %876 = vmatprep.subr.mxu0 0.0
      %877 = vmatpush1.msra.mxu0 0.0
      %878 = vmatprep.subr.mxu0 0.0
      %879 = vmatpush1.msra.mxu0 %v840
      %880 = vmatprep.subr.mxu0 0.0
      %881 = vmatpush1.msra.mxu0 %v839
      %882 = vmatprep.subr.mxu0 0.0
      %883 = vmatpush1.msra.mxu0 %v838
      %884 = vmatprep.subr.mxu0 0.0
      %885 = vmatpush1.msra.mxu0 %v837
      %886 = vmatprep.subr.mxu0 0.0
      %887 = vmatpush2.msra.mxu0 0.0
      %888 = vmatprep.subr.mxu0 0.0
      %889 = vmatpush2.msra.mxu0 0.0
      %890 = vmatprep.subr.mxu0 0.0
      %891 = vmatpush2.msra.mxu0 0.0
      %892 = vmatprep.subr.mxu0 0.0
      %893 = vmatpush2.msra.mxu0 0.0
      %894 = vmatprep.subr.mxu0 0.0
      %895 = vmatpush2.msra.mxu0 0.0
      %896 = vmatprep.subr.mxu0 0.0
      %897 = vmatpush2.msra.mxu0 0.0
      %898 = vmatprep.subr.mxu0 0.0
      %899 = vmatpush2.msra.mxu0 0.0
      %900 = vmatprep.subr.mxu0 0.0
      %901 = vmatpush2.msra.mxu0 0.0
      %902 = vmatprep.subr.mxu0 0.0
      %903 = vmatpush2.msra.mxu0 0.0
      %904 = vmatprep.subr.mxu0 0.0
      %905 = vmatpush2.msra.mxu0 0.0
      %906 = vmatprep.subr.mxu0 0.0
      %907 = vmatpush2.msra.mxu0 0.0
      %908 = vmatprep.subr.mxu0 0.0
      %909 = vmatpush2.msra.mxu0 0.0
      %910 = vmatprep.subr.mxu0 0.0
      %911 = vmatpush2.msra.mxu0 0.0
      %912 = vmatprep.subr.mxu0 0.0
      %913 = vmatpush2.msra.mxu0 0.0
      %914 = vmatprep.subr.mxu0 0.0
      %915 = vmatpush2.msra.mxu0 0.0
      %916 = vmatprep.subr.mxu0 0.0
      %917 = vmatpush2.msra.mxu0 0.0
      %918 = vmatprep.mubr.f32.mxu0 0.0
      %919 = vmatmul.mubr.f32.gmra.mxu0 %v849
      %v920 = vpop.f32.mrf.mxu0
      %v921 = vadd.f32 %v845, %v920
      %v922 = vpop.f32.mrf.mxu0
      %923 = vmatprep.mubr.f32.mxu0 0.0
      %924 = vmatmul.mubr.f32.gmra.mxu0 %v852
      %v925 = vpop.f32.mrf.mxu0
      %v926 = vadd.f32 %v845, %v925
      %v927 = vpop.f32.mrf.mxu0
      %928 = vdwg.mxu0
      %v929 = vadd.f32 %v646, %v921
      %v930 = vadd.f32 %v652, %v926
      %v931 = vadd.f32 %v658, %v921
      %v932 = vadd.f32 %v664, %v926
      %v933 = vadd.f32 %v670, %v921
      %v934 = vadd.f32 %v676, %v926
      %v935 = vadd.f32 %v682, %v921
      %v936 = vadd.f32 %v688, %v926
      %v937 = vadd.f32 %v694, %v921
      %v938 = vadd.f32 %v700, %v926
      %v939 = vadd.f32 %v706, %v921
      %v940 = vadd.f32 %v712, %v926
      %v941 = vadd.f32 %v718, %v921
      %v942 = vadd.f32 %v724, %v926
      %v943 = vadd.f32 %v730, %v921
      %v944 = vadd.f32 %v736, %v926
      %v945 = vadd.f32 %v742, %v921
      %v946 = vadd.f32 %v748, %v926
      %v947 = vadd.f32 %v754, %v921
      %v948 = vadd.f32 %v760, %v926
      %v949 = vadd.f32 %v766, %v921
      %v950 = vadd.f32 %v772, %v926
      %v951 = vadd.f32 %v778, %v921
      %v952 = vadd.f32 %v784, %v926
      %v953 = vadd.f32 %v790, %v921
      %v954 = vadd.f32 %v796, %v926
      %v955 = vadd.f32 %v802, %v921
      %v956 = vadd.f32 %v808, %v926
      %v957 = vadd.f32 %v814, %v921
      %v958 = vadd.f32 %v820, %v926
      %v959 = vadd.f32 %v826, %v921
      %v960 = vadd.f32 %v832, %v926
      %v963 = vcombine.high %v921, %v921
      %v965 = vunpack.c.l.s4 1966171168
      %v966 = vunpack.c.0.s8 %v965
      %v967 = vlaneseq
      %v968 = vshrl.u32 %v967, 7
      %v969 = vsub.s32 %v966, %v968
      %v970 = vrot.slane %v921, %v969
      %v972 = vunpack.c.l.s4 1966171168
      %v973 = vunpack.c.0.s8 %v972
      %v974 = vlaneseq
      %v975 = vshrl.u32 %v974, 7
      %v976 = vsub.s32 %v973, %v975
      %v977 = vrot.slane %v963, %v976
      %v978 = vcombine.high %v970, %v970
      %v979 = vcombine.high %v977, %v977
      %v981 = vunpack.c.l.s4 1966171168
      %v982 = vunpack.c.0.s8 %v981
      %v983 = vlaneseq
      %v984 = vshrl.u32 %v983, 7
      %v985 = vsub.s32 %v982, %v984
      %v986 = vrot.slane %v970, %v985
      %v988 = vunpack.c.l.s4 1966171168
      %v989 = vunpack.c.0.s8 %v988
      %v990 = vlaneseq
      %v991 = vshrl.u32 %v990, 7
      %v992 = vsub.s32 %v989, %v991
      %v993 = vrot.slane %v977, %v992
      %v995 = vunpack.c.l.s4 1966171168
      %v996 = vunpack.c.0.s8 %v995
      %v997 = vlaneseq
      %v998 = vshrl.u32 %v997, 7
      %v999 = vsub.s32 %v996, %v998
      %v1000 = vrot.slane %v978, %v999
      %v1002 = vunpack.c.l.s4 1966171168
      %v1003 = vunpack.c.0.s8 %v1002
      %v1004 = vlaneseq
      %v1005 = vshrl.u32 %v1004, 7
      %v1006 = vsub.s32 %v1003, %v1005
      %v1007 = vrot.slane %v979, %v1006
      %v1008 = vcombine.high %v986, %v986
      %v1009 = vcombine.high %v993, %v993
      %v1010 = vcombine.high %v1000, %v1000
      %v1011 = vcombine.high %v1007, %v1007
      %v1012 = vcombine.high %v926, %v926
      %v1014 = vunpack.c.l.s4 1966171168
      %v1015 = vunpack.c.0.s8 %v1014
      %v1016 = vlaneseq
      %v1017 = vshrl.u32 %v1016, 7
      %v1018 = vsub.s32 %v1015, %v1017
      %v1019 = vrot.slane %v926, %v1018
      %v1021 = vunpack.c.l.s4 1966171168
      %v1022 = vunpack.c.0.s8 %v1021
      %v1023 = vlaneseq
      %v1024 = vshrl.u32 %v1023, 7
      %v1025 = vsub.s32 %v1022, %v1024
      %v1026 = vrot.slane %v1012, %v1025
      %v1027 = vcombine.high %v1019, %v1019
      %v1028 = vcombine.high %v1026, %v1026
      %v1030 = vunpack.c.l.s4 1966171168
      %v1031 = vunpack.c.0.s8 %v1030
      %v1032 = vlaneseq
      %v1033 = vshrl.u32 %v1032, 7
      %v1034 = vsub.s32 %v1031, %v1033
      %v1035 = vrot.slane %v1019, %v1034
      %v1037 = vunpack.c.l.s4 1966171168
      %v1038 = vunpack.c.0.s8 %v1037
      %v1039 = vlaneseq
      %v1040 = vshrl.u32 %v1039, 7
      %v1041 = vsub.s32 %v1038, %v1040
      %v1042 = vrot.slane %v1026, %v1041
      %v1044 = vunpack.c.l.s4 1966171168
      %v1045 = vunpack.c.0.s8 %v1044
      %v1046 = vlaneseq
      %v1047 = vshrl.u32 %v1046, 7
      %v1048 = vsub.s32 %v1045, %v1047
      %v1049 = vrot.slane %v1027, %v1048
      %v1051 = vunpack.c.l.s4 1966171168
      %v1052 = vunpack.c.0.s8 %v1051
      %v1053 = vlaneseq
      %v1054 = vshrl.u32 %v1053, 7
      %v1055 = vsub.s32 %v1052, %v1054
      %v1056 = vrot.slane %v1028, %v1055
      %v1057 = vcombine.high %v1035, %v1035
      %v1058 = vcombine.high %v1042, %v1042
      %v1059 = vcombine.high %v1049, %v1049
      %v1060 = vcombine.high %v1056, %v1056
      %v1061 = vlaneseq
      %v1062 = vshrl.u32 %v1061, 7
      %v1063 = vsub.s32 0, %v1062
      %v1064 = vrot.slane %v986, %v1063
      %v1065 = vlaneseq
      %v1066 = vshrl.u32 %v1065, 7
      %v1067 = vsub.s32 0, %v1066
      %v1068 = vrot.slane %v1000, %v1067
      %v1069 = vlaneseq
      %v1070 = vshrl.u32 %v1069, 7
      %v1071 = vsub.s32 0, %v1070
      %v1072 = vrot.slane %v1008, %v1071
      %v1073 = vlaneseq
      %v1074 = vshrl.u32 %v1073, 7
      %v1075 = vsub.s32 0, %v1074
      %v1076 = vrot.slane %v1010, %v1075
      %v1077 = vlaneseq
      %v1078 = vshrl.u32 %v1077, 7
      %v1079 = vsub.s32 0, %v1078
      %v1080 = vrot.slane %v993, %v1079
      %v1081 = vlaneseq
      %v1082 = vshrl.u32 %v1081, 7
      %v1083 = vsub.s32 0, %v1082
      %v1084 = vrot.slane %v1007, %v1083
      %v1085 = vlaneseq
      %v1086 = vshrl.u32 %v1085, 7
      %v1087 = vsub.s32 0, %v1086
      %v1088 = vrot.slane %v1009, %v1087
      %v1089 = vlaneseq
      %v1090 = vshrl.u32 %v1089, 7
      %v1091 = vsub.s32 0, %v1090
      %v1092 = vrot.slane %v1011, %v1091
      %v1093 = vlaneseq
      %v1094 = vshrl.u32 %v1093, 7
      %v1095 = vsub.s32 0, %v1094
      %v1096 = vrot.slane %v1035, %v1095
      %v1097 = vlaneseq
      %v1098 = vshrl.u32 %v1097, 7
      %v1099 = vsub.s32 0, %v1098
      %v1100 = vrot.slane %v1049, %v1099
      %v1101 = vlaneseq
      %v1102 = vshrl.u32 %v1101, 7
      %v1103 = vsub.s32 0, %v1102
      %v1104 = vrot.slane %v1057, %v1103
      %v1105 = vlaneseq
      %v1106 = vshrl.u32 %v1105, 7
      %v1107 = vsub.s32 0, %v1106
      %v1108 = vrot.slane %v1059, %v1107
      %v1109 = vlaneseq
      %v1110 = vshrl.u32 %v1109, 7
      %v1111 = vsub.s32 0, %v1110
      %v1112 = vrot.slane %v1042, %v1111
      %v1113 = vlaneseq
      %v1114 = vshrl.u32 %v1113, 7
      %v1115 = vsub.s32 0, %v1114
      %v1116 = vrot.slane %v1056, %v1115
      %v1117 = vlaneseq
      %v1118 = vshrl.u32 %v1117, 7
      %v1119 = vsub.s32 0, %v1118
      %v1120 = vrot.slane %v1058, %v1119
      %v1121 = vlaneseq
      %v1122 = vshrl.u32 %v1121, 7
      %v1123 = vsub.s32 0, %v1122
      %v1124 = vrot.slane %v1060, %v1123
      %1125 = vrot.lane.b32.xlu0 %v1064, 96
      %v1126 = vpop.permute.xlu0 %1125
      %1127 = vrot.lane.b32.xlu0 %v1068, 96
      %v1128 = vpop.permute.xlu0 %1127
      %1129 = vrot.lane.b32.xlu0 %v1072, 96
      %v1130 = vpop.permute.xlu0 %1129
      %1131 = vrot.lane.b32.xlu0 %v1076, 96
      %v1132 = vpop.permute.xlu0 %1131
      %1133 = vrot.lane.b32.xlu0 %v1080, 96
      %v1134 = vpop.permute.xlu0 %1133
      %1135 = vrot.lane.b32.xlu0 %v1084, 96
      %v1136 = vpop.permute.xlu0 %1135
      %1137 = vrot.lane.b32.xlu0 %v1088, 96
      %v1138 = vpop.permute.xlu0 %1137
      %1139 = vrot.lane.b32.xlu0 %v1092, 96
      %v1140 = vpop.permute.xlu0 %1139
      %1141 = vrot.lane.b32.xlu0 %v1096, 96
      %v1142 = vpop.permute.xlu0 %1141
      %1143 = vrot.lane.b32.xlu0 %v1100, 96
      %v1144 = vpop.permute.xlu0 %1143
      %1145 = vrot.lane.b32.xlu0 %v1104, 96
      %v1146 = vpop.permute.xlu0 %1145
      %1147 = vrot.lane.b32.xlu0 %v1108, 96
      %v1148 = vpop.permute.xlu0 %1147
      %1149 = vrot.lane.b32.xlu0 %v1112, 96
      %v1150 = vpop.permute.xlu0 %1149
      %1151 = vrot.lane.b32.xlu0 %v1116, 96
      %v1152 = vpop.permute.xlu0 %1151
      %1153 = vrot.lane.b32.xlu0 %v1120, 96
      %v1154 = vpop.permute.xlu0 %1153
      %1155 = vrot.lane.b32.xlu0 %v1124, 96
      %v1156 = vpop.permute.xlu0 %1155
      %v1173 = vadd.f32 %v929, %v1126
      %v1174 = vadd.f32 %v930, %v1126
      %v1175 = vadd.f32 %v931, %v1128
      %v1176 = vadd.f32 %v932, %v1128
      %v1177 = vadd.f32 %v933, %v1130
      %v1178 = vadd.f32 %v934, %v1130
      %v1179 = vadd.f32 %v935, %v1132
      %v1180 = vadd.f32 %v936, %v1132
      %v1181 = vadd.f32 %v937, %v1134
      %v1182 = vadd.f32 %v938, %v1134
      %v1183 = vadd.f32 %v939, %v1136
      %v1184 = vadd.f32 %v940, %v1136
      %v1185 = vadd.f32 %v941, %v1138
      %v1186 = vadd.f32 %v942, %v1138
      %v1187 = vadd.f32 %v943, %v1140
      %v1188 = vadd.f32 %v944, %v1140
      %v1189 = vadd.f32 %v945, %v1142
      %v1190 = vadd.f32 %v946, %v1142
      %v1191 = vadd.f32 %v947, %v1144
      %v1192 = vadd.f32 %v948, %v1144
      %v1193 = vadd.f32 %v949, %v1146
      %v1194 = vadd.f32 %v950, %v1146
      %v1195 = vadd.f32 %v951, %v1148
      %v1196 = vadd.f32 %v952, %v1148
      %v1197 = vadd.f32 %v953, %v1150
      %v1198 = vadd.f32 %v954, %v1150
      %v1199 = vadd.f32 %v955, %v1152
      %v1200 = vadd.f32 %v956, %v1152
      %v1201 = vadd.f32 %v957, %v1154
      %v1202 = vadd.f32 %v958, %v1154
      %v1203 = vadd.f32 %v959, %v1156
      %v1204 = vadd.f32 %v960, %v1156
      %vm1205 = vcmp.gt.f32.partialorder %v1173, 0.0
      %vm1206 = vcmp.gt.f32.partialorder %v1174, 0.0
      %vm1207 = vcmp.gt.f32.partialorder %v1175, 0.0
      %vm1208 = vcmp.gt.f32.partialorder %v1176, 0.0
      %vm1209 = vcmp.gt.f32.partialorder %v1177, 0.0
      %vm1210 = vcmp.gt.f32.partialorder %v1178, 0.0
      %vm1211 = vcmp.gt.f32.partialorder %v1179, 0.0
      %vm1212 = vcmp.gt.f32.partialorder %v1180, 0.0
      %vm1213 = vcmp.gt.f32.partialorder %v1181, 0.0
      %vm1214 = vcmp.gt.f32.partialorder %v1182, 0.0
      %vm1215 = vcmp.gt.f32.partialorder %v1183, 0.0
      %vm1216 = vcmp.gt.f32.partialorder %v1184, 0.0
      %vm1217 = vcmp.gt.f32.partialorder %v1185, 0.0
      %vm1218 = vcmp.gt.f32.partialorder %v1186, 0.0
      %vm1219 = vcmp.gt.f32.partialorder %v1187, 0.0
      %vm1220 = vcmp.gt.f32.partialorder %v1188, 0.0
      %vm1221 = vcmp.gt.f32.partialorder %v1189, 0.0
      %vm1222 = vcmp.gt.f32.partialorder %v1190, 0.0
      %vm1223 = vcmp.gt.f32.partialorder %v1191, 0.0
      %vm1224 = vcmp.gt.f32.partialorder %v1192, 0.0
      %vm1225 = vcmp.gt.f32.partialorder %v1193, 0.0
      %vm1226 = vcmp.gt.f32.partialorder %v1194, 0.0
      %vm1227 = vcmp.gt.f32.partialorder %v1195, 0.0
      %vm1228 = vcmp.gt.f32.partialorder %v1196, 0.0
      %vm1229 = vcmp.gt.f32.partialorder %v1197, 0.0
      %vm1230 = vcmp.gt.f32.partialorder %v1198, 0.0
      %vm1231 = vcmp.gt.f32.partialorder %v1199, 0.0
      %vm1232 = vcmp.gt.f32.partialorder %v1200, 0.0
      %vm1233 = vcmp.gt.f32.partialorder %v1201, 0.0
      %vm1234 = vcmp.gt.f32.partialorder %v1202, 0.0
      %vm1235 = vcmp.gt.f32.partialorder %v1203, 0.0
      %vm1236 = vcmp.gt.f32.partialorder %v1204, 0.0
      %v1237 = vmul.f32 %v1173, 0.2
      %v1238 = vmul.f32 %v1174, 0.2
      %v1239 = vmul.f32 %v1175, 0.2
      %v1240 = vmul.f32 %v1176, 0.2
      %v1241 = vmul.f32 %v1177, 0.2
      %v1242 = vmul.f32 %v1178, 0.2
      %v1243 = vmul.f32 %v1179, 0.2
      %v1244 = vmul.f32 %v1180, 0.2
      %v1245 = vmul.f32 %v1181, 0.2
      %v1246 = vmul.f32 %v1182, 0.2
      %v1247 = vmul.f32 %v1183, 0.2
      %v1248 = vmul.f32 %v1184, 0.2
      %v1249 = vmul.f32 %v1185, 0.2
      %v1250 = vmul.f32 %v1186, 0.2
      %v1251 = vmul.f32 %v1187, 0.2
      %v1252 = vmul.f32 %v1188, 0.2
      %v1253 = vmul.f32 %v1189, 0.2
      %v1254 = vmul.f32 %v1190, 0.2
      %v1255 = vmul.f32 %v1191, 0.2
      %v1256 = vmul.f32 %v1192, 0.2
      %v1257 = vmul.f32 %v1193, 0.2
      %v1258 = vmul.f32 %v1194, 0.2
      %v1259 = vmul.f32 %v1195, 0.2
      %v1260 = vmul.f32 %v1196, 0.2
      %v1261 = vmul.f32 %v1197, 0.2
      %v1262 = vmul.f32 %v1198, 0.2
      %v1263 = vmul.f32 %v1199, 0.2
      %v1264 = vmul.f32 %v1200, 0.2
      %v1265 = vmul.f32 %v1201, 0.2
      %v1266 = vmul.f32 %v1202, 0.2
      %v1267 = vmul.f32 %v1203, 0.2
      %v1268 = vmul.f32 %v1204, 0.2
      %v1269 = vsel %vm1205, %v1173, %v1237
      %v1270 = vsel %vm1206, %v1174, %v1238
      %v1271 = vsel %vm1207, %v1175, %v1239
      %v1272 = vsel %vm1208, %v1176, %v1240
      %v1273 = vsel %vm1209, %v1177, %v1241
      %v1274 = vsel %vm1210, %v1178, %v1242
      %v1275 = vsel %vm1211, %v1179, %v1243
      %v1276 = vsel %vm1212, %v1180, %v1244
      %v1277 = vsel %vm1213, %v1181, %v1245
      %v1278 = vsel %vm1214, %v1182, %v1246
      %v1279 = vsel %vm1215, %v1183, %v1247
      %v1280 = vsel %vm1216, %v1184, %v1248
      %v1281 = vsel %vm1217, %v1185, %v1249
      %v1282 = vsel %vm1218, %v1186, %v1250
      %v1283 = vsel %vm1219, %v1187, %v1251
      %v1284 = vsel %vm1220, %v1188, %v1252
      %v1285 = vsel %vm1221, %v1189, %v1253
      %v1286 = vsel %vm1222, %v1190, %v1254
      %v1287 = vsel %vm1223, %v1191, %v1255
      %v1288 = vsel %vm1224, %v1192, %v1256
      %v1289 = vsel %vm1225, %v1193, %v1257
      %v1290 = vsel %vm1226, %v1194, %v1258
      %v1291 = vsel %vm1227, %v1195, %v1259
      %v1292 = vsel %vm1228, %v1196, %v1260
      %v1293 = vsel %vm1229, %v1197, %v1261
      %v1294 = vsel %vm1230, %v1198, %v1262
      %v1295 = vsel %vm1231, %v1199, %v1263
      %v1296 = vsel %vm1232, %v1200, %v1264
      %v1297 = vsel %vm1233, %v1201, %v1265
      %v1298 = vsel %vm1234, %v1202, %v1266
      %v1299 = vsel %vm1235, %v1203, %v1267
      %v1300 = vsel %vm1236, %v1204, %v1268
      %1301 = vrot.lane.b32.xlu0 %v845, 64
      %v1302 = vpop.permute.xlu0 %1301
      %v1304 = vmul.f32 %v1269, %v1302
      %v1305 = vmul.f32 %v1270, %v1302
      %v1306 = vmul.f32 %v1271, %v1302
      %v1307 = vmul.f32 %v1272, %v1302
      %v1308 = vmul.f32 %v1273, %v1302
      %v1309 = vmul.f32 %v1274, %v1302
      %v1310 = vmul.f32 %v1275, %v1302
      %v1311 = vmul.f32 %v1276, %v1302
      %v1312 = vmul.f32 %v1277, %v1302
      %v1313 = vmul.f32 %v1278, %v1302
      %v1314 = vmul.f32 %v1279, %v1302
      %v1315 = vmul.f32 %v1280, %v1302
      %v1316 = vmul.f32 %v1281, %v1302
      %v1317 = vmul.f32 %v1282, %v1302
      %v1318 = vmul.f32 %v1283, %v1302
      %v1319 = vmul.f32 %v1284, %v1302
      %v1320 = vmul.f32 %v1285, %v1302
      %v1321 = vmul.f32 %v1286, %v1302
      %v1322 = vmul.f32 %v1287, %v1302
      %v1323 = vmul.f32 %v1288, %v1302
      %v1324 = vmul.f32 %v1289, %v1302
      %v1325 = vmul.f32 %v1290, %v1302
      %v1326 = vmul.f32 %v1291, %v1302
      %v1327 = vmul.f32 %v1292, %v1302
      %v1328 = vmul.f32 %v1293, %v1302
      %v1329 = vmul.f32 %v1294, %v1302
      %v1330 = vmul.f32 %v1295, %v1302
      %v1331 = vmul.f32 %v1296, %v1302
      %v1332 = vmul.f32 %v1297, %v1302
      %v1333 = vmul.f32 %v1298, %v1302
      %v1334 = vmul.f32 %v1299, %v1302
      %v1335 = vmul.f32 %v1300, %v1302
      %v1336 = vsel %vm847, %v1304, 0.0
      %1337 = vadd.xlane.f32.xlu0 %v1336
      %v1338 = vpop.xlane.xlu0 %1337
      %v1339 = vsel %vm847, %v1305, 0.0
      %1340 = vadd.xlane.f32.xlu0 %v1339
      %v1341 = vpop.xlane.xlu0 %1340
      %v1342 = vsel %vm847, %v1306, 0.0
      %1343 = vadd.xlane.f32.xlu0 %v1342
      %v1344 = vpop.xlane.xlu0 %1343
      %v1345 = vsel %vm847, %v1307, 0.0
      %1346 = vadd.xlane.f32.xlu0 %v1345
      %v1347 = vpop.xlane.xlu0 %1346
      %v1348 = vsel %vm847, %v1308, 0.0
      %1349 = vadd.xlane.f32.xlu0 %v1348
      %v1350 = vpop.xlane.xlu0 %1349
      %v1351 = vsel %vm847, %v1309, 0.0
      %1352 = vadd.xlane.f32.xlu0 %v1351
      %v1353 = vpop.xlane.xlu0 %1352
      %v1354 = vsel %vm847, %v1310, 0.0
      %1355 = vadd.xlane.f32.xlu0 %v1354
      %v1356 = vpop.xlane.xlu0 %1355
      %v1357 = vsel %vm847, %v1311, 0.0
      %1358 = vadd.xlane.f32.xlu0 %v1357
      %v1359 = vpop.xlane.xlu0 %1358
      %v1360 = vsel %vm847, %v1312, 0.0
      %1361 = vadd.xlane.f32.xlu0 %v1360
      %v1362 = vpop.xlane.xlu0 %1361
      %v1363 = vsel %vm847, %v1313, 0.0
      %1364 = vadd.xlane.f32.xlu0 %v1363
      %v1365 = vpop.xlane.xlu0 %1364
      %v1366 = vsel %vm847, %v1314, 0.0
      %1367 = vadd.xlane.f32.xlu0 %v1366
      %v1368 = vpop.xlane.xlu0 %1367
      %v1369 = vsel %vm847, %v1315, 0.0
      %1370 = vadd.xlane.f32.xlu0 %v1369
      %v1371 = vpop.xlane.xlu0 %1370
      %v1372 = vsel %vm847, %v1316, 0.0
      %1373 = vadd.xlane.f32.xlu0 %v1372
      %v1374 = vpop.xlane.xlu0 %1373
      %v1375 = vsel %vm847, %v1317, 0.0
      %1376 = vadd.xlane.f32.xlu0 %v1375
      %v1377 = vpop.xlane.xlu0 %1376
      %v1378 = vsel %vm847, %v1318, 0.0
      %1379 = vadd.xlane.f32.xlu0 %v1378
      %v1380 = vpop.xlane.xlu0 %1379
      %v1381 = vsel %vm847, %v1319, 0.0
      %1382 = vadd.xlane.f32.xlu0 %v1381
      %v1383 = vpop.xlane.xlu0 %1382
      %v1384 = vsel %vm847, %v1320, 0.0
      %1385 = vadd.xlane.f32.xlu0 %v1384
      %v1386 = vpop.xlane.xlu0 %1385
      %v1387 = vsel %vm847, %v1321, 0.0
      %1388 = vadd.xlane.f32.xlu0 %v1387
      %v1389 = vpop.xlane.xlu0 %1388
      %v1390 = vsel %vm847, %v1322, 0.0
      %1391 = vadd.xlane.f32.xlu0 %v1390
      %v1392 = vpop.xlane.xlu0 %1391
      %v1393 = vsel %vm847, %v1323, 0.0
      %1394 = vadd.xlane.f32.xlu0 %v1393
      %v1395 = vpop.xlane.xlu0 %1394
      %v1396 = vsel %vm847, %v1324, 0.0
      %1397 = vadd.xlane.f32.xlu0 %v1396
      %v1398 = vpop.xlane.xlu0 %1397
      %v1399 = vsel %vm847, %v1325, 0.0
      %1400 = vadd.xlane.f32.xlu0 %v1399
      %v1401 = vpop.xlane.xlu0 %1400
      %v1402 = vsel %vm847, %v1326, 0.0
      %1403 = vadd.xlane.f32.xlu0 %v1402
      %v1404 = vpop.xlane.xlu0 %1403
      %v1405 = vsel %vm847, %v1327, 0.0
      %1406 = vadd.xlane.f32.xlu0 %v1405
      %v1407 = vpop.xlane.xlu0 %1406
      %v1408 = vsel %vm847, %v1328, 0.0
      %1409 = vadd.xlane.f32.xlu0 %v1408
      %v1410 = vpop.xlane.xlu0 %1409
      %v1411 = vsel %vm847, %v1329, 0.0
      %1412 = vadd.xlane.f32.xlu0 %v1411
      %v1413 = vpop.xlane.xlu0 %1412
      %v1414 = vsel %vm847, %v1330, 0.0
      %1415 = vadd.xlane.f32.xlu0 %v1414
      %v1416 = vpop.xlane.xlu0 %1415
      %v1417 = vsel %vm847, %v1331, 0.0
      %1418 = vadd.xlane.f32.xlu0 %v1417
      %v1419 = vpop.xlane.xlu0 %1418
      %v1420 = vsel %vm847, %v1332, 0.0
      %1421 = vadd.xlane.f32.xlu0 %v1420
      %v1422 = vpop.xlane.xlu0 %1421
      %v1423 = vsel %vm847, %v1333, 0.0
      %1424 = vadd.xlane.f32.xlu0 %v1423
      %v1425 = vpop.xlane.xlu0 %1424
      %v1426 = vsel %vm847, %v1334, 0.0
      %1427 = vadd.xlane.f32.xlu0 %v1426
      %v1428 = vpop.xlane.xlu0 %1427
      %v1429 = vsel %vm847, %v1335, 0.0
      %1430 = vadd.xlane.f32.xlu0 %v1429
      %v1431 = vpop.xlane.xlu0 %1430
      %vm1432 = vcmp.gt.f32.partialorder %v435, 0.0
      %vm1433 = vcmp.gt.f32.partialorder %v436, 0.0
      %v1466 = vlaneseq
      %v1467 = vand.u32 %v1466, 127
      %v1468 = vlaneseq
      %v1469 = vshrl.u32 %v1468, 7
      %v1470 = vsub.s32 %v1467, %v1469
      %v1471 = vrot.slane %v1338, %v1470
      %v1472 = vadd.s32 %v1467, 4294967288
      %v1473 = vlaneseq
      %v1474 = vshrl.u32 %v1473, 7
      %v1475 = vsub.s32 %v1472, %v1474
      %v1476 = vrot.slane %v1341, %v1475
      %vm1477 = vcmask 130112
      %v1478 = vsel %vm1477, %v1476, %v1471
      %v1479 = vlaneseq
      %v1480 = vshrl.u32 %v1479, 7
      %v1481 = vsub.s32 %v1467, %v1480
      %v1482 = vrot.slane %v1344, %v1481
      %v1483 = vlaneseq
      %v1484 = vshrl.u32 %v1483, 7
      %v1485 = vsub.s32 %v1472, %v1484
      %v1486 = vrot.slane %v1347, %v1485
      %v1487 = vsel %vm1477, %v1486, %v1482
      %v1488 = vlaneseq
      %v1489 = vshrl.u32 %v1488, 7
      %v1490 = vsub.s32 %v1467, %v1489
      %v1491 = vrot.slane %v1350, %v1490
      %v1492 = vlaneseq
      %v1493 = vshrl.u32 %v1492, 7
      %v1494 = vsub.s32 %v1472, %v1493
      %v1495 = vrot.slane %v1353, %v1494
      %v1496 = vsel %vm1477, %v1495, %v1491
      %v1497 = vlaneseq
      %v1498 = vshrl.u32 %v1497, 7
      %v1499 = vsub.s32 %v1467, %v1498
      %v1500 = vrot.slane %v1356, %v1499
      %v1501 = vlaneseq
      %v1502 = vshrl.u32 %v1501, 7
      %v1503 = vsub.s32 %v1472, %v1502
      %v1504 = vrot.slane %v1359, %v1503
      %v1505 = vsel %vm1477, %v1504, %v1500
      %v1506 = vlaneseq
      %v1507 = vshrl.u32 %v1506, 7
      %v1508 = vsub.s32 %v1467, %v1507
      %v1509 = vrot.slane %v1362, %v1508
      %v1510 = vlaneseq
      %v1511 = vshrl.u32 %v1510, 7
      %v1512 = vsub.s32 %v1472, %v1511
      %v1513 = vrot.slane %v1365, %v1512
      %v1514 = vsel %vm1477, %v1513, %v1509
      %v1515 = vlaneseq
      %v1516 = vshrl.u32 %v1515, 7
      %v1517 = vsub.s32 %v1467, %v1516
      %v1518 = vrot.slane %v1368, %v1517
      %v1519 = vlaneseq
      %v1520 = vshrl.u32 %v1519, 7
      %v1521 = vsub.s32 %v1472, %v1520
      %v1522 = vrot.slane %v1371, %v1521
      %v1523 = vsel %vm1477, %v1522, %v1518
      %v1524 = vlaneseq
      %v1525 = vshrl.u32 %v1524, 7
      %v1526 = vsub.s32 %v1467, %v1525
      %v1527 = vrot.slane %v1374, %v1526
      %v1528 = vlaneseq
      %v1529 = vshrl.u32 %v1528, 7
      %v1530 = vsub.s32 %v1472, %v1529
      %v1531 = vrot.slane %v1377, %v1530
      %v1532 = vsel %vm1477, %v1531, %v1527
      %v1533 = vlaneseq
      %v1534 = vshrl.u32 %v1533, 7
      %v1535 = vsub.s32 %v1467, %v1534
      %v1536 = vrot.slane %v1380, %v1535
      %v1537 = vlaneseq
      %v1538 = vshrl.u32 %v1537, 7
      %v1539 = vsub.s32 %v1472, %v1538
      %v1540 = vrot.slane %v1383, %v1539
      %v1541 = vsel %vm1477, %v1540, %v1536
      %v1542 = vlaneseq
      %v1543 = vshrl.u32 %v1542, 7
      %v1544 = vsub.s32 %v1467, %v1543
      %v1545 = vrot.slane %v1386, %v1544
      %v1546 = vlaneseq
      %v1547 = vshrl.u32 %v1546, 7
      %v1548 = vsub.s32 %v1472, %v1547
      %v1549 = vrot.slane %v1389, %v1548
      %v1550 = vsel %vm1477, %v1549, %v1545
      %v1551 = vlaneseq
      %v1552 = vshrl.u32 %v1551, 7
      %v1553 = vsub.s32 %v1467, %v1552
      %v1554 = vrot.slane %v1392, %v1553
      %v1555 = vlaneseq
      %v1556 = vshrl.u32 %v1555, 7
      %v1557 = vsub.s32 %v1472, %v1556
      %v1558 = vrot.slane %v1395, %v1557
      %v1559 = vsel %vm1477, %v1558, %v1554
      %v1560 = vlaneseq
      %v1561 = vshrl.u32 %v1560, 7
      %v1562 = vsub.s32 %v1467, %v1561
      %v1563 = vrot.slane %v1398, %v1562
      %v1564 = vlaneseq
      %v1565 = vshrl.u32 %v1564, 7
      %v1566 = vsub.s32 %v1472, %v1565
      %v1567 = vrot.slane %v1401, %v1566
      %v1568 = vsel %vm1477, %v1567, %v1563
      %v1569 = vlaneseq
      %v1570 = vshrl.u32 %v1569, 7
      %v1571 = vsub.s32 %v1467, %v1570
      %v1572 = vrot.slane %v1404, %v1571
      %v1573 = vlaneseq
      %v1574 = vshrl.u32 %v1573, 7
      %v1575 = vsub.s32 %v1472, %v1574
      %v1576 = vrot.slane %v1407, %v1575
      %v1577 = vsel %vm1477, %v1576, %v1572
      %v1578 = vlaneseq
      %v1579 = vshrl.u32 %v1578, 7
      %v1580 = vsub.s32 %v1467, %v1579
      %v1581 = vrot.slane %v1410, %v1580
      %v1582 = vlaneseq
      %v1583 = vshrl.u32 %v1582, 7
      %v1584 = vsub.s32 %v1472, %v1583
      %v1585 = vrot.slane %v1413, %v1584
      %v1586 = vsel %vm1477, %v1585, %v1581
      %v1587 = vlaneseq
      %v1588 = vshrl.u32 %v1587, 7
      %v1589 = vsub.s32 %v1467, %v1588
      %v1590 = vrot.slane %v1416, %v1589
      %v1591 = vlaneseq
      %v1592 = vshrl.u32 %v1591, 7
      %v1593 = vsub.s32 %v1472, %v1592
      %v1594 = vrot.slane %v1419, %v1593
      %v1595 = vsel %vm1477, %v1594, %v1590
      %v1596 = vlaneseq
      %v1597 = vshrl.u32 %v1596, 7
      %v1598 = vsub.s32 %v1467, %v1597
      %v1599 = vrot.slane %v1422, %v1598
      %v1600 = vlaneseq
      %v1601 = vshrl.u32 %v1600, 7
      %v1602 = vsub.s32 %v1472, %v1601
      %v1603 = vrot.slane %v1425, %v1602
      %v1604 = vsel %vm1477, %v1603, %v1599
      %v1605 = vlaneseq
      %v1606 = vshrl.u32 %v1605, 7
      %v1607 = vsub.s32 %v1467, %v1606
      %v1608 = vrot.slane %v1428, %v1607
      %v1609 = vlaneseq
      %v1610 = vshrl.u32 %v1609, 7
      %v1611 = vsub.s32 %v1472, %v1610
      %v1612 = vrot.slane %v1431, %v1611
      %v1613 = vsel %vm1477, %v1612, %v1608
      %vm1614 = vcmask 1041409
      %v1615 = vsel %vm1614, %v1487, %v1478
      %vm1616 = vcmask 1042434
      %v1617 = vsel %vm1616, %v1496, %v1615
      %vm1618 = vcmask 1043459
      %v1619 = vsel %vm1618, %v1505, %v1617
      %vm1620 = vcmask 1044484
      %v1621 = vsel %vm1620, %v1514, %v1619
      %vm1622 = vcmask 1045509
      %v1623 = vsel %vm1622, %v1523, %v1621
      %vm1624 = vcmask 1046534
      %v1625 = vsel %vm1624, %v1532, %v1623
      %vm1626 = vcmask 1047559
      %v1627 = vsel %vm1626, %v1541, %v1625
      %v1628 = vsel %vm1614, %v1559, %v1550
      %v1629 = vsel %vm1616, %v1568, %v1628
      %v1630 = vsel %vm1618, %v1577, %v1629
      %v1631 = vsel %vm1620, %v1586, %v1630
      %v1632 = vsel %vm1622, %v1595, %v1631
      %v1633 = vsel %vm1624, %v1604, %v1632
      %v1634 = vsel %vm1626, %v1613, %v1633
      %v1637 = vsel %vm1432, %v1627, -1e+30
      %v1638 = vsel %vm1433, %v1634, -1e+30
      %vm1639 = vcmask 130048
      %v1640 = vsel %vm1639, %v1637, -inf
      %1641 = vmax.xlane.f32.xlu0 %v1640
      %v1642 = vpop.xlane.xlu0 %1641
      %v1643 = vsel %vm1639, %v1638, -inf
      %1644 = vmax.xlane.f32.xlu0 %v1643
      %v1645 = vpop.xlane.xlu0 %1644
      %v1646 = vsub.f32 %v1637, %v1642
      %v1647 = vsub.f32 %v1638, %v1645
      %v1648 = vmul.f32 %v1646, 1.442695
      %v1649 = vpow.pop %v1648
      %v1650 = vmul.f32 %v1647, 1.442695
      %v1651 = vpow.pop %v1650
      %v1652 = vsel %vm1639, %v1649, 0.0
      %1653 = vadd.xlane.f32.xlu0 %v1652
      %v1654 = vpop.xlane.xlu0 %1653
      %v1655 = vsel %vm1639, %v1651, 0.0
      %1656 = vadd.xlane.f32.xlu0 %v1655
      %v1657 = vpop.xlane.xlu0 %1656
      %v1658 = vrcp.pop %v1654
      %v1659 = vrcp.pop %v1657
      %v1660 = vmul.f32 %v1649, %v1658
      %v1661 = vmul.f32 %v1651, %v1659
      %1662 = vrot.lane.b32.xlu0 %v845, 32
      %v1663 = vpop.permute.xlu0 %1662
      %v1666 = vsel %vm1639, %v1660, 0
      %v1669 = vsel %vm1639, %v1661, 0
      %1671 = vmatprep.subr.mxu0 0.0
      %1672 = vmatpush1.msra.mxu0 0.0
      %1673 = vmatprep.subr.mxu0 0.0
      %1674 = vmatpush1.msra.mxu0 0.0
      %1675 = vmatprep.subr.mxu0 0.0
      %1676 = vmatpush1.msra.mxu0 0.0
      %1677 = vmatprep.subr.mxu0 0.0
      %1678 = vmatpush1.msra.mxu0 0.0
      %1679 = vmatprep.subr.mxu0 0.0
      %1680 = vmatpush1.msra.mxu0 0.0
      %1681 = vmatprep.subr.mxu0 0.0
      %1682 = vmatpush1.msra.mxu0 0.0
      %1683 = vmatprep.subr.mxu0 0.0
      %1684 = vmatpush1.msra.mxu0 0.0
      %1685 = vmatprep.subr.mxu0 0.0
      %1686 = vmatpush1.msra.mxu0 0.0
      %1687 = vmatprep.subr.mxu0 0.0
      %1688 = vmatpush1.msra.mxu0 0.0
      %1689 = vmatprep.subr.mxu0 0.0
      %1690 = vmatpush1.msra.mxu0 0.0
      %1691 = vmatprep.subr.mxu0 0.0
      %1692 = vmatpush1.msra.mxu0 0.0
      %1693 = vmatprep.subr.mxu0 0.0
      %1694 = vmatpush1.msra.mxu0 0.0
      %1695 = vmatprep.subr.mxu0 0.0
      %1696 = vmatpush1.msra.mxu0 0.0
      %1697 = vmatprep.subr.mxu0 0.0
      %1698 = vmatpush1.msra.mxu0 0.0
      %1699 = vmatprep.subr.mxu0 0.0
      %1700 = vmatpush1.msra.mxu0 %v926
      %1701 = vmatprep.subr.mxu0 0.0
      %1702 = vmatpush1.msra.mxu0 %v921
      %1703 = vmatprep.subr.mxu0 0.0
      %1704 = vmatpush2.msra.mxu0 0.0
      %1705 = vmatprep.subr.mxu0 0.0
      %1706 = vmatpush2.msra.mxu0 0.0
      %1707 = vmatprep.subr.mxu0 0.0
      %1708 = vmatpush2.msra.mxu0 0.0
      %1709 = vmatprep.subr.mxu0 0.0
      %1710 = vmatpush2.msra.mxu0 0.0
      %1711 = vmatprep.subr.mxu0 0.0
      %1712 = vmatpush2.msra.mxu0 0.0
      %1713 = vmatprep.subr.mxu0 0.0
      %1714 = vmatpush2.msra.mxu0 0.0
      %1715 = vmatprep.subr.mxu0 0.0
      %1716 = vmatpush2.msra.mxu0 0.0
      %1717 = vmatprep.subr.mxu0 0.0
      %1718 = vmatpush2.msra.mxu0 0.0
      %1719 = vmatprep.subr.mxu0 0.0
      %1720 = vmatpush2.msra.mxu0 0.0
      %1721 = vmatprep.subr.mxu0 0.0
      %1722 = vmatpush2.msra.mxu0 0.0
      %1723 = vmatprep.subr.mxu0 0.0
      %1724 = vmatpush2.msra.mxu0 0.0
      %1725 = vmatprep.subr.mxu0 0.0
      %1726 = vmatpush2.msra.mxu0 0.0
      %1727 = vmatprep.subr.mxu0 0.0
      %1728 = vmatpush2.msra.mxu0 0.0
      %1729 = vmatprep.subr.mxu0 0.0
      %1730 = vmatpush2.msra.mxu0 0.0
      %1731 = vmatprep.subr.mxu0 0.0
      %1732 = vmatpush2.msra.mxu0 0.0
      %1733 = vmatprep.subr.mxu0 0.0
      %1734 = vmatpush2.msra.mxu0 0.0
      %1735 = vmatprep.mubr.f32.mxu0 0.0
      %1736 = vmatmul.mubr.f32.gmra.mxu0 %v1666
      %v1737 = vpop.f32.mrf.mxu0
      %v1738 = vadd.f32 %v1663, %v1737
      %v1739 = vpop.f32.mrf.mxu0
      %1740 = vmatprep.mubr.f32.mxu0 0.0
      %1741 = vmatmul.mubr.f32.gmra.mxu0 %v1669
      %v1742 = vpop.f32.mrf.mxu0
      %v1743 = vadd.f32 %v1663, %v1742
      %v1744 = vpop.f32.mrf.mxu0
      %1745 = vdwg.mxu0
      %v1746 = vtanh.pop %v1738
      %v1747 = vtanh.pop %v1743
      %s1748 = scalar_lea.vmem %s7, 1
      %v1749 = vld [vmem:[%s1748] sm:$0x1]
      %s1750 = scalar_lea.vmem %s5, 32
      %v1751 = vld [vmem:[%s1750] sm:$0xff]
      %v1752 = vld [vmem:[%s1750 + $0x8] sm:$0xff]
      %v1753 = vld [vmem:[%s1750 + $0x10] sm:$0xff]
      %v1754 = vld [vmem:[%s1750 + $0x18] sm:$0xff]
      %v1756 = vlaneseq
      %v1757 = vshrl.u32 %v1756, 7
      %v1758 = vsub.s32 0, %v1757
      %v1759 = vrot.slane %v1749, %v1758
      %v1762 = vsel %vm847, %v1746, 0
      %v1765 = vsel %vm847, %v1747, 0
      %1767 = vmatprep.subr.mxu0 0.0
      %1768 = vmatpush1.msra.mxu0 0.0
      %1769 = vmatprep.subr.mxu0 0.0
      %1770 = vmatpush1.msra.mxu0 0.0
      %1771 = vmatprep.subr.mxu0 0.0
      %1772 = vmatpush1.msra.mxu0 0.0
      %1773 = vmatprep.subr.mxu0 0.0
      %1774 = vmatpush1.msra.mxu0 0.0
      %1775 = vmatprep.subr.mxu0 0.0
      %1776 = vmatpush1.msra.mxu0 0.0
      %1777 = vmatprep.subr.mxu0 0.0
      %1778 = vmatpush1.msra.mxu0 0.0
      %1779 = vmatprep.subr.mxu0 0.0
      %1780 = vmatpush1.msra.mxu0 0.0
      %1781 = vmatprep.subr.mxu0 0.0
      %1782 = vmatpush1.msra.mxu0 0.0
      %1783 = vmatprep.subr.mxu0 0.0
      %1784 = vmatpush1.msra.mxu0 0.0
      %1785 = vmatprep.subr.mxu0 0.0
      %1786 = vmatpush1.msra.mxu0 0.0
      %1787 = vmatprep.subr.mxu0 0.0
      %1788 = vmatpush1.msra.mxu0 0.0
      %1789 = vmatprep.subr.mxu0 0.0
      %1790 = vmatpush1.msra.mxu0 0.0
      %1791 = vmatprep.subr.mxu0 0.0
      %1792 = vmatpush1.msra.mxu0 %v1754
      %1793 = vmatprep.subr.mxu0 0.0
      %1794 = vmatpush1.msra.mxu0 %v1753
      %1795 = vmatprep.subr.mxu0 0.0
      %1796 = vmatpush1.msra.mxu0 %v1752
      %1797 = vmatprep.subr.mxu0 0.0
      %1798 = vmatpush1.msra.mxu0 %v1751
      %1799 = vmatprep.subr.mxu0 0.0
      %1800 = vmatpush2.msra.mxu0 0.0
      %1801 = vmatprep.subr.mxu0 0.0
      %1802 = vmatpush2.msra.mxu0 0.0
      %1803 = vmatprep.subr.mxu0 0.0
      %1804 = vmatpush2.msra.mxu0 0.0
      %1805 = vmatprep.subr.mxu0 0.0
      %1806 = vmatpush2.msra.mxu0 0.0
      %1807 = vmatprep.subr.mxu0 0.0
      %1808 = vmatpush2.msra.mxu0 0.0
      %1809 = vmatprep.subr.mxu0 0.0
      %1810 = vmatpush2.msra.mxu0 0.0
      %1811 = vmatprep.subr.mxu0 0.0
      %1812 = vmatpush2.msra.mxu0 0.0
      %1813 = vmatprep.subr.mxu0 0.0
      %1814 = vmatpush2.msra.mxu0 0.0
      %1815 = vmatprep.subr.mxu0 0.0
      %1816 = vmatpush2.msra.mxu0 0.0
      %1817 = vmatprep.subr.mxu0 0.0
      %1818 = vmatpush2.msra.mxu0 0.0
      %1819 = vmatprep.subr.mxu0 0.0
      %1820 = vmatpush2.msra.mxu0 0.0
      %1821 = vmatprep.subr.mxu0 0.0
      %1822 = vmatpush2.msra.mxu0 0.0
      %1823 = vmatprep.subr.mxu0 0.0
      %1824 = vmatpush2.msra.mxu0 0.0
      %1825 = vmatprep.subr.mxu0 0.0
      %1826 = vmatpush2.msra.mxu0 0.0
      %1827 = vmatprep.subr.mxu0 0.0
      %1828 = vmatpush2.msra.mxu0 0.0
      %1829 = vmatprep.subr.mxu0 0.0
      %1830 = vmatpush2.msra.mxu0 0.0
      %1831 = vmatprep.mubr.f32.mxu0 0.0
      %1832 = vmatmul.mubr.f32.gmra.mxu0 %v1762
      %v1833 = vpop.f32.mrf.mxu0
      %v1834 = vadd.f32 %v1759, %v1833
      %v1835 = vpop.f32.mrf.mxu0
      %1836 = vmatprep.mubr.f32.mxu0 0.0
      %1837 = vmatmul.mubr.f32.gmra.mxu0 %v1765
      %v1838 = vpop.f32.mrf.mxu0
      %v1839 = vadd.f32 %v1759, %v1838
      %v1840 = vpop.f32.mrf.mxu0
      %1841 = vdwg.mxu0
      %1844 = vrot.lane.b32.xlu0 %v1834, 32
      %v1845 = vpop.permute.xlu0 %1844
      %1846 = vrot.lane.b32.xlu0 %v1839, 32
      %v1847 = vpop.permute.xlu0 %1846
      %v1850 = vadd.f32 %v646, %v1845
      %v1851 = vadd.f32 %v652, %v1847
      %v1852 = vadd.f32 %v658, %v1845
      %v1853 = vadd.f32 %v664, %v1847
      %v1854 = vadd.f32 %v670, %v1845
      %v1855 = vadd.f32 %v676, %v1847
      %v1856 = vadd.f32 %v682, %v1845
      %v1857 = vadd.f32 %v688, %v1847
      %v1858 = vadd.f32 %v694, %v1845
      %v1859 = vadd.f32 %v700, %v1847
      %v1860 = vadd.f32 %v706, %v1845
      %v1861 = vadd.f32 %v712, %v1847
      %v1862 = vadd.f32 %v718, %v1845
      %v1863 = vadd.f32 %v724, %v1847
      %v1864 = vadd.f32 %v730, %v1845
      %v1865 = vadd.f32 %v736, %v1847
      %v1866 = vadd.f32 %v742, %v1845
      %v1867 = vadd.f32 %v748, %v1847
      %v1868 = vadd.f32 %v754, %v1845
      %v1869 = vadd.f32 %v760, %v1847
      %v1870 = vadd.f32 %v766, %v1845
      %v1871 = vadd.f32 %v772, %v1847
      %v1872 = vadd.f32 %v778, %v1845
      %v1873 = vadd.f32 %v784, %v1847
      %v1874 = vadd.f32 %v790, %v1845
      %v1875 = vadd.f32 %v796, %v1847
      %v1876 = vadd.f32 %v802, %v1845
      %v1877 = vadd.f32 %v808, %v1847
      %v1878 = vadd.f32 %v814, %v1845
      %v1879 = vadd.f32 %v820, %v1847
      %v1880 = vadd.f32 %v826, %v1845
      %v1881 = vadd.f32 %v832, %v1847
      %v1882 = vcombine.high %v1834, %v1834
      %v1884 = vunpack.c.l.s4 1966171168
      %v1885 = vunpack.c.0.s8 %v1884
      %v1886 = vlaneseq
      %v1887 = vshrl.u32 %v1886, 7
      %v1888 = vsub.s32 %v1885, %v1887
      %v1889 = vrot.slane %v1834, %v1888
      %v1891 = vunpack.c.l.s4 1966171168
      %v1892 = vunpack.c.0.s8 %v1891
      %v1893 = vlaneseq
      %v1894 = vshrl.u32 %v1893, 7
      %v1895 = vsub.s32 %v1892, %v1894
      %v1896 = vrot.slane %v1882, %v1895
      %v1897 = vcombine.high %v1889, %v1889
      %v1898 = vcombine.high %v1896, %v1896
      %v1900 = vunpack.c.l.s4 1966171168
      %v1901 = vunpack.c.0.s8 %v1900
      %v1902 = vlaneseq
      %v1903 = vshrl.u32 %v1902, 7
      %v1904 = vsub.s32 %v1901, %v1903
      %v1905 = vrot.slane %v1889, %v1904
      %v1907 = vunpack.c.l.s4 1966171168
      %v1908 = vunpack.c.0.s8 %v1907
      %v1909 = vlaneseq
      %v1910 = vshrl.u32 %v1909, 7
      %v1911 = vsub.s32 %v1908, %v1910
      %v1912 = vrot.slane %v1896, %v1911
      %v1914 = vunpack.c.l.s4 1966171168
      %v1915 = vunpack.c.0.s8 %v1914
      %v1916 = vlaneseq
      %v1917 = vshrl.u32 %v1916, 7
      %v1918 = vsub.s32 %v1915, %v1917
      %v1919 = vrot.slane %v1897, %v1918
      %v1921 = vunpack.c.l.s4 1966171168
      %v1922 = vunpack.c.0.s8 %v1921
      %v1923 = vlaneseq
      %v1924 = vshrl.u32 %v1923, 7
      %v1925 = vsub.s32 %v1922, %v1924
      %v1926 = vrot.slane %v1898, %v1925
      %v1927 = vcombine.high %v1905, %v1905
      %v1928 = vcombine.high %v1912, %v1912
      %v1929 = vcombine.high %v1919, %v1919
      %v1930 = vcombine.high %v1926, %v1926
      %v1931 = vcombine.high %v1839, %v1839
      %v1933 = vunpack.c.l.s4 1966171168
      %v1934 = vunpack.c.0.s8 %v1933
      %v1935 = vlaneseq
      %v1936 = vshrl.u32 %v1935, 7
      %v1937 = vsub.s32 %v1934, %v1936
      %v1938 = vrot.slane %v1839, %v1937
      %v1940 = vunpack.c.l.s4 1966171168
      %v1941 = vunpack.c.0.s8 %v1940
      %v1942 = vlaneseq
      %v1943 = vshrl.u32 %v1942, 7
      %v1944 = vsub.s32 %v1941, %v1943
      %v1945 = vrot.slane %v1931, %v1944
      %v1946 = vcombine.high %v1938, %v1938
      %v1947 = vcombine.high %v1945, %v1945
      %v1949 = vunpack.c.l.s4 1966171168
      %v1950 = vunpack.c.0.s8 %v1949
      %v1951 = vlaneseq
      %v1952 = vshrl.u32 %v1951, 7
      %v1953 = vsub.s32 %v1950, %v1952
      %v1954 = vrot.slane %v1938, %v1953
      %v1956 = vunpack.c.l.s4 1966171168
      %v1957 = vunpack.c.0.s8 %v1956
      %v1958 = vlaneseq
      %v1959 = vshrl.u32 %v1958, 7
      %v1960 = vsub.s32 %v1957, %v1959
      %v1961 = vrot.slane %v1945, %v1960
      %v1963 = vunpack.c.l.s4 1966171168
      %v1964 = vunpack.c.0.s8 %v1963
      %v1965 = vlaneseq
      %v1966 = vshrl.u32 %v1965, 7
      %v1967 = vsub.s32 %v1964, %v1966
      %v1968 = vrot.slane %v1946, %v1967
      %v1970 = vunpack.c.l.s4 1966171168
      %v1971 = vunpack.c.0.s8 %v1970
      %v1972 = vlaneseq
      %v1973 = vshrl.u32 %v1972, 7
      %v1974 = vsub.s32 %v1971, %v1973
      %v1975 = vrot.slane %v1947, %v1974
      %v1976 = vcombine.high %v1954, %v1954
      %v1977 = vcombine.high %v1961, %v1961
      %v1978 = vcombine.high %v1968, %v1968
      %v1979 = vcombine.high %v1975, %v1975
      %v1980 = vlaneseq
      %v1981 = vshrl.u32 %v1980, 7
      %v1982 = vsub.s32 0, %v1981
      %v1983 = vrot.slane %v1905, %v1982
      %v1984 = vlaneseq
      %v1985 = vshrl.u32 %v1984, 7
      %v1986 = vsub.s32 0, %v1985
      %v1987 = vrot.slane %v1919, %v1986
      %v1988 = vlaneseq
      %v1989 = vshrl.u32 %v1988, 7
      %v1990 = vsub.s32 0, %v1989
      %v1991 = vrot.slane %v1927, %v1990
      %v1992 = vlaneseq
      %v1993 = vshrl.u32 %v1992, 7
      %v1994 = vsub.s32 0, %v1993
      %v1995 = vrot.slane %v1929, %v1994
      %v1996 = vlaneseq
      %v1997 = vshrl.u32 %v1996, 7
      %v1998 = vsub.s32 0, %v1997
      %v1999 = vrot.slane %v1912, %v1998
      %v2000 = vlaneseq
      %v2001 = vshrl.u32 %v2000, 7
      %v2002 = vsub.s32 0, %v2001
      %v2003 = vrot.slane %v1926, %v2002
      %v2004 = vlaneseq
      %v2005 = vshrl.u32 %v2004, 7
      %v2006 = vsub.s32 0, %v2005
      %v2007 = vrot.slane %v1928, %v2006
      %v2008 = vlaneseq
      %v2009 = vshrl.u32 %v2008, 7
      %v2010 = vsub.s32 0, %v2009
      %v2011 = vrot.slane %v1930, %v2010
      %v2012 = vlaneseq
      %v2013 = vshrl.u32 %v2012, 7
      %v2014 = vsub.s32 0, %v2013
      %v2015 = vrot.slane %v1954, %v2014
      %v2016 = vlaneseq
      %v2017 = vshrl.u32 %v2016, 7
      %v2018 = vsub.s32 0, %v2017
      %v2019 = vrot.slane %v1968, %v2018
      %v2020 = vlaneseq
      %v2021 = vshrl.u32 %v2020, 7
      %v2022 = vsub.s32 0, %v2021
      %v2023 = vrot.slane %v1976, %v2022
      %v2024 = vlaneseq
      %v2025 = vshrl.u32 %v2024, 7
      %v2026 = vsub.s32 0, %v2025
      %v2027 = vrot.slane %v1978, %v2026
      %v2028 = vlaneseq
      %v2029 = vshrl.u32 %v2028, 7
      %v2030 = vsub.s32 0, %v2029
      %v2031 = vrot.slane %v1961, %v2030
      %v2032 = vlaneseq
      %v2033 = vshrl.u32 %v2032, 7
      %v2034 = vsub.s32 0, %v2033
      %v2035 = vrot.slane %v1975, %v2034
      %v2036 = vlaneseq
      %v2037 = vshrl.u32 %v2036, 7
      %v2038 = vsub.s32 0, %v2037
      %v2039 = vrot.slane %v1977, %v2038
      %v2040 = vlaneseq
      %v2041 = vshrl.u32 %v2040, 7
      %v2042 = vsub.s32 0, %v2041
      %v2043 = vrot.slane %v1979, %v2042
      %v2060 = vadd.f32 %v1850, %v1983
      %v2061 = vadd.f32 %v1851, %v1983
      %v2062 = vadd.f32 %v1852, %v1987
      %v2063 = vadd.f32 %v1853, %v1987
      %v2064 = vadd.f32 %v1854, %v1991
      %v2065 = vadd.f32 %v1855, %v1991
      %v2066 = vadd.f32 %v1856, %v1995
      %v2067 = vadd.f32 %v1857, %v1995
      %v2068 = vadd.f32 %v1858, %v1999
      %v2069 = vadd.f32 %v1859, %v1999
      %v2070 = vadd.f32 %v1860, %v2003
      %v2071 = vadd.f32 %v1861, %v2003
      %v2072 = vadd.f32 %v1862, %v2007
      %v2073 = vadd.f32 %v1863, %v2007
      %v2074 = vadd.f32 %v1864, %v2011
      %v2075 = vadd.f32 %v1865, %v2011
      %v2076 = vadd.f32 %v1866, %v2015
      %v2077 = vadd.f32 %v1867, %v2015
      %v2078 = vadd.f32 %v1868, %v2019
      %v2079 = vadd.f32 %v1869, %v2019
      %v2080 = vadd.f32 %v1870, %v2023
      %v2081 = vadd.f32 %v1871, %v2023
      %v2082 = vadd.f32 %v1872, %v2027
      %v2083 = vadd.f32 %v1873, %v2027
      %v2084 = vadd.f32 %v1874, %v2031
      %v2085 = vadd.f32 %v1875, %v2031
      %v2086 = vadd.f32 %v1876, %v2035
      %v2087 = vadd.f32 %v1877, %v2035
      %v2088 = vadd.f32 %v1878, %v2039
      %v2089 = vadd.f32 %v1879, %v2039
      %v2090 = vadd.f32 %v1880, %v2043
      %v2091 = vadd.f32 %v1881, %v2043
      %vm2092 = vcmp.gt.f32.partialorder %v2060, 0.0
      %vm2093 = vcmp.gt.f32.partialorder %v2061, 0.0
      %vm2094 = vcmp.gt.f32.partialorder %v2062, 0.0
      %vm2095 = vcmp.gt.f32.partialorder %v2063, 0.0
      %vm2096 = vcmp.gt.f32.partialorder %v2064, 0.0
      %vm2097 = vcmp.gt.f32.partialorder %v2065, 0.0
      %vm2098 = vcmp.gt.f32.partialorder %v2066, 0.0
      %vm2099 = vcmp.gt.f32.partialorder %v2067, 0.0
      %vm2100 = vcmp.gt.f32.partialorder %v2068, 0.0
      %vm2101 = vcmp.gt.f32.partialorder %v2069, 0.0
      %vm2102 = vcmp.gt.f32.partialorder %v2070, 0.0
      %vm2103 = vcmp.gt.f32.partialorder %v2071, 0.0
      %vm2104 = vcmp.gt.f32.partialorder %v2072, 0.0
      %vm2105 = vcmp.gt.f32.partialorder %v2073, 0.0
      %vm2106 = vcmp.gt.f32.partialorder %v2074, 0.0
      %vm2107 = vcmp.gt.f32.partialorder %v2075, 0.0
      %vm2108 = vcmp.gt.f32.partialorder %v2076, 0.0
      %vm2109 = vcmp.gt.f32.partialorder %v2077, 0.0
      %vm2110 = vcmp.gt.f32.partialorder %v2078, 0.0
      %vm2111 = vcmp.gt.f32.partialorder %v2079, 0.0
      %vm2112 = vcmp.gt.f32.partialorder %v2080, 0.0
      %vm2113 = vcmp.gt.f32.partialorder %v2081, 0.0
      %vm2114 = vcmp.gt.f32.partialorder %v2082, 0.0
      %vm2115 = vcmp.gt.f32.partialorder %v2083, 0.0
      %vm2116 = vcmp.gt.f32.partialorder %v2084, 0.0
      %vm2117 = vcmp.gt.f32.partialorder %v2085, 0.0
      %vm2118 = vcmp.gt.f32.partialorder %v2086, 0.0
      %vm2119 = vcmp.gt.f32.partialorder %v2087, 0.0
      %vm2120 = vcmp.gt.f32.partialorder %v2088, 0.0
      %vm2121 = vcmp.gt.f32.partialorder %v2089, 0.0
      %vm2122 = vcmp.gt.f32.partialorder %v2090, 0.0
      %vm2123 = vcmp.gt.f32.partialorder %v2091, 0.0
      %v2124 = vmul.f32 %v2060, 0.2
      %v2125 = vmul.f32 %v2061, 0.2
      %v2126 = vmul.f32 %v2062, 0.2
      %v2127 = vmul.f32 %v2063, 0.2
      %v2128 = vmul.f32 %v2064, 0.2
      %v2129 = vmul.f32 %v2065, 0.2
      %v2130 = vmul.f32 %v2066, 0.2
      %v2131 = vmul.f32 %v2067, 0.2
      %v2132 = vmul.f32 %v2068, 0.2
      %v2133 = vmul.f32 %v2069, 0.2
      %v2134 = vmul.f32 %v2070, 0.2
      %v2135 = vmul.f32 %v2071, 0.2
      %v2136 = vmul.f32 %v2072, 0.2
      %v2137 = vmul.f32 %v2073, 0.2
      %v2138 = vmul.f32 %v2074, 0.2
      %v2139 = vmul.f32 %v2075, 0.2
      %v2140 = vmul.f32 %v2076, 0.2
      %v2141 = vmul.f32 %v2077, 0.2
      %v2142 = vmul.f32 %v2078, 0.2
      %v2143 = vmul.f32 %v2079, 0.2
      %v2144 = vmul.f32 %v2080, 0.2
      %v2145 = vmul.f32 %v2081, 0.2
      %v2146 = vmul.f32 %v2082, 0.2
      %v2147 = vmul.f32 %v2083, 0.2
      %v2148 = vmul.f32 %v2084, 0.2
      %v2149 = vmul.f32 %v2085, 0.2
      %v2150 = vmul.f32 %v2086, 0.2
      %v2151 = vmul.f32 %v2087, 0.2
      %v2152 = vmul.f32 %v2088, 0.2
      %v2153 = vmul.f32 %v2089, 0.2
      %v2154 = vmul.f32 %v2090, 0.2
      %v2155 = vmul.f32 %v2091, 0.2
      %v2156 = vsel %vm2092, %v2060, %v2124
      %v2157 = vsel %vm2093, %v2061, %v2125
      %v2158 = vsel %vm2094, %v2062, %v2126
      %v2159 = vsel %vm2095, %v2063, %v2127
      %v2160 = vsel %vm2096, %v2064, %v2128
      %v2161 = vsel %vm2097, %v2065, %v2129
      %v2162 = vsel %vm2098, %v2066, %v2130
      %v2163 = vsel %vm2099, %v2067, %v2131
      %v2164 = vsel %vm2100, %v2068, %v2132
      %v2165 = vsel %vm2101, %v2069, %v2133
      %v2166 = vsel %vm2102, %v2070, %v2134
      %v2167 = vsel %vm2103, %v2071, %v2135
      %v2168 = vsel %vm2104, %v2072, %v2136
      %v2169 = vsel %vm2105, %v2073, %v2137
      %v2170 = vsel %vm2106, %v2074, %v2138
      %v2171 = vsel %vm2107, %v2075, %v2139
      %v2172 = vsel %vm2108, %v2076, %v2140
      %v2173 = vsel %vm2109, %v2077, %v2141
      %v2174 = vsel %vm2110, %v2078, %v2142
      %v2175 = vsel %vm2111, %v2079, %v2143
      %v2176 = vsel %vm2112, %v2080, %v2144
      %v2177 = vsel %vm2113, %v2081, %v2145
      %v2178 = vsel %vm2114, %v2082, %v2146
      %v2179 = vsel %vm2115, %v2083, %v2147
      %v2180 = vsel %vm2116, %v2084, %v2148
      %v2181 = vsel %vm2117, %v2085, %v2149
      %v2182 = vsel %vm2118, %v2086, %v2150
      %v2183 = vsel %vm2119, %v2087, %v2151
      %v2184 = vsel %vm2120, %v2088, %v2152
      %v2185 = vsel %vm2121, %v2089, %v2153
      %v2186 = vsel %vm2122, %v2090, %v2154
      %v2187 = vsel %vm2123, %v2091, %v2155
      %2188 = vrot.lane.b32.xlu0 %v1759, 96
      %v2189 = vpop.permute.xlu0 %2188
      %v2191 = vmul.f32 %v2156, %v2189
      %v2192 = vmul.f32 %v2157, %v2189
      %v2193 = vmul.f32 %v2158, %v2189
      %v2194 = vmul.f32 %v2159, %v2189
      %v2195 = vmul.f32 %v2160, %v2189
      %v2196 = vmul.f32 %v2161, %v2189
      %v2197 = vmul.f32 %v2162, %v2189
      %v2198 = vmul.f32 %v2163, %v2189
      %v2199 = vmul.f32 %v2164, %v2189
      %v2200 = vmul.f32 %v2165, %v2189
      %v2201 = vmul.f32 %v2166, %v2189
      %v2202 = vmul.f32 %v2167, %v2189
      %v2203 = vmul.f32 %v2168, %v2189
      %v2204 = vmul.f32 %v2169, %v2189
      %v2205 = vmul.f32 %v2170, %v2189
      %v2206 = vmul.f32 %v2171, %v2189
      %v2207 = vmul.f32 %v2172, %v2189
      %v2208 = vmul.f32 %v2173, %v2189
      %v2209 = vmul.f32 %v2174, %v2189
      %v2210 = vmul.f32 %v2175, %v2189
      %v2211 = vmul.f32 %v2176, %v2189
      %v2212 = vmul.f32 %v2177, %v2189
      %v2213 = vmul.f32 %v2178, %v2189
      %v2214 = vmul.f32 %v2179, %v2189
      %v2215 = vmul.f32 %v2180, %v2189
      %v2216 = vmul.f32 %v2181, %v2189
      %v2217 = vmul.f32 %v2182, %v2189
      %v2218 = vmul.f32 %v2183, %v2189
      %v2219 = vmul.f32 %v2184, %v2189
      %v2220 = vmul.f32 %v2185, %v2189
      %v2221 = vmul.f32 %v2186, %v2189
      %v2222 = vmul.f32 %v2187, %v2189
      %2255 = vrot.lane.b32.xlu0 %v2191, 96
      %v2256 = vpop.permute.xlu0 %2255
      %2257 = vrot.lane.b32.xlu0 %v2192, 96
      %v2258 = vpop.permute.xlu0 %2257
      %2259 = vrot.lane.b32.xlu0 %v2193, 96
      %v2260 = vpop.permute.xlu0 %2259
      %2261 = vrot.lane.b32.xlu0 %v2194, 96
      %v2262 = vpop.permute.xlu0 %2261
      %2263 = vrot.lane.b32.xlu0 %v2195, 96
      %v2264 = vpop.permute.xlu0 %2263
      %2265 = vrot.lane.b32.xlu0 %v2196, 96
      %v2266 = vpop.permute.xlu0 %2265
      %2267 = vrot.lane.b32.xlu0 %v2197, 96
      %v2268 = vpop.permute.xlu0 %2267
      %2269 = vrot.lane.b32.xlu0 %v2198, 96
      %v2270 = vpop.permute.xlu0 %2269
      %2271 = vrot.lane.b32.xlu0 %v2199, 96
      %v2272 = vpop.permute.xlu0 %2271
      %2273 = vrot.lane.b32.xlu0 %v2200, 96
      %v2274 = vpop.permute.xlu0 %2273
      %2275 = vrot.lane.b32.xlu0 %v2201, 96
      %v2276 = vpop.permute.xlu0 %2275
      %2277 = vrot.lane.b32.xlu0 %v2202, 96
      %v2278 = vpop.permute.xlu0 %2277
      %2279 = vrot.lane.b32.xlu0 %v2203, 96
      %v2280 = vpop.permute.xlu0 %2279
      %2281 = vrot.lane.b32.xlu0 %v2204, 96
      %v2282 = vpop.permute.xlu0 %2281
      %2283 = vrot.lane.b32.xlu0 %v2205, 96
      %v2284 = vpop.permute.xlu0 %2283
      %2285 = vrot.lane.b32.xlu0 %v2206, 96
      %v2286 = vpop.permute.xlu0 %2285
      %2287 = vrot.lane.b32.xlu0 %v2207, 96
      %v2288 = vpop.permute.xlu0 %2287
      %2289 = vrot.lane.b32.xlu0 %v2208, 96
      %v2290 = vpop.permute.xlu0 %2289
      %2291 = vrot.lane.b32.xlu0 %v2209, 96
      %v2292 = vpop.permute.xlu0 %2291
      %2293 = vrot.lane.b32.xlu0 %v2210, 96
      %v2294 = vpop.permute.xlu0 %2293
      %2295 = vrot.lane.b32.xlu0 %v2211, 96
      %v2296 = vpop.permute.xlu0 %2295
      %2297 = vrot.lane.b32.xlu0 %v2212, 96
      %v2298 = vpop.permute.xlu0 %2297
      %2299 = vrot.lane.b32.xlu0 %v2213, 96
      %v2300 = vpop.permute.xlu0 %2299
      %2301 = vrot.lane.b32.xlu0 %v2214, 96
      %v2302 = vpop.permute.xlu0 %2301
      %2303 = vrot.lane.b32.xlu0 %v2215, 96
      %v2304 = vpop.permute.xlu0 %2303
      %2305 = vrot.lane.b32.xlu0 %v2216, 96
      %v2306 = vpop.permute.xlu0 %2305
      %2307 = vrot.lane.b32.xlu0 %v2217, 96
      %v2308 = vpop.permute.xlu0 %2307
      %2309 = vrot.lane.b32.xlu0 %v2218, 96
      %v2310 = vpop.permute.xlu0 %2309
      %2311 = vrot.lane.b32.xlu0 %v2219, 96
      %v2312 = vpop.permute.xlu0 %2311
      %2313 = vrot.lane.b32.xlu0 %v2220, 96
      %v2314 = vpop.permute.xlu0 %2313
      %2315 = vrot.lane.b32.xlu0 %v2221, 96
      %v2316 = vpop.permute.xlu0 %2315
      %2317 = vrot.lane.b32.xlu0 %v2222, 96
      %v2318 = vpop.permute.xlu0 %2317
      %v2351 = vsel %vm847, %v2256, 0.0
      %2352 = vadd.xlane.f32.xlu0 %v2351
      %v2353 = vpop.xlane.xlu0 %2352
      %v2354 = vsel %vm847, %v2258, 0.0
      %2355 = vadd.xlane.f32.xlu0 %v2354
      %v2356 = vpop.xlane.xlu0 %2355
      %v2357 = vsel %vm847, %v2260, 0.0
      %2358 = vadd.xlane.f32.xlu0 %v2357
      %v2359 = vpop.xlane.xlu0 %2358
      %v2360 = vsel %vm847, %v2262, 0.0
      %2361 = vadd.xlane.f32.xlu0 %v2360
      %v2362 = vpop.xlane.xlu0 %2361
      %v2363 = vsel %vm847, %v2264, 0.0
      %2364 = vadd.xlane.f32.xlu0 %v2363
      %v2365 = vpop.xlane.xlu0 %2364
      %v2366 = vsel %vm847, %v2266, 0.0
      %2367 = vadd.xlane.f32.xlu0 %v2366
      %v2368 = vpop.xlane.xlu0 %2367
      %v2369 = vsel %vm847, %v2268, 0.0
      %2370 = vadd.xlane.f32.xlu0 %v2369
      %v2371 = vpop.xlane.xlu0 %2370
      %v2372 = vsel %vm847, %v2270, 0.0
      %2373 = vadd.xlane.f32.xlu0 %v2372
      %v2374 = vpop.xlane.xlu0 %2373
      %v2375 = vsel %vm847, %v2272, 0.0
      %2376 = vadd.xlane.f32.xlu0 %v2375
      %v2377 = vpop.xlane.xlu0 %2376
      %v2378 = vsel %vm847, %v2274, 0.0
      %2379 = vadd.xlane.f32.xlu0 %v2378
      %v2380 = vpop.xlane.xlu0 %2379
      %v2381 = vsel %vm847, %v2276, 0.0
      %2382 = vadd.xlane.f32.xlu0 %v2381
      %v2383 = vpop.xlane.xlu0 %2382
      %v2384 = vsel %vm847, %v2278, 0.0
      %2385 = vadd.xlane.f32.xlu0 %v2384
      %v2386 = vpop.xlane.xlu0 %2385
      %v2387 = vsel %vm847, %v2280, 0.0
      %2388 = vadd.xlane.f32.xlu0 %v2387
      %v2389 = vpop.xlane.xlu0 %2388
      %v2390 = vsel %vm847, %v2282, 0.0
      %2391 = vadd.xlane.f32.xlu0 %v2390
      %v2392 = vpop.xlane.xlu0 %2391
      %v2393 = vsel %vm847, %v2284, 0.0
      %2394 = vadd.xlane.f32.xlu0 %v2393
      %v2395 = vpop.xlane.xlu0 %2394
      %v2396 = vsel %vm847, %v2286, 0.0
      %2397 = vadd.xlane.f32.xlu0 %v2396
      %v2398 = vpop.xlane.xlu0 %2397
      %v2399 = vsel %vm847, %v2288, 0.0
      %2400 = vadd.xlane.f32.xlu0 %v2399
      %v2401 = vpop.xlane.xlu0 %2400
      %v2402 = vsel %vm847, %v2290, 0.0
      %2403 = vadd.xlane.f32.xlu0 %v2402
      %v2404 = vpop.xlane.xlu0 %2403
      %v2405 = vsel %vm847, %v2292, 0.0
      %2406 = vadd.xlane.f32.xlu0 %v2405
      %v2407 = vpop.xlane.xlu0 %2406
      %v2408 = vsel %vm847, %v2294, 0.0
      %2409 = vadd.xlane.f32.xlu0 %v2408
      %v2410 = vpop.xlane.xlu0 %2409
      %v2411 = vsel %vm847, %v2296, 0.0
      %2412 = vadd.xlane.f32.xlu0 %v2411
      %v2413 = vpop.xlane.xlu0 %2412
      %v2414 = vsel %vm847, %v2298, 0.0
      %2415 = vadd.xlane.f32.xlu0 %v2414
      %v2416 = vpop.xlane.xlu0 %2415
      %v2417 = vsel %vm847, %v2300, 0.0
      %2418 = vadd.xlane.f32.xlu0 %v2417
      %v2419 = vpop.xlane.xlu0 %2418
      %v2420 = vsel %vm847, %v2302, 0.0
      %2421 = vadd.xlane.f32.xlu0 %v2420
      %v2422 = vpop.xlane.xlu0 %2421
      %v2423 = vsel %vm847, %v2304, 0.0
      %2424 = vadd.xlane.f32.xlu0 %v2423
      %v2425 = vpop.xlane.xlu0 %2424
      %v2426 = vsel %vm847, %v2306, 0.0
      %2427 = vadd.xlane.f32.xlu0 %v2426
      %v2428 = vpop.xlane.xlu0 %2427
      %v2429 = vsel %vm847, %v2308, 0.0
      %2430 = vadd.xlane.f32.xlu0 %v2429
      %v2431 = vpop.xlane.xlu0 %2430
      %v2432 = vsel %vm847, %v2310, 0.0
      %2433 = vadd.xlane.f32.xlu0 %v2432
      %v2434 = vpop.xlane.xlu0 %2433
      %v2435 = vsel %vm847, %v2312, 0.0
      %2436 = vadd.xlane.f32.xlu0 %v2435
      %v2437 = vpop.xlane.xlu0 %2436
      %v2438 = vsel %vm847, %v2314, 0.0
      %2439 = vadd.xlane.f32.xlu0 %v2438
      %v2440 = vpop.xlane.xlu0 %2439
      %v2441 = vsel %vm847, %v2316, 0.0
      %2442 = vadd.xlane.f32.xlu0 %v2441
      %v2443 = vpop.xlane.xlu0 %2442
      %v2444 = vsel %vm847, %v2318, 0.0
      %2445 = vadd.xlane.f32.xlu0 %v2444
      %v2446 = vpop.xlane.xlu0 %2445
      %v2479 = vlaneseq
      %v2480 = vshrl.u32 %v2479, 7
      %v2481 = vsub.s32 %v1467, %v2480
      %v2482 = vrot.slane %v2353, %v2481
      %v2483 = vlaneseq
      %v2484 = vshrl.u32 %v2483, 7
      %v2485 = vsub.s32 %v1472, %v2484
      %v2486 = vrot.slane %v2356, %v2485
      %v2487 = vsel %vm1477, %v2486, %v2482
      %v2488 = vlaneseq
      %v2489 = vshrl.u32 %v2488, 7
      %v2490 = vsub.s32 %v1467, %v2489
      %v2491 = vrot.slane %v2359, %v2490
      %v2492 = vlaneseq
      %v2493 = vshrl.u32 %v2492, 7
      %v2494 = vsub.s32 %v1472, %v2493
      %v2495 = vrot.slane %v2362, %v2494
      %v2496 = vsel %vm1477, %v2495, %v2491
      %v2497 = vlaneseq
      %v2498 = vshrl.u32 %v2497, 7
      %v2499 = vsub.s32 %v1467, %v2498
      %v2500 = vrot.slane %v2365, %v2499
      %v2501 = vlaneseq
      %v2502 = vshrl.u32 %v2501, 7
      %v2503 = vsub.s32 %v1472, %v2502
      %v2504 = vrot.slane %v2368, %v2503
      %v2505 = vsel %vm1477, %v2504, %v2500
      %v2506 = vlaneseq
      %v2507 = vshrl.u32 %v2506, 7
      %v2508 = vsub.s32 %v1467, %v2507
      %v2509 = vrot.slane %v2371, %v2508
      %v2510 = vlaneseq
      %v2511 = vshrl.u32 %v2510, 7
      %v2512 = vsub.s32 %v1472, %v2511
      %v2513 = vrot.slane %v2374, %v2512
      %v2514 = vsel %vm1477, %v2513, %v2509
      %v2515 = vlaneseq
      %v2516 = vshrl.u32 %v2515, 7
      %v2517 = vsub.s32 %v1467, %v2516
      %v2518 = vrot.slane %v2377, %v2517
      %v2519 = vlaneseq
      %v2520 = vshrl.u32 %v2519, 7
      %v2521 = vsub.s32 %v1472, %v2520
      %v2522 = vrot.slane %v2380, %v2521
      %v2523 = vsel %vm1477, %v2522, %v2518
      %v2524 = vlaneseq
      %v2525 = vshrl.u32 %v2524, 7
      %v2526 = vsub.s32 %v1467, %v2525
      %v2527 = vrot.slane %v2383, %v2526
      %v2528 = vlaneseq
      %v2529 = vshrl.u32 %v2528, 7
      %v2530 = vsub.s32 %v1472, %v2529
      %v2531 = vrot.slane %v2386, %v2530
      %v2532 = vsel %vm1477, %v2531, %v2527
      %v2533 = vlaneseq
      %v2534 = vshrl.u32 %v2533, 7
      %v2535 = vsub.s32 %v1467, %v2534
      %v2536 = vrot.slane %v2389, %v2535
      %v2537 = vlaneseq
      %v2538 = vshrl.u32 %v2537, 7
      %v2539 = vsub.s32 %v1472, %v2538
      %v2540 = vrot.slane %v2392, %v2539
      %v2541 = vsel %vm1477, %v2540, %v2536
      %v2542 = vlaneseq
      %v2543 = vshrl.u32 %v2542, 7
      %v2544 = vsub.s32 %v1467, %v2543
      %v2545 = vrot.slane %v2395, %v2544
      %v2546 = vlaneseq
      %v2547 = vshrl.u32 %v2546, 7
      %v2548 = vsub.s32 %v1472, %v2547
      %v2549 = vrot.slane %v2398, %v2548
      %v2550 = vsel %vm1477, %v2549, %v2545
      %v2551 = vlaneseq
      %v2552 = vshrl.u32 %v2551, 7
      %v2553 = vsub.s32 %v1467, %v2552
      %v2554 = vrot.slane %v2401, %v2553
      %v2555 = vlaneseq
      %v2556 = vshrl.u32 %v2555, 7
      %v2557 = vsub.s32 %v1472, %v2556
      %v2558 = vrot.slane %v2404, %v2557
      %v2559 = vsel %vm1477, %v2558, %v2554
      %v2560 = vlaneseq
      %v2561 = vshrl.u32 %v2560, 7
      %v2562 = vsub.s32 %v1467, %v2561
      %v2563 = vrot.slane %v2407, %v2562
      %v2564 = vlaneseq
      %v2565 = vshrl.u32 %v2564, 7
      %v2566 = vsub.s32 %v1472, %v2565
      %v2567 = vrot.slane %v2410, %v2566
      %v2568 = vsel %vm1477, %v2567, %v2563
      %v2569 = vlaneseq
      %v2570 = vshrl.u32 %v2569, 7
      %v2571 = vsub.s32 %v1467, %v2570
      %v2572 = vrot.slane %v2413, %v2571
      %v2573 = vlaneseq
      %v2574 = vshrl.u32 %v2573, 7
      %v2575 = vsub.s32 %v1472, %v2574
      %v2576 = vrot.slane %v2416, %v2575
      %v2577 = vsel %vm1477, %v2576, %v2572
      %v2578 = vlaneseq
      %v2579 = vshrl.u32 %v2578, 7
      %v2580 = vsub.s32 %v1467, %v2579
      %v2581 = vrot.slane %v2419, %v2580
      %v2582 = vlaneseq
      %v2583 = vshrl.u32 %v2582, 7
      %v2584 = vsub.s32 %v1472, %v2583
      %v2585 = vrot.slane %v2422, %v2584
      %v2586 = vsel %vm1477, %v2585, %v2581
      %v2587 = vlaneseq
      %v2588 = vshrl.u32 %v2587, 7
      %v2589 = vsub.s32 %v1467, %v2588
      %v2590 = vrot.slane %v2425, %v2589
      %v2591 = vlaneseq
      %v2592 = vshrl.u32 %v2591, 7
      %v2593 = vsub.s32 %v1472, %v2592
      %v2594 = vrot.slane %v2428, %v2593
      %v2595 = vsel %vm1477, %v2594, %v2590
      %v2596 = vlaneseq
      %v2597 = vshrl.u32 %v2596, 7
      %v2598 = vsub.s32 %v1467, %v2597
      %v2599 = vrot.slane %v2431, %v2598
      %v2600 = vlaneseq
      %v2601 = vshrl.u32 %v2600, 7
      %v2602 = vsub.s32 %v1472, %v2601
      %v2603 = vrot.slane %v2434, %v2602
      %v2604 = vsel %vm1477, %v2603, %v2599
      %v2605 = vlaneseq
      %v2606 = vshrl.u32 %v2605, 7
      %v2607 = vsub.s32 %v1467, %v2606
      %v2608 = vrot.slane %v2437, %v2607
      %v2609 = vlaneseq
      %v2610 = vshrl.u32 %v2609, 7
      %v2611 = vsub.s32 %v1472, %v2610
      %v2612 = vrot.slane %v2440, %v2611
      %v2613 = vsel %vm1477, %v2612, %v2608
      %v2614 = vlaneseq
      %v2615 = vshrl.u32 %v2614, 7
      %v2616 = vsub.s32 %v1467, %v2615
      %v2617 = vrot.slane %v2443, %v2616
      %v2618 = vlaneseq
      %v2619 = vshrl.u32 %v2618, 7
      %v2620 = vsub.s32 %v1472, %v2619
      %v2621 = vrot.slane %v2446, %v2620
      %v2622 = vsel %vm1477, %v2621, %v2617
      %v2623 = vsel %vm1614, %v2496, %v2487
      %v2624 = vsel %vm1616, %v2505, %v2623
      %v2625 = vsel %vm1618, %v2514, %v2624
      %v2626 = vsel %vm1620, %v2523, %v2625
      %v2627 = vsel %vm1622, %v2532, %v2626
      %v2628 = vsel %vm1624, %v2541, %v2627
      %v2629 = vsel %vm1626, %v2550, %v2628
      %v2630 = vsel %vm1614, %v2568, %v2559
      %v2631 = vsel %vm1616, %v2577, %v2630
      %v2632 = vsel %vm1618, %v2586, %v2631
      %v2633 = vsel %vm1620, %v2595, %v2632
      %v2634 = vsel %vm1622, %v2604, %v2633
      %v2635 = vsel %vm1624, %v2613, %v2634
      %v2636 = vsel %vm1626, %v2622, %v2635
      %v2639 = vsel %vm1432, %v2629, -1e+30
      %v2640 = vsel %vm1433, %v2636, -1e+30
      %v2641 = vsel %vm1639, %v2639, -inf
      %2642 = vmax.xlane.f32.xlu0 %v2641
      %v2643 = vpop.xlane.xlu0 %2642
      %v2644 = vsel %vm1639, %v2640, -inf
      %2645 = vmax.xlane.f32.xlu0 %v2644
      %v2646 = vpop.xlane.xlu0 %2645
      %v2647 = vsub.f32 %v2639, %v2643
      %v2648 = vsub.f32 %v2640, %v2646
      %v2649 = vmul.f32 %v2647, 1.442695
      %v2650 = vpow.pop %v2649
      %v2651 = vmul.f32 %v2648, 1.442695
      %v2652 = vpow.pop %v2651
      %v2653 = vsel %vm1639, %v2650, 0.0
      %2654 = vadd.xlane.f32.xlu0 %v2653
      %v2655 = vpop.xlane.xlu0 %2654
      %v2656 = vsel %vm1639, %v2652, 0.0
      %2657 = vadd.xlane.f32.xlu0 %v2656
      %v2658 = vpop.xlane.xlu0 %2657
      %v2659 = vrcp.pop %v2655
      %v2660 = vrcp.pop %v2658
      %v2661 = vmul.f32 %v2650, %v2659
      %v2662 = vmul.f32 %v2652, %v2660
      %2663 = vrot.lane.b32.xlu0 %v1759, 32
      %v2664 = vpop.permute.xlu0 %2663
      %v2667 = vsel %vm1639, %v2661, 0
      %v2670 = vsel %vm1639, %v2662, 0
      %2672 = vmatprep.subr.mxu0 0.0
      %2673 = vmatpush1.msra.mxu0 0.0
      %2674 = vmatprep.subr.mxu0 0.0
      %2675 = vmatpush1.msra.mxu0 0.0
      %2676 = vmatprep.subr.mxu0 0.0
      %2677 = vmatpush1.msra.mxu0 0.0
      %2678 = vmatprep.subr.mxu0 0.0
      %2679 = vmatpush1.msra.mxu0 0.0
      %2680 = vmatprep.subr.mxu0 0.0
      %2681 = vmatpush1.msra.mxu0 0.0
      %2682 = vmatprep.subr.mxu0 0.0
      %2683 = vmatpush1.msra.mxu0 0.0
      %2684 = vmatprep.subr.mxu0 0.0
      %2685 = vmatpush1.msra.mxu0 0.0
      %2686 = vmatprep.subr.mxu0 0.0
      %2687 = vmatpush1.msra.mxu0 0.0
      %2688 = vmatprep.subr.mxu0 0.0
      %2689 = vmatpush1.msra.mxu0 0.0
      %2690 = vmatprep.subr.mxu0 0.0
      %2691 = vmatpush1.msra.mxu0 0.0
      %2692 = vmatprep.subr.mxu0 0.0
      %2693 = vmatpush1.msra.mxu0 0.0
      %2694 = vmatprep.subr.mxu0 0.0
      %2695 = vmatpush1.msra.mxu0 0.0
      %2696 = vmatprep.subr.mxu0 0.0
      %2697 = vmatpush1.msra.mxu0 0.0
      %2698 = vmatprep.subr.mxu0 0.0
      %2699 = vmatpush1.msra.mxu0 0.0
      %2700 = vmatprep.subr.mxu0 0.0
      %2701 = vmatpush1.msra.mxu0 %v1839
      %2702 = vmatprep.subr.mxu0 0.0
      %2703 = vmatpush1.msra.mxu0 %v1834
      %2704 = vmatprep.subr.mxu0 0.0
      %2705 = vmatpush2.msra.mxu0 0.0
      %2706 = vmatprep.subr.mxu0 0.0
      %2707 = vmatpush2.msra.mxu0 0.0
      %2708 = vmatprep.subr.mxu0 0.0
      %2709 = vmatpush2.msra.mxu0 0.0
      %2710 = vmatprep.subr.mxu0 0.0
      %2711 = vmatpush2.msra.mxu0 0.0
      %2712 = vmatprep.subr.mxu0 0.0
      %2713 = vmatpush2.msra.mxu0 0.0
      %2714 = vmatprep.subr.mxu0 0.0
      %2715 = vmatpush2.msra.mxu0 0.0
      %2716 = vmatprep.subr.mxu0 0.0
      %2717 = vmatpush2.msra.mxu0 0.0
      %2718 = vmatprep.subr.mxu0 0.0
      %2719 = vmatpush2.msra.mxu0 0.0
      %2720 = vmatprep.subr.mxu0 0.0
      %2721 = vmatpush2.msra.mxu0 0.0
      %2722 = vmatprep.subr.mxu0 0.0
      %2723 = vmatpush2.msra.mxu0 0.0
      %2724 = vmatprep.subr.mxu0 0.0
      %2725 = vmatpush2.msra.mxu0 0.0
      %2726 = vmatprep.subr.mxu0 0.0
      %2727 = vmatpush2.msra.mxu0 0.0
      %2728 = vmatprep.subr.mxu0 0.0
      %2729 = vmatpush2.msra.mxu0 0.0
      %2730 = vmatprep.subr.mxu0 0.0
      %2731 = vmatpush2.msra.mxu0 0.0
      %2732 = vmatprep.subr.mxu0 0.0
      %2733 = vmatpush2.msra.mxu0 0.0
      %2734 = vmatprep.subr.mxu0 0.0
      %2735 = vmatpush2.msra.mxu0 0.0
      %2736 = vmatprep.mubr.f32.mxu0 0.0
      %2737 = vmatmul.mubr.f32.gmra.mxu0 %v2667
      %v2738 = vpop.f32.mrf.mxu0
      %v2739 = vadd.f32 %v2664, %v2738
      %v2740 = vpop.f32.mrf.mxu0
      %2741 = vmatprep.mubr.f32.mxu0 0.0
      %2742 = vmatmul.mubr.f32.gmra.mxu0 %v2670
      %v2743 = vpop.f32.mrf.mxu0
      %v2744 = vadd.f32 %v2664, %v2743
      %v2745 = vpop.f32.mrf.mxu0
      %2746 = vdwg.mxu0
      %v2747 = vtanh.pop %v2739
      %v2748 = vtanh.pop %v2744
      %s2749 = scalar_lea.vmem %s7, 2
      %v2750 = vld [vmem:[%s2749] sm:$0x1]
      %s2751 = scalar_lea.vmem %s5, 64
      %v2752 = vld [vmem:[%s2751] sm:$0xff]
      %v2753 = vld [vmem:[%s2751 + $0x8] sm:$0xff]
      %v2754 = vld [vmem:[%s2751 + $0x10] sm:$0xff]
      %v2755 = vld [vmem:[%s2751 + $0x18] sm:$0xff]
      %v2757 = vlaneseq
      %v2758 = vshrl.u32 %v2757, 7
      %v2759 = vsub.s32 0, %v2758
      %v2760 = vrot.slane %v2750, %v2759
      %v2763 = vsel %vm847, %v2747, 0
      %v2766 = vsel %vm847, %v2748, 0
      %2768 = vmatprep.subr.mxu0 0.0
      %2769 = vmatpush1.msra.mxu0 0.0
      %2770 = vmatprep.subr.mxu0 0.0
      %2771 = vmatpush1.msra.mxu0 0.0
      %2772 = vmatprep.subr.mxu0 0.0
      %2773 = vmatpush1.msra.mxu0 0.0
      %2774 = vmatprep.subr.mxu0 0.0
      %2775 = vmatpush1.msra.mxu0 0.0
      %2776 = vmatprep.subr.mxu0 0.0
      %2777 = vmatpush1.msra.mxu0 0.0
      %2778 = vmatprep.subr.mxu0 0.0
      %2779 = vmatpush1.msra.mxu0 0.0
      %2780 = vmatprep.subr.mxu0 0.0
      %2781 = vmatpush1.msra.mxu0 0.0
      %2782 = vmatprep.subr.mxu0 0.0
      %2783 = vmatpush1.msra.mxu0 0.0
      %2784 = vmatprep.subr.mxu0 0.0
      %2785 = vmatpush1.msra.mxu0 0.0
      %2786 = vmatprep.subr.mxu0 0.0
      %2787 = vmatpush1.msra.mxu0 0.0
      %2788 = vmatprep.subr.mxu0 0.0
      %2789 = vmatpush1.msra.mxu0 0.0
      %2790 = vmatprep.subr.mxu0 0.0
      %2791 = vmatpush1.msra.mxu0 0.0
      %2792 = vmatprep.subr.mxu0 0.0
      %2793 = vmatpush1.msra.mxu0 %v2755
      %2794 = vmatprep.subr.mxu0 0.0
      %2795 = vmatpush1.msra.mxu0 %v2754
      %2796 = vmatprep.subr.mxu0 0.0
      %2797 = vmatpush1.msra.mxu0 %v2753
      %2798 = vmatprep.subr.mxu0 0.0
      %2799 = vmatpush1.msra.mxu0 %v2752
      %2800 = vmatprep.subr.mxu0 0.0
      %2801 = vmatpush2.msra.mxu0 0.0
      %2802 = vmatprep.subr.mxu0 0.0
      %2803 = vmatpush2.msra.mxu0 0.0
      %2804 = vmatprep.subr.mxu0 0.0
      %2805 = vmatpush2.msra.mxu0 0.0
      %2806 = vmatprep.subr.mxu0 0.0
      %2807 = vmatpush2.msra.mxu0 0.0
      %2808 = vmatprep.subr.mxu0 0.0
      %2809 = vmatpush2.msra.mxu0 0.0
      %2810 = vmatprep.subr.mxu0 0.0
      %2811 = vmatpush2.msra.mxu0 0.0
      %2812 = vmatprep.subr.mxu0 0.0
      %2813 = vmatpush2.msra.mxu0 0.0
      %2814 = vmatprep.subr.mxu0 0.0
      %2815 = vmatpush2.msra.mxu0 0.0
      %2816 = vmatprep.subr.mxu0 0.0
      %2817 = vmatpush2.msra.mxu0 0.0
      %2818 = vmatprep.subr.mxu0 0.0
      %2819 = vmatpush2.msra.mxu0 0.0
      %2820 = vmatprep.subr.mxu0 0.0
      %2821 = vmatpush2.msra.mxu0 0.0
      %2822 = vmatprep.subr.mxu0 0.0
      %2823 = vmatpush2.msra.mxu0 0.0
      %2824 = vmatprep.subr.mxu0 0.0
      %2825 = vmatpush2.msra.mxu0 0.0
      %2826 = vmatprep.subr.mxu0 0.0
      %2827 = vmatpush2.msra.mxu0 0.0
      %2828 = vmatprep.subr.mxu0 0.0
      %2829 = vmatpush2.msra.mxu0 0.0
      %2830 = vmatprep.subr.mxu0 0.0
      %2831 = vmatpush2.msra.mxu0 0.0
      %2832 = vmatprep.mubr.f32.mxu0 0.0
      %2833 = vmatmul.mubr.f32.gmra.mxu0 %v2763
      %v2834 = vpop.f32.mrf.mxu0
      %v2835 = vadd.f32 %v2760, %v2834
      %v2836 = vpop.f32.mrf.mxu0
      %2837 = vmatprep.mubr.f32.mxu0 0.0
      %2838 = vmatmul.mubr.f32.gmra.mxu0 %v2766
      %v2839 = vpop.f32.mrf.mxu0
      %v2840 = vadd.f32 %v2760, %v2839
      %v2841 = vpop.f32.mrf.mxu0
      %2842 = vdwg.mxu0
      %2845 = vrot.lane.b32.xlu0 %v2835, 64
      %v2846 = vpop.permute.xlu0 %2845
      %2847 = vrot.lane.b32.xlu0 %v2840, 64
      %v2848 = vpop.permute.xlu0 %2847
      %v2851 = vadd.f32 %v646, %v2846
      %v2852 = vadd.f32 %v652, %v2848
      %v2853 = vadd.f32 %v658, %v2846
      %v2854 = vadd.f32 %v664, %v2848
      %v2855 = vadd.f32 %v670, %v2846
      %v2856 = vadd.f32 %v676, %v2848
      %v2857 = vadd.f32 %v682, %v2846
      %v2858 = vadd.f32 %v688, %v2848
      %v2859 = vadd.f32 %v694, %v2846
      %v2860 = vadd.f32 %v700, %v2848
      %v2861 = vadd.f32 %v706, %v2846
      %v2862 = vadd.f32 %v712, %v2848
      %v2863 = vadd.f32 %v718, %v2846
      %v2864 = vadd.f32 %v724, %v2848
      %v2865 = vadd.f32 %v730, %v2846
      %v2866 = vadd.f32 %v736, %v2848
      %v2867 = vadd.f32 %v742, %v2846
      %v2868 = vadd.f32 %v748, %v2848
      %v2869 = vadd.f32 %v754, %v2846
      %v2870 = vadd.f32 %v760, %v2848
      %v2871 = vadd.f32 %v766, %v2846
      %v2872 = vadd.f32 %v772, %v2848
      %v2873 = vadd.f32 %v778, %v2846
      %v2874 = vadd.f32 %v784, %v2848
      %v2875 = vadd.f32 %v790, %v2846
      %v2876 = vadd.f32 %v796, %v2848
      %v2877 = vadd.f32 %v802, %v2846
      %v2878 = vadd.f32 %v808, %v2848
      %v2879 = vadd.f32 %v814, %v2846
      %v2880 = vadd.f32 %v820, %v2848
      %v2881 = vadd.f32 %v826, %v2846
      %v2882 = vadd.f32 %v832, %v2848
      %v2883 = vcombine.high %v2835, %v2835
      %v2885 = vunpack.c.l.s4 1966171168
      %v2886 = vunpack.c.0.s8 %v2885
      %v2887 = vlaneseq
      %v2888 = vshrl.u32 %v2887, 7
      %v2889 = vsub.s32 %v2886, %v2888
      %v2890 = vrot.slane %v2835, %v2889
      %v2892 = vunpack.c.l.s4 1966171168
      %v2893 = vunpack.c.0.s8 %v2892
      %v2894 = vlaneseq
      %v2895 = vshrl.u32 %v2894, 7
      %v2896 = vsub.s32 %v2893, %v2895
      %v2897 = vrot.slane %v2883, %v2896
      %v2898 = vcombine.high %v2890, %v2890
      %v2899 = vcombine.high %v2897, %v2897
      %v2901 = vunpack.c.l.s4 1966171168
      %v2902 = vunpack.c.0.s8 %v2901
      %v2903 = vlaneseq
      %v2904 = vshrl.u32 %v2903, 7
      %v2905 = vsub.s32 %v2902, %v2904
      %v2906 = vrot.slane %v2890, %v2905
      %v2908 = vunpack.c.l.s4 1966171168
      %v2909 = vunpack.c.0.s8 %v2908
      %v2910 = vlaneseq
      %v2911 = vshrl.u32 %v2910, 7
      %v2912 = vsub.s32 %v2909, %v2911
      %v2913 = vrot.slane %v2897, %v2912
      %v2915 = vunpack.c.l.s4 1966171168
      %v2916 = vunpack.c.0.s8 %v2915
      %v2917 = vlaneseq
      %v2918 = vshrl.u32 %v2917, 7
      %v2919 = vsub.s32 %v2916, %v2918
      %v2920 = vrot.slane %v2898, %v2919
      %v2922 = vunpack.c.l.s4 1966171168
      %v2923 = vunpack.c.0.s8 %v2922
      %v2924 = vlaneseq
      %v2925 = vshrl.u32 %v2924, 7
      %v2926 = vsub.s32 %v2923, %v2925
      %v2927 = vrot.slane %v2899, %v2926
      %v2928 = vcombine.high %v2906, %v2906
      %v2929 = vcombine.high %v2913, %v2913
      %v2930 = vcombine.high %v2920, %v2920
      %v2931 = vcombine.high %v2927, %v2927
      %v2932 = vcombine.high %v2840, %v2840
      %v2934 = vunpack.c.l.s4 1966171168
      %v2935 = vunpack.c.0.s8 %v2934
      %v2936 = vlaneseq
      %v2937 = vshrl.u32 %v2936, 7
      %v2938 = vsub.s32 %v2935, %v2937
      %v2939 = vrot.slane %v2840, %v2938
      %v2941 = vunpack.c.l.s4 1966171168
      %v2942 = vunpack.c.0.s8 %v2941
      %v2943 = vlaneseq
      %v2944 = vshrl.u32 %v2943, 7
      %v2945 = vsub.s32 %v2942, %v2944
      %v2946 = vrot.slane %v2932, %v2945
      %v2947 = vcombine.high %v2939, %v2939
      %v2948 = vcombine.high %v2946, %v2946
      %v2950 = vunpack.c.l.s4 1966171168
      %v2951 = vunpack.c.0.s8 %v2950
      %v2952 = vlaneseq
      %v2953 = vshrl.u32 %v2952, 7
      %v2954 = vsub.s32 %v2951, %v2953
      %v2955 = vrot.slane %v2939, %v2954
      %v2957 = vunpack.c.l.s4 1966171168
      %v2958 = vunpack.c.0.s8 %v2957
      %v2959 = vlaneseq
      %v2960 = vshrl.u32 %v2959, 7
      %v2961 = vsub.s32 %v2958, %v2960
      %v2962 = vrot.slane %v2946, %v2961
      %v2964 = vunpack.c.l.s4 1966171168
      %v2965 = vunpack.c.0.s8 %v2964
      %v2966 = vlaneseq
      %v2967 = vshrl.u32 %v2966, 7
      %v2968 = vsub.s32 %v2965, %v2967
      %v2969 = vrot.slane %v2947, %v2968
      %v2971 = vunpack.c.l.s4 1966171168
      %v2972 = vunpack.c.0.s8 %v2971
      %v2973 = vlaneseq
      %v2974 = vshrl.u32 %v2973, 7
      %v2975 = vsub.s32 %v2972, %v2974
      %v2976 = vrot.slane %v2948, %v2975
      %v2977 = vcombine.high %v2955, %v2955
      %v2978 = vcombine.high %v2962, %v2962
      %v2979 = vcombine.high %v2969, %v2969
      %v2980 = vcombine.high %v2976, %v2976
      %v2981 = vlaneseq
      %v2982 = vshrl.u32 %v2981, 7
      %v2983 = vsub.s32 0, %v2982
      %v2984 = vrot.slane %v2906, %v2983
      %v2985 = vlaneseq
      %v2986 = vshrl.u32 %v2985, 7
      %v2987 = vsub.s32 0, %v2986
      %v2988 = vrot.slane %v2920, %v2987
      %v2989 = vlaneseq
      %v2990 = vshrl.u32 %v2989, 7
      %v2991 = vsub.s32 0, %v2990
      %v2992 = vrot.slane %v2928, %v2991
      %v2993 = vlaneseq
      %v2994 = vshrl.u32 %v2993, 7
      %v2995 = vsub.s32 0, %v2994
      %v2996 = vrot.slane %v2930, %v2995
      %v2997 = vlaneseq
      %v2998 = vshrl.u32 %v2997, 7
      %v2999 = vsub.s32 0, %v2998
      %v3000 = vrot.slane %v2913, %v2999
      %v3001 = vlaneseq
      %v3002 = vshrl.u32 %v3001, 7
      %v3003 = vsub.s32 0, %v3002
      %v3004 = vrot.slane %v2927, %v3003
      %v3005 = vlaneseq
      %v3006 = vshrl.u32 %v3005, 7
      %v3007 = vsub.s32 0, %v3006
      %v3008 = vrot.slane %v2929, %v3007
      %v3009 = vlaneseq
      %v3010 = vshrl.u32 %v3009, 7
      %v3011 = vsub.s32 0, %v3010
      %v3012 = vrot.slane %v2931, %v3011
      %v3013 = vlaneseq
      %v3014 = vshrl.u32 %v3013, 7
      %v3015 = vsub.s32 0, %v3014
      %v3016 = vrot.slane %v2955, %v3015
      %v3017 = vlaneseq
      %v3018 = vshrl.u32 %v3017, 7
      %v3019 = vsub.s32 0, %v3018
      %v3020 = vrot.slane %v2969, %v3019
      %v3021 = vlaneseq
      %v3022 = vshrl.u32 %v3021, 7
      %v3023 = vsub.s32 0, %v3022
      %v3024 = vrot.slane %v2977, %v3023
      %v3025 = vlaneseq
      %v3026 = vshrl.u32 %v3025, 7
      %v3027 = vsub.s32 0, %v3026
      %v3028 = vrot.slane %v2979, %v3027
      %v3029 = vlaneseq
      %v3030 = vshrl.u32 %v3029, 7
      %v3031 = vsub.s32 0, %v3030
      %v3032 = vrot.slane %v2962, %v3031
      %v3033 = vlaneseq
      %v3034 = vshrl.u32 %v3033, 7
      %v3035 = vsub.s32 0, %v3034
      %v3036 = vrot.slane %v2976, %v3035
      %v3037 = vlaneseq
      %v3038 = vshrl.u32 %v3037, 7
      %v3039 = vsub.s32 0, %v3038
      %v3040 = vrot.slane %v2978, %v3039
      %v3041 = vlaneseq
      %v3042 = vshrl.u32 %v3041, 7
      %v3043 = vsub.s32 0, %v3042
      %v3044 = vrot.slane %v2980, %v3043
      %3045 = vrot.lane.b32.xlu0 %v2984, 32
      %v3046 = vpop.permute.xlu0 %3045
      %3047 = vrot.lane.b32.xlu0 %v2988, 32
      %v3048 = vpop.permute.xlu0 %3047
      %3049 = vrot.lane.b32.xlu0 %v2992, 32
      %v3050 = vpop.permute.xlu0 %3049
      %3051 = vrot.lane.b32.xlu0 %v2996, 32
      %v3052 = vpop.permute.xlu0 %3051
      %3053 = vrot.lane.b32.xlu0 %v3000, 32
      %v3054 = vpop.permute.xlu0 %3053
      %3055 = vrot.lane.b32.xlu0 %v3004, 32
      %v3056 = vpop.permute.xlu0 %3055
      %3057 = vrot.lane.b32.xlu0 %v3008, 32
      %v3058 = vpop.permute.xlu0 %3057
      %3059 = vrot.lane.b32.xlu0 %v3012, 32
      %v3060 = vpop.permute.xlu0 %3059
      %3061 = vrot.lane.b32.xlu0 %v3016, 32
      %v3062 = vpop.permute.xlu0 %3061
      %3063 = vrot.lane.b32.xlu0 %v3020, 32
      %v3064 = vpop.permute.xlu0 %3063
      %3065 = vrot.lane.b32.xlu0 %v3024, 32
      %v3066 = vpop.permute.xlu0 %3065
      %3067 = vrot.lane.b32.xlu0 %v3028, 32
      %v3068 = vpop.permute.xlu0 %3067
      %3069 = vrot.lane.b32.xlu0 %v3032, 32
      %v3070 = vpop.permute.xlu0 %3069
      %3071 = vrot.lane.b32.xlu0 %v3036, 32
      %v3072 = vpop.permute.xlu0 %3071
      %3073 = vrot.lane.b32.xlu0 %v3040, 32
      %v3074 = vpop.permute.xlu0 %3073
      %3075 = vrot.lane.b32.xlu0 %v3044, 32
      %v3076 = vpop.permute.xlu0 %3075
      %v3093 = vadd.f32 %v2851, %v3046
      %v3094 = vadd.f32 %v2852, %v3046
      %v3095 = vadd.f32 %v2853, %v3048
      %v3096 = vadd.f32 %v2854, %v3048
      %v3097 = vadd.f32 %v2855, %v3050
      %v3098 = vadd.f32 %v2856, %v3050
      %v3099 = vadd.f32 %v2857, %v3052
      %v3100 = vadd.f32 %v2858, %v3052
      %v3101 = vadd.f32 %v2859, %v3054
      %v3102 = vadd.f32 %v2860, %v3054
      %v3103 = vadd.f32 %v2861, %v3056
      %v3104 = vadd.f32 %v2862, %v3056
      %v3105 = vadd.f32 %v2863, %v3058
      %v3106 = vadd.f32 %v2864, %v3058
      %v3107 = vadd.f32 %v2865, %v3060
      %v3108 = vadd.f32 %v2866, %v3060
      %v3109 = vadd.f32 %v2867, %v3062
      %v3110 = vadd.f32 %v2868, %v3062
      %v3111 = vadd.f32 %v2869, %v3064
      %v3112 = vadd.f32 %v2870, %v3064
      %v3113 = vadd.f32 %v2871, %v3066
      %v3114 = vadd.f32 %v2872, %v3066
      %v3115 = vadd.f32 %v2873, %v3068
      %v3116 = vadd.f32 %v2874, %v3068
      %v3117 = vadd.f32 %v2875, %v3070
      %v3118 = vadd.f32 %v2876, %v3070
      %v3119 = vadd.f32 %v2877, %v3072
      %v3120 = vadd.f32 %v2878, %v3072
      %v3121 = vadd.f32 %v2879, %v3074
      %v3122 = vadd.f32 %v2880, %v3074
      %v3123 = vadd.f32 %v2881, %v3076
      %v3124 = vadd.f32 %v2882, %v3076
      %vm3125 = vcmp.gt.f32.partialorder %v3093, 0.0
      %vm3126 = vcmp.gt.f32.partialorder %v3094, 0.0
      %vm3127 = vcmp.gt.f32.partialorder %v3095, 0.0
      %vm3128 = vcmp.gt.f32.partialorder %v3096, 0.0
      %vm3129 = vcmp.gt.f32.partialorder %v3097, 0.0
      %vm3130 = vcmp.gt.f32.partialorder %v3098, 0.0
      %vm3131 = vcmp.gt.f32.partialorder %v3099, 0.0
      %vm3132 = vcmp.gt.f32.partialorder %v3100, 0.0
      %vm3133 = vcmp.gt.f32.partialorder %v3101, 0.0
      %vm3134 = vcmp.gt.f32.partialorder %v3102, 0.0
      %vm3135 = vcmp.gt.f32.partialorder %v3103, 0.0
      %vm3136 = vcmp.gt.f32.partialorder %v3104, 0.0
      %vm3137 = vcmp.gt.f32.partialorder %v3105, 0.0
      %vm3138 = vcmp.gt.f32.partialorder %v3106, 0.0
      %vm3139 = vcmp.gt.f32.partialorder %v3107, 0.0
      %vm3140 = vcmp.gt.f32.partialorder %v3108, 0.0
      %vm3141 = vcmp.gt.f32.partialorder %v3109, 0.0
      %vm3142 = vcmp.gt.f32.partialorder %v3110, 0.0
      %vm3143 = vcmp.gt.f32.partialorder %v3111, 0.0
      %vm3144 = vcmp.gt.f32.partialorder %v3112, 0.0
      %vm3145 = vcmp.gt.f32.partialorder %v3113, 0.0
      %vm3146 = vcmp.gt.f32.partialorder %v3114, 0.0
      %vm3147 = vcmp.gt.f32.partialorder %v3115, 0.0
      %vm3148 = vcmp.gt.f32.partialorder %v3116, 0.0
      %vm3149 = vcmp.gt.f32.partialorder %v3117, 0.0
      %vm3150 = vcmp.gt.f32.partialorder %v3118, 0.0
      %vm3151 = vcmp.gt.f32.partialorder %v3119, 0.0
      %vm3152 = vcmp.gt.f32.partialorder %v3120, 0.0
      %vm3153 = vcmp.gt.f32.partialorder %v3121, 0.0
      %vm3154 = vcmp.gt.f32.partialorder %v3122, 0.0
      %vm3155 = vcmp.gt.f32.partialorder %v3123, 0.0
      %vm3156 = vcmp.gt.f32.partialorder %v3124, 0.0
      %v3157 = vmul.f32 %v3093, 0.2
      %v3158 = vmul.f32 %v3094, 0.2
      %v3159 = vmul.f32 %v3095, 0.2
      %v3160 = vmul.f32 %v3096, 0.2
      %v3161 = vmul.f32 %v3097, 0.2
      %v3162 = vmul.f32 %v3098, 0.2
      %v3163 = vmul.f32 %v3099, 0.2
      %v3164 = vmul.f32 %v3100, 0.2
      %v3165 = vmul.f32 %v3101, 0.2
      %v3166 = vmul.f32 %v3102, 0.2
      %v3167 = vmul.f32 %v3103, 0.2
      %v3168 = vmul.f32 %v3104, 0.2
      %v3169 = vmul.f32 %v3105, 0.2
      %v3170 = vmul.f32 %v3106, 0.2
      %v3171 = vmul.f32 %v3107, 0.2
      %v3172 = vmul.f32 %v3108, 0.2
      %v3173 = vmul.f32 %v3109, 0.2
      %v3174 = vmul.f32 %v3110, 0.2
      %v3175 = vmul.f32 %v3111, 0.2
      %v3176 = vmul.f32 %v3112, 0.2
      %v3177 = vmul.f32 %v3113, 0.2
      %v3178 = vmul.f32 %v3114, 0.2
      %v3179 = vmul.f32 %v3115, 0.2
      %v3180 = vmul.f32 %v3116, 0.2
      %v3181 = vmul.f32 %v3117, 0.2
      %v3182 = vmul.f32 %v3118, 0.2
      %v3183 = vmul.f32 %v3119, 0.2
      %v3184 = vmul.f32 %v3120, 0.2
      %v3185 = vmul.f32 %v3121, 0.2
      %v3186 = vmul.f32 %v3122, 0.2
      %v3187 = vmul.f32 %v3123, 0.2
      %v3188 = vmul.f32 %v3124, 0.2
      %v3189 = vsel %vm3125, %v3093, %v3157
      %v3190 = vsel %vm3126, %v3094, %v3158
      %v3191 = vsel %vm3127, %v3095, %v3159
      %v3192 = vsel %vm3128, %v3096, %v3160
      %v3193 = vsel %vm3129, %v3097, %v3161
      %v3194 = vsel %vm3130, %v3098, %v3162
      %v3195 = vsel %vm3131, %v3099, %v3163
      %v3196 = vsel %vm3132, %v3100, %v3164
      %v3197 = vsel %vm3133, %v3101, %v3165
      %v3198 = vsel %vm3134, %v3102, %v3166
      %v3199 = vsel %vm3135, %v3103, %v3167
      %v3200 = vsel %vm3136, %v3104, %v3168
      %v3201 = vsel %vm3137, %v3105, %v3169
      %v3202 = vsel %vm3138, %v3106, %v3170
      %v3203 = vsel %vm3139, %v3107, %v3171
      %v3204 = vsel %vm3140, %v3108, %v3172
      %v3205 = vsel %vm3141, %v3109, %v3173
      %v3206 = vsel %vm3142, %v3110, %v3174
      %v3207 = vsel %vm3143, %v3111, %v3175
      %v3208 = vsel %vm3144, %v3112, %v3176
      %v3209 = vsel %vm3145, %v3113, %v3177
      %v3210 = vsel %vm3146, %v3114, %v3178
      %v3211 = vsel %vm3147, %v3115, %v3179
      %v3212 = vsel %vm3148, %v3116, %v3180
      %v3213 = vsel %vm3149, %v3117, %v3181
      %v3214 = vsel %vm3150, %v3118, %v3182
      %v3215 = vsel %vm3151, %v3119, %v3183
      %v3216 = vsel %vm3152, %v3120, %v3184
      %v3217 = vsel %vm3153, %v3121, %v3185
      %v3218 = vsel %vm3154, %v3122, %v3186
      %v3219 = vsel %vm3155, %v3123, %v3187
      %v3220 = vsel %vm3156, %v3124, %v3188
      %v3221 = vmul.f32 %v3189, %v2760
      %v3222 = vmul.f32 %v3190, %v2760
      %v3223 = vmul.f32 %v3191, %v2760
      %v3224 = vmul.f32 %v3192, %v2760
      %v3225 = vmul.f32 %v3193, %v2760
      %v3226 = vmul.f32 %v3194, %v2760
      %v3227 = vmul.f32 %v3195, %v2760
      %v3228 = vmul.f32 %v3196, %v2760
      %v3229 = vmul.f32 %v3197, %v2760
      %v3230 = vmul.f32 %v3198, %v2760
      %v3231 = vmul.f32 %v3199, %v2760
      %v3232 = vmul.f32 %v3200, %v2760
      %v3233 = vmul.f32 %v3201, %v2760
      %v3234 = vmul.f32 %v3202, %v2760
      %v3235 = vmul.f32 %v3203, %v2760
      %v3236 = vmul.f32 %v3204, %v2760
      %v3237 = vmul.f32 %v3205, %v2760
      %v3238 = vmul.f32 %v3206, %v2760
      %v3239 = vmul.f32 %v3207, %v2760
      %v3240 = vmul.f32 %v3208, %v2760
      %v3241 = vmul.f32 %v3209, %v2760
      %v3242 = vmul.f32 %v3210, %v2760
      %v3243 = vmul.f32 %v3211, %v2760
      %v3244 = vmul.f32 %v3212, %v2760
      %v3245 = vmul.f32 %v3213, %v2760
      %v3246 = vmul.f32 %v3214, %v2760
      %v3247 = vmul.f32 %v3215, %v2760
      %v3248 = vmul.f32 %v3216, %v2760
      %v3249 = vmul.f32 %v3217, %v2760
      %v3250 = vmul.f32 %v3218, %v2760
      %v3251 = vmul.f32 %v3219, %v2760
      %v3252 = vmul.f32 %v3220, %v2760
      %3285 = vrot.lane.b32.xlu0 %v3221, 64
      %v3286 = vpop.permute.xlu0 %3285
      %3287 = vrot.lane.b32.xlu0 %v3222, 64
      %v3288 = vpop.permute.xlu0 %3287
      %3289 = vrot.lane.b32.xlu0 %v3223, 64
      %v3290 = vpop.permute.xlu0 %3289
      %3291 = vrot.lane.b32.xlu0 %v3224, 64
      %v3292 = vpop.permute.xlu0 %3291
      %3293 = vrot.lane.b32.xlu0 %v3225, 64
      %v3294 = vpop.permute.xlu0 %3293
      %3295 = vrot.lane.b32.xlu0 %v3226, 64
      %v3296 = vpop.permute.xlu0 %3295
      %3297 = vrot.lane.b32.xlu0 %v3227, 64
      %v3298 = vpop.permute.xlu0 %3297
      %3299 = vrot.lane.b32.xlu0 %v3228, 64
      %v3300 = vpop.permute.xlu0 %3299
      %3301 = vrot.lane.b32.xlu0 %v3229, 64
      %v3302 = vpop.permute.xlu0 %3301
      %3303 = vrot.lane.b32.xlu0 %v3230, 64
      %v3304 = vpop.permute.xlu0 %3303
      %3305 = vrot.lane.b32.xlu0 %v3231, 64
      %v3306 = vpop.permute.xlu0 %3305
      %3307 = vrot.lane.b32.xlu0 %v3232, 64
      %v3308 = vpop.permute.xlu0 %3307
      %3309 = vrot.lane.b32.xlu0 %v3233, 64
      %v3310 = vpop.permute.xlu0 %3309
      %3311 = vrot.lane.b32.xlu0 %v3234, 64
      %v3312 = vpop.permute.xlu0 %3311
      %3313 = vrot.lane.b32.xlu0 %v3235, 64
      %v3314 = vpop.permute.xlu0 %3313
      %3315 = vrot.lane.b32.xlu0 %v3236, 64
      %v3316 = vpop.permute.xlu0 %3315
      %3317 = vrot.lane.b32.xlu0 %v3237, 64
      %v3318 = vpop.permute.xlu0 %3317
      %3319 = vrot.lane.b32.xlu0 %v3238, 64
      %v3320 = vpop.permute.xlu0 %3319
      %3321 = vrot.lane.b32.xlu0 %v3239, 64
      %v3322 = vpop.permute.xlu0 %3321
      %3323 = vrot.lane.b32.xlu0 %v3240, 64
      %v3324 = vpop.permute.xlu0 %3323
      %3325 = vrot.lane.b32.xlu0 %v3241, 64
      %v3326 = vpop.permute.xlu0 %3325
      %3327 = vrot.lane.b32.xlu0 %v3242, 64
      %v3328 = vpop.permute.xlu0 %3327
      %3329 = vrot.lane.b32.xlu0 %v3243, 64
      %v3330 = vpop.permute.xlu0 %3329
      %3331 = vrot.lane.b32.xlu0 %v3244, 64
      %v3332 = vpop.permute.xlu0 %3331
      %3333 = vrot.lane.b32.xlu0 %v3245, 64
      %v3334 = vpop.permute.xlu0 %3333
      %3335 = vrot.lane.b32.xlu0 %v3246, 64
      %v3336 = vpop.permute.xlu0 %3335
      %3337 = vrot.lane.b32.xlu0 %v3247, 64
      %v3338 = vpop.permute.xlu0 %3337
      %3339 = vrot.lane.b32.xlu0 %v3248, 64
      %v3340 = vpop.permute.xlu0 %3339
      %3341 = vrot.lane.b32.xlu0 %v3249, 64
      %v3342 = vpop.permute.xlu0 %3341
      %3343 = vrot.lane.b32.xlu0 %v3250, 64
      %v3344 = vpop.permute.xlu0 %3343
      %3345 = vrot.lane.b32.xlu0 %v3251, 64
      %v3346 = vpop.permute.xlu0 %3345
      %3347 = vrot.lane.b32.xlu0 %v3252, 64
      %v3348 = vpop.permute.xlu0 %3347
      %v3381 = vsel %vm847, %v3286, 0.0
      %3382 = vadd.xlane.f32.xlu0 %v3381
      %v3383 = vpop.xlane.xlu0 %3382
      %v3384 = vsel %vm847, %v3288, 0.0
      %3385 = vadd.xlane.f32.xlu0 %v3384
      %v3386 = vpop.xlane.xlu0 %3385
      %v3387 = vsel %vm847, %v3290, 0.0
      %3388 = vadd.xlane.f32.xlu0 %v3387
      %v3389 = vpop.xlane.xlu0 %3388
      %v3390 = vsel %vm847, %v3292, 0.0
      %3391 = vadd.xlane.f32.xlu0 %v3390
      %v3392 = vpop.xlane.xlu0 %3391
      %v3393 = vsel %vm847, %v3294, 0.0
      %3394 = vadd.xlane.f32.xlu0 %v3393
      %v3395 = vpop.xlane.xlu0 %3394
      %v3396 = vsel %vm847, %v3296, 0.0
      %3397 = vadd.xlane.f32.xlu0 %v3396
      %v3398 = vpop.xlane.xlu0 %3397
      %v3399 = vsel %vm847, %v3298, 0.0
      %3400 = vadd.xlane.f32.xlu0 %v3399
      %v3401 = vpop.xlane.xlu0 %3400
      %v3402 = vsel %vm847, %v3300, 0.0
      %3403 = vadd.xlane.f32.xlu0 %v3402
      %v3404 = vpop.xlane.xlu0 %3403
      %v3405 = vsel %vm847, %v3302, 0.0
      %3406 = vadd.xlane.f32.xlu0 %v3405
      %v3407 = vpop.xlane.xlu0 %3406
      %v3408 = vsel %vm847, %v3304, 0.0
      %3409 = vadd.xlane.f32.xlu0 %v3408
      %v3410 = vpop.xlane.xlu0 %3409
      %v3411 = vsel %vm847, %v3306, 0.0
      %3412 = vadd.xlane.f32.xlu0 %v3411
      %v3413 = vpop.xlane.xlu0 %3412
      %v3414 = vsel %vm847, %v3308, 0.0
      %3415 = vadd.xlane.f32.xlu0 %v3414
      %v3416 = vpop.xlane.xlu0 %3415
      %v3417 = vsel %vm847, %v3310, 0.0
      %3418 = vadd.xlane.f32.xlu0 %v3417
      %v3419 = vpop.xlane.xlu0 %3418
      %v3420 = vsel %vm847, %v3312, 0.0
      %3421 = vadd.xlane.f32.xlu0 %v3420
      %v3422 = vpop.xlane.xlu0 %3421
      %v3423 = vsel %vm847, %v3314, 0.0
      %3424 = vadd.xlane.f32.xlu0 %v3423
      %v3425 = vpop.xlane.xlu0 %3424
      %v3426 = vsel %vm847, %v3316, 0.0
      %3427 = vadd.xlane.f32.xlu0 %v3426
      %v3428 = vpop.xlane.xlu0 %3427
      %v3429 = vsel %vm847, %v3318, 0.0
      %3430 = vadd.xlane.f32.xlu0 %v3429
      %v3431 = vpop.xlane.xlu0 %3430
      %v3432 = vsel %vm847, %v3320, 0.0
      %3433 = vadd.xlane.f32.xlu0 %v3432
      %v3434 = vpop.xlane.xlu0 %3433
      %v3435 = vsel %vm847, %v3322, 0.0
      %3436 = vadd.xlane.f32.xlu0 %v3435
      %v3437 = vpop.xlane.xlu0 %3436
      %v3438 = vsel %vm847, %v3324, 0.0
      %3439 = vadd.xlane.f32.xlu0 %v3438
      %v3440 = vpop.xlane.xlu0 %3439
      %v3441 = vsel %vm847, %v3326, 0.0
      %3442 = vadd.xlane.f32.xlu0 %v3441
      %v3443 = vpop.xlane.xlu0 %3442
      %v3444 = vsel %vm847, %v3328, 0.0
      %3445 = vadd.xlane.f32.xlu0 %v3444
      %v3446 = vpop.xlane.xlu0 %3445
      %v3447 = vsel %vm847, %v3330, 0.0
      %3448 = vadd.xlane.f32.xlu0 %v3447
      %v3449 = vpop.xlane.xlu0 %3448
      %v3450 = vsel %vm847, %v3332, 0.0
      %3451 = vadd.xlane.f32.xlu0 %v3450
      %v3452 = vpop.xlane.xlu0 %3451
      %v3453 = vsel %vm847, %v3334, 0.0
      %3454 = vadd.xlane.f32.xlu0 %v3453
      %v3455 = vpop.xlane.xlu0 %3454
      %v3456 = vsel %vm847, %v3336, 0.0
      %3457 = vadd.xlane.f32.xlu0 %v3456
      %v3458 = vpop.xlane.xlu0 %3457
      %v3459 = vsel %vm847, %v3338, 0.0
      %3460 = vadd.xlane.f32.xlu0 %v3459
      %v3461 = vpop.xlane.xlu0 %3460
      %v3462 = vsel %vm847, %v3340, 0.0
      %3463 = vadd.xlane.f32.xlu0 %v3462
      %v3464 = vpop.xlane.xlu0 %3463
      %v3465 = vsel %vm847, %v3342, 0.0
      %3466 = vadd.xlane.f32.xlu0 %v3465
      %v3467 = vpop.xlane.xlu0 %3466
      %v3468 = vsel %vm847, %v3344, 0.0
      %3469 = vadd.xlane.f32.xlu0 %v3468
      %v3470 = vpop.xlane.xlu0 %3469
      %v3471 = vsel %vm847, %v3346, 0.0
      %3472 = vadd.xlane.f32.xlu0 %v3471
      %v3473 = vpop.xlane.xlu0 %3472
      %v3474 = vsel %vm847, %v3348, 0.0
      %3475 = vadd.xlane.f32.xlu0 %v3474
      %v3476 = vpop.xlane.xlu0 %3475
      %v3509 = vlaneseq
      %v3510 = vshrl.u32 %v3509, 7
      %v3511 = vsub.s32 %v1467, %v3510
      %v3512 = vrot.slane %v3383, %v3511
      %v3513 = vlaneseq
      %v3514 = vshrl.u32 %v3513, 7
      %v3515 = vsub.s32 %v1472, %v3514
      %v3516 = vrot.slane %v3386, %v3515
      %v3517 = vsel %vm1477, %v3516, %v3512
      %v3518 = vlaneseq
      %v3519 = vshrl.u32 %v3518, 7
      %v3520 = vsub.s32 %v1467, %v3519
      %v3521 = vrot.slane %v3389, %v3520
      %v3522 = vlaneseq
      %v3523 = vshrl.u32 %v3522, 7
      %v3524 = vsub.s32 %v1472, %v3523
      %v3525 = vrot.slane %v3392, %v3524
      %v3526 = vsel %vm1477, %v3525, %v3521
      %v3527 = vlaneseq
      %v3528 = vshrl.u32 %v3527, 7
      %v3529 = vsub.s32 %v1467, %v3528
      %v3530 = vrot.slane %v3395, %v3529
      %v3531 = vlaneseq
      %v3532 = vshrl.u32 %v3531, 7
      %v3533 = vsub.s32 %v1472, %v3532
      %v3534 = vrot.slane %v3398, %v3533
      %v3535 = vsel %vm1477, %v3534, %v3530
      %v3536 = vlaneseq
      %v3537 = vshrl.u32 %v3536, 7
      %v3538 = vsub.s32 %v1467, %v3537
      %v3539 = vrot.slane %v3401, %v3538
      %v3540 = vlaneseq
      %v3541 = vshrl.u32 %v3540, 7
      %v3542 = vsub.s32 %v1472, %v3541
      %v3543 = vrot.slane %v3404, %v3542
      %v3544 = vsel %vm1477, %v3543, %v3539
      %v3545 = vlaneseq
      %v3546 = vshrl.u32 %v3545, 7
      %v3547 = vsub.s32 %v1467, %v3546
      %v3548 = vrot.slane %v3407, %v3547
      %v3549 = vlaneseq
      %v3550 = vshrl.u32 %v3549, 7
      %v3551 = vsub.s32 %v1472, %v3550
      %v3552 = vrot.slane %v3410, %v3551
      %v3553 = vsel %vm1477, %v3552, %v3548
      %v3554 = vlaneseq
      %v3555 = vshrl.u32 %v3554, 7
      %v3556 = vsub.s32 %v1467, %v3555
      %v3557 = vrot.slane %v3413, %v3556
      %v3558 = vlaneseq
      %v3559 = vshrl.u32 %v3558, 7
      %v3560 = vsub.s32 %v1472, %v3559
      %v3561 = vrot.slane %v3416, %v3560
      %v3562 = vsel %vm1477, %v3561, %v3557
      %v3563 = vlaneseq
      %v3564 = vshrl.u32 %v3563, 7
      %v3565 = vsub.s32 %v1467, %v3564
      %v3566 = vrot.slane %v3419, %v3565
      %v3567 = vlaneseq
      %v3568 = vshrl.u32 %v3567, 7
      %v3569 = vsub.s32 %v1472, %v3568
      %v3570 = vrot.slane %v3422, %v3569
      %v3571 = vsel %vm1477, %v3570, %v3566
      %v3572 = vlaneseq
      %v3573 = vshrl.u32 %v3572, 7
      %v3574 = vsub.s32 %v1467, %v3573
      %v3575 = vrot.slane %v3425, %v3574
      %v3576 = vlaneseq
      %v3577 = vshrl.u32 %v3576, 7
      %v3578 = vsub.s32 %v1472, %v3577
      %v3579 = vrot.slane %v3428, %v3578
      %v3580 = vsel %vm1477, %v3579, %v3575
      %v3581 = vlaneseq
      %v3582 = vshrl.u32 %v3581, 7
      %v3583 = vsub.s32 %v1467, %v3582
      %v3584 = vrot.slane %v3431, %v3583
      %v3585 = vlaneseq
      %v3586 = vshrl.u32 %v3585, 7
      %v3587 = vsub.s32 %v1472, %v3586
      %v3588 = vrot.slane %v3434, %v3587
      %v3589 = vsel %vm1477, %v3588, %v3584
      %v3590 = vlaneseq
      %v3591 = vshrl.u32 %v3590, 7
      %v3592 = vsub.s32 %v1467, %v3591
      %v3593 = vrot.slane %v3437, %v3592
      %v3594 = vlaneseq
      %v3595 = vshrl.u32 %v3594, 7
      %v3596 = vsub.s32 %v1472, %v3595
      %v3597 = vrot.slane %v3440, %v3596
      %v3598 = vsel %vm1477, %v3597, %v3593
      %v3599 = vlaneseq
      %v3600 = vshrl.u32 %v3599, 7
      %v3601 = vsub.s32 %v1467, %v3600
      %v3602 = vrot.slane %v3443, %v3601
      %v3603 = vlaneseq
      %v3604 = vshrl.u32 %v3603, 7
      %v3605 = vsub.s32 %v1472, %v3604
      %v3606 = vrot.slane %v3446, %v3605
      %v3607 = vsel %vm1477, %v3606, %v3602
      %v3608 = vlaneseq
      %v3609 = vshrl.u32 %v3608, 7
      %v3610 = vsub.s32 %v1467, %v3609
      %v3611 = vrot.slane %v3449, %v3610
      %v3612 = vlaneseq
      %v3613 = vshrl.u32 %v3612, 7
      %v3614 = vsub.s32 %v1472, %v3613
      %v3615 = vrot.slane %v3452, %v3614
      %v3616 = vsel %vm1477, %v3615, %v3611
      %v3617 = vlaneseq
      %v3618 = vshrl.u32 %v3617, 7
      %v3619 = vsub.s32 %v1467, %v3618
      %v3620 = vrot.slane %v3455, %v3619
      %v3621 = vlaneseq
      %v3622 = vshrl.u32 %v3621, 7
      %v3623 = vsub.s32 %v1472, %v3622
      %v3624 = vrot.slane %v3458, %v3623
      %v3625 = vsel %vm1477, %v3624, %v3620
      %v3626 = vlaneseq
      %v3627 = vshrl.u32 %v3626, 7
      %v3628 = vsub.s32 %v1467, %v3627
      %v3629 = vrot.slane %v3461, %v3628
      %v3630 = vlaneseq
      %v3631 = vshrl.u32 %v3630, 7
      %v3632 = vsub.s32 %v1472, %v3631
      %v3633 = vrot.slane %v3464, %v3632
      %v3634 = vsel %vm1477, %v3633, %v3629
      %v3635 = vlaneseq
      %v3636 = vshrl.u32 %v3635, 7
      %v3637 = vsub.s32 %v1467, %v3636
      %v3638 = vrot.slane %v3467, %v3637
      %v3639 = vlaneseq
      %v3640 = vshrl.u32 %v3639, 7
      %v3641 = vsub.s32 %v1472, %v3640
      %v3642 = vrot.slane %v3470, %v3641
      %v3643 = vsel %vm1477, %v3642, %v3638
      %v3644 = vlaneseq
      %v3645 = vshrl.u32 %v3644, 7
      %v3646 = vsub.s32 %v1467, %v3645
      %v3647 = vrot.slane %v3473, %v3646
      %v3648 = vlaneseq
      %v3649 = vshrl.u32 %v3648, 7
      %v3650 = vsub.s32 %v1472, %v3649
      %v3651 = vrot.slane %v3476, %v3650
      %v3652 = vsel %vm1477, %v3651, %v3647
      %v3653 = vsel %vm1614, %v3526, %v3517
      %v3654 = vsel %vm1616, %v3535, %v3653
      %v3655 = vsel %vm1618, %v3544, %v3654
      %v3656 = vsel %vm1620, %v3553, %v3655
      %v3657 = vsel %vm1622, %v3562, %v3656
      %v3658 = vsel %vm1624, %v3571, %v3657
      %v3659 = vsel %vm1626, %v3580, %v3658
      %v3660 = vsel %vm1614, %v3598, %v3589
      %v3661 = vsel %vm1616, %v3607, %v3660
      %v3662 = vsel %vm1618, %v3616, %v3661
      %v3663 = vsel %vm1620, %v3625, %v3662
      %v3664 = vsel %vm1622, %v3634, %v3663
      %v3665 = vsel %vm1624, %v3643, %v3664
      %v3666 = vsel %vm1626, %v3652, %v3665
      %v3669 = vsel %vm1432, %v3659, -1e+30
      %v3670 = vsel %vm1433, %v3666, -1e+30
      %v3671 = vsel %vm1639, %v3669, -inf
      %3672 = vmax.xlane.f32.xlu0 %v3671
      %v3673 = vpop.xlane.xlu0 %3672
      %v3674 = vsel %vm1639, %v3670, -inf
      %3675 = vmax.xlane.f32.xlu0 %v3674
      %v3676 = vpop.xlane.xlu0 %3675
      %v3677 = vsub.f32 %v3669, %v3673
      %v3678 = vsub.f32 %v3670, %v3676
      %v3679 = vmul.f32 %v3677, 1.442695
      %v3680 = vpow.pop %v3679
      %v3681 = vmul.f32 %v3678, 1.442695
      %v3682 = vpow.pop %v3681
      %v3683 = vsel %vm1639, %v3680, 0.0
      %3684 = vadd.xlane.f32.xlu0 %v3683
      %v3685 = vpop.xlane.xlu0 %3684
      %v3686 = vsel %vm1639, %v3682, 0.0
      %3687 = vadd.xlane.f32.xlu0 %v3686
      %v3688 = vpop.xlane.xlu0 %3687
      %v3689 = vrcp.pop %v3685
      %v3690 = vrcp.pop %v3688
      %v3691 = vmul.f32 %v3680, %v3689
      %v3692 = vmul.f32 %v3682, %v3690
      %3693 = vrot.lane.b32.xlu0 %v2760, 32
      %v3694 = vpop.permute.xlu0 %3693
      %v3697 = vsel %vm1639, %v3691, 0
      %v3700 = vsel %vm1639, %v3692, 0
      %3702 = vmatprep.subr.mxu0 0.0
      %3703 = vmatpush1.msra.mxu0 0.0
      %3704 = vmatprep.subr.mxu0 0.0
      %3705 = vmatpush1.msra.mxu0 0.0
      %3706 = vmatprep.subr.mxu0 0.0
      %3707 = vmatpush1.msra.mxu0 0.0
      %3708 = vmatprep.subr.mxu0 0.0
      %3709 = vmatpush1.msra.mxu0 0.0
      %3710 = vmatprep.subr.mxu0 0.0
      %3711 = vmatpush1.msra.mxu0 0.0
      %3712 = vmatprep.subr.mxu0 0.0
      %3713 = vmatpush1.msra.mxu0 0.0
      %3714 = vmatprep.subr.mxu0 0.0
      %3715 = vmatpush1.msra.mxu0 0.0
      %3716 = vmatprep.subr.mxu0 0.0
      %3717 = vmatpush1.msra.mxu0 0.0
      %3718 = vmatprep.subr.mxu0 0.0
      %3719 = vmatpush1.msra.mxu0 0.0
      %3720 = vmatprep.subr.mxu0 0.0
      %3721 = vmatpush1.msra.mxu0 0.0
      %3722 = vmatprep.subr.mxu0 0.0
      %3723 = vmatpush1.msra.mxu0 0.0
      %3724 = vmatprep.subr.mxu0 0.0
      %3725 = vmatpush1.msra.mxu0 0.0
      %3726 = vmatprep.subr.mxu0 0.0
      %3727 = vmatpush1.msra.mxu0 0.0
      %3728 = vmatprep.subr.mxu0 0.0
      %3729 = vmatpush1.msra.mxu0 0.0
      %3730 = vmatprep.subr.mxu0 0.0
      %3731 = vmatpush1.msra.mxu0 %v2840
      %3732 = vmatprep.subr.mxu0 0.0
      %3733 = vmatpush1.msra.mxu0 %v2835
      %3734 = vmatprep.subr.mxu0 0.0
      %3735 = vmatpush2.msra.mxu0 0.0
      %3736 = vmatprep.subr.mxu0 0.0
      %3737 = vmatpush2.msra.mxu0 0.0
      %3738 = vmatprep.subr.mxu0 0.0
      %3739 = vmatpush2.msra.mxu0 0.0
      %3740 = vmatprep.subr.mxu0 0.0
      %3741 = vmatpush2.msra.mxu0 0.0
      %3742 = vmatprep.subr.mxu0 0.0
      %3743 = vmatpush2.msra.mxu0 0.0
      %3744 = vmatprep.subr.mxu0 0.0
      %3745 = vmatpush2.msra.mxu0 0.0
      %3746 = vmatprep.subr.mxu0 0.0
      %3747 = vmatpush2.msra.mxu0 0.0
      %3748 = vmatprep.subr.mxu0 0.0
      %3749 = vmatpush2.msra.mxu0 0.0
      %3750 = vmatprep.subr.mxu0 0.0
      %3751 = vmatpush2.msra.mxu0 0.0
      %3752 = vmatprep.subr.mxu0 0.0
      %3753 = vmatpush2.msra.mxu0 0.0
      %3754 = vmatprep.subr.mxu0 0.0
      %3755 = vmatpush2.msra.mxu0 0.0
      %3756 = vmatprep.subr.mxu0 0.0
      %3757 = vmatpush2.msra.mxu0 0.0
      %3758 = vmatprep.subr.mxu0 0.0
      %3759 = vmatpush2.msra.mxu0 0.0
      %3760 = vmatprep.subr.mxu0 0.0
      %3761 = vmatpush2.msra.mxu0 0.0
      %3762 = vmatprep.subr.mxu0 0.0
      %3763 = vmatpush2.msra.mxu0 0.0
      %3764 = vmatprep.subr.mxu0 0.0
      %3765 = vmatpush2.msra.mxu0 0.0
      %3766 = vmatprep.mubr.f32.mxu0 0.0
      %3767 = vmatmul.mubr.f32.gmra.mxu0 %v3697
      %v3768 = vpop.f32.mrf.mxu0
      %v3769 = vadd.f32 %v3694, %v3768
      %v3770 = vpop.f32.mrf.mxu0
      %3771 = vmatprep.mubr.f32.mxu0 0.0
      %3772 = vmatmul.mubr.f32.gmra.mxu0 %v3700
      %v3773 = vpop.f32.mrf.mxu0
      %v3774 = vadd.f32 %v3694, %v3773
      %v3775 = vpop.f32.mrf.mxu0
      %3776 = vdwg.mxu0
      %v3777 = vtanh.pop %v3769
      %v3778 = vtanh.pop %v3774
      %s3779 = scalar_lea.vmem %s7, 3
      %v3780 = vld [vmem:[%s3779] sm:$0x1]
      %s3781 = scalar_lea.vmem %s5, 96
      %v3782 = vld [vmem:[%s3781] sm:$0xff]
      %v3783 = vld [vmem:[%s3781 + $0x8] sm:$0xff]
      %v3784 = vld [vmem:[%s3781 + $0x10] sm:$0xff]
      %v3785 = vld [vmem:[%s3781 + $0x18] sm:$0xff]
      %v3787 = vlaneseq
      %v3788 = vshrl.u32 %v3787, 7
      %v3789 = vsub.s32 0, %v3788
      %v3790 = vrot.slane %v3780, %v3789
      %v3793 = vsel %vm847, %v3777, 0
      %v3796 = vsel %vm847, %v3778, 0
      %3798 = vmatprep.subr.mxu0 0.0
      %3799 = vmatpush1.msra.mxu0 0.0
      %3800 = vmatprep.subr.mxu0 0.0
      %3801 = vmatpush1.msra.mxu0 0.0
      %3802 = vmatprep.subr.mxu0 0.0
      %3803 = vmatpush1.msra.mxu0 0.0
      %3804 = vmatprep.subr.mxu0 0.0
      %3805 = vmatpush1.msra.mxu0 0.0
      %3806 = vmatprep.subr.mxu0 0.0
      %3807 = vmatpush1.msra.mxu0 0.0
      %3808 = vmatprep.subr.mxu0 0.0
      %3809 = vmatpush1.msra.mxu0 0.0
      %3810 = vmatprep.subr.mxu0 0.0
      %3811 = vmatpush1.msra.mxu0 0.0
      %3812 = vmatprep.subr.mxu0 0.0
      %3813 = vmatpush1.msra.mxu0 0.0
      %3814 = vmatprep.subr.mxu0 0.0
      %3815 = vmatpush1.msra.mxu0 0.0
      %3816 = vmatprep.subr.mxu0 0.0
      %3817 = vmatpush1.msra.mxu0 0.0
      %3818 = vmatprep.subr.mxu0 0.0
      %3819 = vmatpush1.msra.mxu0 0.0
      %3820 = vmatprep.subr.mxu0 0.0
      %3821 = vmatpush1.msra.mxu0 0.0
      %3822 = vmatprep.subr.mxu0 0.0
      %3823 = vmatpush1.msra.mxu0 %v3785
      %3824 = vmatprep.subr.mxu0 0.0
      %3825 = vmatpush1.msra.mxu0 %v3784
      %3826 = vmatprep.subr.mxu0 0.0
      %3827 = vmatpush1.msra.mxu0 %v3783
      %3828 = vmatprep.subr.mxu0 0.0
      %3829 = vmatpush1.msra.mxu0 %v3782
      %3830 = vmatprep.subr.mxu0 0.0
      %3831 = vmatpush2.msra.mxu0 0.0
      %3832 = vmatprep.subr.mxu0 0.0
      %3833 = vmatpush2.msra.mxu0 0.0
      %3834 = vmatprep.subr.mxu0 0.0
      %3835 = vmatpush2.msra.mxu0 0.0
      %3836 = vmatprep.subr.mxu0 0.0
      %3837 = vmatpush2.msra.mxu0 0.0
      %3838 = vmatprep.subr.mxu0 0.0
      %3839 = vmatpush2.msra.mxu0 0.0
      %3840 = vmatprep.subr.mxu0 0.0
      %3841 = vmatpush2.msra.mxu0 0.0
      %3842 = vmatprep.subr.mxu0 0.0
      %3843 = vmatpush2.msra.mxu0 0.0
      %3844 = vmatprep.subr.mxu0 0.0
      %3845 = vmatpush2.msra.mxu0 0.0
      %3846 = vmatprep.subr.mxu0 0.0
      %3847 = vmatpush2.msra.mxu0 0.0
      %3848 = vmatprep.subr.mxu0 0.0
      %3849 = vmatpush2.msra.mxu0 0.0
      %3850 = vmatprep.subr.mxu0 0.0
      %3851 = vmatpush2.msra.mxu0 0.0
      %3852 = vmatprep.subr.mxu0 0.0
      %3853 = vmatpush2.msra.mxu0 0.0
      %3854 = vmatprep.subr.mxu0 0.0
      %3855 = vmatpush2.msra.mxu0 0.0
      %3856 = vmatprep.subr.mxu0 0.0
      %3857 = vmatpush2.msra.mxu0 0.0
      %3858 = vmatprep.subr.mxu0 0.0
      %3859 = vmatpush2.msra.mxu0 0.0
      %3860 = vmatprep.subr.mxu0 0.0
      %3861 = vmatpush2.msra.mxu0 0.0
      %3862 = vmatprep.mubr.f32.mxu0 0.0
      %3863 = vmatmul.mubr.f32.gmra.mxu0 %v3793
      %v3864 = vpop.f32.mrf.mxu0
      %v3865 = vadd.f32 %v3790, %v3864
      %v3866 = vpop.f32.mrf.mxu0
      %3867 = vmatprep.mubr.f32.mxu0 0.0
      %3868 = vmatmul.mubr.f32.gmra.mxu0 %v3796
      %v3869 = vpop.f32.mrf.mxu0
      %v3870 = vadd.f32 %v3790, %v3869
      %v3871 = vpop.f32.mrf.mxu0
      %3872 = vdwg.mxu0
      %3875 = vrot.lane.b32.xlu0 %v3865, 96
      %v3876 = vpop.permute.xlu0 %3875
      %3877 = vrot.lane.b32.xlu0 %v3870, 96
      %v3878 = vpop.permute.xlu0 %3877
      %v3881 = vadd.f32 %v646, %v3876
      %v3882 = vadd.f32 %v652, %v3878
      %v3883 = vadd.f32 %v658, %v3876
      %v3884 = vadd.f32 %v664, %v3878
      %v3885 = vadd.f32 %v670, %v3876
      %v3886 = vadd.f32 %v676, %v3878
      %v3887 = vadd.f32 %v682, %v3876
      %v3888 = vadd.f32 %v688, %v3878
      %v3889 = vadd.f32 %v694, %v3876
      %v3890 = vadd.f32 %v700, %v3878
      %v3891 = vadd.f32 %v706, %v3876
      %v3892 = vadd.f32 %v712, %v3878
      %v3893 = vadd.f32 %v718, %v3876
      %v3894 = vadd.f32 %v724, %v3878
      %v3895 = vadd.f32 %v730, %v3876
      %v3896 = vadd.f32 %v736, %v3878
      %v3897 = vadd.f32 %v742, %v3876
      %v3898 = vadd.f32 %v748, %v3878
      %v3899 = vadd.f32 %v754, %v3876
      %v3900 = vadd.f32 %v760, %v3878
      %v3901 = vadd.f32 %v766, %v3876
      %v3902 = vadd.f32 %v772, %v3878
      %v3903 = vadd.f32 %v778, %v3876
      %v3904 = vadd.f32 %v784, %v3878
      %v3905 = vadd.f32 %v790, %v3876
      %v3906 = vadd.f32 %v796, %v3878
      %v3907 = vadd.f32 %v802, %v3876
      %v3908 = vadd.f32 %v808, %v3878
      %v3909 = vadd.f32 %v814, %v3876
      %v3910 = vadd.f32 %v820, %v3878
      %v3911 = vadd.f32 %v826, %v3876
      %v3912 = vadd.f32 %v832, %v3878
      %v3913 = vcombine.high %v3865, %v3865
      %v3915 = vunpack.c.l.s4 1966171168
      %v3916 = vunpack.c.0.s8 %v3915
      %v3917 = vlaneseq
      %v3918 = vshrl.u32 %v3917, 7
      %v3919 = vsub.s32 %v3916, %v3918
      %v3920 = vrot.slane %v3865, %v3919
      %v3922 = vunpack.c.l.s4 1966171168
      %v3923 = vunpack.c.0.s8 %v3922
      %v3924 = vlaneseq
      %v3925 = vshrl.u32 %v3924, 7
      %v3926 = vsub.s32 %v3923, %v3925
      %v3927 = vrot.slane %v3913, %v3926
      %v3928 = vcombine.high %v3920, %v3920
      %v3929 = vcombine.high %v3927, %v3927
      %v3931 = vunpack.c.l.s4 1966171168
      %v3932 = vunpack.c.0.s8 %v3931
      %v3933 = vlaneseq
      %v3934 = vshrl.u32 %v3933, 7
      %v3935 = vsub.s32 %v3932, %v3934
      %v3936 = vrot.slane %v3920, %v3935
      %v3938 = vunpack.c.l.s4 1966171168
      %v3939 = vunpack.c.0.s8 %v3938
      %v3940 = vlaneseq
      %v3941 = vshrl.u32 %v3940, 7
      %v3942 = vsub.s32 %v3939, %v3941
      %v3943 = vrot.slane %v3927, %v3942
      %v3945 = vunpack.c.l.s4 1966171168
      %v3946 = vunpack.c.0.s8 %v3945
      %v3947 = vlaneseq
      %v3948 = vshrl.u32 %v3947, 7
      %v3949 = vsub.s32 %v3946, %v3948
      %v3950 = vrot.slane %v3928, %v3949
      %v3952 = vunpack.c.l.s4 1966171168
      %v3953 = vunpack.c.0.s8 %v3952
      %v3954 = vlaneseq
      %v3955 = vshrl.u32 %v3954, 7
      %v3956 = vsub.s32 %v3953, %v3955
      %v3957 = vrot.slane %v3929, %v3956
      %v3958 = vcombine.high %v3936, %v3936
      %v3959 = vcombine.high %v3943, %v3943
      %v3960 = vcombine.high %v3950, %v3950
      %v3961 = vcombine.high %v3957, %v3957
      %v3962 = vcombine.high %v3870, %v3870
      %v3964 = vunpack.c.l.s4 1966171168
      %v3965 = vunpack.c.0.s8 %v3964
      %v3966 = vlaneseq
      %v3967 = vshrl.u32 %v3966, 7
      %v3968 = vsub.s32 %v3965, %v3967
      %v3969 = vrot.slane %v3870, %v3968
      %v3971 = vunpack.c.l.s4 1966171168
      %v3972 = vunpack.c.0.s8 %v3971
      %v3973 = vlaneseq
      %v3974 = vshrl.u32 %v3973, 7
      %v3975 = vsub.s32 %v3972, %v3974
      %v3976 = vrot.slane %v3962, %v3975
      %v3977 = vcombine.high %v3969, %v3969
      %v3978 = vcombine.high %v3976, %v3976
      %v3980 = vunpack.c.l.s4 1966171168
      %v3981 = vunpack.c.0.s8 %v3980
      %v3982 = vlaneseq
      %v3983 = vshrl.u32 %v3982, 7
      %v3984 = vsub.s32 %v3981, %v3983
      %v3985 = vrot.slane %v3969, %v3984
      %v3987 = vunpack.c.l.s4 1966171168
      %v3988 = vunpack.c.0.s8 %v3987
      %v3989 = vlaneseq
      %v3990 = vshrl.u32 %v3989, 7
      %v3991 = vsub.s32 %v3988, %v3990
      %v3992 = vrot.slane %v3976, %v3991
      %v3994 = vunpack.c.l.s4 1966171168
      %v3995 = vunpack.c.0.s8 %v3994
      %v3996 = vlaneseq
      %v3997 = vshrl.u32 %v3996, 7
      %v3998 = vsub.s32 %v3995, %v3997
      %v3999 = vrot.slane %v3977, %v3998
      %v4001 = vunpack.c.l.s4 1966171168
      %v4002 = vunpack.c.0.s8 %v4001
      %v4003 = vlaneseq
      %v4004 = vshrl.u32 %v4003, 7
      %v4005 = vsub.s32 %v4002, %v4004
      %v4006 = vrot.slane %v3978, %v4005
      %v4007 = vcombine.high %v3985, %v3985
      %v4008 = vcombine.high %v3992, %v3992
      %v4009 = vcombine.high %v3999, %v3999
      %v4010 = vcombine.high %v4006, %v4006
      %v4011 = vlaneseq
      %v4012 = vshrl.u32 %v4011, 7
      %v4013 = vsub.s32 0, %v4012
      %v4014 = vrot.slane %v3936, %v4013
      %v4015 = vlaneseq
      %v4016 = vshrl.u32 %v4015, 7
      %v4017 = vsub.s32 0, %v4016
      %v4018 = vrot.slane %v3950, %v4017
      %v4019 = vlaneseq
      %v4020 = vshrl.u32 %v4019, 7
      %v4021 = vsub.s32 0, %v4020
      %v4022 = vrot.slane %v3958, %v4021
      %v4023 = vlaneseq
      %v4024 = vshrl.u32 %v4023, 7
      %v4025 = vsub.s32 0, %v4024
      %v4026 = vrot.slane %v3960, %v4025
      %v4027 = vlaneseq
      %v4028 = vshrl.u32 %v4027, 7
      %v4029 = vsub.s32 0, %v4028
      %v4030 = vrot.slane %v3943, %v4029
      %v4031 = vlaneseq
      %v4032 = vshrl.u32 %v4031, 7
      %v4033 = vsub.s32 0, %v4032
      %v4034 = vrot.slane %v3957, %v4033
      %v4035 = vlaneseq
      %v4036 = vshrl.u32 %v4035, 7
      %v4037 = vsub.s32 0, %v4036
      %v4038 = vrot.slane %v3959, %v4037
      %v4039 = vlaneseq
      %v4040 = vshrl.u32 %v4039, 7
      %v4041 = vsub.s32 0, %v4040
      %v4042 = vrot.slane %v3961, %v4041
      %v4043 = vlaneseq
      %v4044 = vshrl.u32 %v4043, 7
      %v4045 = vsub.s32 0, %v4044
      %v4046 = vrot.slane %v3985, %v4045
      %v4047 = vlaneseq
      %v4048 = vshrl.u32 %v4047, 7
      %v4049 = vsub.s32 0, %v4048
      %v4050 = vrot.slane %v3999, %v4049
      %v4051 = vlaneseq
      %v4052 = vshrl.u32 %v4051, 7
      %v4053 = vsub.s32 0, %v4052
      %v4054 = vrot.slane %v4007, %v4053
      %v4055 = vlaneseq
      %v4056 = vshrl.u32 %v4055, 7
      %v4057 = vsub.s32 0, %v4056
      %v4058 = vrot.slane %v4009, %v4057
      %v4059 = vlaneseq
      %v4060 = vshrl.u32 %v4059, 7
      %v4061 = vsub.s32 0, %v4060
      %v4062 = vrot.slane %v3992, %v4061
      %v4063 = vlaneseq
      %v4064 = vshrl.u32 %v4063, 7
      %v4065 = vsub.s32 0, %v4064
      %v4066 = vrot.slane %v4006, %v4065
      %v4067 = vlaneseq
      %v4068 = vshrl.u32 %v4067, 7
      %v4069 = vsub.s32 0, %v4068
      %v4070 = vrot.slane %v4008, %v4069
      %v4071 = vlaneseq
      %v4072 = vshrl.u32 %v4071, 7
      %v4073 = vsub.s32 0, %v4072
      %v4074 = vrot.slane %v4010, %v4073
      %4075 = vrot.lane.b32.xlu0 %v4014, 64
      %v4076 = vpop.permute.xlu0 %4075
      %4077 = vrot.lane.b32.xlu0 %v4018, 64
      %v4078 = vpop.permute.xlu0 %4077
      %4079 = vrot.lane.b32.xlu0 %v4022, 64
      %v4080 = vpop.permute.xlu0 %4079
      %4081 = vrot.lane.b32.xlu0 %v4026, 64
      %v4082 = vpop.permute.xlu0 %4081
      %4083 = vrot.lane.b32.xlu0 %v4030, 64
      %v4084 = vpop.permute.xlu0 %4083
      %4085 = vrot.lane.b32.xlu0 %v4034, 64
      %v4086 = vpop.permute.xlu0 %4085
      %4087 = vrot.lane.b32.xlu0 %v4038, 64
      %v4088 = vpop.permute.xlu0 %4087
      %4089 = vrot.lane.b32.xlu0 %v4042, 64
      %v4090 = vpop.permute.xlu0 %4089
      %4091 = vrot.lane.b32.xlu0 %v4046, 64
      %v4092 = vpop.permute.xlu0 %4091
      %4093 = vrot.lane.b32.xlu0 %v4050, 64
      %v4094 = vpop.permute.xlu0 %4093
      %4095 = vrot.lane.b32.xlu0 %v4054, 64
      %v4096 = vpop.permute.xlu0 %4095
      %4097 = vrot.lane.b32.xlu0 %v4058, 64
      %v4098 = vpop.permute.xlu0 %4097
      %4099 = vrot.lane.b32.xlu0 %v4062, 64
      %v4100 = vpop.permute.xlu0 %4099
      %4101 = vrot.lane.b32.xlu0 %v4066, 64
      %v4102 = vpop.permute.xlu0 %4101
      %4103 = vrot.lane.b32.xlu0 %v4070, 64
      %v4104 = vpop.permute.xlu0 %4103
      %4105 = vrot.lane.b32.xlu0 %v4074, 64
      %v4106 = vpop.permute.xlu0 %4105
      %v4123 = vadd.f32 %v3881, %v4076
      %v4124 = vadd.f32 %v3882, %v4076
      %v4125 = vadd.f32 %v3883, %v4078
      %v4126 = vadd.f32 %v3884, %v4078
      %v4127 = vadd.f32 %v3885, %v4080
      %v4128 = vadd.f32 %v3886, %v4080
      %v4129 = vadd.f32 %v3887, %v4082
      %v4130 = vadd.f32 %v3888, %v4082
      %v4131 = vadd.f32 %v3889, %v4084
      %v4132 = vadd.f32 %v3890, %v4084
      %v4133 = vadd.f32 %v3891, %v4086
      %v4134 = vadd.f32 %v3892, %v4086
      %v4135 = vadd.f32 %v3893, %v4088
      %v4136 = vadd.f32 %v3894, %v4088
      %v4137 = vadd.f32 %v3895, %v4090
      %v4138 = vadd.f32 %v3896, %v4090
      %v4139 = vadd.f32 %v3897, %v4092
      %v4140 = vadd.f32 %v3898, %v4092
      %v4141 = vadd.f32 %v3899, %v4094
      %v4142 = vadd.f32 %v3900, %v4094
      %v4143 = vadd.f32 %v3901, %v4096
      %v4144 = vadd.f32 %v3902, %v4096
      %v4145 = vadd.f32 %v3903, %v4098
      %v4146 = vadd.f32 %v3904, %v4098
      %v4147 = vadd.f32 %v3905, %v4100
      %v4148 = vadd.f32 %v3906, %v4100
      %v4149 = vadd.f32 %v3907, %v4102
      %v4150 = vadd.f32 %v3908, %v4102
      %v4151 = vadd.f32 %v3909, %v4104
      %v4152 = vadd.f32 %v3910, %v4104
      %v4153 = vadd.f32 %v3911, %v4106
      %v4154 = vadd.f32 %v3912, %v4106
      %vm4155 = vcmp.gt.f32.partialorder %v4123, 0.0
      %vm4156 = vcmp.gt.f32.partialorder %v4124, 0.0
      %vm4157 = vcmp.gt.f32.partialorder %v4125, 0.0
      %vm4158 = vcmp.gt.f32.partialorder %v4126, 0.0
      %vm4159 = vcmp.gt.f32.partialorder %v4127, 0.0
      %vm4160 = vcmp.gt.f32.partialorder %v4128, 0.0
      %vm4161 = vcmp.gt.f32.partialorder %v4129, 0.0
      %vm4162 = vcmp.gt.f32.partialorder %v4130, 0.0
      %vm4163 = vcmp.gt.f32.partialorder %v4131, 0.0
      %vm4164 = vcmp.gt.f32.partialorder %v4132, 0.0
      %vm4165 = vcmp.gt.f32.partialorder %v4133, 0.0
      %vm4166 = vcmp.gt.f32.partialorder %v4134, 0.0
      %vm4167 = vcmp.gt.f32.partialorder %v4135, 0.0
      %vm4168 = vcmp.gt.f32.partialorder %v4136, 0.0
      %vm4169 = vcmp.gt.f32.partialorder %v4137, 0.0
      %vm4170 = vcmp.gt.f32.partialorder %v4138, 0.0
      %vm4171 = vcmp.gt.f32.partialorder %v4139, 0.0
      %vm4172 = vcmp.gt.f32.partialorder %v4140, 0.0
      %vm4173 = vcmp.gt.f32.partialorder %v4141, 0.0
      %vm4174 = vcmp.gt.f32.partialorder %v4142, 0.0
      %vm4175 = vcmp.gt.f32.partialorder %v4143, 0.0
      %vm4176 = vcmp.gt.f32.partialorder %v4144, 0.0
      %vm4177 = vcmp.gt.f32.partialorder %v4145, 0.0
      %vm4178 = vcmp.gt.f32.partialorder %v4146, 0.0
      %vm4179 = vcmp.gt.f32.partialorder %v4147, 0.0
      %vm4180 = vcmp.gt.f32.partialorder %v4148, 0.0
      %vm4181 = vcmp.gt.f32.partialorder %v4149, 0.0
      %vm4182 = vcmp.gt.f32.partialorder %v4150, 0.0
      %vm4183 = vcmp.gt.f32.partialorder %v4151, 0.0
      %vm4184 = vcmp.gt.f32.partialorder %v4152, 0.0
      %vm4185 = vcmp.gt.f32.partialorder %v4153, 0.0
      %vm4186 = vcmp.gt.f32.partialorder %v4154, 0.0
      %v4187 = vmul.f32 %v4123, 0.2
      %v4188 = vmul.f32 %v4124, 0.2
      %v4189 = vmul.f32 %v4125, 0.2
      %v4190 = vmul.f32 %v4126, 0.2
      %v4191 = vmul.f32 %v4127, 0.2
      %v4192 = vmul.f32 %v4128, 0.2
      %v4193 = vmul.f32 %v4129, 0.2
      %v4194 = vmul.f32 %v4130, 0.2
      %v4195 = vmul.f32 %v4131, 0.2
      %v4196 = vmul.f32 %v4132, 0.2
      %v4197 = vmul.f32 %v4133, 0.2
      %v4198 = vmul.f32 %v4134, 0.2
      %v4199 = vmul.f32 %v4135, 0.2
      %v4200 = vmul.f32 %v4136, 0.2
      %v4201 = vmul.f32 %v4137, 0.2
      %v4202 = vmul.f32 %v4138, 0.2
      %v4203 = vmul.f32 %v4139, 0.2
      %v4204 = vmul.f32 %v4140, 0.2
      %v4205 = vmul.f32 %v4141, 0.2
      %v4206 = vmul.f32 %v4142, 0.2
      %v4207 = vmul.f32 %v4143, 0.2
      %v4208 = vmul.f32 %v4144, 0.2
      %v4209 = vmul.f32 %v4145, 0.2
      %v4210 = vmul.f32 %v4146, 0.2
      %v4211 = vmul.f32 %v4147, 0.2
      %v4212 = vmul.f32 %v4148, 0.2
      %v4213 = vmul.f32 %v4149, 0.2
      %v4214 = vmul.f32 %v4150, 0.2
      %v4215 = vmul.f32 %v4151, 0.2
      %v4216 = vmul.f32 %v4152, 0.2
      %v4217 = vmul.f32 %v4153, 0.2
      %v4218 = vmul.f32 %v4154, 0.2
      %v4219 = vsel %vm4155, %v4123, %v4187
      %v4220 = vsel %vm4156, %v4124, %v4188
      %v4221 = vsel %vm4157, %v4125, %v4189
      %v4222 = vsel %vm4158, %v4126, %v4190
      %v4223 = vsel %vm4159, %v4127, %v4191
      %v4224 = vsel %vm4160, %v4128, %v4192
      %v4225 = vsel %vm4161, %v4129, %v4193
      %v4226 = vsel %vm4162, %v4130, %v4194
      %v4227 = vsel %vm4163, %v4131, %v4195
      %v4228 = vsel %vm4164, %v4132, %v4196
      %v4229 = vsel %vm4165, %v4133, %v4197
      %v4230 = vsel %vm4166, %v4134, %v4198
      %v4231 = vsel %vm4167, %v4135, %v4199
      %v4232 = vsel %vm4168, %v4136, %v4200
      %v4233 = vsel %vm4169, %v4137, %v4201
      %v4234 = vsel %vm4170, %v4138, %v4202
      %v4235 = vsel %vm4171, %v4139, %v4203
      %v4236 = vsel %vm4172, %v4140, %v4204
      %v4237 = vsel %vm4173, %v4141, %v4205
      %v4238 = vsel %vm4174, %v4142, %v4206
      %v4239 = vsel %vm4175, %v4143, %v4207
      %v4240 = vsel %vm4176, %v4144, %v4208
      %v4241 = vsel %vm4177, %v4145, %v4209
      %v4242 = vsel %vm4178, %v4146, %v4210
      %v4243 = vsel %vm4179, %v4147, %v4211
      %v4244 = vsel %vm4180, %v4148, %v4212
      %v4245 = vsel %vm4181, %v4149, %v4213
      %v4246 = vsel %vm4182, %v4150, %v4214
      %v4247 = vsel %vm4183, %v4151, %v4215
      %v4248 = vsel %vm4184, %v4152, %v4216
      %v4249 = vsel %vm4185, %v4153, %v4217
      %v4250 = vsel %vm4186, %v4154, %v4218
      %4251 = vrot.lane.b32.xlu0 %v3790, 32
      %v4252 = vpop.permute.xlu0 %4251
      %v4254 = vmul.f32 %v4219, %v4252
      %v4255 = vmul.f32 %v4220, %v4252
      %v4256 = vmul.f32 %v4221, %v4252
      %v4257 = vmul.f32 %v4222, %v4252
      %v4258 = vmul.f32 %v4223, %v4252
      %v4259 = vmul.f32 %v4224, %v4252
      %v4260 = vmul.f32 %v4225, %v4252
      %v4261 = vmul.f32 %v4226, %v4252
      %v4262 = vmul.f32 %v4227, %v4252
      %v4263 = vmul.f32 %v4228, %v4252
      %v4264 = vmul.f32 %v4229, %v4252
      %v4265 = vmul.f32 %v4230, %v4252
      %v4266 = vmul.f32 %v4231, %v4252
      %v4267 = vmul.f32 %v4232, %v4252
      %v4268 = vmul.f32 %v4233, %v4252
      %v4269 = vmul.f32 %v4234, %v4252
      %v4270 = vmul.f32 %v4235, %v4252
      %v4271 = vmul.f32 %v4236, %v4252
      %v4272 = vmul.f32 %v4237, %v4252
      %v4273 = vmul.f32 %v4238, %v4252
      %v4274 = vmul.f32 %v4239, %v4252
      %v4275 = vmul.f32 %v4240, %v4252
      %v4276 = vmul.f32 %v4241, %v4252
      %v4277 = vmul.f32 %v4242, %v4252
      %v4278 = vmul.f32 %v4243, %v4252
      %v4279 = vmul.f32 %v4244, %v4252
      %v4280 = vmul.f32 %v4245, %v4252
      %v4281 = vmul.f32 %v4246, %v4252
      %v4282 = vmul.f32 %v4247, %v4252
      %v4283 = vmul.f32 %v4248, %v4252
      %v4284 = vmul.f32 %v4249, %v4252
      %v4285 = vmul.f32 %v4250, %v4252
      %4318 = vrot.lane.b32.xlu0 %v4254, 32
      %v4319 = vpop.permute.xlu0 %4318
      %4320 = vrot.lane.b32.xlu0 %v4255, 32
      %v4321 = vpop.permute.xlu0 %4320
      %4322 = vrot.lane.b32.xlu0 %v4256, 32
      %v4323 = vpop.permute.xlu0 %4322
      %4324 = vrot.lane.b32.xlu0 %v4257, 32
      %v4325 = vpop.permute.xlu0 %4324
      %4326 = vrot.lane.b32.xlu0 %v4258, 32
      %v4327 = vpop.permute.xlu0 %4326
      %4328 = vrot.lane.b32.xlu0 %v4259, 32
      %v4329 = vpop.permute.xlu0 %4328
      %4330 = vrot.lane.b32.xlu0 %v4260, 32
      %v4331 = vpop.permute.xlu0 %4330
      %4332 = vrot.lane.b32.xlu0 %v4261, 32
      %v4333 = vpop.permute.xlu0 %4332
      %4334 = vrot.lane.b32.xlu0 %v4262, 32
      %v4335 = vpop.permute.xlu0 %4334
      %4336 = vrot.lane.b32.xlu0 %v4263, 32
      %v4337 = vpop.permute.xlu0 %4336
      %4338 = vrot.lane.b32.xlu0 %v4264, 32
      %v4339 = vpop.permute.xlu0 %4338
      %4340 = vrot.lane.b32.xlu0 %v4265, 32
      %v4341 = vpop.permute.xlu0 %4340
      %4342 = vrot.lane.b32.xlu0 %v4266, 32
      %v4343 = vpop.permute.xlu0 %4342
      %4344 = vrot.lane.b32.xlu0 %v4267, 32
      %v4345 = vpop.permute.xlu0 %4344
      %4346 = vrot.lane.b32.xlu0 %v4268, 32
      %v4347 = vpop.permute.xlu0 %4346
      %4348 = vrot.lane.b32.xlu0 %v4269, 32
      %v4349 = vpop.permute.xlu0 %4348
      %4350 = vrot.lane.b32.xlu0 %v4270, 32
      %v4351 = vpop.permute.xlu0 %4350
      %4352 = vrot.lane.b32.xlu0 %v4271, 32
      %v4353 = vpop.permute.xlu0 %4352
      %4354 = vrot.lane.b32.xlu0 %v4272, 32
      %v4355 = vpop.permute.xlu0 %4354
      %4356 = vrot.lane.b32.xlu0 %v4273, 32
      %v4357 = vpop.permute.xlu0 %4356
      %4358 = vrot.lane.b32.xlu0 %v4274, 32
      %v4359 = vpop.permute.xlu0 %4358
      %4360 = vrot.lane.b32.xlu0 %v4275, 32
      %v4361 = vpop.permute.xlu0 %4360
      %4362 = vrot.lane.b32.xlu0 %v4276, 32
      %v4363 = vpop.permute.xlu0 %4362
      %4364 = vrot.lane.b32.xlu0 %v4277, 32
      %v4365 = vpop.permute.xlu0 %4364
      %4366 = vrot.lane.b32.xlu0 %v4278, 32
      %v4367 = vpop.permute.xlu0 %4366
      %4368 = vrot.lane.b32.xlu0 %v4279, 32
      %v4369 = vpop.permute.xlu0 %4368
      %4370 = vrot.lane.b32.xlu0 %v4280, 32
      %v4371 = vpop.permute.xlu0 %4370
      %4372 = vrot.lane.b32.xlu0 %v4281, 32
      %v4373 = vpop.permute.xlu0 %4372
      %4374 = vrot.lane.b32.xlu0 %v4282, 32
      %v4375 = vpop.permute.xlu0 %4374
      %4376 = vrot.lane.b32.xlu0 %v4283, 32
      %v4377 = vpop.permute.xlu0 %4376
      %4378 = vrot.lane.b32.xlu0 %v4284, 32
      %v4379 = vpop.permute.xlu0 %4378
      %4380 = vrot.lane.b32.xlu0 %v4285, 32
      %v4381 = vpop.permute.xlu0 %4380
      %v4414 = vsel %vm847, %v4319, 0.0
      %4415 = vadd.xlane.f32.xlu0 %v4414
      %v4416 = vpop.xlane.xlu0 %4415
      %v4417 = vsel %vm847, %v4321, 0.0
      %4418 = vadd.xlane.f32.xlu0 %v4417
      %v4419 = vpop.xlane.xlu0 %4418
      %v4420 = vsel %vm847, %v4323, 0.0
      %4421 = vadd.xlane.f32.xlu0 %v4420
      %v4422 = vpop.xlane.xlu0 %4421
      %v4423 = vsel %vm847, %v4325, 0.0
      %4424 = vadd.xlane.f32.xlu0 %v4423
      %v4425 = vpop.xlane.xlu0 %4424
      %v4426 = vsel %vm847, %v4327, 0.0
      %4427 = vadd.xlane.f32.xlu0 %v4426
      %v4428 = vpop.xlane.xlu0 %4427
      %v4429 = vsel %vm847, %v4329, 0.0
      %4430 = vadd.xlane.f32.xlu0 %v4429
      %v4431 = vpop.xlane.xlu0 %4430
      %v4432 = vsel %vm847, %v4331, 0.0
      %4433 = vadd.xlane.f32.xlu0 %v4432
      %v4434 = vpop.xlane.xlu0 %4433
      %v4435 = vsel %vm847, %v4333, 0.0
      %4436 = vadd.xlane.f32.xlu0 %v4435
      %v4437 = vpop.xlane.xlu0 %4436
      %v4438 = vsel %vm847, %v4335, 0.0
      %4439 = vadd.xlane.f32.xlu0 %v4438
      %v4440 = vpop.xlane.xlu0 %4439
      %v4441 = vsel %vm847, %v4337, 0.0
      %4442 = vadd.xlane.f32.xlu0 %v4441
      %v4443 = vpop.xlane.xlu0 %4442
      %v4444 = vsel %vm847, %v4339, 0.0
      %4445 = vadd.xlane.f32.xlu0 %v4444
      %v4446 = vpop.xlane.xlu0 %4445
      %v4447 = vsel %vm847, %v4341, 0.0
      %4448 = vadd.xlane.f32.xlu0 %v4447
      %v4449 = vpop.xlane.xlu0 %4448
      %v4450 = vsel %vm847, %v4343, 0.0
      %4451 = vadd.xlane.f32.xlu0 %v4450
      %v4452 = vpop.xlane.xlu0 %4451
      %v4453 = vsel %vm847, %v4345, 0.0
      %4454 = vadd.xlane.f32.xlu0 %v4453
      %v4455 = vpop.xlane.xlu0 %4454
      %v4456 = vsel %vm847, %v4347, 0.0
      %4457 = vadd.xlane.f32.xlu0 %v4456
      %v4458 = vpop.xlane.xlu0 %4457
      %v4459 = vsel %vm847, %v4349, 0.0
      %4460 = vadd.xlane.f32.xlu0 %v4459
      %v4461 = vpop.xlane.xlu0 %4460
      %v4462 = vsel %vm847, %v4351, 0.0
      %4463 = vadd.xlane.f32.xlu0 %v4462
      %v4464 = vpop.xlane.xlu0 %4463
      %v4465 = vsel %vm847, %v4353, 0.0
      %4466 = vadd.xlane.f32.xlu0 %v4465
      %v4467 = vpop.xlane.xlu0 %4466
      %v4468 = vsel %vm847, %v4355, 0.0
      %4469 = vadd.xlane.f32.xlu0 %v4468
      %v4470 = vpop.xlane.xlu0 %4469
      %v4471 = vsel %vm847, %v4357, 0.0
      %4472 = vadd.xlane.f32.xlu0 %v4471
      %v4473 = vpop.xlane.xlu0 %4472
      %v4474 = vsel %vm847, %v4359, 0.0
      %4475 = vadd.xlane.f32.xlu0 %v4474
      %v4476 = vpop.xlane.xlu0 %4475
      %v4477 = vsel %vm847, %v4361, 0.0
      %4478 = vadd.xlane.f32.xlu0 %v4477
      %v4479 = vpop.xlane.xlu0 %4478
      %v4480 = vsel %vm847, %v4363, 0.0
      %4481 = vadd.xlane.f32.xlu0 %v4480
      %v4482 = vpop.xlane.xlu0 %4481
      %v4483 = vsel %vm847, %v4365, 0.0
      %4484 = vadd.xlane.f32.xlu0 %v4483
      %v4485 = vpop.xlane.xlu0 %4484
      %v4486 = vsel %vm847, %v4367, 0.0
      %4487 = vadd.xlane.f32.xlu0 %v4486
      %v4488 = vpop.xlane.xlu0 %4487
      %v4489 = vsel %vm847, %v4369, 0.0
      %4490 = vadd.xlane.f32.xlu0 %v4489
      %v4491 = vpop.xlane.xlu0 %4490
      %v4492 = vsel %vm847, %v4371, 0.0
      %4493 = vadd.xlane.f32.xlu0 %v4492
      %v4494 = vpop.xlane.xlu0 %4493
      %v4495 = vsel %vm847, %v4373, 0.0
      %4496 = vadd.xlane.f32.xlu0 %v4495
      %v4497 = vpop.xlane.xlu0 %4496
      %v4498 = vsel %vm847, %v4375, 0.0
      %4499 = vadd.xlane.f32.xlu0 %v4498
      %v4500 = vpop.xlane.xlu0 %4499
      %v4501 = vsel %vm847, %v4377, 0.0
      %4502 = vadd.xlane.f32.xlu0 %v4501
      %v4503 = vpop.xlane.xlu0 %4502
      %v4504 = vsel %vm847, %v4379, 0.0
      %4505 = vadd.xlane.f32.xlu0 %v4504
      %v4506 = vpop.xlane.xlu0 %4505
      %v4507 = vsel %vm847, %v4381, 0.0
      %4508 = vadd.xlane.f32.xlu0 %v4507
      %v4509 = vpop.xlane.xlu0 %4508
      %v4542 = vlaneseq
      %v4543 = vshrl.u32 %v4542, 7
      %v4544 = vsub.s32 %v1467, %v4543
      %v4545 = vrot.slane %v4416, %v4544
      %v4546 = vlaneseq
      %v4547 = vshrl.u32 %v4546, 7
      %v4548 = vsub.s32 %v1472, %v4547
      %v4549 = vrot.slane %v4419, %v4548
      %v4550 = vsel %vm1477, %v4549, %v4545
      %v4551 = vlaneseq
      %v4552 = vshrl.u32 %v4551, 7
      %v4553 = vsub.s32 %v1467, %v4552
      %v4554 = vrot.slane %v4422, %v4553
      %v4555 = vlaneseq
      %v4556 = vshrl.u32 %v4555, 7
      %v4557 = vsub.s32 %v1472, %v4556
      %v4558 = vrot.slane %v4425, %v4557
      %v4559 = vsel %vm1477, %v4558, %v4554
      %v4560 = vlaneseq
      %v4561 = vshrl.u32 %v4560, 7
      %v4562 = vsub.s32 %v1467, %v4561
      %v4563 = vrot.slane %v4428, %v4562
      %v4564 = vlaneseq
      %v4565 = vshrl.u32 %v4564, 7
      %v4566 = vsub.s32 %v1472, %v4565
      %v4567 = vrot.slane %v4431, %v4566
      %v4568 = vsel %vm1477, %v4567, %v4563
      %v4569 = vlaneseq
      %v4570 = vshrl.u32 %v4569, 7
      %v4571 = vsub.s32 %v1467, %v4570
      %v4572 = vrot.slane %v4434, %v4571
      %v4573 = vlaneseq
      %v4574 = vshrl.u32 %v4573, 7
      %v4575 = vsub.s32 %v1472, %v4574
      %v4576 = vrot.slane %v4437, %v4575
      %v4577 = vsel %vm1477, %v4576, %v4572
      %v4578 = vlaneseq
      %v4579 = vshrl.u32 %v4578, 7
      %v4580 = vsub.s32 %v1467, %v4579
      %v4581 = vrot.slane %v4440, %v4580
      %v4582 = vlaneseq
      %v4583 = vshrl.u32 %v4582, 7
      %v4584 = vsub.s32 %v1472, %v4583
      %v4585 = vrot.slane %v4443, %v4584
      %v4586 = vsel %vm1477, %v4585, %v4581
      %v4587 = vlaneseq
      %v4588 = vshrl.u32 %v4587, 7
      %v4589 = vsub.s32 %v1467, %v4588
      %v4590 = vrot.slane %v4446, %v4589
      %v4591 = vlaneseq
      %v4592 = vshrl.u32 %v4591, 7
      %v4593 = vsub.s32 %v1472, %v4592
      %v4594 = vrot.slane %v4449, %v4593
      %v4595 = vsel %vm1477, %v4594, %v4590
      %v4596 = vlaneseq
      %v4597 = vshrl.u32 %v4596, 7
      %v4598 = vsub.s32 %v1467, %v4597
      %v4599 = vrot.slane %v4452, %v4598
      %v4600 = vlaneseq
      %v4601 = vshrl.u32 %v4600, 7
      %v4602 = vsub.s32 %v1472, %v4601
      %v4603 = vrot.slane %v4455, %v4602
      %v4604 = vsel %vm1477, %v4603, %v4599
      %v4605 = vlaneseq
      %v4606 = vshrl.u32 %v4605, 7
      %v4607 = vsub.s32 %v1467, %v4606
      %v4608 = vrot.slane %v4458, %v4607
      %v4609 = vlaneseq
      %v4610 = vshrl.u32 %v4609, 7
      %v4611 = vsub.s32 %v1472, %v4610
      %v4612 = vrot.slane %v4461, %v4611
      %v4613 = vsel %vm1477, %v4612, %v4608
      %v4614 = vlaneseq
      %v4615 = vshrl.u32 %v4614, 7
      %v4616 = vsub.s32 %v1467, %v4615
      %v4617 = vrot.slane %v4464, %v4616
      %v4618 = vlaneseq
      %v4619 = vshrl.u32 %v4618, 7
      %v4620 = vsub.s32 %v1472, %v4619
      %v4621 = vrot.slane %v4467, %v4620
      %v4622 = vsel %vm1477, %v4621, %v4617
      %v4623 = vlaneseq
      %v4624 = vshrl.u32 %v4623, 7
      %v4625 = vsub.s32 %v1467, %v4624
      %v4626 = vrot.slane %v4470, %v4625
      %v4627 = vlaneseq
      %v4628 = vshrl.u32 %v4627, 7
      %v4629 = vsub.s32 %v1472, %v4628
      %v4630 = vrot.slane %v4473, %v4629
      %v4631 = vsel %vm1477, %v4630, %v4626
      %v4632 = vlaneseq
      %v4633 = vshrl.u32 %v4632, 7
      %v4634 = vsub.s32 %v1467, %v4633
      %v4635 = vrot.slane %v4476, %v4634
      %v4636 = vlaneseq
      %v4637 = vshrl.u32 %v4636, 7
      %v4638 = vsub.s32 %v1472, %v4637
      %v4639 = vrot.slane %v4479, %v4638
      %v4640 = vsel %vm1477, %v4639, %v4635
      %v4641 = vlaneseq
      %v4642 = vshrl.u32 %v4641, 7
      %v4643 = vsub.s32 %v1467, %v4642
      %v4644 = vrot.slane %v4482, %v4643
      %v4645 = vlaneseq
      %v4646 = vshrl.u32 %v4645, 7
      %v4647 = vsub.s32 %v1472, %v4646
      %v4648 = vrot.slane %v4485, %v4647
      %v4649 = vsel %vm1477, %v4648, %v4644
      %v4650 = vlaneseq
      %v4651 = vshrl.u32 %v4650, 7
      %v4652 = vsub.s32 %v1467, %v4651
      %v4653 = vrot.slane %v4488, %v4652
      %v4654 = vlaneseq
      %v4655 = vshrl.u32 %v4654, 7
      %v4656 = vsub.s32 %v1472, %v4655
      %v4657 = vrot.slane %v4491, %v4656
      %v4658 = vsel %vm1477, %v4657, %v4653
      %v4659 = vlaneseq
      %v4660 = vshrl.u32 %v4659, 7
      %v4661 = vsub.s32 %v1467, %v4660
      %v4662 = vrot.slane %v4494, %v4661
      %v4663 = vlaneseq
      %v4664 = vshrl.u32 %v4663, 7
      %v4665 = vsub.s32 %v1472, %v4664
      %v4666 = vrot.slane %v4497, %v4665
      %v4667 = vsel %vm1477, %v4666, %v4662
      %v4668 = vlaneseq
      %v4669 = vshrl.u32 %v4668, 7
      %v4670 = vsub.s32 %v1467, %v4669
      %v4671 = vrot.slane %v4500, %v4670
      %v4672 = vlaneseq
      %v4673 = vshrl.u32 %v4672, 7
      %v4674 = vsub.s32 %v1472, %v4673
      %v4675 = vrot.slane %v4503, %v4674
      %v4676 = vsel %vm1477, %v4675, %v4671
      %v4677 = vlaneseq
      %v4678 = vshrl.u32 %v4677, 7
      %v4679 = vsub.s32 %v1467, %v4678
      %v4680 = vrot.slane %v4506, %v4679
      %v4681 = vlaneseq
      %v4682 = vshrl.u32 %v4681, 7
      %v4683 = vsub.s32 %v1472, %v4682
      %v4684 = vrot.slane %v4509, %v4683
      %v4685 = vsel %vm1477, %v4684, %v4680
      %v4686 = vsel %vm1614, %v4559, %v4550
      %v4687 = vsel %vm1616, %v4568, %v4686
      %v4688 = vsel %vm1618, %v4577, %v4687
      %v4689 = vsel %vm1620, %v4586, %v4688
      %v4690 = vsel %vm1622, %v4595, %v4689
      %v4691 = vsel %vm1624, %v4604, %v4690
      %v4692 = vsel %vm1626, %v4613, %v4691
      %v4693 = vsel %vm1614, %v4631, %v4622
      %v4694 = vsel %vm1616, %v4640, %v4693
      %v4695 = vsel %vm1618, %v4649, %v4694
      %v4696 = vsel %vm1620, %v4658, %v4695
      %v4697 = vsel %vm1622, %v4667, %v4696
      %v4698 = vsel %vm1624, %v4676, %v4697
      %v4699 = vsel %vm1626, %v4685, %v4698
      %v4702 = vsel %vm1432, %v4692, -1e+30
      %v4703 = vsel %vm1433, %v4699, -1e+30
      %v4704 = vsel %vm1639, %v4702, -inf
      %4705 = vmax.xlane.f32.xlu0 %v4704
      %v4706 = vpop.xlane.xlu0 %4705
      %v4707 = vsel %vm1639, %v4703, -inf
      %4708 = vmax.xlane.f32.xlu0 %v4707
      %v4709 = vpop.xlane.xlu0 %4708
      %v4710 = vsub.f32 %v4702, %v4706
      %v4711 = vsub.f32 %v4703, %v4709
      %v4712 = vmul.f32 %v4710, 1.442695
      %v4713 = vpow.pop %v4712
      %v4714 = vmul.f32 %v4711, 1.442695
      %v4715 = vpow.pop %v4714
      %v4716 = vsel %vm1639, %v4713, 0.0
      %4717 = vadd.xlane.f32.xlu0 %v4716
      %v4718 = vpop.xlane.xlu0 %4717
      %v4719 = vsel %vm1639, %v4715, 0.0
      %4720 = vadd.xlane.f32.xlu0 %v4719
      %v4721 = vpop.xlane.xlu0 %4720
      %v4722 = vrcp.pop %v4718
      %v4723 = vrcp.pop %v4721
      %v4724 = vmul.f32 %v4713, %v4722
      %v4725 = vmul.f32 %v4715, %v4723
      %v4727 = vsel %vm1639, %v4724, 0
      %v4730 = vsel %vm1639, %v4725, 0
      %4732 = vmatprep.subr.mxu0 0.0
      %4733 = vmatpush1.msra.mxu0 0.0
      %4734 = vmatprep.subr.mxu0 0.0
      %4735 = vmatpush1.msra.mxu0 0.0
      %4736 = vmatprep.subr.mxu0 0.0
      %4737 = vmatpush1.msra.mxu0 0.0
      %4738 = vmatprep.subr.mxu0 0.0
      %4739 = vmatpush1.msra.mxu0 0.0
      %4740 = vmatprep.subr.mxu0 0.0
      %4741 = vmatpush1.msra.mxu0 0.0
      %4742 = vmatprep.subr.mxu0 0.0
      %4743 = vmatpush1.msra.mxu0 0.0
      %4744 = vmatprep.subr.mxu0 0.0
      %4745 = vmatpush1.msra.mxu0 0.0
      %4746 = vmatprep.subr.mxu0 0.0
      %4747 = vmatpush1.msra.mxu0 0.0
      %4748 = vmatprep.subr.mxu0 0.0
      %4749 = vmatpush1.msra.mxu0 0.0
      %4750 = vmatprep.subr.mxu0 0.0
      %4751 = vmatpush1.msra.mxu0 0.0
      %4752 = vmatprep.subr.mxu0 0.0
      %4753 = vmatpush1.msra.mxu0 0.0
      %4754 = vmatprep.subr.mxu0 0.0
      %4755 = vmatpush1.msra.mxu0 0.0
      %4756 = vmatprep.subr.mxu0 0.0
      %4757 = vmatpush1.msra.mxu0 0.0
      %4758 = vmatprep.subr.mxu0 0.0
      %4759 = vmatpush1.msra.mxu0 0.0
      %4760 = vmatprep.subr.mxu0 0.0
      %4761 = vmatpush1.msra.mxu0 %v3870
      %4762 = vmatprep.subr.mxu0 0.0
      %4763 = vmatpush1.msra.mxu0 %v3865
      %4764 = vmatprep.subr.mxu0 0.0
      %4765 = vmatpush2.msra.mxu0 0.0
      %4766 = vmatprep.subr.mxu0 0.0
      %4767 = vmatpush2.msra.mxu0 0.0
      %4768 = vmatprep.subr.mxu0 0.0
      %4769 = vmatpush2.msra.mxu0 0.0
      %4770 = vmatprep.subr.mxu0 0.0
      %4771 = vmatpush2.msra.mxu0 0.0
      %4772 = vmatprep.subr.mxu0 0.0
      %4773 = vmatpush2.msra.mxu0 0.0
      %4774 = vmatprep.subr.mxu0 0.0
      %4775 = vmatpush2.msra.mxu0 0.0
      %4776 = vmatprep.subr.mxu0 0.0
      %4777 = vmatpush2.msra.mxu0 0.0
      %4778 = vmatprep.subr.mxu0 0.0
      %4779 = vmatpush2.msra.mxu0 0.0
      %4780 = vmatprep.subr.mxu0 0.0
      %4781 = vmatpush2.msra.mxu0 0.0
      %4782 = vmatprep.subr.mxu0 0.0
      %4783 = vmatpush2.msra.mxu0 0.0
      %4784 = vmatprep.subr.mxu0 0.0
      %4785 = vmatpush2.msra.mxu0 0.0
      %4786 = vmatprep.subr.mxu0 0.0
      %4787 = vmatpush2.msra.mxu0 0.0
      %4788 = vmatprep.subr.mxu0 0.0
      %4789 = vmatpush2.msra.mxu0 0.0
      %4790 = vmatprep.subr.mxu0 0.0
      %4791 = vmatpush2.msra.mxu0 0.0
      %4792 = vmatprep.subr.mxu0 0.0
      %4793 = vmatpush2.msra.mxu0 0.0
      %4794 = vmatprep.subr.mxu0 0.0
      %4795 = vmatpush2.msra.mxu0 0.0
      %4796 = vmatprep.mubr.f32.mxu0 0.0
      %4797 = vmatmul.mubr.f32.gmra.mxu0 %v4727
      %v4798 = vpop.f32.mrf.mxu0
      %v4799 = vadd.f32 %v4252, %v4798
      %v4800 = vpop.f32.mrf.mxu0
      %4801 = vmatprep.mubr.f32.mxu0 0.0
      %4802 = vmatmul.mubr.f32.gmra.mxu0 %v4730
      %v4803 = vpop.f32.mrf.mxu0
      %v4804 = vadd.f32 %v4252, %v4803
      %v4805 = vpop.f32.mrf.mxu0
      %4806 = vdwg.mxu0
      %v4807 = vtanh.pop %v4799
      %v4808 = vtanh.pop %v4804
      %s4809 = scalar_lea.vmem %s7, 4
      %v4810 = vld [vmem:[%s4809] sm:$0x1]
      %s4811 = scalar_lea.vmem %s5, 128
      %v4812 = vld [vmem:[%s4811] sm:$0xff]
      %v4813 = vld [vmem:[%s4811 + $0x8] sm:$0xff]
      %v4814 = vld [vmem:[%s4811 + $0x10] sm:$0xff]
      %v4815 = vld [vmem:[%s4811 + $0x18] sm:$0xff]
      %v4817 = vlaneseq
      %v4818 = vshrl.u32 %v4817, 7
      %v4819 = vsub.s32 0, %v4818
      %v4820 = vrot.slane %v4810, %v4819
      %v4823 = vsel %vm847, %v4807, 0
      %v4826 = vsel %vm847, %v4808, 0
      %4828 = vmatprep.subr.mxu0 0.0
      %4829 = vmatpush1.msra.mxu0 0.0
      %4830 = vmatprep.subr.mxu0 0.0
      %4831 = vmatpush1.msra.mxu0 0.0
      %4832 = vmatprep.subr.mxu0 0.0
      %4833 = vmatpush1.msra.mxu0 0.0
      %4834 = vmatprep.subr.mxu0 0.0
      %4835 = vmatpush1.msra.mxu0 0.0
      %4836 = vmatprep.subr.mxu0 0.0
      %4837 = vmatpush1.msra.mxu0 0.0
      %4838 = vmatprep.subr.mxu0 0.0
      %4839 = vmatpush1.msra.mxu0 0.0
      %4840 = vmatprep.subr.mxu0 0.0
      %4841 = vmatpush1.msra.mxu0 0.0
      %4842 = vmatprep.subr.mxu0 0.0
      %4843 = vmatpush1.msra.mxu0 0.0
      %4844 = vmatprep.subr.mxu0 0.0
      %4845 = vmatpush1.msra.mxu0 0.0
      %4846 = vmatprep.subr.mxu0 0.0
      %4847 = vmatpush1.msra.mxu0 0.0
      %4848 = vmatprep.subr.mxu0 0.0
      %4849 = vmatpush1.msra.mxu0 0.0
      %4850 = vmatprep.subr.mxu0 0.0
      %4851 = vmatpush1.msra.mxu0 0.0
      %4852 = vmatprep.subr.mxu0 0.0
      %4853 = vmatpush1.msra.mxu0 %v4815
      %4854 = vmatprep.subr.mxu0 0.0
      %4855 = vmatpush1.msra.mxu0 %v4814
      %4856 = vmatprep.subr.mxu0 0.0
      %4857 = vmatpush1.msra.mxu0 %v4813
      %4858 = vmatprep.subr.mxu0 0.0
      %4859 = vmatpush1.msra.mxu0 %v4812
      %4860 = vmatprep.subr.mxu0 0.0
      %4861 = vmatpush2.msra.mxu0 0.0
      %4862 = vmatprep.subr.mxu0 0.0
      %4863 = vmatpush2.msra.mxu0 0.0
      %4864 = vmatprep.subr.mxu0 0.0
      %4865 = vmatpush2.msra.mxu0 0.0
      %4866 = vmatprep.subr.mxu0 0.0
      %4867 = vmatpush2.msra.mxu0 0.0
      %4868 = vmatprep.subr.mxu0 0.0
      %4869 = vmatpush2.msra.mxu0 0.0
      %4870 = vmatprep.subr.mxu0 0.0
      %4871 = vmatpush2.msra.mxu0 0.0
      %4872 = vmatprep.subr.mxu0 0.0
      %4873 = vmatpush2.msra.mxu0 0.0
      %4874 = vmatprep.subr.mxu0 0.0
      %4875 = vmatpush2.msra.mxu0 0.0
      %4876 = vmatprep.subr.mxu0 0.0
      %4877 = vmatpush2.msra.mxu0 0.0
      %4878 = vmatprep.subr.mxu0 0.0
      %4879 = vmatpush2.msra.mxu0 0.0
      %4880 = vmatprep.subr.mxu0 0.0
      %4881 = vmatpush2.msra.mxu0 0.0
      %4882 = vmatprep.subr.mxu0 0.0
      %4883 = vmatpush2.msra.mxu0 0.0
      %4884 = vmatprep.subr.mxu0 0.0
      %4885 = vmatpush2.msra.mxu0 0.0
      %4886 = vmatprep.subr.mxu0 0.0
      %4887 = vmatpush2.msra.mxu0 0.0
      %4888 = vmatprep.subr.mxu0 0.0
      %4889 = vmatpush2.msra.mxu0 0.0
      %4890 = vmatprep.subr.mxu0 0.0
      %4891 = vmatpush2.msra.mxu0 0.0
      %4892 = vmatprep.mubr.f32.mxu0 0.0
      %4893 = vmatmul.mubr.f32.gmra.mxu0 %v4823
      %v4894 = vpop.f32.mrf.mxu0
      %v4895 = vadd.f32 %v4820, %v4894
      %v4896 = vpop.f32.mrf.mxu0
      %4897 = vmatprep.mubr.f32.mxu0 0.0
      %4898 = vmatmul.mubr.f32.gmra.mxu0 %v4826
      %v4899 = vpop.f32.mrf.mxu0
      %v4900 = vadd.f32 %v4820, %v4899
      %v4901 = vpop.f32.mrf.mxu0
      %4902 = vdwg.mxu0
      %v4903 = vadd.f32 %v648, %v4895
      %v4904 = vadd.f32 %v654, %v4900
      %v4905 = vadd.f32 %v660, %v4895
      %v4906 = vadd.f32 %v666, %v4900
      %v4907 = vadd.f32 %v672, %v4895
      %v4908 = vadd.f32 %v678, %v4900
      %v4909 = vadd.f32 %v684, %v4895
      %v4910 = vadd.f32 %v690, %v4900
      %v4911 = vadd.f32 %v696, %v4895
      %v4912 = vadd.f32 %v702, %v4900
      %v4913 = vadd.f32 %v708, %v4895
      %v4914 = vadd.f32 %v714, %v4900
      %v4915 = vadd.f32 %v720, %v4895
      %v4916 = vadd.f32 %v726, %v4900
      %v4917 = vadd.f32 %v732, %v4895
      %v4918 = vadd.f32 %v738, %v4900
      %v4919 = vadd.f32 %v744, %v4895
      %v4920 = vadd.f32 %v750, %v4900
      %v4921 = vadd.f32 %v756, %v4895
      %v4922 = vadd.f32 %v762, %v4900
      %v4923 = vadd.f32 %v768, %v4895
      %v4924 = vadd.f32 %v774, %v4900
      %v4925 = vadd.f32 %v780, %v4895
      %v4926 = vadd.f32 %v786, %v4900
      %v4927 = vadd.f32 %v792, %v4895
      %v4928 = vadd.f32 %v798, %v4900
      %v4929 = vadd.f32 %v804, %v4895
      %v4930 = vadd.f32 %v810, %v4900
      %v4931 = vadd.f32 %v816, %v4895
      %v4932 = vadd.f32 %v822, %v4900
      %v4933 = vadd.f32 %v828, %v4895
      %v4934 = vadd.f32 %v834, %v4900
      %v4937 = vcombine.high %v4895, %v4895
      %v4939 = vunpack.c.l.s4 1966171168
      %v4940 = vunpack.c.0.s8 %v4939
      %v4941 = vlaneseq
      %v4942 = vshrl.u32 %v4941, 7
      %v4943 = vsub.s32 %v4940, %v4942
      %v4944 = vrot.slane %v4895, %v4943
      %v4946 = vunpack.c.l.s4 1966171168
      %v4947 = vunpack.c.0.s8 %v4946
      %v4948 = vlaneseq
      %v4949 = vshrl.u32 %v4948, 7
      %v4950 = vsub.s32 %v4947, %v4949
      %v4951 = vrot.slane %v4937, %v4950
      %v4952 = vcombine.high %v4944, %v4944
      %v4953 = vcombine.high %v4951, %v4951
      %v4955 = vunpack.c.l.s4 1966171168
      %v4956 = vunpack.c.0.s8 %v4955
      %v4957 = vlaneseq
      %v4958 = vshrl.u32 %v4957, 7
      %v4959 = vsub.s32 %v4956, %v4958
      %v4960 = vrot.slane %v4944, %v4959
      %v4962 = vunpack.c.l.s4 1966171168
      %v4963 = vunpack.c.0.s8 %v4962
      %v4964 = vlaneseq
      %v4965 = vshrl.u32 %v4964, 7
      %v4966 = vsub.s32 %v4963, %v4965
      %v4967 = vrot.slane %v4951, %v4966
      %v4969 = vunpack.c.l.s4 1966171168
      %v4970 = vunpack.c.0.s8 %v4969
      %v4971 = vlaneseq
      %v4972 = vshrl.u32 %v4971, 7
      %v4973 = vsub.s32 %v4970, %v4972
      %v4974 = vrot.slane %v4952, %v4973
      %v4976 = vunpack.c.l.s4 1966171168
      %v4977 = vunpack.c.0.s8 %v4976
      %v4978 = vlaneseq
      %v4979 = vshrl.u32 %v4978, 7
      %v4980 = vsub.s32 %v4977, %v4979
      %v4981 = vrot.slane %v4953, %v4980
      %v4982 = vcombine.high %v4960, %v4960
      %v4983 = vcombine.high %v4967, %v4967
      %v4984 = vcombine.high %v4974, %v4974
      %v4985 = vcombine.high %v4981, %v4981
      %v4986 = vcombine.high %v4900, %v4900
      %v4988 = vunpack.c.l.s4 1966171168
      %v4989 = vunpack.c.0.s8 %v4988
      %v4990 = vlaneseq
      %v4991 = vshrl.u32 %v4990, 7
      %v4992 = vsub.s32 %v4989, %v4991
      %v4993 = vrot.slane %v4900, %v4992
      %v4995 = vunpack.c.l.s4 1966171168
      %v4996 = vunpack.c.0.s8 %v4995
      %v4997 = vlaneseq
      %v4998 = vshrl.u32 %v4997, 7
      %v4999 = vsub.s32 %v4996, %v4998
      %v5000 = vrot.slane %v4986, %v4999
      %v5001 = vcombine.high %v4993, %v4993
      %v5002 = vcombine.high %v5000, %v5000
      %v5004 = vunpack.c.l.s4 1966171168
      %v5005 = vunpack.c.0.s8 %v5004
      %v5006 = vlaneseq
      %v5007 = vshrl.u32 %v5006, 7
      %v5008 = vsub.s32 %v5005, %v5007
      %v5009 = vrot.slane %v4993, %v5008
      %v5011 = vunpack.c.l.s4 1966171168
      %v5012 = vunpack.c.0.s8 %v5011
      %v5013 = vlaneseq
      %v5014 = vshrl.u32 %v5013, 7
      %v5015 = vsub.s32 %v5012, %v5014
      %v5016 = vrot.slane %v5000, %v5015
      %v5018 = vunpack.c.l.s4 1966171168
      %v5019 = vunpack.c.0.s8 %v5018
      %v5020 = vlaneseq
      %v5021 = vshrl.u32 %v5020, 7
      %v5022 = vsub.s32 %v5019, %v5021
      %v5023 = vrot.slane %v5001, %v5022
      %v5025 = vunpack.c.l.s4 1966171168
      %v5026 = vunpack.c.0.s8 %v5025
      %v5027 = vlaneseq
      %v5028 = vshrl.u32 %v5027, 7
      %v5029 = vsub.s32 %v5026, %v5028
      %v5030 = vrot.slane %v5002, %v5029
      %v5031 = vcombine.high %v5009, %v5009
      %v5032 = vcombine.high %v5016, %v5016
      %v5033 = vcombine.high %v5023, %v5023
      %v5034 = vcombine.high %v5030, %v5030
      %v5035 = vlaneseq
      %v5036 = vshrl.u32 %v5035, 7
      %v5037 = vsub.s32 0, %v5036
      %v5038 = vrot.slane %v4960, %v5037
      %v5039 = vlaneseq
      %v5040 = vshrl.u32 %v5039, 7
      %v5041 = vsub.s32 0, %v5040
      %v5042 = vrot.slane %v4974, %v5041
      %v5043 = vlaneseq
      %v5044 = vshrl.u32 %v5043, 7
      %v5045 = vsub.s32 0, %v5044
      %v5046 = vrot.slane %v4982, %v5045
      %v5047 = vlaneseq
      %v5048 = vshrl.u32 %v5047, 7
      %v5049 = vsub.s32 0, %v5048
      %v5050 = vrot.slane %v4984, %v5049
      %v5051 = vlaneseq
      %v5052 = vshrl.u32 %v5051, 7
      %v5053 = vsub.s32 0, %v5052
      %v5054 = vrot.slane %v4967, %v5053
      %v5055 = vlaneseq
      %v5056 = vshrl.u32 %v5055, 7
      %v5057 = vsub.s32 0, %v5056
      %v5058 = vrot.slane %v4981, %v5057
      %v5059 = vlaneseq
      %v5060 = vshrl.u32 %v5059, 7
      %v5061 = vsub.s32 0, %v5060
      %v5062 = vrot.slane %v4983, %v5061
      %v5063 = vlaneseq
      %v5064 = vshrl.u32 %v5063, 7
      %v5065 = vsub.s32 0, %v5064
      %v5066 = vrot.slane %v4985, %v5065
      %v5067 = vlaneseq
      %v5068 = vshrl.u32 %v5067, 7
      %v5069 = vsub.s32 0, %v5068
      %v5070 = vrot.slane %v5009, %v5069
      %v5071 = vlaneseq
      %v5072 = vshrl.u32 %v5071, 7
      %v5073 = vsub.s32 0, %v5072
      %v5074 = vrot.slane %v5023, %v5073
      %v5075 = vlaneseq
      %v5076 = vshrl.u32 %v5075, 7
      %v5077 = vsub.s32 0, %v5076
      %v5078 = vrot.slane %v5031, %v5077
      %v5079 = vlaneseq
      %v5080 = vshrl.u32 %v5079, 7
      %v5081 = vsub.s32 0, %v5080
      %v5082 = vrot.slane %v5033, %v5081
      %v5083 = vlaneseq
      %v5084 = vshrl.u32 %v5083, 7
      %v5085 = vsub.s32 0, %v5084
      %v5086 = vrot.slane %v5016, %v5085
      %v5087 = vlaneseq
      %v5088 = vshrl.u32 %v5087, 7
      %v5089 = vsub.s32 0, %v5088
      %v5090 = vrot.slane %v5030, %v5089
      %v5091 = vlaneseq
      %v5092 = vshrl.u32 %v5091, 7
      %v5093 = vsub.s32 0, %v5092
      %v5094 = vrot.slane %v5032, %v5093
      %v5095 = vlaneseq
      %v5096 = vshrl.u32 %v5095, 7
      %v5097 = vsub.s32 0, %v5096
      %v5098 = vrot.slane %v5034, %v5097
      %5099 = vrot.lane.b32.xlu0 %v5038, 96
      %v5100 = vpop.permute.xlu0 %5099
      %5101 = vrot.lane.b32.xlu0 %v5042, 96
      %v5102 = vpop.permute.xlu0 %5101
      %5103 = vrot.lane.b32.xlu0 %v5046, 96
      %v5104 = vpop.permute.xlu0 %5103
      %5105 = vrot.lane.b32.xlu0 %v5050, 96
      %v5106 = vpop.permute.xlu0 %5105
      %5107 = vrot.lane.b32.xlu0 %v5054, 96
      %v5108 = vpop.permute.xlu0 %5107
      %5109 = vrot.lane.b32.xlu0 %v5058, 96
      %v5110 = vpop.permute.xlu0 %5109
      %5111 = vrot.lane.b32.xlu0 %v5062, 96
      %v5112 = vpop.permute.xlu0 %5111
      %5113 = vrot.lane.b32.xlu0 %v5066, 96
      %v5114 = vpop.permute.xlu0 %5113
      %5115 = vrot.lane.b32.xlu0 %v5070, 96
      %v5116 = vpop.permute.xlu0 %5115
      %5117 = vrot.lane.b32.xlu0 %v5074, 96
      %v5118 = vpop.permute.xlu0 %5117
      %5119 = vrot.lane.b32.xlu0 %v5078, 96
      %v5120 = vpop.permute.xlu0 %5119
      %5121 = vrot.lane.b32.xlu0 %v5082, 96
      %v5122 = vpop.permute.xlu0 %5121
      %5123 = vrot.lane.b32.xlu0 %v5086, 96
      %v5124 = vpop.permute.xlu0 %5123
      %5125 = vrot.lane.b32.xlu0 %v5090, 96
      %v5126 = vpop.permute.xlu0 %5125
      %5127 = vrot.lane.b32.xlu0 %v5094, 96
      %v5128 = vpop.permute.xlu0 %5127
      %5129 = vrot.lane.b32.xlu0 %v5098, 96
      %v5130 = vpop.permute.xlu0 %5129
      %v5147 = vadd.f32 %v4903, %v5100
      %v5148 = vadd.f32 %v4904, %v5100
      %v5149 = vadd.f32 %v4905, %v5102
      %v5150 = vadd.f32 %v4906, %v5102
      %v5151 = vadd.f32 %v4907, %v5104
      %v5152 = vadd.f32 %v4908, %v5104
      %v5153 = vadd.f32 %v4909, %v5106
      %v5154 = vadd.f32 %v4910, %v5106
      %v5155 = vadd.f32 %v4911, %v5108
      %v5156 = vadd.f32 %v4912, %v5108
      %v5157 = vadd.f32 %v4913, %v5110
      %v5158 = vadd.f32 %v4914, %v5110
      %v5159 = vadd.f32 %v4915, %v5112
      %v5160 = vadd.f32 %v4916, %v5112
      %v5161 = vadd.f32 %v4917, %v5114
      %v5162 = vadd.f32 %v4918, %v5114
      %v5163 = vadd.f32 %v4919, %v5116
      %v5164 = vadd.f32 %v4920, %v5116
      %v5165 = vadd.f32 %v4921, %v5118
      %v5166 = vadd.f32 %v4922, %v5118
      %v5167 = vadd.f32 %v4923, %v5120
      %v5168 = vadd.f32 %v4924, %v5120
      %v5169 = vadd.f32 %v4925, %v5122
      %v5170 = vadd.f32 %v4926, %v5122
      %v5171 = vadd.f32 %v4927, %v5124
      %v5172 = vadd.f32 %v4928, %v5124
      %v5173 = vadd.f32 %v4929, %v5126
      %v5174 = vadd.f32 %v4930, %v5126
      %v5175 = vadd.f32 %v4931, %v5128
      %v5176 = vadd.f32 %v4932, %v5128
      %v5177 = vadd.f32 %v4933, %v5130
      %v5178 = vadd.f32 %v4934, %v5130
      %vm5179 = vcmp.gt.f32.partialorder %v5147, 0.0
      %vm5180 = vcmp.gt.f32.partialorder %v5148, 0.0
      %vm5181 = vcmp.gt.f32.partialorder %v5149, 0.0
      %vm5182 = vcmp.gt.f32.partialorder %v5150, 0.0
      %vm5183 = vcmp.gt.f32.partialorder %v5151, 0.0
      %vm5184 = vcmp.gt.f32.partialorder %v5152, 0.0
      %vm5185 = vcmp.gt.f32.partialorder %v5153, 0.0
      %vm5186 = vcmp.gt.f32.partialorder %v5154, 0.0
      %vm5187 = vcmp.gt.f32.partialorder %v5155, 0.0
      %vm5188 = vcmp.gt.f32.partialorder %v5156, 0.0
      %vm5189 = vcmp.gt.f32.partialorder %v5157, 0.0
      %vm5190 = vcmp.gt.f32.partialorder %v5158, 0.0
      %vm5191 = vcmp.gt.f32.partialorder %v5159, 0.0
      %vm5192 = vcmp.gt.f32.partialorder %v5160, 0.0
      %vm5193 = vcmp.gt.f32.partialorder %v5161, 0.0
      %vm5194 = vcmp.gt.f32.partialorder %v5162, 0.0
      %vm5195 = vcmp.gt.f32.partialorder %v5163, 0.0
      %vm5196 = vcmp.gt.f32.partialorder %v5164, 0.0
      %vm5197 = vcmp.gt.f32.partialorder %v5165, 0.0
      %vm5198 = vcmp.gt.f32.partialorder %v5166, 0.0
      %vm5199 = vcmp.gt.f32.partialorder %v5167, 0.0
      %vm5200 = vcmp.gt.f32.partialorder %v5168, 0.0
      %vm5201 = vcmp.gt.f32.partialorder %v5169, 0.0
      %vm5202 = vcmp.gt.f32.partialorder %v5170, 0.0
      %vm5203 = vcmp.gt.f32.partialorder %v5171, 0.0
      %vm5204 = vcmp.gt.f32.partialorder %v5172, 0.0
      %vm5205 = vcmp.gt.f32.partialorder %v5173, 0.0
      %vm5206 = vcmp.gt.f32.partialorder %v5174, 0.0
      %vm5207 = vcmp.gt.f32.partialorder %v5175, 0.0
      %vm5208 = vcmp.gt.f32.partialorder %v5176, 0.0
      %vm5209 = vcmp.gt.f32.partialorder %v5177, 0.0
      %vm5210 = vcmp.gt.f32.partialorder %v5178, 0.0
      %v5211 = vmul.f32 %v5147, 0.2
      %v5212 = vmul.f32 %v5148, 0.2
      %v5213 = vmul.f32 %v5149, 0.2
      %v5214 = vmul.f32 %v5150, 0.2
      %v5215 = vmul.f32 %v5151, 0.2
      %v5216 = vmul.f32 %v5152, 0.2
      %v5217 = vmul.f32 %v5153, 0.2
      %v5218 = vmul.f32 %v5154, 0.2
      %v5219 = vmul.f32 %v5155, 0.2
      %v5220 = vmul.f32 %v5156, 0.2
      %v5221 = vmul.f32 %v5157, 0.2
      %v5222 = vmul.f32 %v5158, 0.2
      %v5223 = vmul.f32 %v5159, 0.2
      %v5224 = vmul.f32 %v5160, 0.2
      %v5225 = vmul.f32 %v5161, 0.2
      %v5226 = vmul.f32 %v5162, 0.2
      %v5227 = vmul.f32 %v5163, 0.2
      %v5228 = vmul.f32 %v5164, 0.2
      %v5229 = vmul.f32 %v5165, 0.2
      %v5230 = vmul.f32 %v5166, 0.2
      %v5231 = vmul.f32 %v5167, 0.2
      %v5232 = vmul.f32 %v5168, 0.2
      %v5233 = vmul.f32 %v5169, 0.2
      %v5234 = vmul.f32 %v5170, 0.2
      %v5235 = vmul.f32 %v5171, 0.2
      %v5236 = vmul.f32 %v5172, 0.2
      %v5237 = vmul.f32 %v5173, 0.2
      %v5238 = vmul.f32 %v5174, 0.2
      %v5239 = vmul.f32 %v5175, 0.2
      %v5240 = vmul.f32 %v5176, 0.2
      %v5241 = vmul.f32 %v5177, 0.2
      %v5242 = vmul.f32 %v5178, 0.2
      %v5243 = vsel %vm5179, %v5147, %v5211
      %v5244 = vsel %vm5180, %v5148, %v5212
      %v5245 = vsel %vm5181, %v5149, %v5213
      %v5246 = vsel %vm5182, %v5150, %v5214
      %v5247 = vsel %vm5183, %v5151, %v5215
      %v5248 = vsel %vm5184, %v5152, %v5216
      %v5249 = vsel %vm5185, %v5153, %v5217
      %v5250 = vsel %vm5186, %v5154, %v5218
      %v5251 = vsel %vm5187, %v5155, %v5219
      %v5252 = vsel %vm5188, %v5156, %v5220
      %v5253 = vsel %vm5189, %v5157, %v5221
      %v5254 = vsel %vm5190, %v5158, %v5222
      %v5255 = vsel %vm5191, %v5159, %v5223
      %v5256 = vsel %vm5192, %v5160, %v5224
      %v5257 = vsel %vm5193, %v5161, %v5225
      %v5258 = vsel %vm5194, %v5162, %v5226
      %v5259 = vsel %vm5195, %v5163, %v5227
      %v5260 = vsel %vm5196, %v5164, %v5228
      %v5261 = vsel %vm5197, %v5165, %v5229
      %v5262 = vsel %vm5198, %v5166, %v5230
      %v5263 = vsel %vm5199, %v5167, %v5231
      %v5264 = vsel %vm5200, %v5168, %v5232
      %v5265 = vsel %vm5201, %v5169, %v5233
      %v5266 = vsel %vm5202, %v5170, %v5234
      %v5267 = vsel %vm5203, %v5171, %v5235
      %v5268 = vsel %vm5204, %v5172, %v5236
      %v5269 = vsel %vm5205, %v5173, %v5237
      %v5270 = vsel %vm5206, %v5174, %v5238
      %v5271 = vsel %vm5207, %v5175, %v5239
      %v5272 = vsel %vm5208, %v5176, %v5240
      %v5273 = vsel %vm5209, %v5177, %v5241
      %v5274 = vsel %vm5210, %v5178, %v5242
      %5275 = vrot.lane.b32.xlu0 %v4820, 64
      %v5276 = vpop.permute.xlu0 %5275
      %v5278 = vmul.f32 %v5243, %v5276
      %v5279 = vmul.f32 %v5244, %v5276
      %v5280 = vmul.f32 %v5245, %v5276
      %v5281 = vmul.f32 %v5246, %v5276
      %v5282 = vmul.f32 %v5247, %v5276
      %v5283 = vmul.f32 %v5248, %v5276
      %v5284 = vmul.f32 %v5249, %v5276
      %v5285 = vmul.f32 %v5250, %v5276
      %v5286 = vmul.f32 %v5251, %v5276
      %v5287 = vmul.f32 %v5252, %v5276
      %v5288 = vmul.f32 %v5253, %v5276
      %v5289 = vmul.f32 %v5254, %v5276
      %v5290 = vmul.f32 %v5255, %v5276
      %v5291 = vmul.f32 %v5256, %v5276
      %v5292 = vmul.f32 %v5257, %v5276
      %v5293 = vmul.f32 %v5258, %v5276
      %v5294 = vmul.f32 %v5259, %v5276
      %v5295 = vmul.f32 %v5260, %v5276
      %v5296 = vmul.f32 %v5261, %v5276
      %v5297 = vmul.f32 %v5262, %v5276
      %v5298 = vmul.f32 %v5263, %v5276
      %v5299 = vmul.f32 %v5264, %v5276
      %v5300 = vmul.f32 %v5265, %v5276
      %v5301 = vmul.f32 %v5266, %v5276
      %v5302 = vmul.f32 %v5267, %v5276
      %v5303 = vmul.f32 %v5268, %v5276
      %v5304 = vmul.f32 %v5269, %v5276
      %v5305 = vmul.f32 %v5270, %v5276
      %v5306 = vmul.f32 %v5271, %v5276
      %v5307 = vmul.f32 %v5272, %v5276
      %v5308 = vmul.f32 %v5273, %v5276
      %v5309 = vmul.f32 %v5274, %v5276
      %v5310 = vsel %vm847, %v5278, 0.0
      %5311 = vadd.xlane.f32.xlu0 %v5310
      %v5312 = vpop.xlane.xlu0 %5311
      %v5313 = vsel %vm847, %v5279, 0.0
      %5314 = vadd.xlane.f32.xlu0 %v5313
      %v5315 = vpop.xlane.xlu0 %5314
      %v5316 = vsel %vm847, %v5280, 0.0
      %5317 = vadd.xlane.f32.xlu0 %v5316
      %v5318 = vpop.xlane.xlu0 %5317
      %v5319 = vsel %vm847, %v5281, 0.0
      %5320 = vadd.xlane.f32.xlu0 %v5319
      %v5321 = vpop.xlane.xlu0 %5320
      %v5322 = vsel %vm847, %v5282, 0.0
      %5323 = vadd.xlane.f32.xlu0 %v5322
      %v5324 = vpop.xlane.xlu0 %5323
      %v5325 = vsel %vm847, %v5283, 0.0
      %5326 = vadd.xlane.f32.xlu0 %v5325
      %v5327 = vpop.xlane.xlu0 %5326
      %v5328 = vsel %vm847, %v5284, 0.0
      %5329 = vadd.xlane.f32.xlu0 %v5328
      %v5330 = vpop.xlane.xlu0 %5329
      %v5331 = vsel %vm847, %v5285, 0.0
      %5332 = vadd.xlane.f32.xlu0 %v5331
      %v5333 = vpop.xlane.xlu0 %5332
      %v5334 = vsel %vm847, %v5286, 0.0
      %5335 = vadd.xlane.f32.xlu0 %v5334
      %v5336 = vpop.xlane.xlu0 %5335
      %v5337 = vsel %vm847, %v5287, 0.0
      %5338 = vadd.xlane.f32.xlu0 %v5337
      %v5339 = vpop.xlane.xlu0 %5338
      %v5340 = vsel %vm847, %v5288, 0.0
      %5341 = vadd.xlane.f32.xlu0 %v5340
      %v5342 = vpop.xlane.xlu0 %5341
      %v5343 = vsel %vm847, %v5289, 0.0
      %5344 = vadd.xlane.f32.xlu0 %v5343
      %v5345 = vpop.xlane.xlu0 %5344
      %v5346 = vsel %vm847, %v5290, 0.0
      %5347 = vadd.xlane.f32.xlu0 %v5346
      %v5348 = vpop.xlane.xlu0 %5347
      %v5349 = vsel %vm847, %v5291, 0.0
      %5350 = vadd.xlane.f32.xlu0 %v5349
      %v5351 = vpop.xlane.xlu0 %5350
      %v5352 = vsel %vm847, %v5292, 0.0
      %5353 = vadd.xlane.f32.xlu0 %v5352
      %v5354 = vpop.xlane.xlu0 %5353
      %v5355 = vsel %vm847, %v5293, 0.0
      %5356 = vadd.xlane.f32.xlu0 %v5355
      %v5357 = vpop.xlane.xlu0 %5356
      %v5358 = vsel %vm847, %v5294, 0.0
      %5359 = vadd.xlane.f32.xlu0 %v5358
      %v5360 = vpop.xlane.xlu0 %5359
      %v5361 = vsel %vm847, %v5295, 0.0
      %5362 = vadd.xlane.f32.xlu0 %v5361
      %v5363 = vpop.xlane.xlu0 %5362
      %v5364 = vsel %vm847, %v5296, 0.0
      %5365 = vadd.xlane.f32.xlu0 %v5364
      %v5366 = vpop.xlane.xlu0 %5365
      %v5367 = vsel %vm847, %v5297, 0.0
      %5368 = vadd.xlane.f32.xlu0 %v5367
      %v5369 = vpop.xlane.xlu0 %5368
      %v5370 = vsel %vm847, %v5298, 0.0
      %5371 = vadd.xlane.f32.xlu0 %v5370
      %v5372 = vpop.xlane.xlu0 %5371
      %v5373 = vsel %vm847, %v5299, 0.0
      %5374 = vadd.xlane.f32.xlu0 %v5373
      %v5375 = vpop.xlane.xlu0 %5374
      %v5376 = vsel %vm847, %v5300, 0.0
      %5377 = vadd.xlane.f32.xlu0 %v5376
      %v5378 = vpop.xlane.xlu0 %5377
      %v5379 = vsel %vm847, %v5301, 0.0
      %5380 = vadd.xlane.f32.xlu0 %v5379
      %v5381 = vpop.xlane.xlu0 %5380
      %v5382 = vsel %vm847, %v5302, 0.0
      %5383 = vadd.xlane.f32.xlu0 %v5382
      %v5384 = vpop.xlane.xlu0 %5383
      %v5385 = vsel %vm847, %v5303, 0.0
      %5386 = vadd.xlane.f32.xlu0 %v5385
      %v5387 = vpop.xlane.xlu0 %5386
      %v5388 = vsel %vm847, %v5304, 0.0
      %5389 = vadd.xlane.f32.xlu0 %v5388
      %v5390 = vpop.xlane.xlu0 %5389
      %v5391 = vsel %vm847, %v5305, 0.0
      %5392 = vadd.xlane.f32.xlu0 %v5391
      %v5393 = vpop.xlane.xlu0 %5392
      %v5394 = vsel %vm847, %v5306, 0.0
      %5395 = vadd.xlane.f32.xlu0 %v5394
      %v5396 = vpop.xlane.xlu0 %5395
      %v5397 = vsel %vm847, %v5307, 0.0
      %5398 = vadd.xlane.f32.xlu0 %v5397
      %v5399 = vpop.xlane.xlu0 %5398
      %v5400 = vsel %vm847, %v5308, 0.0
      %5401 = vadd.xlane.f32.xlu0 %v5400
      %v5402 = vpop.xlane.xlu0 %5401
      %v5403 = vsel %vm847, %v5309, 0.0
      %5404 = vadd.xlane.f32.xlu0 %v5403
      %v5405 = vpop.xlane.xlu0 %5404
      %v5438 = vlaneseq
      %v5439 = vshrl.u32 %v5438, 7
      %v5440 = vsub.s32 %v1467, %v5439
      %v5441 = vrot.slane %v5312, %v5440
      %v5442 = vlaneseq
      %v5443 = vshrl.u32 %v5442, 7
      %v5444 = vsub.s32 %v1472, %v5443
      %v5445 = vrot.slane %v5315, %v5444
      %v5446 = vsel %vm1477, %v5445, %v5441
      %v5447 = vlaneseq
      %v5448 = vshrl.u32 %v5447, 7
      %v5449 = vsub.s32 %v1467, %v5448
      %v5450 = vrot.slane %v5318, %v5449
      %v5451 = vlaneseq
      %v5452 = vshrl.u32 %v5451, 7
      %v5453 = vsub.s32 %v1472, %v5452
      %v5454 = vrot.slane %v5321, %v5453
      %v5455 = vsel %vm1477, %v5454, %v5450
      %v5456 = vlaneseq
      %v5457 = vshrl.u32 %v5456, 7
      %v5458 = vsub.s32 %v1467, %v5457
      %v5459 = vrot.slane %v5324, %v5458
      %v5460 = vlaneseq
      %v5461 = vshrl.u32 %v5460, 7
      %v5462 = vsub.s32 %v1472, %v5461
      %v5463 = vrot.slane %v5327, %v5462
      %v5464 = vsel %vm1477, %v5463, %v5459
      %v5465 = vlaneseq
      %v5466 = vshrl.u32 %v5465, 7
      %v5467 = vsub.s32 %v1467, %v5466
      %v5468 = vrot.slane %v5330, %v5467
      %v5469 = vlaneseq
      %v5470 = vshrl.u32 %v5469, 7
      %v5471 = vsub.s32 %v1472, %v5470
      %v5472 = vrot.slane %v5333, %v5471
      %v5473 = vsel %vm1477, %v5472, %v5468
      %v5474 = vlaneseq
      %v5475 = vshrl.u32 %v5474, 7
      %v5476 = vsub.s32 %v1467, %v5475
      %v5477 = vrot.slane %v5336, %v5476
      %v5478 = vlaneseq
      %v5479 = vshrl.u32 %v5478, 7
      %v5480 = vsub.s32 %v1472, %v5479
      %v5481 = vrot.slane %v5339, %v5480
      %v5482 = vsel %vm1477, %v5481, %v5477
      %v5483 = vlaneseq
      %v5484 = vshrl.u32 %v5483, 7
      %v5485 = vsub.s32 %v1467, %v5484
      %v5486 = vrot.slane %v5342, %v5485
      %v5487 = vlaneseq
      %v5488 = vshrl.u32 %v5487, 7
      %v5489 = vsub.s32 %v1472, %v5488
      %v5490 = vrot.slane %v5345, %v5489
      %v5491 = vsel %vm1477, %v5490, %v5486
      %v5492 = vlaneseq
      %v5493 = vshrl.u32 %v5492, 7
      %v5494 = vsub.s32 %v1467, %v5493
      %v5495 = vrot.slane %v5348, %v5494
      %v5496 = vlaneseq
      %v5497 = vshrl.u32 %v5496, 7
      %v5498 = vsub.s32 %v1472, %v5497
      %v5499 = vrot.slane %v5351, %v5498
      %v5500 = vsel %vm1477, %v5499, %v5495
      %v5501 = vlaneseq
      %v5502 = vshrl.u32 %v5501, 7
      %v5503 = vsub.s32 %v1467, %v5502
      %v5504 = vrot.slane %v5354, %v5503
      %v5505 = vlaneseq
      %v5506 = vshrl.u32 %v5505, 7
      %v5507 = vsub.s32 %v1472, %v5506
      %v5508 = vrot.slane %v5357, %v5507
      %v5509 = vsel %vm1477, %v5508, %v5504
      %v5510 = vlaneseq
      %v5511 = vshrl.u32 %v5510, 7
      %v5512 = vsub.s32 %v1467, %v5511
      %v5513 = vrot.slane %v5360, %v5512
      %v5514 = vlaneseq
      %v5515 = vshrl.u32 %v5514, 7
      %v5516 = vsub.s32 %v1472, %v5515
      %v5517 = vrot.slane %v5363, %v5516
      %v5518 = vsel %vm1477, %v5517, %v5513
      %v5519 = vlaneseq
      %v5520 = vshrl.u32 %v5519, 7
      %v5521 = vsub.s32 %v1467, %v5520
      %v5522 = vrot.slane %v5366, %v5521
      %v5523 = vlaneseq
      %v5524 = vshrl.u32 %v5523, 7
      %v5525 = vsub.s32 %v1472, %v5524
      %v5526 = vrot.slane %v5369, %v5525
      %v5527 = vsel %vm1477, %v5526, %v5522
      %v5528 = vlaneseq
      %v5529 = vshrl.u32 %v5528, 7
      %v5530 = vsub.s32 %v1467, %v5529
      %v5531 = vrot.slane %v5372, %v5530
      %v5532 = vlaneseq
      %v5533 = vshrl.u32 %v5532, 7
      %v5534 = vsub.s32 %v1472, %v5533
      %v5535 = vrot.slane %v5375, %v5534
      %v5536 = vsel %vm1477, %v5535, %v5531
      %v5537 = vlaneseq
      %v5538 = vshrl.u32 %v5537, 7
      %v5539 = vsub.s32 %v1467, %v5538
      %v5540 = vrot.slane %v5378, %v5539
      %v5541 = vlaneseq
      %v5542 = vshrl.u32 %v5541, 7
      %v5543 = vsub.s32 %v1472, %v5542
      %v5544 = vrot.slane %v5381, %v5543
      %v5545 = vsel %vm1477, %v5544, %v5540
      %v5546 = vlaneseq
      %v5547 = vshrl.u32 %v5546, 7
      %v5548 = vsub.s32 %v1467, %v5547
      %v5549 = vrot.slane %v5384, %v5548
      %v5550 = vlaneseq
      %v5551 = vshrl.u32 %v5550, 7
      %v5552 = vsub.s32 %v1472, %v5551
      %v5553 = vrot.slane %v5387, %v5552
      %v5554 = vsel %vm1477, %v5553, %v5549
      %v5555 = vlaneseq
      %v5556 = vshrl.u32 %v5555, 7
      %v5557 = vsub.s32 %v1467, %v5556
      %v5558 = vrot.slane %v5390, %v5557
      %v5559 = vlaneseq
      %v5560 = vshrl.u32 %v5559, 7
      %v5561 = vsub.s32 %v1472, %v5560
      %v5562 = vrot.slane %v5393, %v5561
      %v5563 = vsel %vm1477, %v5562, %v5558
      %v5564 = vlaneseq
      %v5565 = vshrl.u32 %v5564, 7
      %v5566 = vsub.s32 %v1467, %v5565
      %v5567 = vrot.slane %v5396, %v5566
      %v5568 = vlaneseq
      %v5569 = vshrl.u32 %v5568, 7
      %v5570 = vsub.s32 %v1472, %v5569
      %v5571 = vrot.slane %v5399, %v5570
      %v5572 = vsel %vm1477, %v5571, %v5567
      %v5573 = vlaneseq
      %v5574 = vshrl.u32 %v5573, 7
      %v5575 = vsub.s32 %v1467, %v5574
      %v5576 = vrot.slane %v5402, %v5575
      %v5577 = vlaneseq
      %v5578 = vshrl.u32 %v5577, 7
      %v5579 = vsub.s32 %v1472, %v5578
      %v5580 = vrot.slane %v5405, %v5579
      %v5581 = vsel %vm1477, %v5580, %v5576
      %v5582 = vsel %vm1614, %v5455, %v5446
      %v5583 = vsel %vm1616, %v5464, %v5582
      %v5584 = vsel %vm1618, %v5473, %v5583
      %v5585 = vsel %vm1620, %v5482, %v5584
      %v5586 = vsel %vm1622, %v5491, %v5585
      %v5587 = vsel %vm1624, %v5500, %v5586
      %v5588 = vsel %vm1626, %v5509, %v5587
      %v5589 = vsel %vm1614, %v5527, %v5518
      %v5590 = vsel %vm1616, %v5536, %v5589
      %v5591 = vsel %vm1618, %v5545, %v5590
      %v5592 = vsel %vm1620, %v5554, %v5591
      %v5593 = vsel %vm1622, %v5563, %v5592
      %v5594 = vsel %vm1624, %v5572, %v5593
      %v5595 = vsel %vm1626, %v5581, %v5594
      %v5598 = vsel %vm1432, %v5588, -1e+30
      %v5599 = vsel %vm1433, %v5595, -1e+30
      %v5600 = vsel %vm1639, %v5598, -inf
      %5601 = vmax.xlane.f32.xlu0 %v5600
      %v5602 = vpop.xlane.xlu0 %5601
      %v5603 = vsel %vm1639, %v5599, -inf
      %5604 = vmax.xlane.f32.xlu0 %v5603
      %v5605 = vpop.xlane.xlu0 %5604
      %v5606 = vsub.f32 %v5598, %v5602
      %v5607 = vsub.f32 %v5599, %v5605
      %v5608 = vmul.f32 %v5606, 1.442695
      %v5609 = vpow.pop %v5608
      %v5610 = vmul.f32 %v5607, 1.442695
      %v5611 = vpow.pop %v5610
      %v5612 = vsel %vm1639, %v5609, 0.0
      %5613 = vadd.xlane.f32.xlu0 %v5612
      %v5614 = vpop.xlane.xlu0 %5613
      %v5615 = vsel %vm1639, %v5611, 0.0
      %5616 = vadd.xlane.f32.xlu0 %v5615
      %v5617 = vpop.xlane.xlu0 %5616
      %v5618 = vrcp.pop %v5614
      %v5619 = vrcp.pop %v5617
      %v5620 = vmul.f32 %v5609, %v5618
      %v5621 = vmul.f32 %v5611, %v5619
      %5622 = vrot.lane.b32.xlu0 %v4820, 32
      %v5623 = vpop.permute.xlu0 %5622
      %v5626 = vsel %vm1639, %v5620, 0
      %v5629 = vsel %vm1639, %v5621, 0
      %5631 = vmatprep.subr.mxu0 0.0
      %5632 = vmatpush1.msra.mxu0 0.0
      %5633 = vmatprep.subr.mxu0 0.0
      %5634 = vmatpush1.msra.mxu0 0.0
      %5635 = vmatprep.subr.mxu0 0.0
      %5636 = vmatpush1.msra.mxu0 0.0
      %5637 = vmatprep.subr.mxu0 0.0
      %5638 = vmatpush1.msra.mxu0 0.0
      %5639 = vmatprep.subr.mxu0 0.0
      %5640 = vmatpush1.msra.mxu0 0.0
      %5641 = vmatprep.subr.mxu0 0.0
      %5642 = vmatpush1.msra.mxu0 0.0
      %5643 = vmatprep.subr.mxu0 0.0
      %5644 = vmatpush1.msra.mxu0 0.0
      %5645 = vmatprep.subr.mxu0 0.0
      %5646 = vmatpush1.msra.mxu0 0.0
      %5647 = vmatprep.subr.mxu0 0.0
      %5648 = vmatpush1.msra.mxu0 0.0
      %5649 = vmatprep.subr.mxu0 0.0
      %5650 = vmatpush1.msra.mxu0 0.0
      %5651 = vmatprep.subr.mxu0 0.0
      %5652 = vmatpush1.msra.mxu0 0.0
      %5653 = vmatprep.subr.mxu0 0.0
      %5654 = vmatpush1.msra.mxu0 0.0
      %5655 = vmatprep.subr.mxu0 0.0
      %5656 = vmatpush1.msra.mxu0 0.0
      %5657 = vmatprep.subr.mxu0 0.0
      %5658 = vmatpush1.msra.mxu0 0.0
      %5659 = vmatprep.subr.mxu0 0.0
      %5660 = vmatpush1.msra.mxu0 %v4900
      %5661 = vmatprep.subr.mxu0 0.0
      %5662 = vmatpush1.msra.mxu0 %v4895
      %5663 = vmatprep.subr.mxu0 0.0
      %5664 = vmatpush2.msra.mxu0 0.0
      %5665 = vmatprep.subr.mxu0 0.0
      %5666 = vmatpush2.msra.mxu0 0.0
      %5667 = vmatprep.subr.mxu0 0.0
      %5668 = vmatpush2.msra.mxu0 0.0
      %5669 = vmatprep.subr.mxu0 0.0
      %5670 = vmatpush2.msra.mxu0 0.0
      %5671 = vmatprep.subr.mxu0 0.0
      %5672 = vmatpush2.msra.mxu0 0.0
      %5673 = vmatprep.subr.mxu0 0.0
      %5674 = vmatpush2.msra.mxu0 0.0
      %5675 = vmatprep.subr.mxu0 0.0
      %5676 = vmatpush2.msra.mxu0 0.0
      %5677 = vmatprep.subr.mxu0 0.0
      %5678 = vmatpush2.msra.mxu0 0.0
      %5679 = vmatprep.subr.mxu0 0.0
      %5680 = vmatpush2.msra.mxu0 0.0
      %5681 = vmatprep.subr.mxu0 0.0
      %5682 = vmatpush2.msra.mxu0 0.0
      %5683 = vmatprep.subr.mxu0 0.0
      %5684 = vmatpush2.msra.mxu0 0.0
      %5685 = vmatprep.subr.mxu0 0.0
      %5686 = vmatpush2.msra.mxu0 0.0
      %5687 = vmatprep.subr.mxu0 0.0
      %5688 = vmatpush2.msra.mxu0 0.0
      %5689 = vmatprep.subr.mxu0 0.0
      %5690 = vmatpush2.msra.mxu0 0.0
      %5691 = vmatprep.subr.mxu0 0.0
      %5692 = vmatpush2.msra.mxu0 0.0
      %5693 = vmatprep.subr.mxu0 0.0
      %5694 = vmatpush2.msra.mxu0 0.0
      %5695 = vmatprep.mubr.f32.mxu0 0.0
      %5696 = vmatmul.mubr.f32.gmra.mxu0 %v5626
      %v5697 = vpop.f32.mrf.mxu0
      %v5698 = vadd.f32 %v5623, %v5697
      %v5699 = vpop.f32.mrf.mxu0
      %5700 = vmatprep.mubr.f32.mxu0 0.0
      %5701 = vmatmul.mubr.f32.gmra.mxu0 %v5629
      %v5702 = vpop.f32.mrf.mxu0
      %v5703 = vadd.f32 %v5623, %v5702
      %v5704 = vpop.f32.mrf.mxu0
      %5705 = vdwg.mxu0
      %v5706 = vtanh.pop %v5698
      %v5707 = vtanh.pop %v5703
      %v5708 = vld [vmem:[%s8] sm:$0xff]
      %v5709 = vld [vmem:[%s8 + $0x8] sm:$0xff]
      %v5710 = vld [vmem:[%s8 + $0x10] sm:$0xff]
      %v5711 = vld [vmem:[%s8 + $0x18] sm:$0xff]
      %v5712 = vld [vmem:[%s8 + $0x20] sm:$0xff]
      %v5713 = vld [vmem:[%s8 + $0x28] sm:$0xff]
      %v5714 = vld [vmem:[%s8 + $0x30] sm:$0xff]
      %v5715 = vld [vmem:[%s8 + $0x38] sm:$0xff]
      %v5716 = vld [vmem:[%s8 + $0x40] sm:$0xff]
      %v5717 = vld [vmem:[%s8 + $0x48] sm:$0xff]
      %v5718 = vld [vmem:[%s8 + $0x50] sm:$0xff]
      %v5719 = vld [vmem:[%s8 + $0x58] sm:$0xff]
      %v5720 = vld [vmem:[%s8 + $0x60] sm:$0xff]
      %v5721 = vld [vmem:[%s8 + $0x68] sm:$0xff]
      %v5722 = vld [vmem:[%s8 + $0x70] sm:$0xff]
      %v5723 = vld [vmem:[%s8 + $0x78] sm:$0xff]
      %v5724 = vld [vmem:[%s8 + $0x80] sm:$0xff]
      %v5725 = vld [vmem:[%s8 + $0x88] sm:$0xff]
      %v5726 = vld [vmem:[%s8 + $0x90] sm:$0xff]
      %v5727 = vld [vmem:[%s8 + $0x98] sm:$0xff]
      %v5728 = vld [vmem:[%s8 + $0xa0] sm:$0xff]
      %v5729 = vld [vmem:[%s8 + $0xa8] sm:$0xff]
      %v5730 = vld [vmem:[%s8 + $0xb0] sm:$0xff]
      %v5731 = vld [vmem:[%s8 + $0xb8] sm:$0xff]
      %v5732 = vld [vmem:[%s8 + $0xc0] sm:$0xff]
      %v5733 = vld [vmem:[%s8 + $0xc8] sm:$0xff]
      %v5734 = vld [vmem:[%s8 + $0xd0] sm:$0xff]
      %v5735 = vld [vmem:[%s8 + $0xd8] sm:$0xff]
      %v5736 = vld [vmem:[%s9] sm:$0x1]
      %v5737 = vld [vmem:[%s9 + $0x1] sm:$0x1]
      %v5738 = vld [vmem:[%s9 + $0x2] sm:$0x1]
      %v5739 = vld [vmem:[%s9 + $0x3] sm:$0x1]
      %v5740 = vld [vmem:[%s9 + $0x4] sm:$0x1]
      %v5741 = vld [vmem:[%s9 + $0x5] sm:$0x1]
      %v5742 = vld [vmem:[%s9 + $0x6] sm:$0x1]
      %v5744 = vlaneseq
      %v5745 = vshrl.u32 %v5744, 7
      %v5746 = vsub.s32 0, %v5745
      %v5747 = vrot.slane %v5736, %v5746
      %v5750 = vsel %vm847, %v5706, 0
      %v5753 = vsel %vm847, %v5707, 0
      %5755 = vmatprep.subr.mxu0 0.0
      %5756 = vmatpush1.msra.mxu0 0.0
      %5757 = vmatprep.subr.mxu0 0.0
      %5758 = vmatpush1.msra.mxu0 0.0
      %5759 = vmatprep.subr.mxu0 0.0
      %5760 = vmatpush1.msra.mxu0 0.0
      %5761 = vmatprep.subr.mxu0 0.0
      %5762 = vmatpush1.msra.mxu0 0.0
      %5763 = vmatprep.subr.mxu0 0.0
      %5764 = vmatpush1.msra.mxu0 0.0
      %5765 = vmatprep.subr.mxu0 0.0
      %5766 = vmatpush1.msra.mxu0 0.0
      %5767 = vmatprep.subr.mxu0 0.0
      %5768 = vmatpush1.msra.mxu0 0.0
      %5769 = vmatprep.subr.mxu0 0.0
      %5770 = vmatpush1.msra.mxu0 0.0
      %5771 = vmatprep.subr.mxu0 0.0
      %5772 = vmatpush1.msra.mxu0 0.0
      %5773 = vmatprep.subr.mxu0 0.0
      %5774 = vmatpush1.msra.mxu0 0.0
      %5775 = vmatprep.subr.mxu0 0.0
      %5776 = vmatpush1.msra.mxu0 0.0
      %5777 = vmatprep.subr.mxu0 0.0
      %5778 = vmatpush1.msra.mxu0 0.0
      %5779 = vmatprep.subr.mxu0 0.0
      %5780 = vmatpush1.msra.mxu0 %v5711
      %5781 = vmatprep.subr.mxu0 0.0
      %5782 = vmatpush1.msra.mxu0 %v5710
      %5783 = vmatprep.subr.mxu0 0.0
      %5784 = vmatpush1.msra.mxu0 %v5709
      %5785 = vmatprep.subr.mxu0 0.0
      %5786 = vmatpush1.msra.mxu0 %v5708
      %5787 = vmatprep.subr.mxu0 0.0
      %5788 = vmatpush2.msra.mxu0 0.0
      %5789 = vmatprep.subr.mxu0 0.0
      %5790 = vmatpush2.msra.mxu0 0.0
      %5791 = vmatprep.subr.mxu0 0.0
      %5792 = vmatpush2.msra.mxu0 0.0
      %5793 = vmatprep.subr.mxu0 0.0
      %5794 = vmatpush2.msra.mxu0 0.0
      %5795 = vmatprep.subr.mxu0 0.0
      %5796 = vmatpush2.msra.mxu0 0.0
      %5797 = vmatprep.subr.mxu0 0.0
      %5798 = vmatpush2.msra.mxu0 0.0
      %5799 = vmatprep.subr.mxu0 0.0
      %5800 = vmatpush2.msra.mxu0 0.0
      %5801 = vmatprep.subr.mxu0 0.0
      %5802 = vmatpush2.msra.mxu0 0.0
      %5803 = vmatprep.subr.mxu0 0.0
      %5804 = vmatpush2.msra.mxu0 0.0
      %5805 = vmatprep.subr.mxu0 0.0
      %5806 = vmatpush2.msra.mxu0 0.0
      %5807 = vmatprep.subr.mxu0 0.0
      %5808 = vmatpush2.msra.mxu0 0.0
      %5809 = vmatprep.subr.mxu0 0.0
      %5810 = vmatpush2.msra.mxu0 0.0
      %5811 = vmatprep.subr.mxu0 0.0
      %5812 = vmatpush2.msra.mxu0 0.0
      %5813 = vmatprep.subr.mxu0 0.0
      %5814 = vmatpush2.msra.mxu0 0.0
      %5815 = vmatprep.subr.mxu0 0.0
      %5816 = vmatpush2.msra.mxu0 0.0
      %5817 = vmatprep.subr.mxu0 0.0
      %5818 = vmatpush2.msra.mxu0 0.0
      %5819 = vmatprep.mubr.f32.mxu0 0.0
      %5820 = vmatmul.mubr.f32.gmra.mxu0 %v5750
      %v5821 = vpop.f32.mrf.mxu0
      %v5822 = vadd.f32 %v5747, %v5821
      %v5823 = vpop.f32.mrf.mxu0
      %5824 = vmatprep.mubr.f32.mxu0 0.0
      %5825 = vmatmul.mubr.f32.gmra.mxu0 %v5753
      %v5826 = vpop.f32.mrf.mxu0
      %v5827 = vadd.f32 %v5747, %v5826
      %v5828 = vpop.f32.mrf.mxu0
      %5829 = vdwg.mxu0
      %v5830 = vtanh.pop %v5822
      %v5831 = vtanh.pop %v5827
      %v5833 = vlaneseq
      %v5834 = vshrl.u32 %v5833, 7
      %v5835 = vsub.s32 0, %v5834
      %v5836 = vrot.slane %v5737, %v5835
      %v5839 = vsel %vm847, %v5830, 0
      %v5842 = vsel %vm847, %v5831, 0
      %5844 = vmatprep.subr.mxu0 0.0
      %5845 = vmatpush1.msra.mxu0 0.0
      %5846 = vmatprep.subr.mxu0 0.0
      %5847 = vmatpush1.msra.mxu0 0.0
      %5848 = vmatprep.subr.mxu0 0.0
      %5849 = vmatpush1.msra.mxu0 0.0
      %5850 = vmatprep.subr.mxu0 0.0
      %5851 = vmatpush1.msra.mxu0 0.0
      %5852 = vmatprep.subr.mxu0 0.0
      %5853 = vmatpush1.msra.mxu0 0.0
      %5854 = vmatprep.subr.mxu0 0.0
      %5855 = vmatpush1.msra.mxu0 0.0
      %5856 = vmatprep.subr.mxu0 0.0
      %5857 = vmatpush1.msra.mxu0 0.0
      %5858 = vmatprep.subr.mxu0 0.0
      %5859 = vmatpush1.msra.mxu0 0.0
      %5860 = vmatprep.subr.mxu0 0.0
      %5861 = vmatpush1.msra.mxu0 0.0
      %5862 = vmatprep.subr.mxu0 0.0
      %5863 = vmatpush1.msra.mxu0 0.0
      %5864 = vmatprep.subr.mxu0 0.0
      %5865 = vmatpush1.msra.mxu0 0.0
      %5866 = vmatprep.subr.mxu0 0.0
      %5867 = vmatpush1.msra.mxu0 0.0
      %5868 = vmatprep.subr.mxu0 0.0
      %5869 = vmatpush1.msra.mxu0 %v5715
      %5870 = vmatprep.subr.mxu0 0.0
      %5871 = vmatpush1.msra.mxu0 %v5714
      %5872 = vmatprep.subr.mxu0 0.0
      %5873 = vmatpush1.msra.mxu0 %v5713
      %5874 = vmatprep.subr.mxu0 0.0
      %5875 = vmatpush1.msra.mxu0 %v5712
      %5876 = vmatprep.subr.mxu0 0.0
      %5877 = vmatpush2.msra.mxu0 0.0
      %5878 = vmatprep.subr.mxu0 0.0
      %5879 = vmatpush2.msra.mxu0 0.0
      %5880 = vmatprep.subr.mxu0 0.0
      %5881 = vmatpush2.msra.mxu0 0.0
      %5882 = vmatprep.subr.mxu0 0.0
      %5883 = vmatpush2.msra.mxu0 0.0
      %5884 = vmatprep.subr.mxu0 0.0
      %5885 = vmatpush2.msra.mxu0 0.0
      %5886 = vmatprep.subr.mxu0 0.0
      %5887 = vmatpush2.msra.mxu0 0.0
      %5888 = vmatprep.subr.mxu0 0.0
      %5889 = vmatpush2.msra.mxu0 0.0
      %5890 = vmatprep.subr.mxu0 0.0
      %5891 = vmatpush2.msra.mxu0 0.0
      %5892 = vmatprep.subr.mxu0 0.0
      %5893 = vmatpush2.msra.mxu0 0.0
      %5894 = vmatprep.subr.mxu0 0.0
      %5895 = vmatpush2.msra.mxu0 0.0
      %5896 = vmatprep.subr.mxu0 0.0
      %5897 = vmatpush2.msra.mxu0 0.0
      %5898 = vmatprep.subr.mxu0 0.0
      %5899 = vmatpush2.msra.mxu0 0.0
      %5900 = vmatprep.subr.mxu0 0.0
      %5901 = vmatpush2.msra.mxu0 0.0
      %5902 = vmatprep.subr.mxu0 0.0
      %5903 = vmatpush2.msra.mxu0 0.0
      %5904 = vmatprep.subr.mxu0 0.0
      %5905 = vmatpush2.msra.mxu0 0.0
      %5906 = vmatprep.subr.mxu0 0.0
      %5907 = vmatpush2.msra.mxu0 0.0
      %5908 = vmatprep.mubr.f32.mxu0 0.0
      %5909 = vmatmul.mubr.f32.gmra.mxu0 %v5839
      %v5910 = vpop.f32.mrf.mxu0
      %v5911 = vadd.f32 %v5836, %v5910
      %v5912 = vpop.f32.mrf.mxu0
      %5913 = vmatprep.mubr.f32.mxu0 0.0
      %5914 = vmatmul.mubr.f32.gmra.mxu0 %v5842
      %v5915 = vpop.f32.mrf.mxu0
      %v5916 = vadd.f32 %v5836, %v5915
      %v5917 = vpop.f32.mrf.mxu0
      %5918 = vdwg.mxu0
      %v5919 = vtanh.pop %v5911
      %v5920 = vtanh.pop %v5916
      %v5922 = vlaneseq
      %v5923 = vshrl.u32 %v5922, 7
      %v5924 = vsub.s32 0, %v5923
      %v5925 = vrot.slane %v5738, %v5924
      %v5928 = vsel %vm847, %v5919, 0
      %v5931 = vsel %vm847, %v5920, 0
      %5933 = vmatprep.subr.mxu0 0.0
      %5934 = vmatpush1.msra.mxu0 0.0
      %5935 = vmatprep.subr.mxu0 0.0
      %5936 = vmatpush1.msra.mxu0 0.0
      %5937 = vmatprep.subr.mxu0 0.0
      %5938 = vmatpush1.msra.mxu0 0.0
      %5939 = vmatprep.subr.mxu0 0.0
      %5940 = vmatpush1.msra.mxu0 0.0
      %5941 = vmatprep.subr.mxu0 0.0
      %5942 = vmatpush1.msra.mxu0 0.0
      %5943 = vmatprep.subr.mxu0 0.0
      %5944 = vmatpush1.msra.mxu0 0.0
      %5945 = vmatprep.subr.mxu0 0.0
      %5946 = vmatpush1.msra.mxu0 0.0
      %5947 = vmatprep.subr.mxu0 0.0
      %5948 = vmatpush1.msra.mxu0 0.0
      %5949 = vmatprep.subr.mxu0 0.0
      %5950 = vmatpush1.msra.mxu0 0.0
      %5951 = vmatprep.subr.mxu0 0.0
      %5952 = vmatpush1.msra.mxu0 0.0
      %5953 = vmatprep.subr.mxu0 0.0
      %5954 = vmatpush1.msra.mxu0 0.0
      %5955 = vmatprep.subr.mxu0 0.0
      %5956 = vmatpush1.msra.mxu0 0.0
      %5957 = vmatprep.subr.mxu0 0.0
      %5958 = vmatpush1.msra.mxu0 %v5719
      %5959 = vmatprep.subr.mxu0 0.0
      %5960 = vmatpush1.msra.mxu0 %v5718
      %5961 = vmatprep.subr.mxu0 0.0
      %5962 = vmatpush1.msra.mxu0 %v5717
      %5963 = vmatprep.subr.mxu0 0.0
      %5964 = vmatpush1.msra.mxu0 %v5716
      %5965 = vmatprep.subr.mxu0 0.0
      %5966 = vmatpush2.msra.mxu0 0.0
      %5967 = vmatprep.subr.mxu0 0.0
      %5968 = vmatpush2.msra.mxu0 0.0
      %5969 = vmatprep.subr.mxu0 0.0
      %5970 = vmatpush2.msra.mxu0 0.0
      %5971 = vmatprep.subr.mxu0 0.0
      %5972 = vmatpush2.msra.mxu0 0.0
      %5973 = vmatprep.subr.mxu0 0.0
      %5974 = vmatpush2.msra.mxu0 0.0
      %5975 = vmatprep.subr.mxu0 0.0
      %5976 = vmatpush2.msra.mxu0 0.0
      %5977 = vmatprep.subr.mxu0 0.0
      %5978 = vmatpush2.msra.mxu0 0.0
      %5979 = vmatprep.subr.mxu0 0.0
      %5980 = vmatpush2.msra.mxu0 0.0
      %5981 = vmatprep.subr.mxu0 0.0
      %5982 = vmatpush2.msra.mxu0 0.0
      %5983 = vmatprep.subr.mxu0 0.0
      %5984 = vmatpush2.msra.mxu0 0.0
      %5985 = vmatprep.subr.mxu0 0.0
      %5986 = vmatpush2.msra.mxu0 0.0
      %5987 = vmatprep.subr.mxu0 0.0
      %5988 = vmatpush2.msra.mxu0 0.0
      %5989 = vmatprep.subr.mxu0 0.0
      %5990 = vmatpush2.msra.mxu0 0.0
      %5991 = vmatprep.subr.mxu0 0.0
      %5992 = vmatpush2.msra.mxu0 0.0
      %5993 = vmatprep.subr.mxu0 0.0
      %5994 = vmatpush2.msra.mxu0 0.0
      %5995 = vmatprep.subr.mxu0 0.0
      %5996 = vmatpush2.msra.mxu0 0.0
      %5997 = vmatprep.mubr.f32.mxu0 0.0
      %5998 = vmatmul.mubr.f32.gmra.mxu0 %v5928
      %v5999 = vpop.f32.mrf.mxu0
      %v6000 = vadd.f32 %v5925, %v5999
      %v6001 = vpop.f32.mrf.mxu0
      %6002 = vmatprep.mubr.f32.mxu0 0.0
      %6003 = vmatmul.mubr.f32.gmra.mxu0 %v5931
      %v6004 = vpop.f32.mrf.mxu0
      %v6005 = vadd.f32 %v5925, %v6004
      %v6006 = vpop.f32.mrf.mxu0
      %6007 = vdwg.mxu0
      %v6009 = vlaneseq
      %v6010 = vshrl.u32 %v6009, 7
      %v6011 = vsub.s32 0, %v6010
      %v6012 = vrot.slane %v5739, %v6011
      %6014 = vrot.lane.b32.xlu0 %v5830, 96
      %v6015 = vpop.permute.xlu0 %6014
      %6016 = vrot.lane.b32.xlu0 %v5831, 96
      %v6017 = vpop.permute.xlu0 %6016
      %v6018 = vsel %vm847, %v6015, 0
      %v6020 = vsel %vm847, %v6017, 0
      %6022 = vmatprep.subr.mxu0 0.0
      %6023 = vmatpush1.msra.mxu0 0.0
      %6024 = vmatprep.subr.mxu0 0.0
      %6025 = vmatpush1.msra.mxu0 0.0
      %6026 = vmatprep.subr.mxu0 0.0
      %6027 = vmatpush1.msra.mxu0 0.0
      %6028 = vmatprep.subr.mxu0 0.0
      %6029 = vmatpush1.msra.mxu0 0.0
      %6030 = vmatprep.subr.mxu0 0.0
      %6031 = vmatpush1.msra.mxu0 0.0
      %6032 = vmatprep.subr.mxu0 0.0
      %6033 = vmatpush1.msra.mxu0 0.0
      %6034 = vmatprep.subr.mxu0 0.0
      %6035 = vmatpush1.msra.mxu0 0.0
      %6036 = vmatprep.subr.mxu0 0.0
      %6037 = vmatpush1.msra.mxu0 0.0
      %6038 = vmatprep.subr.mxu0 0.0
      %6039 = vmatpush1.msra.mxu0 0.0
      %6040 = vmatprep.subr.mxu0 0.0
      %6041 = vmatpush1.msra.mxu0 0.0
      %6042 = vmatprep.subr.mxu0 0.0
      %6043 = vmatpush1.msra.mxu0 0.0
      %6044 = vmatprep.subr.mxu0 0.0
      %6045 = vmatpush1.msra.mxu0 0.0
      %6046 = vmatprep.subr.mxu0 0.0
      %6047 = vmatpush1.msra.mxu0 %v5723
      %6048 = vmatprep.subr.mxu0 0.0
      %6049 = vmatpush1.msra.mxu0 %v5722
      %6050 = vmatprep.subr.mxu0 0.0
      %6051 = vmatpush1.msra.mxu0 %v5721
      %6052 = vmatprep.subr.mxu0 0.0
      %6053 = vmatpush1.msra.mxu0 %v5720
      %6054 = vmatprep.subr.mxu0 0.0
      %6055 = vmatpush2.msra.mxu0 0.0
      %6056 = vmatprep.subr.mxu0 0.0
      %6057 = vmatpush2.msra.mxu0 0.0
      %6058 = vmatprep.subr.mxu0 0.0
      %6059 = vmatpush2.msra.mxu0 0.0
      %6060 = vmatprep.subr.mxu0 0.0
      %6061 = vmatpush2.msra.mxu0 0.0
      %6062 = vmatprep.subr.mxu0 0.0
      %6063 = vmatpush2.msra.mxu0 0.0
      %6064 = vmatprep.subr.mxu0 0.0
      %6065 = vmatpush2.msra.mxu0 0.0
      %6066 = vmatprep.subr.mxu0 0.0
      %6067 = vmatpush2.msra.mxu0 0.0
      %6068 = vmatprep.subr.mxu0 0.0
      %6069 = vmatpush2.msra.mxu0 0.0
      %6070 = vmatprep.subr.mxu0 0.0
      %6071 = vmatpush2.msra.mxu0 0.0
      %6072 = vmatprep.subr.mxu0 0.0
      %6073 = vmatpush2.msra.mxu0 0.0
      %6074 = vmatprep.subr.mxu0 0.0
      %6075 = vmatpush2.msra.mxu0 0.0
      %6076 = vmatprep.subr.mxu0 0.0
      %6077 = vmatpush2.msra.mxu0 0.0
      %6078 = vmatprep.subr.mxu0 0.0
      %6079 = vmatpush2.msra.mxu0 0.0
      %6080 = vmatprep.subr.mxu0 0.0
      %6081 = vmatpush2.msra.mxu0 0.0
      %6082 = vmatprep.subr.mxu0 0.0
      %6083 = vmatpush2.msra.mxu0 0.0
      %6084 = vmatprep.subr.mxu0 0.0
      %6085 = vmatpush2.msra.mxu0 0.0
      %6086 = vmatprep.mubr.f32.mxu0 0.0
      %6087 = vmatmul.mubr.f32.gmra.mxu0 %v6018
      %v6088 = vpop.f32.mrf.mxu0
      %v6089 = vadd.f32 %v6012, %v6088
      %v6090 = vpop.f32.mrf.mxu0
      %6091 = vmatprep.mubr.f32.mxu0 0.0
      %6092 = vmatmul.mubr.f32.gmra.mxu0 %v6020
      %v6093 = vpop.f32.mrf.mxu0
      %v6094 = vadd.f32 %v6012, %v6093
      %v6095 = vpop.f32.mrf.mxu0
      %6096 = vdwg.mxu0
      %v6097 = vtanh.pop %v6089
      %v6098 = vtanh.pop %v6094
      %vm6099 = vcmp.gt.f32.partialorder %v438, 0.0
      %vm6100 = vcmp.gt.f32.partialorder %v439, 0.0
      %6102 = vset.pattern.permute.xlu0 0
      %6103 = vperm.xlu0 %6102, %v6000
      %v6104 = vpop.permute.xlu0 %6103
      %6107 = vset.pattern.permute.xlu0 0
      %6108 = vperm.xlu0 %6107, %v6005
      %v6109 = vpop.permute.xlu0 %6108
      %v6111 = vsel %vm6099, %v6104, -1e+30
      %v6112 = vsel %vm6100, %v6109, -1e+30
      %vm6113 = vcmask 15360
      %v6114 = vsel %vm6113, %v6111, -inf
      %v6115 = vsel %vm6113, %v6112, -inf
      %v6116 = vmax.f32 %v6114, %v6115
      %v6117 = vrot.slane %v6116, 4
      %v6118 = vmax.f32 %v6116, %v6117
      %v6119 = vrot.slane %v6118, 2
      %v6120 = vmax.f32 %v6118, %v6119
      %v6121 = vrot.slane %v6120, 1
      %v6122 = vmax.f32 %v6120, %v6121
      %v6123 = vsel %vm6099, %v6122, -1e+30
      %v6124 = vsel %vm6100, %v6122, -1e+30
      %v6125 = vsel %vm6113, %v6123, -inf
      %6126 = vmax.xlane.f32.xlu0 %v6125
      %v6127 = vpop.xlane.xlu0 %6126
      %v6128 = vsel %vm6113, %v6124, -inf
      %6129 = vmax.xlane.f32.xlu0 %v6128
      %v6130 = vpop.xlane.xlu0 %6129
      %v6131 = vsub.f32 %v6000, %v6127
      %v6132 = vsub.f32 %v6005, %v6130
      %v6133 = vmul.f32 %v6131, 1.442695
      %v6134 = vpow.pop %v6133
      %v6135 = vmul.f32 %v6132, 1.442695
      %v6136 = vpow.pop %v6135
      %6138 = vset.pattern.permute.xlu0 0
      %6139 = vperm.xlu0 %6138, %v6134
      %v6140 = vpop.permute.xlu0 %6139
      %6143 = vset.pattern.permute.xlu0 0
      %6144 = vperm.xlu0 %6143, %v6136
      %v6145 = vpop.permute.xlu0 %6144
      %v6147 = vmul.f32 %v6140, %v6097
      %v6148 = vmul.f32 %v6145, %v6098
      %6149 = vrot.lane.b32.xlu0 %v6134, 32
      %v6150 = vpop.permute.xlu0 %6149
      %6151 = vrot.lane.b32.xlu0 %v6136, 32
      %v6152 = vpop.permute.xlu0 %6151
      %v6155 = vsel %vm847, %v6147, %v6150
      %v6156 = vsel %vm847, %v6148, %v6152
      %v6158 = vsel %vm1639, %v437, 0
      %6160 = vmatprep.subr.mxu0 0.0
      %6161 = vmatpush1.msra.mxu0 0.0
      %6162 = vmatprep.subr.mxu0 0.0
      %6163 = vmatpush1.msra.mxu0 0.0
      %6164 = vmatprep.subr.mxu0 0.0
      %6165 = vmatpush1.msra.mxu0 0.0
      %6166 = vmatprep.subr.mxu0 0.0
      %6167 = vmatpush1.msra.mxu0 0.0
      %6168 = vmatprep.subr.mxu0 0.0
      %6169 = vmatpush1.msra.mxu0 0.0
      %6170 = vmatprep.subr.mxu0 0.0
      %6171 = vmatpush1.msra.mxu0 0.0
      %6172 = vmatprep.subr.mxu0 0.0
      %6173 = vmatpush1.msra.mxu0 0.0
      %6174 = vmatprep.subr.mxu0 0.0
      %6175 = vmatpush1.msra.mxu0 0.0
      %6176 = vmatprep.subr.mxu0 0.0
      %6177 = vmatpush1.msra.mxu0 0.0
      %6178 = vmatprep.subr.mxu0 0.0
      %6179 = vmatpush1.msra.mxu0 0.0
      %6180 = vmatprep.subr.mxu0 0.0
      %6181 = vmatpush1.msra.mxu0 0.0
      %6182 = vmatprep.subr.mxu0 0.0
      %6183 = vmatpush1.msra.mxu0 0.0
      %6184 = vmatprep.subr.mxu0 0.0
      %6185 = vmatpush1.msra.mxu0 0.0
      %6186 = vmatprep.subr.mxu0 0.0
      %6187 = vmatpush1.msra.mxu0 0.0
      %6188 = vmatprep.subr.mxu0 0.0
      %6189 = vmatpush1.msra.mxu0 %v6156
      %6190 = vmatprep.subr.mxu0 0.0
      %6191 = vmatpush1.msra.mxu0 %v6155
      %6192 = vmatprep.subr.mxu0 0.0
      %6193 = vmatpush2.msra.mxu0 0.0
      %6194 = vmatprep.subr.mxu0 0.0
      %6195 = vmatpush2.msra.mxu0 0.0
      %6196 = vmatprep.subr.mxu0 0.0
      %6197 = vmatpush2.msra.mxu0 0.0
      %6198 = vmatprep.subr.mxu0 0.0
      %6199 = vmatpush2.msra.mxu0 0.0
      %6200 = vmatprep.subr.mxu0 0.0
      %6201 = vmatpush2.msra.mxu0 0.0
      %6202 = vmatprep.subr.mxu0 0.0
      %6203 = vmatpush2.msra.mxu0 0.0
      %6204 = vmatprep.subr.mxu0 0.0
      %6205 = vmatpush2.msra.mxu0 0.0
      %6206 = vmatprep.subr.mxu0 0.0
      %6207 = vmatpush2.msra.mxu0 0.0
      %6208 = vmatprep.subr.mxu0 0.0
      %6209 = vmatpush2.msra.mxu0 0.0
      %6210 = vmatprep.subr.mxu0 0.0
      %6211 = vmatpush2.msra.mxu0 0.0
      %6212 = vmatprep.subr.mxu0 0.0
      %6213 = vmatpush2.msra.mxu0 0.0
      %6214 = vmatprep.subr.mxu0 0.0
      %6215 = vmatpush2.msra.mxu0 0.0
      %6216 = vmatprep.subr.mxu0 0.0
      %6217 = vmatpush2.msra.mxu0 0.0
      %6218 = vmatprep.subr.mxu0 0.0
      %6219 = vmatpush2.msra.mxu0 0.0
      %6220 = vmatprep.subr.mxu0 0.0
      %6221 = vmatpush2.msra.mxu0 0.0
      %6222 = vmatprep.subr.mxu0 0.0
      %6223 = vmatpush2.msra.mxu0 0.0
      %6224 = vmatprep.mubr.f32.mxu0 0.0
      %6225 = vmatmul.mubr.f32.gmra.mxu0 %v6158
      %v6226 = vpop.f32.mrf.mxu0
      %v6227 = vadd.f32 0.0, %v6226
      %v6228 = vpop.f32.mrf.mxu0
      %6229 = vdwg.mxu0
      %v6230 = vrcp.pop %v6227
      %6232 = vset.pattern.permute.xlu0 32
      %6233 = vperm.xlu0 %6232, %v6230
      %v6234 = vpop.permute.xlu0 %6233
      %v6236 = vmul.f32 %v6227, %v6234
      %v6238 = vlaneseq
      %v6239 = vshrl.u32 %v6238, 7
      %v6240 = vsub.s32 0, %v6239
      %v6241 = vrot.slane %v5740, %v6240
      %v6244 = vsel %vm847, %v6236, 0
      %6246 = vmatprep.subr.mxu0 0.0
      %6247 = vmatpush1.msra.mxu0 0.0
      %6248 = vmatprep.subr.mxu0 0.0
      %6249 = vmatpush1.msra.mxu0 0.0
      %6250 = vmatprep.subr.mxu0 0.0
      %6251 = vmatpush1.msra.mxu0 0.0
      %6252 = vmatprep.subr.mxu0 0.0
      %6253 = vmatpush1.msra.mxu0 0.0
      %6254 = vmatprep.subr.mxu0 0.0
      %6255 = vmatpush1.msra.mxu0 0.0
      %6256 = vmatprep.subr.mxu0 0.0
      %6257 = vmatpush1.msra.mxu0 0.0
      %6258 = vmatprep.subr.mxu0 0.0
      %6259 = vmatpush1.msra.mxu0 0.0
      %6260 = vmatprep.subr.mxu0 0.0
      %6261 = vmatpush1.msra.mxu0 0.0
      %6262 = vmatprep.subr.mxu0 0.0
      %6263 = vmatpush1.msra.mxu0 0.0
      %6264 = vmatprep.subr.mxu0 0.0
      %6265 = vmatpush1.msra.mxu0 0.0
      %6266 = vmatprep.subr.mxu0 0.0
      %6267 = vmatpush1.msra.mxu0 0.0
      %6268 = vmatprep.subr.mxu0 0.0
      %6269 = vmatpush1.msra.mxu0 0.0
      %6270 = vmatprep.subr.mxu0 0.0
      %6271 = vmatpush1.msra.mxu0 %v5727
      %6272 = vmatprep.subr.mxu0 0.0
      %6273 = vmatpush1.msra.mxu0 %v5726
      %6274 = vmatprep.subr.mxu0 0.0
      %6275 = vmatpush1.msra.mxu0 %v5725
      %6276 = vmatprep.subr.mxu0 0.0
      %6277 = vmatpush1.msra.mxu0 %v5724
      %6278 = vmatprep.subr.mxu0 0.0
      %6279 = vmatpush2.msra.mxu0 0.0
      %6280 = vmatprep.subr.mxu0 0.0
      %6281 = vmatpush2.msra.mxu0 0.0
      %6282 = vmatprep.subr.mxu0 0.0
      %6283 = vmatpush2.msra.mxu0 0.0
      %6284 = vmatprep.subr.mxu0 0.0
      %6285 = vmatpush2.msra.mxu0 0.0
      %6286 = vmatprep.subr.mxu0 0.0
      %6287 = vmatpush2.msra.mxu0 0.0
      %6288 = vmatprep.subr.mxu0 0.0
      %6289 = vmatpush2.msra.mxu0 0.0
      %6290 = vmatprep.subr.mxu0 0.0
      %6291 = vmatpush2.msra.mxu0 0.0
      %6292 = vmatprep.subr.mxu0 0.0
      %6293 = vmatpush2.msra.mxu0 0.0
      %6294 = vmatprep.subr.mxu0 0.0
      %6295 = vmatpush2.msra.mxu0 0.0
      %6296 = vmatprep.subr.mxu0 0.0
      %6297 = vmatpush2.msra.mxu0 0.0
      %6298 = vmatprep.subr.mxu0 0.0
      %6299 = vmatpush2.msra.mxu0 0.0
      %6300 = vmatprep.subr.mxu0 0.0
      %6301 = vmatpush2.msra.mxu0 0.0
      %6302 = vmatprep.subr.mxu0 0.0
      %6303 = vmatpush2.msra.mxu0 0.0
      %6304 = vmatprep.subr.mxu0 0.0
      %6305 = vmatpush2.msra.mxu0 0.0
      %6306 = vmatprep.subr.mxu0 0.0
      %6307 = vmatpush2.msra.mxu0 0.0
      %6308 = vmatprep.subr.mxu0 0.0
      %6309 = vmatpush2.msra.mxu0 0.0
      %6310 = vmatprep.mubr.f32.mxu0 0.0
      %6311 = vmatmul.mubr.f32.gmra.mxu0 %v6244
      %v6312 = vpop.f32.mrf.mxu0
      %v6313 = vadd.f32 %v6241, %v6312
      %v6314 = vpop.f32.mrf.mxu0
      %6315 = vdwg.mxu0
      %v6316 = vtanh.pop %v6313
      %v6318 = vlaneseq
      %v6319 = vshrl.u32 %v6318, 7
      %v6320 = vsub.s32 0, %v6319
      %v6321 = vrot.slane %v5741, %v6320
      %v6324 = vsel %vm847, %v6316, 0
      %6326 = vmatprep.subr.mxu0 0.0
      %6327 = vmatpush1.msra.mxu0 0.0
      %6328 = vmatprep.subr.mxu0 0.0
      %6329 = vmatpush1.msra.mxu0 0.0
      %6330 = vmatprep.subr.mxu0 0.0
      %6331 = vmatpush1.msra.mxu0 0.0
      %6332 = vmatprep.subr.mxu0 0.0
      %6333 = vmatpush1.msra.mxu0 0.0
      %6334 = vmatprep.subr.mxu0 0.0
      %6335 = vmatpush1.msra.mxu0 0.0
      %6336 = vmatprep.subr.mxu0 0.0
      %6337 = vmatpush1.msra.mxu0 0.0
      %6338 = vmatprep.subr.mxu0 0.0
      %6339 = vmatpush1.msra.mxu0 0.0
      %6340 = vmatprep.subr.mxu0 0.0
      %6341 = vmatpush1.msra.mxu0 0.0
      %6342 = vmatprep.subr.mxu0 0.0
      %6343 = vmatpush1.msra.mxu0 0.0
      %6344 = vmatprep.subr.mxu0 0.0
      %6345 = vmatpush1.msra.mxu0 0.0
      %6346 = vmatprep.subr.mxu0 0.0
      %6347 = vmatpush1.msra.mxu0 0.0
      %6348 = vmatprep.subr.mxu0 0.0
      %6349 = vmatpush1.msra.mxu0 0.0
      %6350 = vmatprep.subr.mxu0 0.0
      %6351 = vmatpush1.msra.mxu0 %v5731
      %6352 = vmatprep.subr.mxu0 0.0
      %6353 = vmatpush1.msra.mxu0 %v5730
      %6354 = vmatprep.subr.mxu0 0.0
      %6355 = vmatpush1.msra.mxu0 %v5729
      %6356 = vmatprep.subr.mxu0 0.0
      %6357 = vmatpush1.msra.mxu0 %v5728
      %6358 = vmatprep.subr.mxu0 0.0
      %6359 = vmatpush2.msra.mxu0 0.0
      %6360 = vmatprep.subr.mxu0 0.0
      %6361 = vmatpush2.msra.mxu0 0.0
      %6362 = vmatprep.subr.mxu0 0.0
      %6363 = vmatpush2.msra.mxu0 0.0
      %6364 = vmatprep.subr.mxu0 0.0
      %6365 = vmatpush2.msra.mxu0 0.0
      %6366 = vmatprep.subr.mxu0 0.0
      %6367 = vmatpush2.msra.mxu0 0.0
      %6368 = vmatprep.subr.mxu0 0.0
      %6369 = vmatpush2.msra.mxu0 0.0
      %6370 = vmatprep.subr.mxu0 0.0
      %6371 = vmatpush2.msra.mxu0 0.0
      %6372 = vmatprep.subr.mxu0 0.0
      %6373 = vmatpush2.msra.mxu0 0.0
      %6374 = vmatprep.subr.mxu0 0.0
      %6375 = vmatpush2.msra.mxu0 0.0
      %6376 = vmatprep.subr.mxu0 0.0
      %6377 = vmatpush2.msra.mxu0 0.0
      %6378 = vmatprep.subr.mxu0 0.0
      %6379 = vmatpush2.msra.mxu0 0.0
      %6380 = vmatprep.subr.mxu0 0.0
      %6381 = vmatpush2.msra.mxu0 0.0
      %6382 = vmatprep.subr.mxu0 0.0
      %6383 = vmatpush2.msra.mxu0 0.0
      %6384 = vmatprep.subr.mxu0 0.0
      %6385 = vmatpush2.msra.mxu0 0.0
      %6386 = vmatprep.subr.mxu0 0.0
      %6387 = vmatpush2.msra.mxu0 0.0
      %6388 = vmatprep.subr.mxu0 0.0
      %6389 = vmatpush2.msra.mxu0 0.0
      %6390 = vmatprep.mubr.f32.mxu0 0.0
      %6391 = vmatmul.mubr.f32.gmra.mxu0 %v6324
      %v6392 = vpop.f32.mrf.mxu0
      %v6393 = vadd.f32 %v6321, %v6392
      %v6394 = vpop.f32.mrf.mxu0
      %6395 = vdwg.mxu0
      %v6396 = vtanh.pop %v6393
      %v6398 = vlaneseq
      %v6399 = vshrl.u32 %v6398, 7
      %v6400 = vsub.s32 0, %v6399
      %v6401 = vrot.slane %v5742, %v6400
      %v6404 = vsel %vm847, %v6396, 0
      %6406 = vmatprep.subr.mxu0 0.0
      %6407 = vmatpush1.msra.mxu0 0.0
      %6408 = vmatprep.subr.mxu0 0.0
      %6409 = vmatpush1.msra.mxu0 0.0
      %6410 = vmatprep.subr.mxu0 0.0
      %6411 = vmatpush1.msra.mxu0 0.0
      %6412 = vmatprep.subr.mxu0 0.0
      %6413 = vmatpush1.msra.mxu0 0.0
      %6414 = vmatprep.subr.mxu0 0.0
      %6415 = vmatpush1.msra.mxu0 0.0
      %6416 = vmatprep.subr.mxu0 0.0
      %6417 = vmatpush1.msra.mxu0 0.0
      %6418 = vmatprep.subr.mxu0 0.0
      %6419 = vmatpush1.msra.mxu0 0.0
      %6420 = vmatprep.subr.mxu0 0.0
      %6421 = vmatpush1.msra.mxu0 0.0
      %6422 = vmatprep.subr.mxu0 0.0
      %6423 = vmatpush1.msra.mxu0 0.0
      %6424 = vmatprep.subr.mxu0 0.0
      %6425 = vmatpush1.msra.mxu0 0.0
      %6426 = vmatprep.subr.mxu0 0.0
      %6427 = vmatpush1.msra.mxu0 0.0
      %6428 = vmatprep.subr.mxu0 0.0
      %6429 = vmatpush1.msra.mxu0 0.0
      %6430 = vmatprep.subr.mxu0 0.0
      %6431 = vmatpush1.msra.mxu0 %v5735
      %6432 = vmatprep.subr.mxu0 0.0
      %6433 = vmatpush1.msra.mxu0 %v5734
      %6434 = vmatprep.subr.mxu0 0.0
      %6435 = vmatpush1.msra.mxu0 %v5733
      %6436 = vmatprep.subr.mxu0 0.0
      %6437 = vmatpush1.msra.mxu0 %v5732
      %6438 = vmatprep.subr.mxu0 0.0
      %6439 = vmatpush2.msra.mxu0 0.0
      %6440 = vmatprep.subr.mxu0 0.0
      %6441 = vmatpush2.msra.mxu0 0.0
      %6442 = vmatprep.subr.mxu0 0.0
      %6443 = vmatpush2.msra.mxu0 0.0
      %6444 = vmatprep.subr.mxu0 0.0
      %6445 = vmatpush2.msra.mxu0 0.0
      %6446 = vmatprep.subr.mxu0 0.0
      %6447 = vmatpush2.msra.mxu0 0.0
      %6448 = vmatprep.subr.mxu0 0.0
      %6449 = vmatpush2.msra.mxu0 0.0
      %6450 = vmatprep.subr.mxu0 0.0
      %6451 = vmatpush2.msra.mxu0 0.0
      %6452 = vmatprep.subr.mxu0 0.0
      %6453 = vmatpush2.msra.mxu0 0.0
      %6454 = vmatprep.subr.mxu0 0.0
      %6455 = vmatpush2.msra.mxu0 0.0
      %6456 = vmatprep.subr.mxu0 0.0
      %6457 = vmatpush2.msra.mxu0 0.0
      %6458 = vmatprep.subr.mxu0 0.0
      %6459 = vmatpush2.msra.mxu0 0.0
      %6460 = vmatprep.subr.mxu0 0.0
      %6461 = vmatpush2.msra.mxu0 0.0
      %6462 = vmatprep.subr.mxu0 0.0
      %6463 = vmatpush2.msra.mxu0 0.0
      %6464 = vmatprep.subr.mxu0 0.0
      %6465 = vmatpush2.msra.mxu0 0.0
      %6466 = vmatprep.subr.mxu0 0.0
      %6467 = vmatpush2.msra.mxu0 0.0
      %6468 = vmatprep.subr.mxu0 0.0
      %6469 = vmatpush2.msra.mxu0 0.0
      %6470 = vmatprep.mubr.f32.mxu0 0.0
      %6471 = vmatmul.mubr.f32.gmra.mxu0 %v6404
      %v6472 = vpop.f32.mrf.mxu0
      %v6473 = vadd.f32 %v6401, %v6472
      %v6474 = vpop.f32.mrf.mxu0
      %6475 = vdwg.mxu0
      %v6476 = vtanh.pop %v6473
      %vm6477 = vcmask 1024
      %6478 = vst.msk [vmem:[%s434] sm:$0x3] %vm6477, %v6476
      %p6479 = scmp.lt.s32.totalorder %s21, 1
      %s6480 = scalar_select %p6479, %s21, 1
      %s6481 = smul.addr %s6480, 2
      %s6482 = scalar_lea.vmem %s10, %s6481
      // Predicated region
      $region61: #{critic_forward.1} parent=59 // pred_check
        %p6483 = pneg %p274
      $region62: #{critic_forward.1} parent=59 // pred_check_branch
        %6485 = sbr.rel (%p6483) target = $region64
      $region63: #{critic_forward.1} parent=59 // pred_region
        _
      $region64: #{critic_forward.1} parent=59 // pred_fallthru
        _
    $region60: #{critic_forward.1} parent=5 // pred_fallthru
      _
    %p6486 = scmp.le.s32.totalorder 2, %s16
    // Predicated region
    $region65: #{critic_forward.1} parent=5 // pred_check
      %p6487 = pneg %p6486
    $region66: #{critic_forward.1} parent=5 // pred_check_branch
      %6489 = sbr.rel (%p6487) target = $region68
    $region67: #{critic_forward.1} parent=5 // pred_region
      %s6490 = ssub.s32 %s16, 2
      // Predicated region
      $region69: #{critic_forward.1} parent=67 // pred_check
        %p6491 = pneg %p280
      $region70: #{critic_forward.1} parent=67 // pred_check_branch
        %6493 = sbr.rel (%p6491) target = $region72
      $region71: #{critic_forward.1} parent=67 // pred_region
        %p6494 = scmp.lt.s32.totalorder %s22, 1
        %s6495 = scalar_select %p6494, %s22, 1
        %s6496 = smul.addr %s6495, 2
        %s6497 = scalar_lea.vmem %s10, %s6496
      $region72: #{critic_forward.1} parent=67 // pred_fallthru
        _
    $region68: #{critic_forward.1} parent=5 // pred_fallthru
      _
  $region6: #{critic_forward.1} parent=0 // loop_footer
    %s20 = sadd.s32 1, %s16
  $region7: #{critic_forward.1} parent=0 // loop_footer_branch
    %15 = sbr.rel target = $region3
  $region8: #{critic_forward.1} parent=0 // loop_exit
    _

</llo_original>
